<compile_context>
chip_gen: v7x
topology: tpu7x:2x2x1
jax: 0.10.0
libtpu: 0.0.40
codegen_flags: <defaults>
</compile_context>

<pallas_src>
import functools

import jax
import jax.numpy as jnp
from jax.experimental import pallas as pl
from jax.experimental.pallas import tpu as pltpu


# ----------------------------------------------------------------------------
# Small helpers
# ----------------------------------------------------------------------------
_INV_SQRT2 = 0.7071067811865476

_PAR1 = pltpu.CompilerParams(dimension_semantics=("parallel",))
_PAR2 = pltpu.CompilerParams(dimension_semantics=("parallel", "parallel"))


def _apply_act(y, act):
    if act == "gelu":                        # exact erf GELU (PyTorch default)
        return 0.5 * y * (1.0 + jax.lax.erf(y * _INV_SQRT2))
    if act == "relu":
        return jnp.maximum(y, 0.0)
    if act == "sigmoid":
        return jax.nn.sigmoid(y)
    return y


def gelu(x):                                 # XLA-side exact GELU
    return jax.nn.gelu(x, approximate=False)


def relu(x):
    return jnp.maximum(x, 0.0)


def _pick_tile_n(n):
    if n >= 2048 and n % 1024 == 0:
        return 1024
    return n


def _same_pad(k):
    total = k - 1
    lo = total // 2
    return (lo, total - lo)


# ----------------------------------------------------------------------------
# Capability probes (compile-only; guarantee the script runs even if a
# particular Mosaic lowering is unavailable on the installed toolchain).
# ----------------------------------------------------------------------------
_ERF_OK = None
_DW_OK = None


def _erf_in_kernel_ok():
    global _ERF_OK
    if _ERF_OK is None:
        def k(x_ref, o_ref):
            o_ref[...] = jax.lax.erf(x_ref[...])
        try:
            fn = pl.pallas_call(
                k, out_shape=jax.ShapeDtypeStruct((8, 128), jnp.float32))
            jax.jit(fn).lower(
                jax.ShapeDtypeStruct((8, 128), jnp.float32)).compile()
            _ERF_OK = True
        except Exception:
            _ERF_OK = False
    return _ERF_OK


def _resolve_act(act):
    """Return (in-kernel act, apply-exact-gelu-outside?)."""
    if act == "gelu" and not _erf_in_kernel_ok():
        return "none", True
    return act, False


# ----------------------------------------------------------------------------
# Pallas kernels
# ----------------------------------------------------------------------------
def _mm_kernel(x_ref, w_ref, b_ref, o_ref, *, act):
    y = jnp.dot(w_ref[...], x_ref[...],
                preferred_element_type=jnp.float32) + b_ref[...]
    o_ref[...] = _apply_act(y, act)


def mm_act(x2, w2, b, act="none"):
    """Lane-dense matmul: out(M, N) = act(w2(M, K) @ x2(K, N) + b)."""
    K, N = x2.shape
    M = w2.shape[0]
    act_k, post_gelu = _resolve_act(act)
    bb = b if b is not None else jnp.zeros((M,), jnp.float32)
    tn = _pick_tile_n(N)
    out = pl.pallas_call(
        functools.partial(_mm_kernel, act=act_k),
        out_shape=jax.ShapeDtypeStruct((M, N), jnp.float32),
        grid=(N // tn,),
        in_specs=[
            pl.BlockSpec((K, tn), lambda i: (0, i)),
            pl.BlockSpec((M, K), lambda i: (0, 0)),
            pl.BlockSpec((M, 1), lambda i: (0, 0)),
        ],
        out_specs=pl.BlockSpec((M, tn), lambda i: (0, i)),
        compiler_params=_PAR1,
    )(x2, w2, bb.reshape(M, 1))
    if post_gelu:
        out = gelu(out)
    return out


def conv1x1(x, w, b=None, act="none"):
    """1x1 conv in CBHW layout. x: (Cin, B, H, W), w: (Cout, Cin, 1, 1)."""
    Cin = x.shape[0]
    Cout = w.shape[0]
    out = mm_act(x.reshape(Cin, -1), w.reshape(Cout, -1), b, act)
    return out.reshape((Cout,) + x.shape[1:])


def _dw_kernel(x_ref, w_ref, b_ref, o_ref, *, kh, kw, ho, wo, act):
    w = w_ref[...]                                   # (cblk, 1, kh, kw)
    acc = jnp.zeros(o_ref.shape, jnp.float32)
    for di in range(kh):
        band = x_ref[:, :, di:di + ho, :]            # (cblk, 1, ho, Wp)
        for dj in range(kw):
            acc = acc + band[:, :, :, dj:dj + wo] * w[:, :, di:di + 1, dj:dj + 1]
    acc = acc + b_ref[...]
    o_ref[...] = _apply_act(acc, act)


def _dw_conv_pallas(xp, w, b4, H, W, kh, kw, act):
    C, B = xp.shape[0], xp.shape[1]
    Hp, Wp = xp.shape[2], xp.shape[3]
    # keep per-step accumulator small (row/channel strip) for big images
    cblk = 8 if (C % 8 == 0 and H * W > 256) else C
    return pl.pallas_call(
        functools.partial(_dw_kernel, kh=kh, kw=kw, ho=H, wo=W, act=act),
        out_shape=jax.ShapeDtypeStruct((C, B, H, W), jnp.float32),
        grid=(C // cblk, B),
        in_specs=[
            pl.BlockSpec((cblk, 1, Hp, Wp), lambda ci, bi: (ci, bi, 0, 0)),
            pl.BlockSpec((cblk, 1, kh, kw), lambda ci, bi: (ci, 0, 0, 0)),
            pl.BlockSpec((cblk, 1, 1, 1), lambda ci, bi: (ci, 0, 0, 0)),
        ],
        out_specs=pl.BlockSpec((cblk, 1, H, W), lambda ci, bi: (ci, bi, 0, 0)),
        compiler_params=_PAR2,
    )(xp, w, b4)


def _dw_pallas_ok():
    global _DW_OK
    if _DW_OK is None:
        try:
            fn = jax.jit(lambda a, ww, bb: _dw_conv_pallas(
                a, ww, bb, 16, 16, 3, 3, "none"))
            fn.lower(
                jax.ShapeDtypeStruct((8, 1, 18, 18), jnp.float32),
                jax.ShapeDtypeStruct((8, 1, 3, 3), jnp.float32),
                jax.ShapeDtypeStruct((8, 1, 1, 1), jnp.float32),
            ).compile()
            _DW_OK = True
        except Exception:
            _DW_OK = False
    return _DW_OK


def dw_conv(x, w, b=None, pad_mode="constant", act="none"):
    """Depthwise conv, stride 1, 'same' padding, CBHW layout.
    x: (C, B, H, W), w: (C, 1, kh, kw) (PyTorch depthwise layout)."""
    C, B, H, W = x.shape
    kh, kw = int(w.shape[2]), int(w.shape[3])
    xp = jnp.pad(x, ((0, 0), (0, 0), _same_pad(kh), _same_pad(kw)),
                 mode=pad_mode)
    bb = b if b is not None else jnp.zeros((C,), jnp.float32)
    if _dw_pallas_ok():
        act_k, post_gelu = _resolve_act(act)
        out = _dw_conv_pallas(xp, w, bb.reshape(C, 1, 1, 1), H, W, kh, kw, act_k)
        return gelu(out) if post_gelu else out
    # XLA fallback (used only if the Pallas depthwise kernel failed to lower).
    acc = jnp.zeros((C, B, H, W), jnp.float32)
    for di in range(kh):
        for dj in range(kw):
            acc = acc + xp[:, :, di:di + H, dj:dj + W] * \
                w[:, :, di, dj].reshape(C, 1, 1, 1)
    return _apply_act(acc + bb.reshape(C, 1, 1, 1), act)


def _ln_mm_kernel(x_ref, g_ref, be_ref, w_ref, o_ref):
    x = x_ref[...]
    mu = jnp.mean(x, axis=0, keepdims=True)
    var = jnp.mean((x - mu) * (x - mu), axis=0, keepdims=True)
    xn = (x - mu) * jax.lax.rsqrt(var + 1e-5) * g_ref[...] + be_ref[...]
    o_ref[...] = jnp.dot(w_ref[...], xn, preferred_element_type=jnp.float32)


def ln_project_in(x, g, be, w):
    """WithBias LayerNorm over channels fused with the bias-free project_in."""
    C = x.shape[0]
    Cout = w.shape[0]
    x2 = x.reshape(C, -1)
    N = x2.shape[1]
    tn = _pick_tile_n(N)
    out = pl.pallas_call(
        _ln_mm_kernel,
        out_shape=jax.ShapeDtypeStruct((Cout, N), jnp.float32),
        grid=(N // tn,),
        in_specs=[
            pl.BlockSpec((C, tn), lambda i: (0, i)),
            pl.BlockSpec((C, 1), lambda i: (0, 0)),
            pl.BlockSpec((C, 1), lambda i: (0, 0)),
            pl.BlockSpec((Cout, C), lambda i: (0, 0)),
        ],
        out_specs=pl.BlockSpec((Cout, tn), lambda i: (0, i)),
        compiler_params=_PAR1,
    )(x2, g.reshape(C, 1), be.reshape(C, 1), w.reshape(Cout, C))
    return out.reshape((Cout,) + x.shape[1:])


def _l2n_mm_kernel(x_ref, w_ref, b_ref, o_ref):
    x = x_ref[...]
    nrm = jnp.sqrt(jnp.sum(x * x, axis=0, keepdims=True))
    xn = x * (1.0 / jnp.maximum(nrm, 1e-12))
    o_ref[...] = jnp.dot(w_ref[...], xn,
                         preferred_element_type=jnp.float32) + b_ref[...]


def l2norm_linear(x, w, b):
    """F.normalize (L2 over channels) fused with the 1x1 linear_0."""
    C = x.shape[0]
    Cout = w.shape[0]
    x2 = x.reshape(C, -1)
    N = x2.shape[1]
    tn = _pick_tile_n(N)
    out = pl.pallas_call(
        _l2n_mm_kernel,
        out_shape=jax.ShapeDtypeStruct((Cout, N), jnp.float32),
        grid=(N // tn,),
        in_specs=[
            pl.BlockSpec((C, tn), lambda i: (0, i)),
            pl.BlockSpec((Cout, C), lambda i: (0, 0)),
            pl.BlockSpec((Cout, 1), lambda i: (0, 0)),
        ],
        out_specs=pl.BlockSpec((Cout, tn), lambda i: (0, i)),
        compiler_params=_PAR1,
    )(x2, w.reshape(Cout, C), b.reshape(Cout, 1))
    return out.reshape((Cout,) + x.shape[1:])


def _affn_out_kernel(y_ref, w_ref, r_ref, o_ref, *, hidden):
    y = y_ref[...]
    g = _apply_act(y[:hidden], "gelu") * y[hidden:]
    o_ref[...] = jnp.dot(w_ref[...], g,
                         preferred_element_type=jnp.float32) + r_ref[...]


def affn_out(y, w, x, hidden):
    """out = project_out(gelu(y1) * y2) + x   (gating, matmul, residual fused)."""
    C, B, H, W = x.shape
    N = B * H * W
    if not _erf_in_kernel_ok():
        g = gelu(y[:hidden]) * y[hidden:]
        out = mm_act(g.reshape(hidden, N), w.reshape(C, hidden), None)
        return out.reshape(C, B, H, W) + x
    tn = _pick_tile_n(N)
    out = pl.pallas_call(
        functools.partial(_affn_out_kernel, hidden=hidden),
        out_shape=jax.ShapeDtypeStruct((C, N), jnp.float32),
        grid=(N // tn,),
        in_specs=[
            pl.BlockSpec((2 * hidden, tn), lambda i: (0, i)),
            pl.BlockSpec((C, hidden), lambda i: (0, 0)),
            pl.BlockSpec((C, tn), lambda i: (0, i)),
        ],
        out_specs=pl.BlockSpec((C, tn), lambda i: (0, i)),
        compiler_params=_PAR1,
    )(y.reshape(2 * hidden, N), w.reshape(C, hidden), x.reshape(C, N))
    return out.reshape(C, B, H, W)


def _esa_tail_kernel(a_ref, b2_ref, c1_ref, x_ref, wf_ref, bf_ref,
                     w4_ref, b4_ref, o_ref):
    cf = jnp.dot(wf_ref[...], c1_ref[...],
                 preferred_element_type=jnp.float32) + bf_ref[...]
    t = a_ref[...] + b2_ref[...] + cf
    c4 = jnp.dot(w4_ref[...], t,
                 preferred_element_type=jnp.float32) + b4_ref[...]
    xv = x_ref[...]
    o_ref[...] = xv * jax.nn.sigmoid(c4) + xv


def esa_tail(c3_1, c3_2, c1_, x, pf, p4):
    """cf=conv_f(c1_); m=sigmoid(conv4(c3_1+c3_2+cf)); return x*m + x (HVSA)."""
    C, B, H, W = x.shape
    f = c1_.shape[0]
    N = B * H * W
    tn = _pick_tile_n(N)
    out = pl.pallas_call(
        _esa_tail_kernel,
        out_shape=jax.ShapeDtypeStruct((C, N), jnp.float32),
        grid=(N // tn,),
        in_specs=[
            pl.BlockSpec((f, tn), lambda i: (0, i)),
            pl.BlockSpec((f, tn), lambda i: (0, i)),
            pl.BlockSpec((f, tn), lambda i: (0, i)),
            pl.BlockSpec((C, tn), lambda i: (0, i)),
            pl.BlockSpec((f, f), lambda i: (0, 0)),
            pl.BlockSpec((f, 1), lambda i: (0, 0)),
            pl.BlockSpec((C, f), lambda i: (0, 0)),
            pl.BlockSpec((C, 1), lambda i: (0, 0)),
        ],
        out_specs=pl.BlockSpec((C, tn), lambda i: (0, i)),
        compiler_params=_PAR1,
    )(c3_1.reshape(f, N), c3_2.reshape(f, N), c1_.reshape(f, N),
      x.reshape(C, N),
      pf["w"].reshape(f, f), pf["b"].reshape(f, 1),
      p4["w"].reshape(C, f), p4["b"].reshape(C, 1))
    return out.reshape(C, B, H, W)


def _frb_tail_kernel(lfe_ref, hfe_ref, s_ref, w_ref, b_ref, o_ref):
    t = lfe_ref[...] + hfe_ref[...]
    o_ref[...] = (jnp.dot(w_ref[...], t, preferred_element_type=jnp.float32)
                  + b_ref[...] + s_ref[...])


def frb_tail(lfe, hfe, short, w, b):
    """linear_2(lfe + hfe) + short, fused."""
    C, B, H, W = short.shape
    N = B * H * W
    tn = _pick_tile_n(N)
    out = pl.pallas_call(
        _frb_tail_kernel,
        out_shape=jax.ShapeDtypeStruct((C, N), jnp.float32),
        grid=(N // tn,),
        in_specs=[
            pl.BlockSpec((C, tn), lambda i: (0, i)),
            pl.BlockSpec((C, tn), lambda i: (0, i)),
            pl.BlockSpec((C, tn), lambda i: (0, i)),
            pl.BlockSpec((C, C), lambda i: (0, 0)),
            pl.BlockSpec((C, 1), lambda i: (0, 0)),
        ],
        out_specs=pl.BlockSpec((C, tn), lambda i: (0, i)),
        compiler_params=_PAR1,
    )(lfe.reshape(C, N), hfe.reshape(C, N), short.reshape(C, N),
      w.reshape(C, C), b.reshape(C, 1))
    return out.reshape(C, B, H, W)


# ----------------------------------------------------------------------------
# Plain-JAX glue ops (CBHW layout: spatial dims are 2, 3)
# ----------------------------------------------------------------------------
def max_pool(x, k, s, p):
    return jax.lax.reduce_window(
        x, -jnp.inf, jax.lax.max,
        (1, 1, k, k), (1, 1, s, s),
        [(0, 0), (0, 0), (p, p), (p, p)],
    )


def adaptive_max_pool(x, oh, ow):
    C, B, H, W = x.shape
    return x.reshape(C, B, oh, H // oh, ow, W // ow).max(axis=(3, 5))


def get_local_weights(residual, ksize, padding):
    xp = jnp.pad(residual, ((0, 0), (0, 0), (padding, padding),
                            (padding, padding)), mode="reflect")
    n = float(ksize * ksize)
    s = jax.lax.reduce_window(xp, 0.0, jax.lax.add,
                              (1, 1, ksize, ksize), (1, 1, 3, 3), "VALID")
    s2 = jax.lax.reduce_window(xp * xp, 0.0, jax.lax.add,
                               (1, 1, ksize, ksize), (1, 1, 3, 3), "VALID")
    return (s2 - s * s / n) / (n - 1.0)        # unbiased window variance


def bilinear_resize(x, out_h, out_w):
    """F.interpolate(mode='bilinear', align_corners=False) on dims (2, 3)."""
    H, W = x.shape[2], x.shape[3]

    def idx(out_size, in_size):
        d = (jnp.arange(out_size, dtype=jnp.float32) + 0.5) * (in_size / out_size) - 0.5
        d = jnp.maximum(d, 0.0)
        i0f = jnp.floor(d)
        frac = d - i0f
        i0 = i0f.astype(jnp.int32)
        i1 = jnp.minimum(i0 + 1, in_size - 1)
        return i0, i1, frac

    ih0, ih1, fh = idx(out_h, H)
    iw0, iw1, fw = idx(out_w, W)
    top = jnp.take(x, ih0, axis=2)
    bot = jnp.take(x, ih1, axis=2)

    def horiz(t):
        lft = jnp.take(t, iw0, axis=3)
        rgt = jnp.take(t, iw1, axis=3)
        return lft * (1.0 - fw) + rgt * fw

    rt = horiz(top)
    rb = horiz(bot)
    return rt * (1.0 - fh)[:, None] + rb * fh[:, None]


def nearest_resize(x, out_h, out_w):
    H, W = x.shape[2], x.shape[3]
    ih = (jnp.arange(out_h) * H) // out_h
    iw = (jnp.arange(out_w) * W) // out_w
    return jnp.take(jnp.take(x, ih, axis=2), iw, axis=3)


# ----------------------------------------------------------------------------
# Deterministic parameter construction (PyTorch weight layouts)
# ----------------------------------------------------------------------------
class ParamGen:
    def __init__(self, key):
        self.key = key
        self.count = 0

    def take(self, shape, scale=0.1):
        self.count += 1
        k = jax.random.fold_in(self.key, self.count)
        return scale * jax.random.normal(k, shape, jnp.float32)


def init_conv(pg, cout, cin_per_group, kh, kw, bias=True):
    p = {"w": pg.take((cout, cin_per_group, kh, kw))}
    p["b"] = pg.take((cout,)) if bias else None
    return p


def init_mrconv_basic(pg, dim):          # MRConv_basic(dim, dim, 3, 'same')
    d4 = dim // 4
    return {
        "conv1": init_conv(pg, dim, dim, 1, 1),
        "c21": init_conv(pg, d4, 1, 3, 3),
        "c22": init_conv(pg, d4, 1, 5, 3),
        "c23": init_conv(pg, d4, 1, 3, 5),
        "c24a": init_conv(pg, d4, 1, 3, 3),
        "c24b": init_conv(pg, d4, 1, 3, 3),
    }


def init_mrconv(pg, dim):                # MRConv(dim, dim, 3, 'same')
    d3 = dim // 3
    return {
        "conv1": init_conv(pg, dim, dim, 1, 1),
        "c21": init_conv(pg, d3, 1, 3, 3),
        "c22": init_conv(pg, d3, 1, 5, 3),
        "c23": init_conv(pg, d3, 1, 3, 5),
    }


def init_esa(pg, nf):
    f = nf // 4
    return {
        "conv1": init_conv(pg, f, nf, 1, 1),
        "conv_f": init_conv(pg, f, f, 1, 1),
        "conv2_1": init_conv(pg, f, f, 3, 3),
        "conv2_2": init_conv(pg, f, f, 3, 3),
        "conv2_3": init_conv(pg, f, f, 3, 3),
        "conv2_4": init_conv(pg, f, f, 3, 3),
        "conv_max_1": init_mrconv(pg, f),
        "conv_max_2": init_mrconv(pg, f),
        "conv3_1": init_mrconv(pg, f),
        "conv3_2": init_mrconv(pg, f),
        "conv4": init_conv(pg, nf, f, 1, 1),
    }


def init_frb(pg, dim):
    d3 = dim // 3
    return {
        "linear_0": init_conv(pg, dim * 2, dim, 1, 1),
        "conv0": init_conv(pg, dim, dim, 1, 1),
        "dwconv": init_conv(pg, dim, 1, 3, 3),
        "c21": init_conv(pg, d3, 1, 3, 3),
        "c22": init_conv(pg, d3, 1, 5, 3),
        "c23": init_conv(pg, d3, 1, 3, 5),
        "linear_2": init_conv(pg, dim, dim, 1, 1),
        "alpha": jnp.ones((1, dim, 1, 1), jnp.float32),
        "belt": jnp.zeros((1, dim, 1, 1), jnp.float32),
    }


def init_affnblock(pg, dim, ffn_expansion_factor=2.0):
    hidden = int(dim * ffn_expansion_factor)
    return {
        "ln_w": jnp.ones((dim,), jnp.float32),
        "ln_b": jnp.zeros((dim,), jnp.float32),
        "project_in": init_conv(pg, hidden * 2, dim, 1, 1, bias=False),
        "dwconv1": init_conv(pg, hidden * 2, 1, 5, 2, bias=False),
        "dwconv2": init_conv(pg, hidden * 2, 1, 2, 5, bias=False),
        "project_out": init_conv(pg, dim, hidden, 1, 1, bias=False),
    }


def init_fmdb(pg, c):
    dc = c // 2
    return {
        "c1_d": init_conv(pg, dc, c, 1, 1),
        "c1_r": init_mrconv_basic(pg, c),
        "c2_d": init_conv(pg, dc, c, 1, 1),
        "c2_r": init_mrconv_basic(pg, c),
        "c3_d": init_conv(pg, dc, c, 1, 1),
        "c3_r": init_mrconv_basic(pg, c),
        "c4_pw": init_conv(pg, dc, c, 1, 1, bias=False),
        "c4_dw": init_conv(pg, dc, 1, 3, 3),
        "c5": init_conv(pg, c, dc * 4, 1, 1),
        "esa": init_esa(pg, c),
        "frb": init_frb(pg, c),
        "affn": init_affnblock(pg, c),
    }


# ----------------------------------------------------------------------------
# Module forwards (all tensors in CBHW layout)
# ----------------------------------------------------------------------------
def mrconv_basic_fwd(p, x):
    C = x.shape[0]
    d = C // 4
    out = conv1x1(x, p["conv1"]["w"], p["conv1"]["b"])
    o = [out[i * d:(i + 1) * d] for i in range(4)]
    s1 = dw_conv(o[0], p["c21"]["w"], p["c21"]["b"], act="gelu")
    s2 = dw_conv(o[1] + s1, p["c22"]["w"], p["c22"]["b"], act="gelu")
    s3 = dw_conv(o[2] + s2, p["c23"]["w"], p["c23"]["b"], act="gelu")
    t = dw_conv(o[3] + s3, p["c24a"]["w"], p["c24a"]["b"])
    s4 = dw_conv(t, p["c24b"]["w"], p["c24b"]["b"], act="gelu")
    out = jnp.concatenate([s1, s2, s3, s4], axis=0) + x
    return gelu(out)


def mrconv_fwd(p, x):
    C = x.shape[0]
    d = C // 3
    out = conv1x1(x, p["conv1"]["w"], p["conv1"]["b"])
    o = [out[i * d:(i + 1) * d] for i in range(3)]
    s1 = dw_conv(o[0], p["c21"]["w"], p["c21"]["b"], act="gelu")
    s2 = dw_conv(o[1] + s1, p["c22"]["w"], p["c22"]["b"], act="gelu")
    s3 = dw_conv(o[2] + s2, p["c23"]["w"], p["c23"]["b"], act="gelu")
    out = jnp.concatenate([s1, s2, s3], axis=0) + x
    return gelu(out)


def esa_fwd(p, x):
    C, B, H, W = x.shape
    f = C // 4
    c1_ = conv1x1(x, p["conv1"]["w"], p["conv1"]["b"])
    # four stride-2 3x3 reflect convs -> one im2col + one merged matmul
    xp = jnp.pad(c1_, ((0, 0), (0, 0), (1, 1), (1, 1)), mode="reflect")
    Ho, Wo = H // 2, W // 2
    cols = []
    for di in range(3):
        for dj in range(3):
            cols.append(xp[:, :, di:di + 2 * Ho - 1:2, dj:dj + 2 * Wo - 1:2])
    patches = jnp.stack(cols, axis=1).reshape(f * 9, B * Ho * Wo)
    w_cat = jnp.concatenate([p["conv2_1"]["w"], p["conv2_2"]["w"],
                             p["conv2_3"]["w"], p["conv2_4"]["w"]],
                            axis=0).reshape(4 * f, f * 9)
    b_cat = jnp.concatenate([p["conv2_1"]["b"], p["conv2_2"]["b"],
                             p["conv2_3"]["b"], p["conv2_4"]["b"]], axis=0)
    c2 = mm_act(patches, w_cat, b_cat).reshape(4 * f, B, Ho, Wo)
    c2_1, c2_2, c2_3, c2_4 = (c2[0:f], c2[f:2 * f], c2[2 * f:3 * f], c2[3 * f:])
    c1_1 = max_pool(c2_1, 5, 3, 1)
    c1_2 = max_pool(c2_2, 7, 3, 1)
    c1_3 = get_local_weights(c2_3, 7, 1)
    c1_4 = get_local_weights(c2_4, 5, 1)
    v1 = mrconv_fwd(p["conv3_1"], relu(mrconv_fwd(p["conv_max_1"], c1_1 + c1_4)))
    v2 = mrconv_fwd(p["conv3_2"], relu(mrconv_fwd(p["conv_max_2"], c1_2 + c1_3)))
    c3_1 = bilinear_resize(v1, H, W)
    c3_2 = bilinear_resize(v2, H, W)
    # conv_f + conv4 + sigmoid gate + HVSA residual fused in one kernel
    return esa_tail(c3_1, c3_2, c1_, x, p["conv_f"], p["conv4"])


def frb_fwd(p, x):
    C, B, H, W = x.shape
    d3 = C // 3
    short = x
    x1 = l2norm_linear(x, p["linear_0"]["w"], p["linear_0"]["b"])
    x1a, x1b = x1[:C], x1[C:]
    x2 = [x1b[i * d3:(i + 1) * d3] for i in range(3)]
    x_v = jnp.var(x1a.reshape(C, B, H * W), axis=2, ddof=1).reshape(C, B, 1, 1)
    x_s = dw_conv(adaptive_max_pool(x1a, H // 8, W // 8),
                  p["dwconv"]["w"], p["dwconv"]["b"])
    alpha = p["alpha"].reshape(C, 1, 1, 1)
    belt = p["belt"].reshape(C, 1, 1, 1)
    g = conv1x1(x_s * alpha + x_v * belt, p["conv0"]["w"], p["conv0"]["b"],
                act="gelu")
    hfe = x1a * nearest_resize(g, H, W)
    s1 = dw_conv(x2[0], p["c21"]["w"], p["c21"]["b"], act="gelu")
    s2 = dw_conv(x2[1] + s1, p["c22"]["w"], p["c22"]["b"], act="gelu")
    s3 = dw_conv(x2[2] + s2, p["c23"]["w"], p["c23"]["b"], act="gelu")
    lfe = jnp.concatenate([s1, s2, s3], axis=0) + x1b
    return frb_tail(lfe, hfe, short, p["linear_2"]["w"], p["linear_2"]["b"])


def affnblock_fwd(p, x):
    hidden = p["project_in"]["w"].shape[0] // 2
    y = ln_project_in(x, p["ln_w"], p["ln_b"], p["project_in"]["w"])
    y = dw_conv(y, p["dwconv1"]["w"], None)
    y = dw_conv(y, p["dwconv2"]["w"], None)
    return affn_out(y, p["project_out"]["w"], x, hidden)


def fmdb_basic_fwd(params, x_nchw):
    x = jnp.transpose(x_nchw, (1, 0, 2, 3))       # NCHW -> CBHW
    d1 = conv1x1(x, params["c1_d"]["w"], params["c1_d"]["b"], act="gelu")
    r1 = gelu(mrconv_basic_fwd(params["c1_r"], x) + x)
    d2 = conv1x1(r1, params["c2_d"]["w"], params["c2_d"]["b"], act="gelu")
    r2 = gelu(mrconv_basic_fwd(params["c2_r"], r1) + r1)
    d3 = conv1x1(r2, params["c3_d"]["w"], params["c3_d"]["b"], act="gelu")
    r3 = gelu(mrconv_basic_fwd(params["c3_r"], r2) + r2)
    # c4 = BSConvU: pointwise (no bias) + depthwise 3x3 reflect (bias), GELU fused
    r4 = conv1x1(r3, params["c4_pw"]["w"], None)
    r4 = dw_conv(r4, params["c4_dw"]["w"], params["c4_dw"]["b"],
                 pad_mode="reflect", act="gelu")
    out = conv1x1(jnp.concatenate([d1, d2, d3, r4], axis=0),
                  params["c5"]["w"], params["c5"]["b"])
    out = esa_fwd(params["esa"], out)             # HVSA (residual fused in tail)
    out = frb_fwd(params["frb"], out)             # FRB (cca)
    out = affnblock_fwd(params["affn"], out)      # AFFNBlock (ea)
    out = out + x
    return jnp.transpose(out, (1, 0, 2, 3))       # CBHW -> NCHW


# ----------------------------------------------------------------------------
if __name__ == "__main__":
    B, C, H, W = 2, 24, 32, 32          # C divisible by 12, spatial divisible by 8
    key = jax.random.PRNGKey(0)
    pg = ParamGen(jax.random.fold_in(key, 1000))
    params = init_fmdb(pg, C)
    x = jax.random.normal(jax.random.fold_in(key, 0), (B, C, H, W), jnp.float32)

    fwd = jax.jit(functools.partial(fmdb_basic_fwd, params))
    y = fwd(x)
    jax.block_until_ready(y)

    assert y.shape == (B, C, H, W), y.shape
    assert bool(jnp.all(jnp.isfinite(y)))
    print("KERNEL_OK")
</pallas_src>

<mosaic_0001>
module attributes {stable_mosaic.version = 11 : i64} {
  func.func @_mm_kernel(%arg0: i32, %arg1: memref<24x1024xf32, #tpu.memory_space<vmem>>, %arg2: memref<24x24xf32, #tpu.memory_space<vmem>>, %arg3: memref<24x1xf32, #tpu.memory_space<vmem>>, %arg4: memref<24x1024xf32, #tpu.memory_space<vmem>>) attributes {dimension_semantics = [#tpu.dimension_semantics<parallel>], iteration_bounds = array<i64: 2>, scalar_prefetch = 0 : i64, scratch_operands = 0 : i64, tpu.core_type = #tpu.core_type<tc>, window_params = [{transform_indices = @transform_0, window_bounds = array<i64: 24, 1024>}, {pipeline_mode = #tpu.pipeline_mode<synchronous>, transform_indices = @transform_1, window_bounds = array<i64: 24, 24>}, {pipeline_mode = #tpu.pipeline_mode<synchronous>, transform_indices = @transform_2, window_bounds = array<i64: 24, 1>}, {transform_indices = @transform_3, window_bounds = array<i64: 24, 1024>}]} {
    %c0 = arith.constant 0 : index
    %c0_0 = arith.constant 0 : index
    %0 = vector.load %arg2[%c0, %c0_0] : memref<24x24xf32, #tpu.memory_space<vmem>>, vector<24x24xf32>
    %c0_1 = arith.constant 0 : index
    %c0_2 = arith.constant 0 : index
    %1 = vector.load %arg1[%c0_1, %c0_2] : memref<24x1024xf32, #tpu.memory_space<vmem>>, vector<24x1024xf32>
    %cst = arith.constant dense<0.000000e+00> : vector<24x1024xf32>
    %2 = tpu.matmul %0, %1, %cst {dimension_numbers = #tpu.dot_dimension_numbers<[1], [0], [0], [1], [0, 0, 1, 1], [], []>} : vector<24x24xf32>, vector<24x1024xf32>, vector<24x1024xf32> -> vector<24x1024xf32>
    %c0_3 = arith.constant 0 : index
    %c0_4 = arith.constant 0 : index
    %3 = vector.load %arg3[%c0_3, %c0_4] : memref<24x1xf32, #tpu.memory_space<vmem>>, vector<24x1xf32>
    %4 = vector.broadcast %3 : vector<24x1xf32> to vector<24x1024xf32>
    %5 = arith.addf %2, %4 : vector<24x1024xf32>
    %c0_5 = arith.constant 0 : index
    %c0_6 = arith.constant 0 : index
    %6 = vector.load %arg4[%c0_5, %c0_6] : memref<24x1024xf32, #tpu.memory_space<vmem>>, vector<24x1024xf32>
    tpu.vector_store %arg4[%c0_5, %c0_6], %5 {strides = array<i32>} : memref<24x1024xf32, #tpu.memory_space<vmem>>, vector<24x1024xf32>,
    return
  }
  func.func @transform_0(%arg0: i32) -> (i32, i32) {
    %c0_i32 = arith.constant 0 : i32
    %c0_i32_0 = arith.constant 0 : i32
    return %c0_i32, %arg0 : i32, i32
  }
  func.func @transform_1(%arg0: i32) -> (i32, i32) {
    %c0_i32 = arith.constant 0 : i32
    %c0_i32_0 = arith.constant 0 : i32
    %c0_i32_1 = arith.constant 0 : i32
    return %c0_i32, %c0_i32_0 : i32, i32
  }
  func.func @transform_2(%arg0: i32) -> (i32, i32) {
    %c0_i32 = arith.constant 0 : i32
    %c0_i32_0 = arith.constant 0 : i32
    %c0_i32_1 = arith.constant 0 : i32
    return %c0_i32, %c0_i32_0 : i32, i32
  }
  func.func @transform_3(%arg0: i32) -> (i32, i32) {
    %c0_i32 = arith.constant 0 : i32
    %c0_i32_0 = arith.constant 0 : i32
    return %c0_i32, %arg0 : i32, i32
  }
}

module attributes {stable_mosaic.version = 11 : i64} {
  func.func @_mm_kernel(%arg0: i32, %arg1: memref<24x1024xf32, #tpu.memory_space<vmem>>, %arg2: memref<12x24xf32, #tpu.memory_space<vmem>>, %arg3: memref<12x1xf32, #tpu.memory_space<vmem>>, %arg4: memref<12x1024xf32, #tpu.memory_space<vmem>>) attributes {dimension_semantics = [#tpu.dimension_semantics<parallel>], iteration_bounds = array<i64: 2>, scalar_prefetch = 0 : i64, scratch_operands = 0 : i64, tpu.core_type = #tpu.core_type<tc>, window_params = [{transform_indices = @transform_0, window_bounds = array<i64: 24, 1024>}, {pipeline_mode = #tpu.pipeline_mode<synchronous>, transform_indices = @transform_1, window_bounds = array<i64: 12, 24>}, {pipeline_mode = #tpu.pipeline_mode<synchronous>, transform_indices = @transform_2, window_bounds = array<i64: 12, 1>}, {transform_indices = @transform_3, window_bounds = array<i64: 12, 1024>}]} {
    %c0 = arith.constant 0 : index
    %c0_0 = arith.constant 0 : index
    %0 = vector.load %arg2[%c0, %c0_0] : memref<12x24xf32, #tpu.memory_space<vmem>>, vector<12x24xf32>
    %c0_1 = arith.constant 0 : index
    %c0_2 = arith.constant 0 : index
    %1 = vector.load %arg1[%c0_1, %c0_2] : memref<24x1024xf32, #tpu.memory_space<vmem>>, vector<24x1024xf32>
    %cst = arith.constant dense<0.000000e+00> : vector<12x1024xf32>
    %2 = tpu.matmul %0, %1, %cst {dimension_numbers = #tpu.dot_dimension_numbers<[1], [0], [0], [1], [0, 0, 1, 1], [], []>} : vector<12x24xf32>, vector<24x1024xf32>, vector<12x1024xf32> -> vector<12x1024xf32>
    %c0_3 = arith.constant 0 : index
    %c0_4 = arith.constant 0 : index
    %3 = vector.load %arg3[%c0_3, %c0_4] : memref<12x1xf32, #tpu.memory_space<vmem>>, vector<12x1xf32>
    %4 = vector.broadcast %3 : vector<12x1xf32> to vector<12x1024xf32>
    %5 = arith.addf %2, %4 : vector<12x1024xf32>
    %c0_5 = arith.constant 0 : index
    %c0_6 = arith.constant 0 : index
    %6 = vector.load %arg4[%c0_5, %c0_6] : memref<12x1024xf32, #tpu.memory_space<vmem>>, vector<12x1024xf32>
    tpu.vector_store %arg4[%c0_5, %c0_6], %5 {strides = array<i32>} : memref<12x1024xf32, #tpu.memory_space<vmem>>, vector<12x1024xf32>,
    return
  }
  func.func @transform_0(%arg0: i32) -> (i32, i32) {
    %c0_i32 = arith.constant 0 : i32
    %c0_i32_0 = arith.constant 0 : i32
    return %c0_i32, %arg0 : i32, i32
  }
  func.func @transform_1(%arg0: i32) -> (i32, i32) {
    %c0_i32 = arith.constant 0 : i32
    %c0_i32_0 = arith.constant 0 : i32
    %c0_i32_1 = arith.constant 0 : i32
    return %c0_i32, %c0_i32_0 : i32, i32
  }
  func.func @transform_2(%arg0: i32) -> (i32, i32) {
    %c0_i32 = arith.constant 0 : i32
    %c0_i32_0 = arith.constant 0 : i32
    %c0_i32_1 = arith.constant 0 : i32
    return %c0_i32, %c0_i32_0 : i32, i32
  }
  func.func @transform_3(%arg0: i32) -> (i32, i32) {
    %c0_i32 = arith.constant 0 : i32
    %c0_i32_0 = arith.constant 0 : i32
    return %c0_i32, %arg0 : i32, i32
  }
}

module attributes {stable_mosaic.version = 11 : i64} {
  func.func @_mm_kernel(%arg0: i32, %arg1: memref<48x1024xf32, #tpu.memory_space<vmem>>, %arg2: memref<24x48xf32, #tpu.memory_space<vmem>>, %arg3: memref<24x1xf32, #tpu.memory_space<vmem>>, %arg4: memref<24x1024xf32, #tpu.memory_space<vmem>>) attributes {dimension_semantics = [#tpu.dimension_semantics<parallel>], iteration_bounds = array<i64: 2>, scalar_prefetch = 0 : i64, scratch_operands = 0 : i64, tpu.core_type = #tpu.core_type<tc>, window_params = [{transform_indices = @transform_0, window_bounds = array<i64: 48, 1024>}, {pipeline_mode = #tpu.pipeline_mode<synchronous>, transform_indices = @transform_1, window_bounds = array<i64: 24, 48>}, {pipeline_mode = #tpu.pipeline_mode<synchronous>, transform_indices = @transform_2, window_bounds = array<i64: 24, 1>}, {transform_indices = @transform_3, window_bounds = array<i64: 24, 1024>}]} {
    %c0 = arith.constant 0 : index
    %c0_0 = arith.constant 0 : index
    %0 = vector.load %arg2[%c0, %c0_0] : memref<24x48xf32, #tpu.memory_space<vmem>>, vector<24x48xf32>
    %c0_1 = arith.constant 0 : index
    %c0_2 = arith.constant 0 : index
    %1 = vector.load %arg1[%c0_1, %c0_2] : memref<48x1024xf32, #tpu.memory_space<vmem>>, vector<48x1024xf32>
    %cst = arith.constant dense<0.000000e+00> : vector<24x1024xf32>
    %2 = tpu.matmul %0, %1, %cst {dimension_numbers = #tpu.dot_dimension_numbers<[1], [0], [0], [1], [0, 0, 1, 1], [], []>} : vector<24x48xf32>, vector<48x1024xf32>, vector<24x1024xf32> -> vector<24x1024xf32>
    %c0_3 = arith.constant 0 : index
    %c0_4 = arith.constant 0 : index
    %3 = vector.load %arg3[%c0_3, %c0_4] : memref<24x1xf32, #tpu.memory_space<vmem>>, vector<24x1xf32>
    %4 = vector.broadcast %3 : vector<24x1xf32> to vector<24x1024xf32>
    %5 = arith.addf %2, %4 : vector<24x1024xf32>
    %c0_5 = arith.constant 0 : index
    %c0_6 = arith.constant 0 : index
    %6 = vector.load %arg4[%c0_5, %c0_6] : memref<24x1024xf32, #tpu.memory_space<vmem>>, vector<24x1024xf32>
    tpu.vector_store %arg4[%c0_5, %c0_6], %5 {strides = array<i32>} : memref<24x1024xf32, #tpu.memory_space<vmem>>, vector<24x1024xf32>,
    return
  }
  func.func @transform_0(%arg0: i32) -> (i32, i32) {
    %c0_i32 = arith.constant 0 : i32
    %c0_i32_0 = arith.constant 0 : i32
    return %c0_i32, %arg0 : i32, i32
  }
  func.func @transform_1(%arg0: i32) -> (i32, i32) {
    %c0_i32 = arith.constant 0 : i32
    %c0_i32_0 = arith.constant 0 : i32
    %c0_i32_1 = arith.constant 0 : i32
    return %c0_i32, %c0_i32_0 : i32, i32
  }
  func.func @transform_2(%arg0: i32) -> (i32, i32) {
    %c0_i32 = arith.constant 0 : i32
    %c0_i32_0 = arith.constant 0 : i32
    %c0_i32_1 = arith.constant 0 : i32
    return %c0_i32, %c0_i32_0 : i32, i32
  }
  func.func @transform_3(%arg0: i32) -> (i32, i32) {
    %c0_i32 = arith.constant 0 : i32
    %c0_i32_0 = arith.constant 0 : i32
    return %c0_i32, %arg0 : i32, i32
  }
}

module attributes {stable_mosaic.version = 11 : i64} {
  func.func @_mm_kernel(%arg0: i32, %arg1: memref<24x1024xf32, #tpu.memory_space<vmem>>, %arg2: memref<6x24xf32, #tpu.memory_space<vmem>>, %arg3: memref<6x1xf32, #tpu.memory_space<vmem>>, %arg4: memref<6x1024xf32, #tpu.memory_space<vmem>>) attributes {dimension_semantics = [#tpu.dimension_semantics<parallel>], iteration_bounds = array<i64: 2>, scalar_prefetch = 0 : i64, scratch_operands = 0 : i64, tpu.core_type = #tpu.core_type<tc>, window_params = [{transform_indices = @transform_0, window_bounds = array<i64: 24, 1024>}, {pipeline_mode = #tpu.pipeline_mode<synchronous>, transform_indices = @transform_1, window_bounds = array<i64: 6, 24>}, {pipeline_mode = #tpu.pipeline_mode<synchronous>, transform_indices = @transform_2, window_bounds = array<i64: 6, 1>}, {transform_indices = @transform_3, window_bounds = array<i64: 6, 1024>}]} {
    %c0 = arith.constant 0 : index
    %c0_0 = arith.constant 0 : index
    %0 = vector.load %arg2[%c0, %c0_0] : memref<6x24xf32, #tpu.memory_space<vmem>>, vector<6x24xf32>
    %c0_1 = arith.constant 0 : index
    %c0_2 = arith.constant 0 : index
    %1 = vector.load %arg1[%c0_1, %c0_2] : memref<24x1024xf32, #tpu.memory_space<vmem>>, vector<24x1024xf32>
    %cst = arith.constant dense<0.000000e+00> : vector<6x1024xf32>
    %2 = tpu.matmul %0, %1, %cst {dimension_numbers = #tpu.dot_dimension_numbers<[1], [0], [0], [1], [0, 0, 1, 1], [], []>} : vector<6x24xf32>, vector<24x1024xf32>, vector<6x1024xf32> -> vector<6x1024xf32>
    %c0_3 = arith.constant 0 : index
    %c0_4 = arith.constant 0 : index
    %3 = vector.load %arg3[%c0_3, %c0_4] : memref<6x1xf32, #tpu.memory_space<vmem>>, vector<6x1xf32>
    %4 = vector.broadcast %3 : vector<6x1xf32> to vector<6x1024xf32>
    %5 = arith.addf %2, %4 : vector<6x1024xf32>
    %c0_5 = arith.constant 0 : index
    %c0_6 = arith.constant 0 : index
    %6 = vector.load %arg4[%c0_5, %c0_6] : memref<6x1024xf32, #tpu.memory_space<vmem>>, vector<6x1024xf32>
    tpu.vector_store %arg4[%c0_5, %c0_6], %5 {strides = array<i32>} : memref<6x1024xf32, #tpu.memory_space<vmem>>, vector<6x1024xf32>,
    return
  }
  func.func @transform_0(%arg0: i32) -> (i32, i32) {
    %c0_i32 = arith.constant 0 : i32
    %c0_i32_0 = arith.constant 0 : i32
    return %c0_i32, %arg0 : i32, i32
  }
  func.func @transform_1(%arg0: i32) -> (i32, i32) {
    %c0_i32 = arith.constant 0 : i32
    %c0_i32_0 = arith.constant 0 : i32
    %c0_i32_1 = arith.constant 0 : i32
    return %c0_i32, %c0_i32_0 : i32, i32
  }
  func.func @transform_2(%arg0: i32) -> (i32, i32) {
    %c0_i32 = arith.constant 0 : i32
    %c0_i32_0 = arith.constant 0 : i32
    %c0_i32_1 = arith.constant 0 : i32
    return %c0_i32, %c0_i32_0 : i32, i32
  }
  func.func @transform_3(%arg0: i32) -> (i32, i32) {
    %c0_i32 = arith.constant 0 : i32
    %c0_i32_0 = arith.constant 0 : i32
    return %c0_i32, %arg0 : i32, i32
  }
}

module attributes {stable_mosaic.version = 11 : i64} {
  func.func @_mm_kernel(%arg0: i32, %arg1: memref<54x512xf32, #tpu.memory_space<vmem>>, %arg2: memref<24x54xf32, #tpu.memory_space<vmem>>, %arg3: memref<24x1xf32, #tpu.memory_space<vmem>>, %arg4: memref<24x512xf32, #tpu.memory_space<vmem>>) attributes {dimension_semantics = [#tpu.dimension_semantics<parallel>], iteration_bounds = array<i64: 1>, scalar_prefetch = 0 : i64, scratch_operands = 0 : i64, tpu.core_type = #tpu.core_type<tc>, window_params = [{transform_indices = @transform_0, window_bounds = array<i64: 54, 512>}, {pipeline_mode = #tpu.pipeline_mode<synchronous>, transform_indices = @transform_1, window_bounds = array<i64: 24, 54>}, {pipeline_mode = #tpu.pipeline_mode<synchronous>, transform_indices = @transform_2, window_bounds = array<i64: 24, 1>}, {transform_indices = @transform_3, window_bounds = array<i64: 24, 512>}]} {
    %c0 = arith.constant 0 : index
    %c0_0 = arith.constant 0 : index
    %0 = vector.load %arg2[%c0, %c0_0] : memref<24x54xf32, #tpu.memory_space<vmem>>, vector<24x54xf32>
    %c0_1 = arith.constant 0 : index
    %c0_2 = arith.constant 0 : index
    %1 = vector.load %arg1[%c0_1, %c0_2] : memref<54x512xf32, #tpu.memory_space<vmem>>, vector<54x512xf32>
    %cst = arith.constant dense<0.000000e+00> : vector<24x512xf32>
    %2 = tpu.matmul %0, %1, %cst {dimension_numbers = #tpu.dot_dimension_numbers<[1], [0], [0], [1], [0, 0, 1, 1], [], []>} : vector<24x54xf32>, vector<54x512xf32>, vector<24x512xf32> -> vector<24x512xf32>
    %c0_3 = arith.constant 0 : index
    %c0_4 = arith.constant 0 : index
    %3 = vector.load %arg3[%c0_3, %c0_4] : memref<24x1xf32, #tpu.memory_space<vmem>>, vector<24x1xf32>
    %4 = vector.broadcast %3 : vector<24x1xf32> to vector<24x512xf32>
    %5 = arith.addf %2, %4 : vector<24x512xf32>
    %c0_5 = arith.constant 0 : index
    %c0_6 = arith.constant 0 : index
    %6 = vector.load %arg4[%c0_5, %c0_6] : memref<24x512xf32, #tpu.memory_space<vmem>>, vector<24x512xf32>
    tpu.vector_store %arg4[%c0_5, %c0_6], %5 {strides = array<i32>} : memref<24x512xf32, #tpu.memory_space<vmem>>, vector<24x512xf32>,
    return
  }
  func.func @transform_0(%arg0: i32) -> (i32, i32) {
    %c0_i32 = arith.constant 0 : i32
    %c0_i32_0 = arith.constant 0 : i32
    return %c0_i32, %arg0 : i32, i32
  }
  func.func @transform_1(%arg0: i32) -> (i32, i32) {
    %c0_i32 = arith.constant 0 : i32
    %c0_i32_0 = arith.constant 0 : i32
    %c0_i32_1 = arith.constant 0 : i32
    return %c0_i32, %c0_i32_0 : i32, i32
  }
  func.func @transform_2(%arg0: i32) -> (i32, i32) {
    %c0_i32 = arith.constant 0 : i32
    %c0_i32_0 = arith.constant 0 : i32
    %c0_i32_1 = arith.constant 0 : i32
    return %c0_i32, %c0_i32_0 : i32, i32
  }
  func.func @transform_3(%arg0: i32) -> (i32, i32) {
    %c0_i32 = arith.constant 0 : i32
    %c0_i32_0 = arith.constant 0 : i32
    return %c0_i32, %arg0 : i32, i32
  }
}

module attributes {stable_mosaic.version = 11 : i64} {
  func.func @_mm_kernel(%arg0: i32, %arg1: memref<6x32xf32, #tpu.memory_space<vmem>>, %arg2: memref<6x6xf32, #tpu.memory_space<vmem>>, %arg3: memref<6x1xf32, #tpu.memory_space<vmem>>, %arg4: memref<6x32xf32, #tpu.memory_space<vmem>>) attributes {dimension_semantics = [#tpu.dimension_semantics<parallel>], iteration_bounds = array<i64: 1>, scalar_prefetch = 0 : i64, scratch_operands = 0 : i64, tpu.core_type = #tpu.core_type<tc>, window_params = [{transform_indices = @transform_0, window_bounds = array<i64: 6, 32>}, {pipeline_mode = #tpu.pipeline_mode<synchronous>, transform_indices = @transform_1, window_bounds = array<i64: 6, 6>}, {pipeline_mode = #tpu.pipeline_mode<synchronous>, transform_indices = @transform_2, window_bounds = array<i64: 6, 1>}, {transform_indices = @transform_3, window_bounds = array<i64: 6, 32>}]} {
    %c0 = arith.constant 0 : index
    %c0_0 = arith.constant 0 : index
    %0 = vector.load %arg2[%c0, %c0_0] : memref<6x6xf32, #tpu.memory_space<vmem>>, vector<6x6xf32>
    %c0_1 = arith.constant 0 : index
    %c0_2 = arith.constant 0 : index
    %1 = vector.load %arg1[%c0_1, %c0_2] : memref<6x32xf32, #tpu.memory_space<vmem>>, vector<6x32xf32>
    %cst = arith.constant dense<0.000000e+00> : vector<6x32xf32>
    %2 = tpu.matmul %0, %1, %cst {dimension_numbers = #tpu.dot_dimension_numbers<[1], [0], [0], [1], [0, 0, 1, 1], [], []>} : vector<6x6xf32>, vector<6x32xf32>, vector<6x32xf32> -> vector<6x32xf32>
    %c0_3 = arith.constant 0 : index
    %c0_4 = arith.constant 0 : index
    %3 = vector.load %arg3[%c0_3, %c0_4] : memref<6x1xf32, #tpu.memory_space<vmem>>, vector<6x1xf32>
    %4 = vector.broadcast %3 : vector<6x1xf32> to vector<6x32xf32>
    %5 = arith.addf %2, %4 : vector<6x32xf32>
    %c0_5 = arith.constant 0 : index
    %c0_6 = arith.constant 0 : index
    %6 = vector.load %arg4[%c0_5, %c0_6] : memref<6x32xf32, #tpu.memory_space<vmem>>, vector<6x32xf32>
    tpu.vector_store %arg4[%c0_5, %c0_6], %5 {strides = array<i32>} : memref<6x32xf32, #tpu.memory_space<vmem>>, vector<6x32xf32>,
    return
  }
  func.func @transform_0(%arg0: i32) -> (i32, i32) {
    %c0_i32 = arith.constant 0 : i32
    %c0_i32_0 = arith.constant 0 : i32
    return %c0_i32, %arg0 : i32, i32
  }
  func.func @transform_1(%arg0: i32) -> (i32, i32) {
    %c0_i32 = arith.constant 0 : i32
    %c0_i32_0 = arith.constant 0 : i32
    %c0_i32_1 = arith.constant 0 : i32
    return %c0_i32, %c0_i32_0 : i32, i32
  }
  func.func @transform_2(%arg0: i32) -> (i32, i32) {
    %c0_i32 = arith.constant 0 : i32
    %c0_i32_0 = arith.constant 0 : i32
    %c0_i32_1 = arith.constant 0 : i32
    return %c0_i32, %c0_i32_0 : i32, i32
  }
  func.func @transform_3(%arg0: i32) -> (i32, i32) {
    %c0_i32 = arith.constant 0 : i32
    %c0_i32_0 = arith.constant 0 : i32
    return %c0_i32, %arg0 : i32, i32
  }
}

module attributes {stable_mosaic.version = 11 : i64} {
  func.func @_mm_kernel(%arg0: i32, %arg1: memref<6x50xf32, #tpu.memory_space<vmem>>, %arg2: memref<6x6xf32, #tpu.memory_space<vmem>>, %arg3: memref<6x1xf32, #tpu.memory_space<vmem>>, %arg4: memref<6x50xf32, #tpu.memory_space<vmem>>) attributes {dimension_semantics = [#tpu.dimension_semantics<parallel>], iteration_bounds = array<i64: 1>, scalar_prefetch = 0 : i64, scratch_operands = 0 : i64, tpu.core_type = #tpu.core_type<tc>, window_params = [{transform_indices = @transform_0, window_bounds = array<i64: 6, 50>}, {pipeline_mode = #tpu.pipeline_mode<synchronous>, transform_indices = @transform_1, window_bounds = array<i64: 6, 6>}, {pipeline_mode = #tpu.pipeline_mode<synchronous>, transform_indices = @transform_2, window_bounds = array<i64: 6, 1>}, {transform_indices = @transform_3, window_bounds = array<i64: 6, 50>}]} {
    %c0 = arith.constant 0 : index
    %c0_0 = arith.constant 0 : index
    %0 = vector.load %arg2[%c0, %c0_0] : memref<6x6xf32, #tpu.memory_space<vmem>>, vector<6x6xf32>
    %c0_1 = arith.constant 0 : index
    %c0_2 = arith.constant 0 : index
    %1 = vector.load %arg1[%c0_1, %c0_2] : memref<6x50xf32, #tpu.memory_space<vmem>>, vector<6x50xf32>
    %cst = arith.constant dense<0.000000e+00> : vector<6x50xf32>
    %2 = tpu.matmul %0, %1, %cst {dimension_numbers = #tpu.dot_dimension_numbers<[1], [0], [0], [1], [0, 0, 1, 1], [], []>} : vector<6x6xf32>, vector<6x50xf32>, vector<6x50xf32> -> vector<6x50xf32>
    %c0_3 = arith.constant 0 : index
    %c0_4 = arith.constant 0 : index
    %3 = vector.load %arg3[%c0_3, %c0_4] : memref<6x1xf32, #tpu.memory_space<vmem>>, vector<6x1xf32>
    %4 = vector.broadcast %3 : vector<6x1xf32> to vector<6x50xf32>
    %5 = arith.addf %2, %4 : vector<6x50xf32>
    %c0_5 = arith.constant 0 : index
    %c0_6 = arith.constant 0 : index
    %6 = vector.load %arg4[%c0_5, %c0_6] : memref<6x50xf32, #tpu.memory_space<vmem>>, vector<6x50xf32>
    tpu.vector_store %arg4[%c0_5, %c0_6], %5 {strides = array<i32>} : memref<6x50xf32, #tpu.memory_space<vmem>>, vector<6x50xf32>,
    return
  }
  func.func @transform_0(%arg0: i32) -> (i32, i32) {
    %c0_i32 = arith.constant 0 : i32
    %c0_i32_0 = arith.constant 0 : i32
    return %c0_i32, %arg0 : i32, i32
  }
  func.func @transform_1(%arg0: i32) -> (i32, i32) {
    %c0_i32 = arith.constant 0 : i32
    %c0_i32_0 = arith.constant 0 : i32
    %c0_i32_1 = arith.constant 0 : i32
    return %c0_i32, %c0_i32_0 : i32, i32
  }
  func.func @transform_2(%arg0: i32) -> (i32, i32) {
    %c0_i32 = arith.constant 0 : i32
    %c0_i32_0 = arith.constant 0 : i32
    %c0_i32_1 = arith.constant 0 : i32
    return %c0_i32, %c0_i32_0 : i32, i32
  }
  func.func @transform_3(%arg0: i32) -> (i32, i32) {
    %c0_i32 = arith.constant 0 : i32
    %c0_i32_0 = arith.constant 0 : i32
    return %c0_i32, %arg0 : i32, i32
  }
}

module attributes {stable_mosaic.version = 11 : i64} {
  func.func @_esa_tail_kernel(%arg0: i32, %arg1: memref<6x1024xf32, #tpu.memory_space<vmem>>, %arg2: memref<6x1024xf32, #tpu.memory_space<vmem>>, %arg3: memref<6x1024xf32, #tpu.memory_space<vmem>>, %arg4: memref<24x1024xf32, #tpu.memory_space<vmem>>, %arg5: memref<6x6xf32, #tpu.memory_space<vmem>>, %arg6: memref<6x1xf32, #tpu.memory_space<vmem>>, %arg7: memref<24x6xf32, #tpu.memory_space<vmem>>, %arg8: memref<24x1xf32, #tpu.memory_space<vmem>>, %arg9: memref<24x1024xf32, #tpu.memory_space<vmem>>) attributes {dimension_semantics = [#tpu.dimension_semantics<parallel>], iteration_bounds = array<i64: 2>, scalar_prefetch = 0 : i64, scratch_operands = 0 : i64, tpu.core_type = #tpu.core_type<tc>, window_params = [{transform_indices = @transform_0, window_bounds = array<i64: 6, 1024>}, {transform_indices = @transform_1, window_bounds = array<i64: 6, 1024>}, {transform_indices = @transform_2, window_bounds = array<i64: 6, 1024>}, {transform_indices = @transform_3, window_bounds = array<i64: 24, 1024>}, {pipeline_mode = #tpu.pipeline_mode<synchronous>, transform_indices = @transform_4, window_bounds = array<i64: 6, 6>}, {pipeline_mode = #tpu.pipeline_mode<synchronous>, transform_indices = @transform_5, window_bounds = array<i64: 6, 1>}, {pipeline_mode = #tpu.pipeline_mode<synchronous>, transform_indices = @transform_6, window_bounds = array<i64: 24, 6>}, {pipeline_mode = #tpu.pipeline_mode<synchronous>, transform_indices = @transform_7, window_bounds = array<i64: 24, 1>}, {transform_indices = @transform_8, window_bounds = array<i64: 24, 1024>}]} {
    %c0 = arith.constant 0 : index
    %c0_0 = arith.constant 0 : index
    %0 = vector.load %arg5[%c0, %c0_0] : memref<6x6xf32, #tpu.memory_space<vmem>>, vector<6x6xf32>
    %c0_1 = arith.constant 0 : index
    %c0_2 = arith.constant 0 : index
    %1 = vector.load %arg3[%c0_1, %c0_2] : memref<6x1024xf32, #tpu.memory_space<vmem>>, vector<6x1024xf32>
    %cst = arith.constant dense<0.000000e+00> : vector<6x1024xf32>
    %2 = tpu.matmul %0, %1, %cst {dimension_numbers = #tpu.dot_dimension_numbers<[1], [0], [0], [1], [0, 0, 1, 1], [], []>} : vector<6x6xf32>, vector<6x1024xf32>, vector<6x1024xf32> -> vector<6x1024xf32>
    %c0_3 = arith.constant 0 : index
    %c0_4 = arith.constant 0 : index
    %3 = vector.load %arg6[%c0_3, %c0_4] : memref<6x1xf32, #tpu.memory_space<vmem>>, vector<6x1xf32>
    %4 = vector.broadcast %3 : vector<6x1xf32> to vector<6x1024xf32>
    %5 = arith.addf %2, %4 : vector<6x1024xf32>
    %c0_5 = arith.constant 0 : index
    %c0_6 = arith.constant 0 : index
    %6 = vector.load %arg1[%c0_5, %c0_6] : memref<6x1024xf32, #tpu.memory_space<vmem>>, vector<6x1024xf32>
    %c0_7 = arith.constant 0 : index
    %c0_8 = arith.constant 0 : index
    %7 = vector.load %arg2[%c0_7, %c0_8] : memref<6x1024xf32, #tpu.memory_space<vmem>>, vector<6x1024xf32>
    %8 = arith.addf %6, %7 : vector<6x1024xf32>
    %9 = arith.addf %8, %5 : vector<6x1024xf32>
    %c0_9 = arith.constant 0 : index
    %c0_10 = arith.constant 0 : index
    %10 = vector.load %arg7[%c0_9, %c0_10] : memref<24x6xf32, #tpu.memory_space<vmem>>, vector<24x6xf32>
    %cst_11 = arith.constant dense<0.000000e+00> : vector<24x1024xf32>
    %11 = tpu.matmul %10, %9, %cst_11 {dimension_numbers = #tpu.dot_dimension_numbers<[1], [0], [0], [1], [0, 0, 1, 1], [], []>} : vector<24x6xf32>, vector<6x1024xf32>, vector<24x1024xf32> -> vector<24x1024xf32>
    %c0_12 = arith.constant 0 : index
    %c0_13 = arith.constant 0 : index
    %12 = vector.load %arg8[%c0_12, %c0_13] : memref<24x1xf32, #tpu.memory_space<vmem>>, vector<24x1xf32>
    %13 = vector.broadcast %12 : vector<24x1xf32> to vector<24x1024xf32>
    %14 = arith.addf %11, %13 : vector<24x1024xf32>
    %c0_14 = arith.constant 0 : index
    %c0_15 = arith.constant 0 : index
    %15 = vector.load %arg4[%c0_14, %c0_15] : memref<24x1024xf32, #tpu.memory_space<vmem>>, vector<24x1024xf32>
    %16 = arith.negf %14 : vector<24x1024xf32>
    %17 = math.exp %16 : vector<24x1024xf32>
    %cst_16 = arith.constant 1.000000e+00 : f32
    %18 = vector.broadcast %cst_16 : f32 to vector<24x1024xf32>
    %19 = arith.addf %18, %17 : vector<24x1024xf32>
    %20 = arith.divf %18, %19 : vector<24x1024xf32>
    %21 = arith.mulf %15, %20 : vector<24x1024xf32>
    %22 = arith.addf %21, %15 : vector<24x1024xf32>
    %c0_17 = arith.constant 0 : index
    %c0_18 = arith.constant 0 : index
    %23 = vector.load %arg9[%c0_17, %c0_18] : memref<24x1024xf32, #tpu.memory_space<vmem>>, vector<24x1024xf32>
    tpu.vector_store %arg9[%c0_17, %c0_18], %22 {strides = array<i32>} : memref<24x1024xf32, #tpu.memory_space<vmem>>, vector<24x1024xf32>,
    return
  }
  func.func @transform_0(%arg0: i32) -> (i32, i32) {
    %c0_i32 = arith.constant 0 : i32
    %c0_i32_0 = arith.constant 0 : i32
    return %c0_i32, %arg0 : i32, i32
  }
  func.func @transform_1(%arg0: i32) -> (i32, i32) {
    %c0_i32 = arith.constant 0 : i32
    %c0_i32_0 = arith.constant 0 : i32
    return %c0_i32, %arg0 : i32, i32
  }
  func.func @transform_2(%arg0: i32) -> (i32, i32) {
    %c0_i32 = arith.constant 0 : i32
    %c0_i32_0 = arith.constant 0 : i32
    return %c0_i32, %arg0 : i32, i32
  }
  func.func @transform_3(%arg0: i32) -> (i32, i32) {
    %c0_i32 = arith.constant 0 : i32
    %c0_i32_0 = arith.constant 0 : i32
    return %c0_i32, %arg0 : i32, i32
  }
  func.func @transform_4(%arg0: i32) -> (i32, i32) {
    %c0_i32 = arith.constant 0 : i32
    %c0_i32_0 = arith.constant 0 : i32
    %c0_i32_1 = arith.constant 0 : i32
    return %c0_i32, %c0_i32_0 : i32, i32
  }
  func.func @transform_5(%arg0: i32) -> (i32, i32) {
    %c0_i32 = arith.constant 0 : i32
    %c0_i32_0 = arith.constant 0 : i32
    %c0_i32_1 = arith.constant 0 : i32
    return %c0_i32, %c0_i32_0 : i32, i32
  }
  func.func @transform_6(%arg0: i32) -> (i32, i32) {
    %c0_i32 = arith.constant 0 : i32
    %c0_i32_0 = arith.constant 0 : i32
    %c0_i32_1 = arith.constant 0 : i32
    return %c0_i32, %c0_i32_0 : i32, i32
  }
  func.func @transform_7(%arg0: i32) -> (i32, i32) {
    %c0_i32 = arith.constant 0 : i32
    %c0_i32_0 = arith.constant 0 : i32
    %c0_i32_1 = arith.constant 0 : i32
    return %c0_i32, %c0_i32_0 : i32, i32
  }
  func.func @transform_8(%arg0: i32) -> (i32, i32) {
    %c0_i32 = arith.constant 0 : i32
    %c0_i32_0 = arith.constant 0 : i32
    return %c0_i32, %arg0 : i32, i32
  }
}

module attributes {stable_mosaic.version = 11 : i64} {
  func.func @_l2n_mm_kernel(%arg0: i32, %arg1: memref<24x1024xf32, #tpu.memory_space<vmem>>, %arg2: memref<48x24xf32, #tpu.memory_space<vmem>>, %arg3: memref<48x1xf32, #tpu.memory_space<vmem>>, %arg4: memref<48x1024xf32, #tpu.memory_space<vmem>>) attributes {dimension_semantics = [#tpu.dimension_semantics<parallel>], iteration_bounds = array<i64: 2>, scalar_prefetch = 0 : i64, scratch_operands = 0 : i64, tpu.core_type = #tpu.core_type<tc>, window_params = [{transform_indices = @transform_0, window_bounds = array<i64: 24, 1024>}, {pipeline_mode = #tpu.pipeline_mode<synchronous>, transform_indices = @transform_1, window_bounds = array<i64: 48, 24>}, {pipeline_mode = #tpu.pipeline_mode<synchronous>, transform_indices = @transform_2, window_bounds = array<i64: 48, 1>}, {transform_indices = @transform_3, window_bounds = array<i64: 48, 1024>}]} {
    %c0 = arith.constant 0 : index
    %c0_0 = arith.constant 0 : index
    %0 = vector.load %arg1[%c0, %c0_0] : memref<24x1024xf32, #tpu.memory_space<vmem>>, vector<24x1024xf32>
    %1 = arith.mulf %0, %0 : vector<24x1024xf32>
    %cst = arith.constant dense<0.000000e+00> : vector<1024xf32>
    %2 = vector.multi_reduction <add>, %1, %cst [0] : vector<24x1024xf32> to vector<1024xf32>
    %3 = vector.shape_cast %2 : vector<1024xf32> to vector<1x1024xf32>
    %4 = math.sqrt %3 : vector<1x1024xf32>
    %cst_1 = arith.constant 9.99999996E-13 : f32
    %5 = vector.broadcast %cst_1 : f32 to vector<1x1024xf32>
    %6 = arith.maximumf %4, %5 : vector<1x1024xf32>
    %cst_2 = arith.constant 1.000000e+00 : f32
    %7 = vector.broadcast %cst_2 : f32 to vector<1x1024xf32>
    %8 = arith.divf %7, %6 : vector<1x1024xf32>
    %9 = vector.broadcast %8 : vector<1x1024xf32> to vector<24x1024xf32>
    %10 = arith.mulf %0, %9 : vector<24x1024xf32>
    %c0_3 = arith.constant 0 : index
    %c0_4 = arith.constant 0 : index
    %11 = vector.load %arg2[%c0_3, %c0_4] : memref<48x24xf32, #tpu.memory_space<vmem>>, vector<48x24xf32>
    %cst_5 = arith.constant dense<0.000000e+00> : vector<48x1024xf32>
    %12 = tpu.matmul %11, %10, %cst_5 {dimension_numbers = #tpu.dot_dimension_numbers<[1], [0], [0], [1], [0, 0, 1, 1], [], []>} : vector<48x24xf32>, vector<24x1024xf32>, vector<48x1024xf32> -> vector<48x1024xf32>
    %c0_6 = arith.constant 0 : index
    %c0_7 = arith.constant 0 : index
    %13 = vector.load %arg3[%c0_6, %c0_7] : memref<48x1xf32, #tpu.memory_space<vmem>>, vector<48x1xf32>
    %14 = vector.broadcast %13 : vector<48x1xf32> to vector<48x1024xf32>
    %15 = arith.addf %12, %14 : vector<48x1024xf32>
    %c0_8 = arith.constant 0 : index
    %c0_9 = arith.constant 0 : index
    %16 = vector.load %arg4[%c0_8, %c0_9] : memref<48x1024xf32, #tpu.memory_space<vmem>>, vector<48x1024xf32>
    tpu.vector_store %arg4[%c0_8, %c0_9], %15 {strides = array<i32>} : memref<48x1024xf32, #tpu.memory_space<vmem>>, vector<48x1024xf32>,
    return
  }
  func.func @transform_0(%arg0: i32) -> (i32, i32) {
    %c0_i32 = arith.constant 0 : i32
    %c0_i32_0 = arith.constant 0 : i32
    return %c0_i32, %arg0 : i32, i32
  }
  func.func @transform_1(%arg0: i32) -> (i32, i32) {
    %c0_i32 = arith.constant 0 : i32
    %c0_i32_0 = arith.constant 0 : i32
    %c0_i32_1 = arith.constant 0 : i32
    return %c0_i32, %c0_i32_0 : i32, i32
  }
  func.func @transform_2(%arg0: i32) -> (i32, i32) {
    %c0_i32 = arith.constant 0 : i32
    %c0_i32_0 = arith.constant 0 : i32
    %c0_i32_1 = arith.constant 0 : i32
    return %c0_i32, %c0_i32_0 : i32, i32
  }
  func.func @transform_3(%arg0: i32) -> (i32, i32) {
    %c0_i32 = arith.constant 0 : i32
    %c0_i32_0 = arith.constant 0 : i32
    return %c0_i32, %arg0 : i32, i32
  }
}

module attributes {stable_mosaic.version = 11 : i64} {
  func.func @_mm_kernel(%arg0: i32, %arg1: memref<24x32xf32, #tpu.memory_space<vmem>>, %arg2: memref<24x24xf32, #tpu.memory_space<vmem>>, %arg3: memref<24x1xf32, #tpu.memory_space<vmem>>, %arg4: memref<24x32xf32, #tpu.memory_space<vmem>>) attributes {dimension_semantics = [#tpu.dimension_semantics<parallel>], iteration_bounds = array<i64: 1>, scalar_prefetch = 0 : i64, scratch_operands = 0 : i64, tpu.core_type = #tpu.core_type<tc>, window_params = [{transform_indices = @transform_0, window_bounds = array<i64: 24, 32>}, {pipeline_mode = #tpu.pipeline_mode<synchronous>, transform_indices = @transform_1, window_bounds = array<i64: 24, 24>}, {pipeline_mode = #tpu.pipeline_mode<synchronous>, transform_indices = @transform_2, window_bounds = array<i64: 24, 1>}, {transform_indices = @transform_3, window_bounds = array<i64: 24, 32>}]} {
    %c0 = arith.constant 0 : index
    %c0_0 = arith.constant 0 : index
    %0 = vector.load %arg2[%c0, %c0_0] : memref<24x24xf32, #tpu.memory_space<vmem>>, vector<24x24xf32>
    %c0_1 = arith.constant 0 : index
    %c0_2 = arith.constant 0 : index
    %1 = vector.load %arg1[%c0_1, %c0_2] : memref<24x32xf32, #tpu.memory_space<vmem>>, vector<24x32xf32>
    %cst = arith.constant dense<0.000000e+00> : vector<24x32xf32>
    %2 = tpu.matmul %0, %1, %cst {dimension_numbers = #tpu.dot_dimension_numbers<[1], [0], [0], [1], [0, 0, 1, 1], [], []>} : vector<24x24xf32>, vector<24x32xf32>, vector<24x32xf32> -> vector<24x32xf32>
    %c0_3 = arith.constant 0 : index
    %c0_4 = arith.constant 0 : index
    %3 = vector.load %arg3[%c0_3, %c0_4] : memref<24x1xf32, #tpu.memory_space<vmem>>, vector<24x1xf32>
    %4 = vector.broadcast %3 : vector<24x1xf32> to vector<24x32xf32>
    %5 = arith.addf %2, %4 : vector<24x32xf32>
    %c0_5 = arith.constant 0 : index
    %c0_6 = arith.constant 0 : index
    %6 = vector.load %arg4[%c0_5, %c0_6] : memref<24x32xf32, #tpu.memory_space<vmem>>, vector<24x32xf32>
    tpu.vector_store %arg4[%c0_5, %c0_6], %5 {strides = array<i32>} : memref<24x32xf32, #tpu.memory_space<vmem>>, vector<24x32xf32>,
    return
  }
  func.func @transform_0(%arg0: i32) -> (i32, i32) {
    %c0_i32 = arith.constant 0 : i32
    %c0_i32_0 = arith.constant 0 : i32
    return %c0_i32, %arg0 : i32, i32
  }
  func.func @transform_1(%arg0: i32) -> (i32, i32) {
    %c0_i32 = arith.constant 0 : i32
    %c0_i32_0 = arith.constant 0 : i32
    %c0_i32_1 = arith.constant 0 : i32
    return %c0_i32, %c0_i32_0 : i32, i32
  }
  func.func @transform_2(%arg0: i32) -> (i32, i32) {
    %c0_i32 = arith.constant 0 : i32
    %c0_i32_0 = arith.constant 0 : i32
    %c0_i32_1 = arith.constant 0 : i32
    return %c0_i32, %c0_i32_0 : i32, i32
  }
  func.func @transform_3(%arg0: i32) -> (i32, i32) {
    %c0_i32 = arith.constant 0 : i32
    %c0_i32_0 = arith.constant 0 : i32
    return %c0_i32, %arg0 : i32, i32
  }
}

module attributes {stable_mosaic.version = 11 : i64} {
  func.func @_frb_tail_kernel(%arg0: i32, %arg1: memref<24x1024xf32, #tpu.memory_space<vmem>>, %arg2: memref<24x1024xf32, #tpu.memory_space<vmem>>, %arg3: memref<24x1024xf32, #tpu.memory_space<vmem>>, %arg4: memref<24x24xf32, #tpu.memory_space<vmem>>, %arg5: memref<24x1xf32, #tpu.memory_space<vmem>>, %arg6: memref<24x1024xf32, #tpu.memory_space<vmem>>) attributes {dimension_semantics = [#tpu.dimension_semantics<parallel>], iteration_bounds = array<i64: 2>, scalar_prefetch = 0 : i64, scratch_operands = 0 : i64, tpu.core_type = #tpu.core_type<tc>, window_params = [{transform_indices = @transform_0, window_bounds = array<i64: 24, 1024>}, {transform_indices = @transform_1, window_bounds = array<i64: 24, 1024>}, {transform_indices = @transform_2, window_bounds = array<i64: 24, 1024>}, {pipeline_mode = #tpu.pipeline_mode<synchronous>, transform_indices = @transform_3, window_bounds = array<i64: 24, 24>}, {pipeline_mode = #tpu.pipeline_mode<synchronous>, transform_indices = @transform_4, window_bounds = array<i64: 24, 1>}, {transform_indices = @transform_5, window_bounds = array<i64: 24, 1024>}]} {
    %c0 = arith.constant 0 : index
    %c0_0 = arith.constant 0 : index
    %0 = vector.load %arg1[%c0, %c0_0] : memref<24x1024xf32, #tpu.memory_space<vmem>>, vector<24x1024xf32>
    %c0_1 = arith.constant 0 : index
    %c0_2 = arith.constant 0 : index
    %1 = vector.load %arg2[%c0_1, %c0_2] : memref<24x1024xf32, #tpu.memory_space<vmem>>, vector<24x1024xf32>
    %2 = arith.addf %0, %1 : vector<24x1024xf32>
    %c0_3 = arith.constant 0 : index
    %c0_4 = arith.constant 0 : index
    %3 = vector.load %arg4[%c0_3, %c0_4] : memref<24x24xf32, #tpu.memory_space<vmem>>, vector<24x24xf32>
    %cst = arith.constant dense<0.000000e+00> : vector<24x1024xf32>
    %4 = tpu.matmul %3, %2, %cst {dimension_numbers = #tpu.dot_dimension_numbers<[1], [0], [0], [1], [0, 0, 1, 1], [], []>} : vector<24x24xf32>, vector<24x1024xf32>, vector<24x1024xf32> -> vector<24x1024xf32>
    %c0_5 = arith.constant 0 : index
    %c0_6 = arith.constant 0 : index
    %5 = vector.load %arg5[%c0_5, %c0_6] : memref<24x1xf32, #tpu.memory_space<vmem>>, vector<24x1xf32>
    %6 = vector.broadcast %5 : vector<24x1xf32> to vector<24x1024xf32>
    %7 = arith.addf %4, %6 : vector<24x1024xf32>
    %c0_7 = arith.constant 0 : index
    %c0_8 = arith.constant 0 : index
    %8 = vector.load %arg3[%c0_7, %c0_8] : memref<24x1024xf32, #tpu.memory_space<vmem>>, vector<24x1024xf32>
    %9 = arith.addf %7, %8 : vector<24x1024xf32>
    %c0_9 = arith.constant 0 : index
    %c0_10 = arith.constant 0 : index
    %10 = vector.load %arg6[%c0_9, %c0_10] : memref<24x1024xf32, #tpu.memory_space<vmem>>, vector<24x1024xf32>
    tpu.vector_store %arg6[%c0_9, %c0_10], %9 {strides = array<i32>} : memref<24x1024xf32, #tpu.memory_space<vmem>>, vector<24x1024xf32>,
    return
  }
  func.func @transform_0(%arg0: i32) -> (i32, i32) {
    %c0_i32 = arith.constant 0 : i32
    %c0_i32_0 = arith.constant 0 : i32
    return %c0_i32, %arg0 : i32, i32
  }
  func.func @transform_1(%arg0: i32) -> (i32, i32) {
    %c0_i32 = arith.constant 0 : i32
    %c0_i32_0 = arith.constant 0 : i32
    return %c0_i32, %arg0 : i32, i32
  }
  func.func @transform_2(%arg0: i32) -> (i32, i32) {
    %c0_i32 = arith.constant 0 : i32
    %c0_i32_0 = arith.constant 0 : i32
    return %c0_i32, %arg0 : i32, i32
  }
  func.func @transform_3(%arg0: i32) -> (i32, i32) {
    %c0_i32 = arith.constant 0 : i32
    %c0_i32_0 = arith.constant 0 : i32
    %c0_i32_1 = arith.constant 0 : i32
    return %c0_i32, %c0_i32_0 : i32, i32
  }
  func.func @transform_4(%arg0: i32) -> (i32, i32) {
    %c0_i32 = arith.constant 0 : i32
    %c0_i32_0 = arith.constant 0 : i32
    %c0_i32_1 = arith.constant 0 : i32
    return %c0_i32, %c0_i32_0 : i32, i32
  }
  func.func @transform_5(%arg0: i32) -> (i32, i32) {
    %c0_i32 = arith.constant 0 : i32
    %c0_i32_0 = arith.constant 0 : i32
    return %c0_i32, %arg0 : i32, i32
  }
}

module attributes {stable_mosaic.version = 11 : i64} {
  func.func @_ln_mm_kernel(%arg0: i32, %arg1: memref<24x1024xf32, #tpu.memory_space<vmem>>, %arg2: memref<24x1xf32, #tpu.memory_space<vmem>>, %arg3: memref<24x1xf32, #tpu.memory_space<vmem>>, %arg4: memref<96x24xf32, #tpu.memory_space<vmem>>, %arg5: memref<96x1024xf32, #tpu.memory_space<vmem>>) attributes {dimension_semantics = [#tpu.dimension_semantics<parallel>], iteration_bounds = array<i64: 2>, scalar_prefetch = 0 : i64, scratch_operands = 0 : i64, tpu.core_type = #tpu.core_type<tc>, window_params = [{transform_indices = @transform_0, window_bounds = array<i64: 24, 1024>}, {pipeline_mode = #tpu.pipeline_mode<synchronous>, transform_indices = @transform_1, window_bounds = array<i64: 24, 1>}, {pipeline_mode = #tpu.pipeline_mode<synchronous>, transform_indices = @transform_2, window_bounds = array<i64: 24, 1>}, {pipeline_mode = #tpu.pipeline_mode<synchronous>, transform_indices = @transform_3, window_bounds = array<i64: 96, 24>}, {transform_indices = @transform_4, window_bounds = array<i64: 96, 1024>}]} {
    %c0 = arith.constant 0 : index
    %c0_0 = arith.constant 0 : index
    %0 = vector.load %arg1[%c0, %c0_0] : memref<24x1024xf32, #tpu.memory_space<vmem>>, vector<24x1024xf32>
    %cst = arith.constant dense<0.000000e+00> : vector<1024xf32>
    %1 = vector.multi_reduction <add>, %0, %cst [0] : vector<24x1024xf32> to vector<1024xf32>
    %2 = vector.shape_cast %1 : vector<1024xf32> to vector<1x1024xf32>
    %cst_1 = arith.constant 2.400000e+01 : f32
    %3 = vector.broadcast %cst_1 : f32 to vector<1x1024xf32>
    %4 = arith.divf %2, %3 : vector<1x1024xf32>
    %5 = vector.broadcast %4 : vector<1x1024xf32> to vector<24x1024xf32>
    %6 = arith.subf %0, %5 : vector<24x1024xf32>
    %7 = vector.broadcast %4 : vector<1x1024xf32> to vector<24x1024xf32>
    %8 = arith.subf %0, %7 : vector<24x1024xf32>
    %9 = arith.mulf %6, %8 : vector<24x1024xf32>
    %cst_2 = arith.constant dense<0.000000e+00> : vector<1024xf32>
    %10 = vector.multi_reduction <add>, %9, %cst_2 [0] : vector<24x1024xf32> to vector<1024xf32>
    %11 = vector.shape_cast %10 : vector<1024xf32> to vector<1x1024xf32>
    %cst_3 = arith.constant 2.400000e+01 : f32
    %12 = vector.broadcast %cst_3 : f32 to vector<1x1024xf32>
    %13 = arith.divf %11, %12 : vector<1x1024xf32>
    %14 = vector.broadcast %4 : vector<1x1024xf32> to vector<24x1024xf32>
    %15 = arith.subf %0, %14 : vector<24x1024xf32>
    %cst_4 = arith.constant 9.99999974E-6 : f32
    %16 = vector.broadcast %cst_4 : f32 to vector<1x1024xf32>
    %17 = arith.addf %13, %16 : vector<1x1024xf32>
    %18 = math.rsqrt %17 : vector<1x1024xf32>
    %19 = vector.broadcast %18 : vector<1x1024xf32> to vector<24x1024xf32>
    %20 = arith.mulf %15, %19 : vector<24x1024xf32>
    %c0_5 = arith.constant 0 : index
    %c0_6 = arith.constant 0 : index
    %21 = vector.load %arg2[%c0_5, %c0_6] : memref<24x1xf32, #tpu.memory_space<vmem>>, vector<24x1xf32>
    %22 = vector.broadcast %21 : vector<24x1xf32> to vector<24x1024xf32>
    %23 = arith.mulf %20, %22 : vector<24x1024xf32>
    %c0_7 = arith.constant 0 : index
    %c0_8 = arith.constant 0 : index
    %24 = vector.load %arg3[%c0_7, %c0_8] : memref<24x1xf32, #tpu.memory_space<vmem>>, vector<24x1xf32>
    %25 = vector.broadcast %24 : vector<24x1xf32> to vector<24x1024xf32>
    %26 = arith.addf %23, %25 : vector<24x1024xf32>
    %c0_9 = arith.constant 0 : index
    %c0_10 = arith.constant 0 : index
    %27 = vector.load %arg4[%c0_9, %c0_10] : memref<96x24xf32, #tpu.memory_space<vmem>>, vector<96x24xf32>
    %cst_11 = arith.constant dense<0.000000e+00> : vector<96x1024xf32>
    %28 = tpu.matmul %27, %26, %cst_11 {dimension_numbers = #tpu.dot_dimension_numbers<[1], [0], [0], [1], [0, 0, 1, 1], [], []>} : vector<96x24xf32>, vector<24x1024xf32>, vector<96x1024xf32> -> vector<96x1024xf32>
    %c0_12 = arith.constant 0 : index
    %c0_13 = arith.constant 0 : index
    %29 = vector.load %arg5[%c0_12, %c0_13] : memref<96x1024xf32, #tpu.memory_space<vmem>>, vector<96x1024xf32>
    tpu.vector_store %arg5[%c0_12, %c0_13], %28 {strides = array<i32>} : memref<96x1024xf32, #tpu.memory_space<vmem>>, vector<96x1024xf32>,
    return
  }
  func.func @transform_0(%arg0: i32) -> (i32, i32) {
    %c0_i32 = arith.constant 0 : i32
    %c0_i32_0 = arith.constant 0 : i32
    return %c0_i32, %arg0 : i32, i32
  }
  func.func @transform_1(%arg0: i32) -> (i32, i32) {
    %c0_i32 = arith.constant 0 : i32
    %c0_i32_0 = arith.constant 0 : i32
    %c0_i32_1 = arith.constant 0 : i32
    return %c0_i32, %c0_i32_0 : i32, i32
  }
  func.func @transform_2(%arg0: i32) -> (i32, i32) {
    %c0_i32 = arith.constant 0 : i32
    %c0_i32_0 = arith.constant 0 : i32
    %c0_i32_1 = arith.constant 0 : i32
    return %c0_i32, %c0_i32_0 : i32, i32
  }
  func.func @transform_3(%arg0: i32) -> (i32, i32) {
    %c0_i32 = arith.constant 0 : i32
    %c0_i32_0 = arith.constant 0 : i32
    %c0_i32_1 = arith.constant 0 : i32
    return %c0_i32, %c0_i32_0 : i32, i32
  }
  func.func @transform_4(%arg0: i32) -> (i32, i32) {
    %c0_i32 = arith.constant 0 : i32
    %c0_i32_0 = arith.constant 0 : i32
    return %c0_i32, %arg0 : i32, i32
  }
}

</mosaic_0001>

<llo_original>
// kernel: fmdb_basic_fwd.21
$region0: #{fmdb_basic_fwd.21}
  #allocation0 [shape = 'u32[]', space=smem, size = 0x4, offset = 0x4, fixed_abs, tag = 'smem constant byte address 0x4 - core index']
  #allocation1 [shape = 'u32[144,128]{1,0:T(1,128)}', space=vmem, size = 0x12000, scoped, tag = 'internal scratch']
  %s0 = inlined_call_operand.vmem [shape: f32[24,2048], index: 0, kind: input, shape index: {}]
  %s1 = inlined_call_operand.vmem [shape: f32[24,24], index: 1, kind: input, shape index: {}]
  %s2 = inlined_call_operand.vmem [shape: f32[24,1], index: 2, kind: input, shape index: {}]
  %s3 = inlined_call_operand.vmem [shape: f32[24,2048], index: 3, kind: output, shape index: {}]
  %s4 = sld [smem:[#allocation0]]
  $region87: #{fmdb_basic_fwd.21} parent=0
    _
  %s6 = ssub.s32 1, %s4
  %s7 = scalar_select 0, %s6, %s4
  $region1: #{fmdb_basic_fwd.21} parent=0
    #allocation2 [shape = 'u8[196608]{0}', space=vmem, size = 0x30000, scoped, tag = 'input window, operand 0']
    #allocation3 [shape = 'u8[196608]{0}', space=vmem, size = 0x30000, scoped, tag = 'output window, operand 0']
    loop: start=0, step=1, limit=4
    $region2: #{fmdb_basic_fwd.21} parent=1 // loop_pre_header
      _
    $region3: #{fmdb_basic_fwd.21} parent=1 // loop_header
      %s9 = sphi 0, %s13
      %p10 = scmp.ge.s32.totalorder %s9, 4
      %s19 = sphi 0, %s21
      %s22 = sphi 0, %s19
      %s23 = sphi 0, %s22
      %s39 = sphi 0, %s23
      %s43 = sphi 0, %s43
      %s45 = sphi 0, %s43
      %s46 = sphi 0, %s45
      %s60 = sphi 0, %s46
      %s64 = sphi 0, %s64
      %s66 = sphi 0, %s64
      %s67 = sphi 0, %s66
      %s81 = sphi 0, %s67
      %s87 = sphi 0, %s89
      %s90 = sphi 0, %s87
      %s91 = sphi 0, %s90
      %s107 = sphi 0, %s91
    $region4: #{fmdb_basic_fwd.21} parent=1 // loop_header_branch
      %12 = sbr.rel (%p10) target = $region8
    $region5: #{fmdb_basic_fwd.21} parent=1 // loop_body
      %s14 = ssub.s32 %s9, 1
      %s15 = ssub.s32 %s9, 2
      %s16 = sadd.s32 %s9, 1
      %s17 = ssub.s32 %s9, %s16
      %p18 = scmp.eq.s32.totalorder %s17, 0
      %s20 = sadd.s32 %s19, 1
      %s21 = scalar_select %p18, %s19, %s20
      %p24 = pneg %p18
      %p25 = scmp.eq.s32.totalorder %s9, 1
      %p26 = por %p24, %p25
      %p27 = scmp.ne.s32.totalorder %s19, %s22
      %p28 = scmp.eq.s32.totalorder %s9, 0
      %p29 = por %p27, %p28
      %p30 = scmp.ne.s32.totalorder %s19, %s22
      %p31 = scmp.eq.s32.totalorder %s14, 1
      %p32 = por %p30, %p31
      %p33 = scmp.ne.s32.totalorder %s22, %s23
      %p34 = scmp.eq.s32.totalorder %s14, 0
      %p35 = por %p33, %p34
      %p36 = scmp.ne.s32.totalorder %s22, %s23
      %p37 = scmp.eq.s32.totalorder %s15, 1
      %p38 = por %p36, %p37
      %p40 = scmp.ne.s32.totalorder %s23, %s39
      %p41 = scmp.eq.s32.totalorder %s15, 0
      %p42 = por %p40, %p41
      %s44 = sadd.s32 %s43, 1
      %p47 = scmp.eq.s32.totalorder %s9, 1
      %p48 = scmp.ne.s32.totalorder %s43, %s45
      %p49 = scmp.eq.s32.totalorder %s9, 0
      %p50 = por %p48, %p49
      %p51 = scmp.ne.s32.totalorder %s43, %s45
      %p52 = scmp.eq.s32.totalorder %s14, 1
      %p53 = por %p51, %p52
      %p54 = scmp.ne.s32.totalorder %s45, %s46
      %p55 = scmp.eq.s32.totalorder %s14, 0
      %p56 = por %p54, %p55
      %p57 = scmp.ne.s32.totalorder %s45, %s46
      %p58 = scmp.eq.s32.totalorder %s15, 1
      %p59 = por %p57, %p58
      %p61 = scmp.ne.s32.totalorder %s46, %s60
      %p62 = scmp.eq.s32.totalorder %s15, 0
      %p63 = por %p61, %p62
      %s65 = sadd.s32 %s64, 1
      %p68 = scmp.eq.s32.totalorder %s9, 1
      %p69 = scmp.ne.s32.totalorder %s64, %s66
      %p70 = scmp.eq.s32.totalorder %s9, 0
      %p71 = por %p69, %p70
      %p72 = scmp.ne.s32.totalorder %s64, %s66
      %p73 = scmp.eq.s32.totalorder %s14, 1
      %p74 = por %p72, %p73
      %p75 = scmp.ne.s32.totalorder %s66, %s67
      %p76 = scmp.eq.s32.totalorder %s14, 0
      %p77 = por %p75, %p76
      %p78 = scmp.ne.s32.totalorder %s66, %s67
      %p79 = scmp.eq.s32.totalorder %s15, 1
      %p80 = por %p78, %p79
      %p82 = scmp.ne.s32.totalorder %s67, %s81
      %p83 = scmp.eq.s32.totalorder %s15, 0
      %p84 = por %p82, %p83
      %s85 = ssub.s32 %s9, %s16
      %p86 = scmp.eq.s32.totalorder %s85, 0
      %s88 = sadd.s32 %s87, 1
      %s89 = scalar_select %p86, %s87, %s88
      %p92 = pneg %p86
      %p93 = scmp.eq.s32.totalorder %s9, 1
      %p94 = por %p92, %p93
      %p95 = scmp.ne.s32.totalorder %s87, %s90
      %p96 = scmp.eq.s32.totalorder %s9, 0
      %p97 = por %p95, %p96
      %p98 = scmp.ne.s32.totalorder %s87, %s90
      %p99 = scmp.eq.s32.totalorder %s14, 1
      %p100 = por %p98, %p99
      %p101 = scmp.ne.s32.totalorder %s90, %s91
      %p102 = scmp.eq.s32.totalorder %s14, 0
      %p103 = por %p101, %p102
      %p104 = scmp.ne.s32.totalorder %s90, %s91
      %p105 = scmp.eq.s32.totalorder %s15, 1
      %p106 = por %p104, %p105
      %p108 = scmp.ne.s32.totalorder %s91, %s107
      %p109 = scmp.eq.s32.totalorder %s15, 0
      %p110 = por %p108, %p109
      %p111 = scmp.le.s32.totalorder 1, %s9
      %p112 = scmp.lt.s32.totalorder %s9, 3
      %p113 = pnand %p111, %p112
      %p114 = pneg %p113
      // Predicated region
      $region9: #{fmdb_basic_fwd.21} parent=5 // pred_check
        _
      $region10: #{fmdb_basic_fwd.21} parent=5 // pred_check_branch
        %116 = sbr.rel (%p113) target = $region12
      $region11: #{fmdb_basic_fwd.21} parent=5 // pred_region
        %s117 = ssub.s32 %s9, 1
        // Predicated region
        $region13: #{fmdb_basic_fwd.21} parent=11 // pred_check
          %p118 = pneg %p56
        $region14: #{fmdb_basic_fwd.21} parent=11 // pred_check_branch
          %120 = sbr.rel (%p118) target = $region16
        $region15: #{fmdb_basic_fwd.21} parent=11 // pred_region
          _
        $region16: #{fmdb_basic_fwd.21} parent=11 // pred_fallthru
          _
        // Predicated region
        $region17: #{fmdb_basic_fwd.21} parent=11 // pred_check
          %p121 = pneg %p77
        $region18: #{fmdb_basic_fwd.21} parent=11 // pred_check_branch
          %123 = sbr.rel (%p121) target = $region20
        $region19: #{fmdb_basic_fwd.21} parent=11 // pred_region
          _
        $region20: #{fmdb_basic_fwd.21} parent=11 // pred_fallthru
          _
      $region12: #{fmdb_basic_fwd.21} parent=5 // pred_fallthru
        _
      %p124 = scmp.lt.s32.totalorder %s9, 2
      // Predicated region
      $region21: #{fmdb_basic_fwd.21} parent=5 // pred_check
        %p125 = pneg %p124
      $region22: #{fmdb_basic_fwd.21} parent=5 // pred_check_branch
        %127 = sbr.rel (%p125) target = $region24
      $region23: #{fmdb_basic_fwd.21} parent=5 // pred_region
        // Predicated region
        $region25: #{fmdb_basic_fwd.21} parent=23 // pred_check
          %p128 = pneg %p29
        $region26: #{fmdb_basic_fwd.21} parent=23 // pred_check_branch
          %130 = sbr.rel (%p128) target = $region28
        $region27: #{fmdb_basic_fwd.21} parent=23 // pred_region
          %s131 = sand.u32 %s19, 1
          %s132 = sand.u32 %s19, 1
          %s133 = smul.addr %s132, 192
          %s134 = scalar_lea.vmem [#allocation2], %s133
          %s135 = smul.u32 8, %s9
          %s136 = smul.addr %s135, 8
          %s137 = scalar_lea.vmem %s0, %s136
          // Predicated region
          $region29: #{fmdb_basic_fwd.21} parent=27 // pred_check
            _
          $region30: #{fmdb_basic_fwd.21} parent=27 // pred_check_branch
            %139 = sbr.rel (0) target = $region32
          $region31: #{fmdb_basic_fwd.21} parent=27 // pred_region
            // Predicated region
            $region33: #{fmdb_basic_fwd.21} parent=31 // pred_check
              _
            $region34: #{fmdb_basic_fwd.21} parent=31 // pred_check_branch
              %141 = sbr.rel (0) target = $region36
            $region35: #{fmdb_basic_fwd.21} parent=31 // pred_region
              loop: start=0, step=1, limit=1
              $region37: #{fmdb_basic_fwd.21} parent=35 // loop_pre_header
                _
              $region38: #{fmdb_basic_fwd.21} parent=35 // loop_header
                %s143 = sphi 0, %s147
                %p144 = scmp.ge.s32.totalorder %s143, 1
                %s148 = sphi %s137, %s137
                %s149 = sphi %s134, %s134
              $region39: #{fmdb_basic_fwd.21} parent=35 // loop_header_branch
                %146 = sbr.rel (%p144) target = $region43
              $region40: #{fmdb_basic_fwd.21} parent=35 // loop_body
                %v150 = vld [vmem:[%s148] sm:$0xff]
                %151 = vst [vmem:[%s149] sm:$0xff] %v150
                %v152 = vld [vmem:[%s148 + $0x8] sm:$0xff]
                %153 = vst [vmem:[%s149 + $0x8] sm:$0xff] %v152
                %v154 = vld [vmem:[%s148 + $0x10] sm:$0xff]
                %155 = vst [vmem:[%s149 + $0x10] sm:$0xff] %v154
                %v156 = vld [vmem:[%s148 + $0x18] sm:$0xff]
                %157 = vst [vmem:[%s149 + $0x18] sm:$0xff] %v156
                %v158 = vld [vmem:[%s148 + $0x20] sm:$0xff]
                %159 = vst [vmem:[%s149 + $0x20] sm:$0xff] %v158
                %v160 = vld [vmem:[%s148 + $0x28] sm:$0xff]
                %161 = vst [vmem:[%s149 + $0x28] sm:$0xff] %v160
                %v162 = vld [vmem:[%s148 + $0x30] sm:$0xff]
                %163 = vst [vmem:[%s149 + $0x30] sm:$0xff] %v162
                %v164 = vld [vmem:[%s148 + $0x38] sm:$0xff]
                %165 = vst [vmem:[%s149 + $0x38] sm:$0xff] %v164
                %v166 = vld [vmem:[%s148 + $0x80] sm:$0xff]
                %167 = vst [vmem:[%s149 + $0x40] sm:$0xff] %v166
                %v168 = vld [vmem:[%s148 + $0x88] sm:$0xff]
                %169 = vst [vmem:[%s149 + $0x48] sm:$0xff] %v168
                %v170 = vld [vmem:[%s148 + $0x90] sm:$0xff]
                %171 = vst [vmem:[%s149 + $0x50] sm:$0xff] %v170
                %v172 = vld [vmem:[%s148 + $0x98] sm:$0xff]
                %173 = vst [vmem:[%s149 + $0x58] sm:$0xff] %v172
                %v174 = vld [vmem:[%s148 + $0xa0] sm:$0xff]
                %175 = vst [vmem:[%s149 + $0x60] sm:$0xff] %v174
                %v176 = vld [vmem:[%s148 + $0xa8] sm:$0xff]
                %177 = vst [vmem:[%s149 + $0x68] sm:$0xff] %v176
                %v178 = vld [vmem:[%s148 + $0xb0] sm:$0xff]
                %179 = vst [vmem:[%s149 + $0x70] sm:$0xff] %v178
                %v180 = vld [vmem:[%s148 + $0xb8] sm:$0xff]
                %181 = vst [vmem:[%s149 + $0x78] sm:$0xff] %v180
                %v182 = vld [vmem:[%s148 + $0x100] sm:$0xff]
                %183 = vst [vmem:[%s149 + $0x80] sm:$0xff] %v182
                %v184 = vld [vmem:[%s148 + $0x108] sm:$0xff]
                %185 = vst [vmem:[%s149 + $0x88] sm:$0xff] %v184
                %v186 = vld [vmem:[%s148 + $0x110] sm:$0xff]
                %187 = vst [vmem:[%s149 + $0x90] sm:$0xff] %v186
                %v188 = vld [vmem:[%s148 + $0x118] sm:$0xff]
                %189 = vst [vmem:[%s149 + $0x98] sm:$0xff] %v188
                %v190 = vld [vmem:[%s148 + $0x120] sm:$0xff]
                %191 = vst [vmem:[%s149 + $0xa0] sm:$0xff] %v190
                %v192 = vld [vmem:[%s148 + $0x128] sm:$0xff]
                %193 = vst [vmem:[%s149 + $0xa8] sm:$0xff] %v192
                %v194 = vld [vmem:[%s148 + $0x130] sm:$0xff]
                %195 = vst [vmem:[%s149 + $0xb0] sm:$0xff] %v194
                %v196 = vld [vmem:[%s148 + $0x138] sm:$0xff]
                %197 = vst [vmem:[%s149 + $0xb8] sm:$0xff] %v196
              $region41: #{fmdb_basic_fwd.21} parent=35 // loop_footer
                %s147 = sadd.s32 1, %s143
              $region42: #{fmdb_basic_fwd.21} parent=35 // loop_footer_branch
                %142 = sbr.rel target = $region38
              $region43: #{fmdb_basic_fwd.21} parent=35 // loop_exit
                _
            $region36: #{fmdb_basic_fwd.21} parent=31 // pred_fallthru
              _
            // Predicated region
            $region44: #{fmdb_basic_fwd.21} parent=31 // pred_check
              _
            $region45: #{fmdb_basic_fwd.21} parent=31 // pred_check_branch
              %199 = sbr.rel target = $region47
            $region46: #{fmdb_basic_fwd.21} parent=31 // pred_region
              _
            $region47: #{fmdb_basic_fwd.21} parent=31 // pred_fallthru
              _
          $region32: #{fmdb_basic_fwd.21} parent=27 // pred_fallthru
            _
          %200 = vnop
        $region28: #{fmdb_basic_fwd.21} parent=23 // pred_fallthru
          _
      $region24: #{fmdb_basic_fwd.21} parent=5 // pred_fallthru
        _
      %p201 = scmp.le.s32.totalorder 1, %s9
      %p202 = scmp.lt.s32.totalorder %s9, 3
      %p203 = pnand %p201, %p202
      %p204 = pneg %p203
      // Predicated region
      $region48: #{fmdb_basic_fwd.21} parent=5 // pred_check
        _
      $region49: #{fmdb_basic_fwd.21} parent=5 // pred_check_branch
        %206 = sbr.rel (%p203) target = $region51
      $region50: #{fmdb_basic_fwd.21} parent=5 // pred_region
        %s207 = ssub.s32 %s9, 1
        %s208 = sand.u32 %s22, 1
        %s209 = sand.u32 %s22, 1
        %s210 = smul.addr %s209, 192
        %s211 = scalar_lea.vmem [#allocation2], %s210
        // Predicated region
        $region52: #{fmdb_basic_fwd.21} parent=50 // pred_check
          %p212 = pneg %p35
        $region53: #{fmdb_basic_fwd.21} parent=50 // pred_check_branch
          %214 = sbr.rel (%p212) target = $region55
        $region54: #{fmdb_basic_fwd.21} parent=50 // pred_region
          _
        $region55: #{fmdb_basic_fwd.21} parent=50 // pred_fallthru
          _
        %s215 = sand.u32 %s22, 1
        %s216 = sand.u32 %s22, 1
        %s217 = smul.addr %s216, 192
        %s218 = scalar_lea.vmem [#allocation2], %s217
        %p219 = pneg %p35
        %p220 = pneg %p32
        %p221 = pneg %p56
        %p222 = pneg %p53
        %p223 = pneg %p77
        %p224 = pneg %p74
        %p225 = pneg %p103
        %p226 = pneg %p100
        %s227 = sand.u32 %s90, 1
        %s228 = sand.u32 %s90, 1
        %s229 = smul.addr %s228, 192
        %s230 = scalar_lea.vmem [#allocation3], %s229
        %s231 = smul.u32 8, %s14
        %s232 = smul.u32 8, %s14
        %v233 = vld [vmem:[%s1] sm:$0xff]
        %v234 = vld [vmem:[%s1 + $0x8] sm:$0xff]
        %v235 = vld [vmem:[%s1 + $0x10] sm:$0xff]
        %v236 = vld [vmem:[%s211] sm:$0xff]
        %v237 = vld [vmem:[%s211 + $0x8] sm:$0xff]
        %v238 = vld [vmem:[%s211 + $0x10] sm:$0xff]
        %v239 = vld [vmem:[%s211 + $0x18] sm:$0xff]
        %v240 = vld [vmem:[%s211 + $0x20] sm:$0xff]
        %v241 = vld [vmem:[%s211 + $0x28] sm:$0xff]
        %v242 = vld [vmem:[%s211 + $0x30] sm:$0xff]
        %v243 = vld [vmem:[%s211 + $0x38] sm:$0xff]
        %v244 = vld [vmem:[%s211 + $0x40] sm:$0xff]
        %v245 = vld [vmem:[%s211 + $0x48] sm:$0xff]
        %v246 = vld [vmem:[%s211 + $0x50] sm:$0xff]
        %v247 = vld [vmem:[%s211 + $0x58] sm:$0xff]
        %v248 = vld [vmem:[%s211 + $0x60] sm:$0xff]
        %v249 = vld [vmem:[%s211 + $0x68] sm:$0xff]
        %v250 = vld [vmem:[%s211 + $0x70] sm:$0xff]
        %v251 = vld [vmem:[%s211 + $0x78] sm:$0xff]
        %v252 = vld [vmem:[%s211 + $0x80] sm:$0xff]
        %v253 = vld [vmem:[%s211 + $0x88] sm:$0xff]
        %v254 = vld [vmem:[%s211 + $0x90] sm:$0xff]
        %v255 = vld [vmem:[%s211 + $0x98] sm:$0xff]
        %v256 = vld [vmem:[%s211 + $0xa0] sm:$0xff]
        %v257 = vld [vmem:[%s211 + $0xa8] sm:$0xff]
        %v258 = vld [vmem:[%s211 + $0xb0] sm:$0xff]
        %v259 = vld [vmem:[%s211 + $0xb8] sm:$0xff]
        %v260 = vld [vmem:[%s2] sm:$0xff]
        %v261 = vld [vmem:[%s2 + $0x8] sm:$0xff]
        %v262 = vld [vmem:[%s2 + $0x10] sm:$0xff]
        %264 = vset.pattern.permute.xlu0 0
        %265 = vperm.xlu0 %264, %v260
        %v266 = vpop.permute.xlu0 %265
        %269 = vset.pattern.permute.xlu0 0
        %270 = vperm.xlu0 %269, %v261
        %v271 = vpop.permute.xlu0 %270
        %274 = vset.pattern.permute.xlu0 0
        %275 = vperm.xlu0 %274, %v262
        %v276 = vpop.permute.xlu0 %275
        %vm278 = vcmask 195584
        %v280 = vsel %vm278, %v233, 0
        %v283 = vsel %vm278, %v234, 0
        %v286 = vsel %vm278, %v235, 0
        %288 = vmatprep.subr.mxu0 %v237
        %289 = vmatpush1.msra.mxu0 %v236
        %290 = vmatprep.subr.mxu0 %v245
        %291 = vmatpush1.msra.mxu0 %v244
        %292 = vmatprep.subr.mxu0 %v253
        %293 = vmatpush1.msra.mxu0 %v252
        %294 = vmatprep.subr.mxu0 0.0
        %295 = vmatpush1.msra.mxu0 0.0
        %296 = vmatprep.subr.mxu0 0.0
        %297 = vmatpush1.msra.mxu0 0.0
        %298 = vmatprep.subr.mxu0 0.0
        %299 = vmatpush1.msra.mxu0 0.0
        %300 = vmatprep.subr.mxu0 0.0
        %301 = vmatpush1.msra.mxu0 0.0
        %302 = vmatprep.subr.mxu0 0.0
        %303 = vmatpush1.msra.mxu0 0.0
        %304 = vmatprep.subr.mxu0 0.0
        %305 = vmatpush1.msra.mxu0 0.0
        %306 = vmatprep.subr.mxu0 0.0
        %307 = vmatpush1.msra.mxu0 0.0
        %308 = vmatprep.subr.mxu0 0.0
        %309 = vmatpush1.msra.mxu0 0.0
        %310 = vmatprep.subr.mxu0 0.0
        %311 = vmatpush1.msra.mxu0 0.0
        %312 = vmatprep.subr.mxu0 0.0
        %313 = vmatpush1.msra.mxu0 0.0
        %314 = vmatprep.subr.mxu0 0.0
        %315 = vmatpush1.msra.mxu0 0.0
        %316 = vmatprep.subr.mxu0 0.0
        %317 = vmatpush1.msra.mxu0 0.0
        %318 = vmatprep.subr.mxu0 0.0
        %319 = vmatpush1.msra.mxu0 0.0
        %320 = vmatprep.subr.mxu0 0.0
        %321 = vmatpush1.msra.mxu0 0.0
        %322 = vmatprep.subr.mxu0 0.0
        %323 = vmatpush1.msra.mxu0 0.0
        %324 = vmatprep.subr.mxu0 0.0
        %325 = vmatpush1.msra.mxu0 0.0
        %326 = vmatprep.subr.mxu0 0.0
        %327 = vmatpush1.msra.mxu0 0.0
        %328 = vmatprep.subr.mxu0 0.0
        %329 = vmatpush1.msra.mxu0 0.0
        %330 = vmatprep.subr.mxu0 0.0
        %331 = vmatpush1.msra.mxu0 0.0
        %332 = vmatprep.subr.mxu0 0.0
        %333 = vmatpush1.msra.mxu0 0.0
        %334 = vmatprep.subr.mxu0 0.0
        %335 = vmatpush1.msra.mxu0 0.0
        %336 = vmatprep.subr.mxu0 0.0
        %337 = vmatpush1.msra.mxu0 0.0
        %338 = vmatprep.subr.mxu0 0.0
        %339 = vmatpush1.msra.mxu0 0.0
        %340 = vmatprep.subr.mxu0 0.0
        %341 = vmatpush1.msra.mxu0 0.0
        %342 = vmatprep.subr.mxu0 0.0
        %343 = vmatpush1.msra.mxu0 0.0
        %344 = vmatprep.subr.mxu0 0.0
        %345 = vmatpush1.msra.mxu0 0.0
        %346 = vmatprep.subr.mxu0 0.0
        %347 = vmatpush1.msra.mxu0 0.0
        %348 = vmatprep.subr.mxu0 0.0
        %349 = vmatpush1.msra.mxu0 0.0
        %350 = vmatprep.subr.mxu0 0.0
        %351 = vmatpush1.msra.mxu0 0.0
        %352 = vmatprep.mubr.f32.mxu0 0.0
        %353 = vmatmul.mubr.f32.gmra.mrb[0].mxu0 %v280
        %v354 = vpop.f32.mrb[0].mxu0
        %v355 = vadd.f32 %v266, %v354
        %v356 = vpop.f32.mrb[0].mxu0
        %v357 = vadd.f32 %v266, %v356
        %358 = vmatprep.mubr.f32.mxu0 0.0
        %359 = vmatmul.mubr.f32.gmra.mrb[0].mxu0 %v283
        %v360 = vpop.f32.mrb[0].mxu0
        %v361 = vadd.f32 %v271, %v360
        %v362 = vpop.f32.mrb[0].mxu0
        %v363 = vadd.f32 %v271, %v362
        %364 = vmatprep.mubr.f32.mxu0 0.0
        %365 = vmatmul.mubr.f32.gmra.mrb[0].mxu0 %v286
        %v366 = vpop.f32.mrb[0].mxu0
        %v367 = vadd.f32 %v276, %v366
        %v368 = vpop.f32.mrb[0].mxu0
        %v369 = vadd.f32 %v276, %v368
        %370 = vdwg.mxu0
        %371 = vmatprep.subr.mxu0 %v239
        %372 = vmatpush1.msra.mxu0 %v238
        %373 = vmatprep.subr.mxu0 %v247
        %374 = vmatpush1.msra.mxu0 %v246
        %375 = vmatprep.subr.mxu0 %v255
        %376 = vmatpush1.msra.mxu0 %v254
        %377 = vmatprep.subr.mxu0 0.0
        %378 = vmatpush1.msra.mxu0 0.0
        %379 = vmatprep.subr.mxu0 0.0
        %380 = vmatpush1.msra.mxu0 0.0
        %381 = vmatprep.subr.mxu0 0.0
        %382 = vmatpush1.msra.mxu0 0.0
        %383 = vmatprep.subr.mxu0 0.0
        %384 = vmatpush1.msra.mxu0 0.0
        %385 = vmatprep.subr.mxu0 0.0
        %386 = vmatpush1.msra.mxu0 0.0
        %387 = vmatprep.subr.mxu0 0.0
        %388 = vmatpush1.msra.mxu0 0.0
        %389 = vmatprep.subr.mxu0 0.0
        %390 = vmatpush1.msra.mxu0 0.0
        %391 = vmatprep.subr.mxu0 0.0
        %392 = vmatpush1.msra.mxu0 0.0
        %393 = vmatprep.subr.mxu0 0.0
        %394 = vmatpush1.msra.mxu0 0.0
        %395 = vmatprep.subr.mxu0 0.0
        %396 = vmatpush1.msra.mxu0 0.0
        %397 = vmatprep.subr.mxu0 0.0
        %398 = vmatpush1.msra.mxu0 0.0
        %399 = vmatprep.subr.mxu0 0.0
        %400 = vmatpush1.msra.mxu0 0.0
        %401 = vmatprep.subr.mxu0 0.0
        %402 = vmatpush1.msra.mxu0 0.0
        %403 = vmatprep.subr.mxu0 0.0
        %404 = vmatpush1.msra.mxu0 0.0
        %405 = vmatprep.subr.mxu0 0.0
        %406 = vmatpush1.msra.mxu0 0.0
        %407 = vmatprep.subr.mxu0 0.0
        %408 = vmatpush1.msra.mxu0 0.0
        %409 = vmatprep.subr.mxu0 0.0
        %410 = vmatpush1.msra.mxu0 0.0
        %411 = vmatprep.subr.mxu0 0.0
        %412 = vmatpush1.msra.mxu0 0.0
        %413 = vmatprep.subr.mxu0 0.0
        %414 = vmatpush1.msra.mxu0 0.0
        %415 = vmatprep.subr.mxu0 0.0
        %416 = vmatpush1.msra.mxu0 0.0
        %417 = vmatprep.subr.mxu0 0.0
        %418 = vmatpush1.msra.mxu0 0.0
        %419 = vmatprep.subr.mxu0 0.0
        %420 = vmatpush1.msra.mxu0 0.0
        %421 = vmatprep.subr.mxu0 0.0
        %422 = vmatpush1.msra.mxu0 0.0
        %423 = vmatprep.subr.mxu0 0.0
        %424 = vmatpush1.msra.mxu0 0.0
        %425 = vmatprep.subr.mxu0 0.0
        %426 = vmatpush1.msra.mxu0 0.0
        %427 = vmatprep.subr.mxu0 0.0
        %428 = vmatpush1.msra.mxu0 0.0
        %429 = vmatprep.subr.mxu0 0.0
        %430 = vmatpush1.msra.mxu0 0.0
        %431 = vmatprep.subr.mxu0 0.0
        %432 = vmatpush1.msra.mxu0 0.0
        %433 = vmatprep.subr.mxu0 0.0
        %434 = vmatpush1.msra.mxu0 0.0
        %435 = vmatprep.mubr.f32.mxu0 0.0
        %436 = vmatmul.mubr.f32.gmra.mrb[0].mxu0 %v280
        %v437 = vpop.f32.mrb[0].mxu0
        %v438 = vadd.f32 %v266, %v437
        %v439 = vpop.f32.mrb[0].mxu0
        %v440 = vadd.f32 %v266, %v439
        %441 = vmatprep.mubr.f32.mxu0 0.0
        %442 = vmatmul.mubr.f32.gmra.mrb[0].mxu0 %v283
        %v443 = vpop.f32.mrb[0].mxu0
        %v444 = vadd.f32 %v271, %v443
        %v445 = vpop.f32.mrb[0].mxu0
        %v446 = vadd.f32 %v271, %v445
        %447 = vmatprep.mubr.f32.mxu0 0.0
        %448 = vmatmul.mubr.f32.gmra.mrb[0].mxu0 %v286
        %v449 = vpop.f32.mrb[0].mxu0
        %v450 = vadd.f32 %v276, %v449
        %v451 = vpop.f32.mrb[0].mxu0
        %v452 = vadd.f32 %v276, %v451
        %453 = vdwg.mxu0
        %454 = vmatprep.subr.mxu0 %v241
        %455 = vmatpush1.msra.mxu0 %v240
        %456 = vmatprep.subr.mxu0 %v249
        %457 = vmatpush1.msra.mxu0 %v248
        %458 = vmatprep.subr.mxu0 %v257
        %459 = vmatpush1.msra.mxu0 %v256
        %460 = vmatprep.subr.mxu0 0.0
        %461 = vmatpush1.msra.mxu0 0.0
        %462 = vmatprep.subr.mxu0 0.0
        %463 = vmatpush1.msra.mxu0 0.0
        %464 = vmatprep.subr.mxu0 0.0
        %465 = vmatpush1.msra.mxu0 0.0
        %466 = vmatprep.subr.mxu0 0.0
        %467 = vmatpush1.msra.mxu0 0.0
        %468 = vmatprep.subr.mxu0 0.0
        %469 = vmatpush1.msra.mxu0 0.0
        %470 = vmatprep.subr.mxu0 0.0
        %471 = vmatpush1.msra.mxu0 0.0
        %472 = vmatprep.subr.mxu0 0.0
        %473 = vmatpush1.msra.mxu0 0.0
        %474 = vmatprep.subr.mxu0 0.0
        %475 = vmatpush1.msra.mxu0 0.0
        %476 = vmatprep.subr.mxu0 0.0
        %477 = vmatpush1.msra.mxu0 0.0
        %478 = vmatprep.subr.mxu0 0.0
        %479 = vmatpush1.msra.mxu0 0.0
        %480 = vmatprep.subr.mxu0 0.0
        %481 = vmatpush1.msra.mxu0 0.0
        %482 = vmatprep.subr.mxu0 0.0
        %483 = vmatpush1.msra.mxu0 0.0
        %484 = vmatprep.subr.mxu0 0.0
        %485 = vmatpush1.msra.mxu0 0.0
        %486 = vmatprep.subr.mxu0 0.0
        %487 = vmatpush1.msra.mxu0 0.0
        %488 = vmatprep.subr.mxu0 0.0
        %489 = vmatpush1.msra.mxu0 0.0
        %490 = vmatprep.subr.mxu0 0.0
        %491 = vmatpush1.msra.mxu0 0.0
        %492 = vmatprep.subr.mxu0 0.0
        %493 = vmatpush1.msra.mxu0 0.0
        %494 = vmatprep.subr.mxu0 0.0
        %495 = vmatpush1.msra.mxu0 0.0
        %496 = vmatprep.subr.mxu0 0.0
        %497 = vmatpush1.msra.mxu0 0.0
        %498 = vmatprep.subr.mxu0 0.0
        %499 = vmatpush1.msra.mxu0 0.0
        %500 = vmatprep.subr.mxu0 0.0
        %501 = vmatpush1.msra.mxu0 0.0
        %502 = vmatprep.subr.mxu0 0.0
        %503 = vmatpush1.msra.mxu0 0.0
        %504 = vmatprep.subr.mxu0 0.0
        %505 = vmatpush1.msra.mxu0 0.0
        %506 = vmatprep.subr.mxu0 0.0
        %507 = vmatpush1.msra.mxu0 0.0
        %508 = vmatprep.subr.mxu0 0.0
        %509 = vmatpush1.msra.mxu0 0.0
        %510 = vmatprep.subr.mxu0 0.0
        %511 = vmatpush1.msra.mxu0 0.0
        %512 = vmatprep.subr.mxu0 0.0
        %513 = vmatpush1.msra.mxu0 0.0
        %514 = vmatprep.subr.mxu0 0.0
        %515 = vmatpush1.msra.mxu0 0.0
        %516 = vmatprep.subr.mxu0 0.0
        %517 = vmatpush1.msra.mxu0 0.0
        %518 = vmatprep.mubr.f32.mxu0 0.0
        %519 = vmatmul.mubr.f32.gmra.mrb[0].mxu0 %v280
        %v520 = vpop.f32.mrb[0].mxu0
        %v521 = vadd.f32 %v266, %v520
        %v522 = vpop.f32.mrb[0].mxu0
        %v523 = vadd.f32 %v266, %v522
        %524 = vmatprep.mubr.f32.mxu0 0.0
        %525 = vmatmul.mubr.f32.gmra.mrb[0].mxu0 %v283
        %v526 = vpop.f32.mrb[0].mxu0
        %v527 = vadd.f32 %v271, %v526
        %v528 = vpop.f32.mrb[0].mxu0
        %v529 = vadd.f32 %v271, %v528
        %530 = vmatprep.mubr.f32.mxu0 0.0
        %531 = vmatmul.mubr.f32.gmra.mrb[0].mxu0 %v286
        %v532 = vpop.f32.mrb[0].mxu0
        %v533 = vadd.f32 %v276, %v532
        %v534 = vpop.f32.mrb[0].mxu0
        %v535 = vadd.f32 %v276, %v534
        %536 = vdwg.mxu0
        %537 = vmatprep.subr.mxu0 %v243
        %538 = vmatpush1.msra.mxu0 %v242
        %539 = vmatprep.subr.mxu0 %v251
        %540 = vmatpush1.msra.mxu0 %v250
        %541 = vmatprep.subr.mxu0 %v259
        %542 = vmatpush1.msra.mxu0 %v258
        %543 = vmatprep.subr.mxu0 0.0
        %544 = vmatpush1.msra.mxu0 0.0
        %545 = vmatprep.subr.mxu0 0.0
        %546 = vmatpush1.msra.mxu0 0.0
        %547 = vmatprep.subr.mxu0 0.0
        %548 = vmatpush1.msra.mxu0 0.0
        %549 = vmatprep.subr.mxu0 0.0
        %550 = vmatpush1.msra.mxu0 0.0
        %551 = vmatprep.subr.mxu0 0.0
        %552 = vmatpush1.msra.mxu0 0.0
        %553 = vmatprep.subr.mxu0 0.0
        %554 = vmatpush1.msra.mxu0 0.0
        %555 = vmatprep.subr.mxu0 0.0
        %556 = vmatpush1.msra.mxu0 0.0
        %557 = vmatprep.subr.mxu0 0.0
        %558 = vmatpush1.msra.mxu0 0.0
        %559 = vmatprep.subr.mxu0 0.0
        %560 = vmatpush1.msra.mxu0 0.0
        %561 = vmatprep.subr.mxu0 0.0
        %562 = vmatpush1.msra.mxu0 0.0
        %563 = vmatprep.subr.mxu0 0.0
        %564 = vmatpush1.msra.mxu0 0.0
        %565 = vmatprep.subr.mxu0 0.0
        %566 = vmatpush1.msra.mxu0 0.0
        %567 = vmatprep.subr.mxu0 0.0
        %568 = vmatpush1.msra.mxu0 0.0
        %569 = vmatprep.subr.mxu0 0.0
        %570 = vmatpush1.msra.mxu0 0.0
        %571 = vmatprep.subr.mxu0 0.0
        %572 = vmatpush1.msra.mxu0 0.0
        %573 = vmatprep.subr.mxu0 0.0
        %574 = vmatpush1.msra.mxu0 0.0
        %575 = vmatprep.subr.mxu0 0.0
        %576 = vmatpush1.msra.mxu0 0.0
        %577 = vmatprep.subr.mxu0 0.0
        %578 = vmatpush1.msra.mxu0 0.0
        %579 = vmatprep.subr.mxu0 0.0
        %580 = vmatpush1.msra.mxu0 0.0
        %581 = vmatprep.subr.mxu0 0.0
        %582 = vmatpush1.msra.mxu0 0.0
        %583 = vmatprep.subr.mxu0 0.0
        %584 = vmatpush1.msra.mxu0 0.0
        %585 = vmatprep.subr.mxu0 0.0
        %586 = vmatpush1.msra.mxu0 0.0
        %587 = vmatprep.subr.mxu0 0.0
        %588 = vmatpush1.msra.mxu0 0.0
        %589 = vmatprep.subr.mxu0 0.0
        %590 = vmatpush1.msra.mxu0 0.0
        %591 = vmatprep.subr.mxu0 0.0
        %592 = vmatpush1.msra.mxu0 0.0
        %593 = vmatprep.subr.mxu0 0.0
        %594 = vmatpush1.msra.mxu0 0.0
        %595 = vmatprep.subr.mxu0 0.0
        %596 = vmatpush1.msra.mxu0 0.0
        %597 = vmatprep.subr.mxu0 0.0
        %598 = vmatpush1.msra.mxu0 0.0
        %599 = vmatprep.subr.mxu0 0.0
        %600 = vmatpush1.msra.mxu0 0.0
        %601 = vmatprep.mubr.f32.mxu0 0.0
        %602 = vmatmul.mubr.f32.gmra.mrb[0].mxu0 %v280
        %v603 = vpop.f32.mrb[0].mxu0
        %v604 = vadd.f32 %v266, %v603
        %v605 = vpop.f32.mrb[0].mxu0
        %v606 = vadd.f32 %v266, %v605
        %607 = vmatprep.mubr.f32.mxu0 0.0
        %608 = vmatmul.mubr.f32.gmra.mrb[0].mxu0 %v283
        %v609 = vpop.f32.mrb[0].mxu0
        %v610 = vadd.f32 %v271, %v609
        %v611 = vpop.f32.mrb[0].mxu0
        %v612 = vadd.f32 %v271, %v611
        %613 = vmatprep.mubr.f32.mxu0 0.0
        %614 = vmatmul.mubr.f32.gmra.mrb[0].mxu0 %v286
        %v615 = vpop.f32.mrb[0].mxu0
        %v616 = vadd.f32 %v276, %v615
        %v617 = vpop.f32.mrb[0].mxu0
        %v618 = vadd.f32 %v276, %v617
        %619 = vdwg.mxu0
        %620 = vst [vmem:[%s230] sm:$0xff] %v355
        %621 = vst [vmem:[%s230 + $0x8] sm:$0xff] %v357
        %622 = vst [vmem:[%s230 + $0x10] sm:$0xff] %v438
        %623 = vst [vmem:[%s230 + $0x18] sm:$0xff] %v440
        %624 = vst [vmem:[%s230 + $0x20] sm:$0xff] %v521
        %625 = vst [vmem:[%s230 + $0x28] sm:$0xff] %v523
        %626 = vst [vmem:[%s230 + $0x30] sm:$0xff] %v604
        %627 = vst [vmem:[%s230 + $0x38] sm:$0xff] %v606
        %628 = vst [vmem:[%s230 + $0x40] sm:$0xff] %v361
        %629 = vst [vmem:[%s230 + $0x48] sm:$0xff] %v363
        %630 = vst [vmem:[%s230 + $0x50] sm:$0xff] %v444
        %631 = vst [vmem:[%s230 + $0x58] sm:$0xff] %v446
        %632 = vst [vmem:[%s230 + $0x60] sm:$0xff] %v527
        %633 = vst [vmem:[%s230 + $0x68] sm:$0xff] %v529
        %634 = vst [vmem:[%s230 + $0x70] sm:$0xff] %v610
        %635 = vst [vmem:[%s230 + $0x78] sm:$0xff] %v612
        %636 = vst [vmem:[%s230 + $0x80] sm:$0xff] %v367
        %637 = vst [vmem:[%s230 + $0x88] sm:$0xff] %v369
        %638 = vst [vmem:[%s230 + $0x90] sm:$0xff] %v450
        %639 = vst [vmem:[%s230 + $0x98] sm:$0xff] %v452
        %640 = vst [vmem:[%s230 + $0xa0] sm:$0xff] %v533
        %641 = vst [vmem:[%s230 + $0xa8] sm:$0xff] %v535
        %642 = vst [vmem:[%s230 + $0xb0] sm:$0xff] %v616
        %643 = vst [vmem:[%s230 + $0xb8] sm:$0xff] %v618
        %s644 = sand.u32 %s90, 1
        %s645 = sand.u32 %s90, 1
        %s646 = smul.addr %s645, 192
        %s647 = scalar_lea.vmem [#allocation3], %s646
        // Predicated region
        $region56: #{fmdb_basic_fwd.21} parent=50 // pred_check
          %p648 = pneg %p100
        $region57: #{fmdb_basic_fwd.21} parent=50 // pred_check_branch
          %650 = sbr.rel (%p648) target = $region59
        $region58: #{fmdb_basic_fwd.21} parent=50 // pred_region
          %s651 = smul.u32 8, %s14
          %s652 = smul.addr %s651, 8
          %s653 = scalar_lea.vmem %s3, %s652
          // Predicated region
          $region60: #{fmdb_basic_fwd.21} parent=58 // pred_check
            _
          $region61: #{fmdb_basic_fwd.21} parent=58 // pred_check_branch
            %655 = sbr.rel (0) target = $region63
          $region62: #{fmdb_basic_fwd.21} parent=58 // pred_region
            // Predicated region
            $region64: #{fmdb_basic_fwd.21} parent=62 // pred_check
              _
            $region65: #{fmdb_basic_fwd.21} parent=62 // pred_check_branch
              %657 = sbr.rel (0) target = $region67
            $region66: #{fmdb_basic_fwd.21} parent=62 // pred_region
              loop: start=0, step=1, limit=1
              $region68: #{fmdb_basic_fwd.21} parent=66 // loop_pre_header
                _
              $region69: #{fmdb_basic_fwd.21} parent=66 // loop_header
                %s659 = sphi 0, %s663
                %p660 = scmp.ge.s32.totalorder %s659, 1
                %s664 = sphi %s647, %s647
                %s665 = sphi %s653, %s653
              $region70: #{fmdb_basic_fwd.21} parent=66 // loop_header_branch
                %662 = sbr.rel (%p660) target = $region74
              $region71: #{fmdb_basic_fwd.21} parent=66 // loop_body
                %v666 = vld [vmem:[%s664] sm:$0xff]
                %667 = vst [vmem:[%s665] sm:$0xff] %v666
                %v668 = vld [vmem:[%s664 + $0x8] sm:$0xff]
                %669 = vst [vmem:[%s665 + $0x8] sm:$0xff] %v668
                %v670 = vld [vmem:[%s664 + $0x10] sm:$0xff]
                %671 = vst [vmem:[%s665 + $0x10] sm:$0xff] %v670
                %v672 = vld [vmem:[%s664 + $0x18] sm:$0xff]
                %673 = vst [vmem:[%s665 + $0x18] sm:$0xff] %v672
                %v674 = vld [vmem:[%s664 + $0x20] sm:$0xff]
                %675 = vst [vmem:[%s665 + $0x20] sm:$0xff] %v674
                %v676 = vld [vmem:[%s664 + $0x28] sm:$0xff]
                %677 = vst [vmem:[%s665 + $0x28] sm:$0xff] %v676
                %v678 = vld [vmem:[%s664 + $0x30] sm:$0xff]
                %679 = vst [vmem:[%s665 + $0x30] sm:$0xff] %v678
                %v680 = vld [vmem:[%s664 + $0x38] sm:$0xff]
                %681 = vst [vmem:[%s665 + $0x38] sm:$0xff] %v680
                %v682 = vld [vmem:[%s664 + $0x40] sm:$0xff]
                %683 = vst [vmem:[%s665 + $0x80] sm:$0xff] %v682
                %v684 = vld [vmem:[%s664 + $0x48] sm:$0xff]
                %685 = vst [vmem:[%s665 + $0x88] sm:$0xff] %v684
                %v686 = vld [vmem:[%s664 + $0x50] sm:$0xff]
                %687 = vst [vmem:[%s665 + $0x90] sm:$0xff] %v686
                %v688 = vld [vmem:[%s664 + $0x58] sm:$0xff]
                %689 = vst [vmem:[%s665 + $0x98] sm:$0xff] %v688
                %v690 = vld [vmem:[%s664 + $0x60] sm:$0xff]
                %691 = vst [vmem:[%s665 + $0xa0] sm:$0xff] %v690
                %v692 = vld [vmem:[%s664 + $0x68] sm:$0xff]
                %693 = vst [vmem:[%s665 + $0xa8] sm:$0xff] %v692
                %v694 = vld [vmem:[%s664 + $0x70] sm:$0xff]
                %695 = vst [vmem:[%s665 + $0xb0] sm:$0xff] %v694
                %v696 = vld [vmem:[%s664 + $0x78] sm:$0xff]
                %697 = vst [vmem:[%s665 + $0xb8] sm:$0xff] %v696
                %v698 = vld [vmem:[%s664 + $0x80] sm:$0xff]
                %699 = vst [vmem:[%s665 + $0x100] sm:$0xff] %v698
                %v700 = vld [vmem:[%s664 + $0x88] sm:$0xff]
                %701 = vst [vmem:[%s665 + $0x108] sm:$0xff] %v700
                %v702 = vld [vmem:[%s664 + $0x90] sm:$0xff]
                %703 = vst [vmem:[%s665 + $0x110] sm:$0xff] %v702
                %v704 = vld [vmem:[%s664 + $0x98] sm:$0xff]
                %705 = vst [vmem:[%s665 + $0x118] sm:$0xff] %v704
                %v706 = vld [vmem:[%s664 + $0xa0] sm:$0xff]
                %707 = vst [vmem:[%s665 + $0x120] sm:$0xff] %v706
                %v708 = vld [vmem:[%s664 + $0xa8] sm:$0xff]
                %709 = vst [vmem:[%s665 + $0x128] sm:$0xff] %v708
                %v710 = vld [vmem:[%s664 + $0xb0] sm:$0xff]
                %711 = vst [vmem:[%s665 + $0x130] sm:$0xff] %v710
                %v712 = vld [vmem:[%s664 + $0xb8] sm:$0xff]
                %713 = vst [vmem:[%s665 + $0x138] sm:$0xff] %v712
              $region72: #{fmdb_basic_fwd.21} parent=66 // loop_footer
                %s663 = sadd.s32 1, %s659
              $region73: #{fmdb_basic_fwd.21} parent=66 // loop_footer_branch
                %658 = sbr.rel target = $region69
              $region74: #{fmdb_basic_fwd.21} parent=66 // loop_exit
                _
            $region67: #{fmdb_basic_fwd.21} parent=62 // pred_fallthru
              _
            // Predicated region
            $region75: #{fmdb_basic_fwd.21} parent=62 // pred_check
              _
            $region76: #{fmdb_basic_fwd.21} parent=62 // pred_check_branch
              %715 = sbr.rel target = $region78
            $region77: #{fmdb_basic_fwd.21} parent=62 // pred_region
              _
            $region78: #{fmdb_basic_fwd.21} parent=62 // pred_fallthru
              _
          $region63: #{fmdb_basic_fwd.21} parent=58 // pred_fallthru
            _
          %716 = vnop
        $region59: #{fmdb_basic_fwd.21} parent=50 // pred_fallthru
          _
      $region51: #{fmdb_basic_fwd.21} parent=5 // pred_fallthru
        _
      %p717 = scmp.le.s32.totalorder 2, %s9
      // Predicated region
      $region79: #{fmdb_basic_fwd.21} parent=5 // pred_check
        %p718 = pneg %p717
      $region80: #{fmdb_basic_fwd.21} parent=5 // pred_check_branch
        %720 = sbr.rel (%p718) target = $region82
      $region81: #{fmdb_basic_fwd.21} parent=5 // pred_region
        %s721 = ssub.s32 %s9, 2
        // Predicated region
        $region83: #{fmdb_basic_fwd.21} parent=81 // pred_check
          %p722 = pneg %p106
        $region84: #{fmdb_basic_fwd.21} parent=81 // pred_check_branch
          %724 = sbr.rel (%p722) target = $region86
        $region85: #{fmdb_basic_fwd.21} parent=81 // pred_region
          %s725 = sand.u32 %s91, 1
          %s726 = sand.u32 %s91, 1
          %s727 = smul.addr %s726, 192
          %s728 = scalar_lea.vmem [#allocation3], %s727
        $region86: #{fmdb_basic_fwd.21} parent=81 // pred_fallthru
          _
      $region82: #{fmdb_basic_fwd.21} parent=5 // pred_fallthru
        _
    $region6: #{fmdb_basic_fwd.21} parent=1 // loop_footer
      %s13 = sadd.s32 1, %s9
    $region7: #{fmdb_basic_fwd.21} parent=1 // loop_footer_branch
      %8 = sbr.rel target = $region3
    $region8: #{fmdb_basic_fwd.21} parent=1 // loop_exit
      _

// kernel: fmdb_basic_fwd.26
$region0: #{fmdb_basic_fwd.26}
  #allocation0 [shape = 'u32[]', space=smem, size = 0x4, offset = 0x4, fixed_abs, tag = 'smem constant byte address 0x4 - core index']
  #allocation1 [shape = 'u32[144,128]{1,0:T(1,128)}', space=vmem, size = 0x12000, scoped, tag = 'internal scratch']
  %s0 = inlined_call_operand.vmem [shape: f32[24,2048], index: 0, kind: input, shape index: {}]
  %s1 = inlined_call_operand.vmem [shape: f32[12,24], index: 1, kind: input, shape index: {}]
  %s2 = inlined_call_operand.vmem [shape: f32[12,1], index: 2, kind: input, shape index: {}]
  %s3 = inlined_call_operand.vmem [shape: f32[12,2048], index: 3, kind: output, shape index: {}]
  %s4 = sld [smem:[#allocation0]]
  $region87: #{fmdb_basic_fwd.26} parent=0
    _
  %s6 = ssub.s32 1, %s4
  %s7 = scalar_select 0, %s6, %s4
  $region1: #{fmdb_basic_fwd.26} parent=0
    #allocation2 [shape = 'u8[196608]{0}', space=vmem, size = 0x30000, scoped, tag = 'input window, operand 0']
    #allocation3 [shape = 'u8[131072]{0}', space=vmem, size = 0x20000, scoped, tag = 'output window, operand 0']
    loop: start=0, step=1, limit=4
    $region2: #{fmdb_basic_fwd.26} parent=1 // loop_pre_header
      _
    $region3: #{fmdb_basic_fwd.26} parent=1 // loop_header
      %s9 = sphi 0, %s13
      %p10 = scmp.ge.s32.totalorder %s9, 4
      %s19 = sphi 0, %s21
      %s22 = sphi 0, %s19
      %s23 = sphi 0, %s22
      %s39 = sphi 0, %s23
      %s43 = sphi 0, %s43
      %s45 = sphi 0, %s43
      %s46 = sphi 0, %s45
      %s60 = sphi 0, %s46
      %s64 = sphi 0, %s64
      %s66 = sphi 0, %s64
      %s67 = sphi 0, %s66
      %s81 = sphi 0, %s67
      %s87 = sphi 0, %s89
      %s90 = sphi 0, %s87
      %s91 = sphi 0, %s90
      %s107 = sphi 0, %s91
    $region4: #{fmdb_basic_fwd.26} parent=1 // loop_header_branch
      %12 = sbr.rel (%p10) target = $region8
    $region5: #{fmdb_basic_fwd.26} parent=1 // loop_body
      %s14 = ssub.s32 %s9, 1
      %s15 = ssub.s32 %s9, 2
      %s16 = sadd.s32 %s9, 1
      %s17 = ssub.s32 %s9, %s16
      %p18 = scmp.eq.s32.totalorder %s17, 0
      %s20 = sadd.s32 %s19, 1
      %s21 = scalar_select %p18, %s19, %s20
      %p24 = pneg %p18
      %p25 = scmp.eq.s32.totalorder %s9, 1
      %p26 = por %p24, %p25
      %p27 = scmp.ne.s32.totalorder %s19, %s22
      %p28 = scmp.eq.s32.totalorder %s9, 0
      %p29 = por %p27, %p28
      %p30 = scmp.ne.s32.totalorder %s19, %s22
      %p31 = scmp.eq.s32.totalorder %s14, 1
      %p32 = por %p30, %p31
      %p33 = scmp.ne.s32.totalorder %s22, %s23
      %p34 = scmp.eq.s32.totalorder %s14, 0
      %p35 = por %p33, %p34
      %p36 = scmp.ne.s32.totalorder %s22, %s23
      %p37 = scmp.eq.s32.totalorder %s15, 1
      %p38 = por %p36, %p37
      %p40 = scmp.ne.s32.totalorder %s23, %s39
      %p41 = scmp.eq.s32.totalorder %s15, 0
      %p42 = por %p40, %p41
      %s44 = sadd.s32 %s43, 1
      %p47 = scmp.eq.s32.totalorder %s9, 1
      %p48 = scmp.ne.s32.totalorder %s43, %s45
      %p49 = scmp.eq.s32.totalorder %s9, 0
      %p50 = por %p48, %p49
      %p51 = scmp.ne.s32.totalorder %s43, %s45
      %p52 = scmp.eq.s32.totalorder %s14, 1
      %p53 = por %p51, %p52
      %p54 = scmp.ne.s32.totalorder %s45, %s46
      %p55 = scmp.eq.s32.totalorder %s14, 0
      %p56 = por %p54, %p55
      %p57 = scmp.ne.s32.totalorder %s45, %s46
      %p58 = scmp.eq.s32.totalorder %s15, 1
      %p59 = por %p57, %p58
      %p61 = scmp.ne.s32.totalorder %s46, %s60
      %p62 = scmp.eq.s32.totalorder %s15, 0
      %p63 = por %p61, %p62
      %s65 = sadd.s32 %s64, 1
      %p68 = scmp.eq.s32.totalorder %s9, 1
      %p69 = scmp.ne.s32.totalorder %s64, %s66
      %p70 = scmp.eq.s32.totalorder %s9, 0
      %p71 = por %p69, %p70
      %p72 = scmp.ne.s32.totalorder %s64, %s66
      %p73 = scmp.eq.s32.totalorder %s14, 1
      %p74 = por %p72, %p73
      %p75 = scmp.ne.s32.totalorder %s66, %s67
      %p76 = scmp.eq.s32.totalorder %s14, 0
      %p77 = por %p75, %p76
      %p78 = scmp.ne.s32.totalorder %s66, %s67
      %p79 = scmp.eq.s32.totalorder %s15, 1
      %p80 = por %p78, %p79
      %p82 = scmp.ne.s32.totalorder %s67, %s81
      %p83 = scmp.eq.s32.totalorder %s15, 0
      %p84 = por %p82, %p83
      %s85 = ssub.s32 %s9, %s16
      %p86 = scmp.eq.s32.totalorder %s85, 0
      %s88 = sadd.s32 %s87, 1
      %s89 = scalar_select %p86, %s87, %s88
      %p92 = pneg %p86
      %p93 = scmp.eq.s32.totalorder %s9, 1
      %p94 = por %p92, %p93
      %p95 = scmp.ne.s32.totalorder %s87, %s90
      %p96 = scmp.eq.s32.totalorder %s9, 0
      %p97 = por %p95, %p96
      %p98 = scmp.ne.s32.totalorder %s87, %s90
      %p99 = scmp.eq.s32.totalorder %s14, 1
      %p100 = por %p98, %p99
      %p101 = scmp.ne.s32.totalorder %s90, %s91
      %p102 = scmp.eq.s32.totalorder %s14, 0
      %p103 = por %p101, %p102
      %p104 = scmp.ne.s32.totalorder %s90, %s91
      %p105 = scmp.eq.s32.totalorder %s15, 1
      %p106 = por %p104, %p105
      %p108 = scmp.ne.s32.totalorder %s91, %s107
      %p109 = scmp.eq.s32.totalorder %s15, 0
      %p110 = por %p108, %p109
      %p111 = scmp.le.s32.totalorder 1, %s9
      %p112 = scmp.lt.s32.totalorder %s9, 3
      %p113 = pnand %p111, %p112
      %p114 = pneg %p113
      // Predicated region
      $region9: #{fmdb_basic_fwd.26} parent=5 // pred_check
        _
      $region10: #{fmdb_basic_fwd.26} parent=5 // pred_check_branch
        %116 = sbr.rel (%p113) target = $region12
      $region11: #{fmdb_basic_fwd.26} parent=5 // pred_region
        %s117 = ssub.s32 %s9, 1
        // Predicated region
        $region13: #{fmdb_basic_fwd.26} parent=11 // pred_check
          %p118 = pneg %p56
        $region14: #{fmdb_basic_fwd.26} parent=11 // pred_check_branch
          %120 = sbr.rel (%p118) target = $region16
        $region15: #{fmdb_basic_fwd.26} parent=11 // pred_region
          _
        $region16: #{fmdb_basic_fwd.26} parent=11 // pred_fallthru
          _
        // Predicated region
        $region17: #{fmdb_basic_fwd.26} parent=11 // pred_check
          %p121 = pneg %p77
        $region18: #{fmdb_basic_fwd.26} parent=11 // pred_check_branch
          %123 = sbr.rel (%p121) target = $region20
        $region19: #{fmdb_basic_fwd.26} parent=11 // pred_region
          _
        $region20: #{fmdb_basic_fwd.26} parent=11 // pred_fallthru
          _
      $region12: #{fmdb_basic_fwd.26} parent=5 // pred_fallthru
        _
      %p124 = scmp.lt.s32.totalorder %s9, 2
      // Predicated region
      $region21: #{fmdb_basic_fwd.26} parent=5 // pred_check
        %p125 = pneg %p124
      $region22: #{fmdb_basic_fwd.26} parent=5 // pred_check_branch
        %127 = sbr.rel (%p125) target = $region24
      $region23: #{fmdb_basic_fwd.26} parent=5 // pred_region
        // Predicated region
        $region25: #{fmdb_basic_fwd.26} parent=23 // pred_check
          %p128 = pneg %p29
        $region26: #{fmdb_basic_fwd.26} parent=23 // pred_check_branch
          %130 = sbr.rel (%p128) target = $region28
        $region27: #{fmdb_basic_fwd.26} parent=23 // pred_region
          %s131 = sand.u32 %s19, 1
          %s132 = sand.u32 %s19, 1
          %s133 = smul.addr %s132, 192
          %s134 = scalar_lea.vmem [#allocation2], %s133
          %s135 = smul.u32 8, %s9
          %s136 = smul.addr %s135, 8
          %s137 = scalar_lea.vmem %s0, %s136
          // Predicated region
          $region29: #{fmdb_basic_fwd.26} parent=27 // pred_check
            _
          $region30: #{fmdb_basic_fwd.26} parent=27 // pred_check_branch
            %139 = sbr.rel (0) target = $region32
          $region31: #{fmdb_basic_fwd.26} parent=27 // pred_region
            // Predicated region
            $region33: #{fmdb_basic_fwd.26} parent=31 // pred_check
              _
            $region34: #{fmdb_basic_fwd.26} parent=31 // pred_check_branch
              %141 = sbr.rel (0) target = $region36
            $region35: #{fmdb_basic_fwd.26} parent=31 // pred_region
              loop: start=0, step=1, limit=1
              $region37: #{fmdb_basic_fwd.26} parent=35 // loop_pre_header
                _
              $region38: #{fmdb_basic_fwd.26} parent=35 // loop_header
                %s143 = sphi 0, %s147
                %p144 = scmp.ge.s32.totalorder %s143, 1
                %s148 = sphi %s137, %s137
                %s149 = sphi %s134, %s134
              $region39: #{fmdb_basic_fwd.26} parent=35 // loop_header_branch
                %146 = sbr.rel (%p144) target = $region43
              $region40: #{fmdb_basic_fwd.26} parent=35 // loop_body
                %v150 = vld [vmem:[%s148] sm:$0xff]
                %151 = vst [vmem:[%s149] sm:$0xff] %v150
                %v152 = vld [vmem:[%s148 + $0x8] sm:$0xff]
                %153 = vst [vmem:[%s149 + $0x8] sm:$0xff] %v152
                %v154 = vld [vmem:[%s148 + $0x10] sm:$0xff]
                %155 = vst [vmem:[%s149 + $0x10] sm:$0xff] %v154
                %v156 = vld [vmem:[%s148 + $0x18] sm:$0xff]
                %157 = vst [vmem:[%s149 + $0x18] sm:$0xff] %v156
                %v158 = vld [vmem:[%s148 + $0x20] sm:$0xff]
                %159 = vst [vmem:[%s149 + $0x20] sm:$0xff] %v158
                %v160 = vld [vmem:[%s148 + $0x28] sm:$0xff]
                %161 = vst [vmem:[%s149 + $0x28] sm:$0xff] %v160
                %v162 = vld [vmem:[%s148 + $0x30] sm:$0xff]
                %163 = vst [vmem:[%s149 + $0x30] sm:$0xff] %v162
                %v164 = vld [vmem:[%s148 + $0x38] sm:$0xff]
                %165 = vst [vmem:[%s149 + $0x38] sm:$0xff] %v164
                %v166 = vld [vmem:[%s148 + $0x80] sm:$0xff]
                %167 = vst [vmem:[%s149 + $0x40] sm:$0xff] %v166
                %v168 = vld [vmem:[%s148 + $0x88] sm:$0xff]
                %169 = vst [vmem:[%s149 + $0x48] sm:$0xff] %v168
                %v170 = vld [vmem:[%s148 + $0x90] sm:$0xff]
                %171 = vst [vmem:[%s149 + $0x50] sm:$0xff] %v170
                %v172 = vld [vmem:[%s148 + $0x98] sm:$0xff]
                %173 = vst [vmem:[%s149 + $0x58] sm:$0xff] %v172
                %v174 = vld [vmem:[%s148 + $0xa0] sm:$0xff]
                %175 = vst [vmem:[%s149 + $0x60] sm:$0xff] %v174
                %v176 = vld [vmem:[%s148 + $0xa8] sm:$0xff]
                %177 = vst [vmem:[%s149 + $0x68] sm:$0xff] %v176
                %v178 = vld [vmem:[%s148 + $0xb0] sm:$0xff]
                %179 = vst [vmem:[%s149 + $0x70] sm:$0xff] %v178
                %v180 = vld [vmem:[%s148 + $0xb8] sm:$0xff]
                %181 = vst [vmem:[%s149 + $0x78] sm:$0xff] %v180
                %v182 = vld [vmem:[%s148 + $0x100] sm:$0xff]
                %183 = vst [vmem:[%s149 + $0x80] sm:$0xff] %v182
                %v184 = vld [vmem:[%s148 + $0x108] sm:$0xff]
                %185 = vst [vmem:[%s149 + $0x88] sm:$0xff] %v184
                %v186 = vld [vmem:[%s148 + $0x110] sm:$0xff]
                %187 = vst [vmem:[%s149 + $0x90] sm:$0xff] %v186
                %v188 = vld [vmem:[%s148 + $0x118] sm:$0xff]
                %189 = vst [vmem:[%s149 + $0x98] sm:$0xff] %v188
                %v190 = vld [vmem:[%s148 + $0x120] sm:$0xff]
                %191 = vst [vmem:[%s149 + $0xa0] sm:$0xff] %v190
                %v192 = vld [vmem:[%s148 + $0x128] sm:$0xff]
                %193 = vst [vmem:[%s149 + $0xa8] sm:$0xff] %v192
                %v194 = vld [vmem:[%s148 + $0x130] sm:$0xff]
                %195 = vst [vmem:[%s149 + $0xb0] sm:$0xff] %v194
                %v196 = vld [vmem:[%s148 + $0x138] sm:$0xff]
                %197 = vst [vmem:[%s149 + $0xb8] sm:$0xff] %v196
              $region41: #{fmdb_basic_fwd.26} parent=35 // loop_footer
                %s147 = sadd.s32 1, %s143
              $region42: #{fmdb_basic_fwd.26} parent=35 // loop_footer_branch
                %142 = sbr.rel target = $region38
              $region43: #{fmdb_basic_fwd.26} parent=35 // loop_exit
                _
            $region36: #{fmdb_basic_fwd.26} parent=31 // pred_fallthru
              _
            // Predicated region
            $region44: #{fmdb_basic_fwd.26} parent=31 // pred_check
              _
            $region45: #{fmdb_basic_fwd.26} parent=31 // pred_check_branch
              %199 = sbr.rel target = $region47
            $region46: #{fmdb_basic_fwd.26} parent=31 // pred_region
              _
            $region47: #{fmdb_basic_fwd.26} parent=31 // pred_fallthru
              _
          $region32: #{fmdb_basic_fwd.26} parent=27 // pred_fallthru
            _
          %200 = vnop
        $region28: #{fmdb_basic_fwd.26} parent=23 // pred_fallthru
          _
      $region24: #{fmdb_basic_fwd.26} parent=5 // pred_fallthru
        _
      %p201 = scmp.le.s32.totalorder 1, %s9
      %p202 = scmp.lt.s32.totalorder %s9, 3
      %p203 = pnand %p201, %p202
      %p204 = pneg %p203
      // Predicated region
      $region48: #{fmdb_basic_fwd.26} parent=5 // pred_check
        _
      $region49: #{fmdb_basic_fwd.26} parent=5 // pred_check_branch
        %206 = sbr.rel (%p203) target = $region51
      $region50: #{fmdb_basic_fwd.26} parent=5 // pred_region
        %s207 = ssub.s32 %s9, 1
        %s208 = sand.u32 %s22, 1
        %s209 = sand.u32 %s22, 1
        %s210 = smul.addr %s209, 192
        %s211 = scalar_lea.vmem [#allocation2], %s210
        // Predicated region
        $region52: #{fmdb_basic_fwd.26} parent=50 // pred_check
          %p212 = pneg %p35
        $region53: #{fmdb_basic_fwd.26} parent=50 // pred_check_branch
          %214 = sbr.rel (%p212) target = $region55
        $region54: #{fmdb_basic_fwd.26} parent=50 // pred_region
          _
        $region55: #{fmdb_basic_fwd.26} parent=50 // pred_fallthru
          _
        %s215 = sand.u32 %s22, 1
        %s216 = sand.u32 %s22, 1
        %s217 = smul.addr %s216, 192
        %s218 = scalar_lea.vmem [#allocation2], %s217
        %p219 = pneg %p35
        %p220 = pneg %p32
        %p221 = pneg %p56
        %p222 = pneg %p53
        %p223 = pneg %p77
        %p224 = pneg %p74
        %p225 = pneg %p103
        %p226 = pneg %p100
        %s227 = sand.u32 %s90, 1
        %s228 = sand.u32 %s90, 1
        %s229 = smul.addr %s228, 128
        %s230 = scalar_lea.vmem [#allocation3], %s229
        %s231 = smul.u32 8, %s14
        %s232 = smul.u32 8, %s14
        %v233 = vld [vmem:[%s1] sm:$0xff]
        %v234 = vld [vmem:[%s1 + $0x8] sm:$0xf]
        %v235 = vld [vmem:[%s211] sm:$0xff]
        %v236 = vld [vmem:[%s211 + $0x8] sm:$0xff]
        %v237 = vld [vmem:[%s211 + $0x10] sm:$0xff]
        %v238 = vld [vmem:[%s211 + $0x18] sm:$0xff]
        %v239 = vld [vmem:[%s211 + $0x20] sm:$0xff]
        %v240 = vld [vmem:[%s211 + $0x28] sm:$0xff]
        %v241 = vld [vmem:[%s211 + $0x30] sm:$0xff]
        %v242 = vld [vmem:[%s211 + $0x38] sm:$0xff]
        %v243 = vld [vmem:[%s211 + $0x40] sm:$0xff]
        %v244 = vld [vmem:[%s211 + $0x48] sm:$0xff]
        %v245 = vld [vmem:[%s211 + $0x50] sm:$0xff]
        %v246 = vld [vmem:[%s211 + $0x58] sm:$0xff]
        %v247 = vld [vmem:[%s211 + $0x60] sm:$0xff]
        %v248 = vld [vmem:[%s211 + $0x68] sm:$0xff]
        %v249 = vld [vmem:[%s211 + $0x70] sm:$0xff]
        %v250 = vld [vmem:[%s211 + $0x78] sm:$0xff]
        %v251 = vld [vmem:[%s211 + $0x80] sm:$0xff]
        %v252 = vld [vmem:[%s211 + $0x88] sm:$0xff]
        %v253 = vld [vmem:[%s211 + $0x90] sm:$0xff]
        %v254 = vld [vmem:[%s211 + $0x98] sm:$0xff]
        %v255 = vld [vmem:[%s211 + $0xa0] sm:$0xff]
        %v256 = vld [vmem:[%s211 + $0xa8] sm:$0xff]
        %v257 = vld [vmem:[%s211 + $0xb0] sm:$0xff]
        %v258 = vld [vmem:[%s211 + $0xb8] sm:$0xff]
        %v259 = vld [vmem:[%s2] sm:$0xff]
        %v260 = vld [vmem:[%s2 + $0x8] sm:$0xf]
        %262 = vset.pattern.permute.xlu0 0
        %263 = vperm.xlu0 %262, %v259
        %v264 = vpop.permute.xlu0 %263
        %267 = vset.pattern.permute.xlu0 0
        %268 = vperm.xlu0 %267, %v260
        %v269 = vpop.permute.xlu0 %268
        %vm271 = vcmask 195584
        %v273 = vsel %vm271, %v233, 0
        %v276 = vsel %vm271, %v234, 0
        %278 = vmatprep.subr.mxu0 %v236
        %279 = vmatpush1.msra.mxu0 %v235
        %280 = vmatprep.subr.mxu0 %v244
        %281 = vmatpush1.msra.mxu0 %v243
        %282 = vmatprep.subr.mxu0 %v252
        %283 = vmatpush1.msra.mxu0 %v251
        %284 = vmatprep.subr.mxu0 0.0
        %285 = vmatpush1.msra.mxu0 0.0
        %286 = vmatprep.subr.mxu0 0.0
        %287 = vmatpush1.msra.mxu0 0.0
        %288 = vmatprep.subr.mxu0 0.0
        %289 = vmatpush1.msra.mxu0 0.0
        %290 = vmatprep.subr.mxu0 0.0
        %291 = vmatpush1.msra.mxu0 0.0
        %292 = vmatprep.subr.mxu0 0.0
        %293 = vmatpush1.msra.mxu0 0.0
        %294 = vmatprep.subr.mxu0 0.0
        %295 = vmatpush1.msra.mxu0 0.0
        %296 = vmatprep.subr.mxu0 0.0
        %297 = vmatpush1.msra.mxu0 0.0
        %298 = vmatprep.subr.mxu0 0.0
        %299 = vmatpush1.msra.mxu0 0.0
        %300 = vmatprep.subr.mxu0 0.0
        %301 = vmatpush1.msra.mxu0 0.0
        %302 = vmatprep.subr.mxu0 0.0
        %303 = vmatpush1.msra.mxu0 0.0
        %304 = vmatprep.subr.mxu0 0.0
        %305 = vmatpush1.msra.mxu0 0.0
        %306 = vmatprep.subr.mxu0 0.0
        %307 = vmatpush1.msra.mxu0 0.0
        %308 = vmatprep.subr.mxu0 0.0
        %309 = vmatpush1.msra.mxu0 0.0
        %310 = vmatprep.subr.mxu0 0.0
        %311 = vmatpush1.msra.mxu0 0.0
        %312 = vmatprep.subr.mxu0 0.0
        %313 = vmatpush1.msra.mxu0 0.0
        %314 = vmatprep.subr.mxu0 0.0
        %315 = vmatpush1.msra.mxu0 0.0
        %316 = vmatprep.subr.mxu0 0.0
        %317 = vmatpush1.msra.mxu0 0.0
        %318 = vmatprep.subr.mxu0 0.0
        %319 = vmatpush1.msra.mxu0 0.0
        %320 = vmatprep.subr.mxu0 0.0
        %321 = vmatpush1.msra.mxu0 0.0
        %322 = vmatprep.subr.mxu0 0.0
        %323 = vmatpush1.msra.mxu0 0.0
        %324 = vmatprep.subr.mxu0 0.0
        %325 = vmatpush1.msra.mxu0 0.0
        %326 = vmatprep.subr.mxu0 0.0
        %327 = vmatpush1.msra.mxu0 0.0
        %328 = vmatprep.subr.mxu0 0.0
        %329 = vmatpush1.msra.mxu0 0.0
        %330 = vmatprep.subr.mxu0 0.0
        %331 = vmatpush1.msra.mxu0 0.0
        %332 = vmatprep.subr.mxu0 0.0
        %333 = vmatpush1.msra.mxu0 0.0
        %334 = vmatprep.subr.mxu0 0.0
        %335 = vmatpush1.msra.mxu0 0.0
        %336 = vmatprep.subr.mxu0 0.0
        %337 = vmatpush1.msra.mxu0 0.0
        %338 = vmatprep.subr.mxu0 0.0
        %339 = vmatpush1.msra.mxu0 0.0
        %340 = vmatprep.subr.mxu0 0.0
        %341 = vmatpush1.msra.mxu0 0.0
        %342 = vmatprep.mubr.f32.mxu0 0.0
        %343 = vmatmul.mubr.f32.gmra.mrb[0].mxu0 %v273
        %v344 = vpop.f32.mrb[0].mxu0
        %v345 = vadd.f32 %v264, %v344
        %v346 = vpop.f32.mrb[0].mxu0
        %v347 = vadd.f32 %v264, %v346
        %348 = vmatprep.mubr.f32.mxu0 0.0
        %349 = vmatmul.mubr.f32.gmra.mrb[0].mxu0 %v276
        %v350 = vpop.f32.mrb[0].mxu0
        %v351 = vadd.f32 %v269, %v350
        %v352 = vpop.f32.mrb[0].mxu0
        %v353 = vadd.f32 %v269, %v352
        %354 = vdwg.mxu0
        %355 = vmatprep.subr.mxu0 %v238
        %356 = vmatpush1.msra.mxu0 %v237
        %357 = vmatprep.subr.mxu0 %v246
        %358 = vmatpush1.msra.mxu0 %v245
        %359 = vmatprep.subr.mxu0 %v254
        %360 = vmatpush1.msra.mxu0 %v253
        %361 = vmatprep.subr.mxu0 0.0
        %362 = vmatpush1.msra.mxu0 0.0
        %363 = vmatprep.subr.mxu0 0.0
        %364 = vmatpush1.msra.mxu0 0.0
        %365 = vmatprep.subr.mxu0 0.0
        %366 = vmatpush1.msra.mxu0 0.0
        %367 = vmatprep.subr.mxu0 0.0
        %368 = vmatpush1.msra.mxu0 0.0
        %369 = vmatprep.subr.mxu0 0.0
        %370 = vmatpush1.msra.mxu0 0.0
        %371 = vmatprep.subr.mxu0 0.0
        %372 = vmatpush1.msra.mxu0 0.0
        %373 = vmatprep.subr.mxu0 0.0
        %374 = vmatpush1.msra.mxu0 0.0
        %375 = vmatprep.subr.mxu0 0.0
        %376 = vmatpush1.msra.mxu0 0.0
        %377 = vmatprep.subr.mxu0 0.0
        %378 = vmatpush1.msra.mxu0 0.0
        %379 = vmatprep.subr.mxu0 0.0
        %380 = vmatpush1.msra.mxu0 0.0
        %381 = vmatprep.subr.mxu0 0.0
        %382 = vmatpush1.msra.mxu0 0.0
        %383 = vmatprep.subr.mxu0 0.0
        %384 = vmatpush1.msra.mxu0 0.0
        %385 = vmatprep.subr.mxu0 0.0
        %386 = vmatpush1.msra.mxu0 0.0
        %387 = vmatprep.subr.mxu0 0.0
        %388 = vmatpush1.msra.mxu0 0.0
        %389 = vmatprep.subr.mxu0 0.0
        %390 = vmatpush1.msra.mxu0 0.0
        %391 = vmatprep.subr.mxu0 0.0
        %392 = vmatpush1.msra.mxu0 0.0
        %393 = vmatprep.subr.mxu0 0.0
        %394 = vmatpush1.msra.mxu0 0.0
        %395 = vmatprep.subr.mxu0 0.0
        %396 = vmatpush1.msra.mxu0 0.0
        %397 = vmatprep.subr.mxu0 0.0
        %398 = vmatpush1.msra.mxu0 0.0
        %399 = vmatprep.subr.mxu0 0.0
        %400 = vmatpush1.msra.mxu0 0.0
        %401 = vmatprep.subr.mxu0 0.0
        %402 = vmatpush1.msra.mxu0 0.0
        %403 = vmatprep.subr.mxu0 0.0
        %404 = vmatpush1.msra.mxu0 0.0
        %405 = vmatprep.subr.mxu0 0.0
        %406 = vmatpush1.msra.mxu0 0.0
        %407 = vmatprep.subr.mxu0 0.0
        %408 = vmatpush1.msra.mxu0 0.0
        %409 = vmatprep.subr.mxu0 0.0
        %410 = vmatpush1.msra.mxu0 0.0
        %411 = vmatprep.subr.mxu0 0.0
        %412 = vmatpush1.msra.mxu0 0.0
        %413 = vmatprep.subr.mxu0 0.0
        %414 = vmatpush1.msra.mxu0 0.0
        %415 = vmatprep.subr.mxu0 0.0
        %416 = vmatpush1.msra.mxu0 0.0
        %417 = vmatprep.subr.mxu0 0.0
        %418 = vmatpush1.msra.mxu0 0.0
        %419 = vmatprep.mubr.f32.mxu0 0.0
        %420 = vmatmul.mubr.f32.gmra.mrb[0].mxu0 %v273
        %v421 = vpop.f32.mrb[0].mxu0
        %v422 = vadd.f32 %v264, %v421
        %v423 = vpop.f32.mrb[0].mxu0
        %v424 = vadd.f32 %v264, %v423
        %425 = vmatprep.mubr.f32.mxu0 0.0
        %426 = vmatmul.mubr.f32.gmra.mrb[0].mxu0 %v276
        %v427 = vpop.f32.mrb[0].mxu0
        %v428 = vadd.f32 %v269, %v427
        %v429 = vpop.f32.mrb[0].mxu0
        %v430 = vadd.f32 %v269, %v429
        %431 = vdwg.mxu0
        %432 = vmatprep.subr.mxu0 %v240
        %433 = vmatpush1.msra.mxu0 %v239
        %434 = vmatprep.subr.mxu0 %v248
        %435 = vmatpush1.msra.mxu0 %v247
        %436 = vmatprep.subr.mxu0 %v256
        %437 = vmatpush1.msra.mxu0 %v255
        %438 = vmatprep.subr.mxu0 0.0
        %439 = vmatpush1.msra.mxu0 0.0
        %440 = vmatprep.subr.mxu0 0.0
        %441 = vmatpush1.msra.mxu0 0.0
        %442 = vmatprep.subr.mxu0 0.0
        %443 = vmatpush1.msra.mxu0 0.0
        %444 = vmatprep.subr.mxu0 0.0
        %445 = vmatpush1.msra.mxu0 0.0
        %446 = vmatprep.subr.mxu0 0.0
        %447 = vmatpush1.msra.mxu0 0.0
        %448 = vmatprep.subr.mxu0 0.0
        %449 = vmatpush1.msra.mxu0 0.0
        %450 = vmatprep.subr.mxu0 0.0
        %451 = vmatpush1.msra.mxu0 0.0
        %452 = vmatprep.subr.mxu0 0.0
        %453 = vmatpush1.msra.mxu0 0.0
        %454 = vmatprep.subr.mxu0 0.0
        %455 = vmatpush1.msra.mxu0 0.0
        %456 = vmatprep.subr.mxu0 0.0
        %457 = vmatpush1.msra.mxu0 0.0
        %458 = vmatprep.subr.mxu0 0.0
        %459 = vmatpush1.msra.mxu0 0.0
        %460 = vmatprep.subr.mxu0 0.0
        %461 = vmatpush1.msra.mxu0 0.0
        %462 = vmatprep.subr.mxu0 0.0
        %463 = vmatpush1.msra.mxu0 0.0
        %464 = vmatprep.subr.mxu0 0.0
        %465 = vmatpush1.msra.mxu0 0.0
        %466 = vmatprep.subr.mxu0 0.0
        %467 = vmatpush1.msra.mxu0 0.0
        %468 = vmatprep.subr.mxu0 0.0
        %469 = vmatpush1.msra.mxu0 0.0
        %470 = vmatprep.subr.mxu0 0.0
        %471 = vmatpush1.msra.mxu0 0.0
        %472 = vmatprep.subr.mxu0 0.0
        %473 = vmatpush1.msra.mxu0 0.0
        %474 = vmatprep.subr.mxu0 0.0
        %475 = vmatpush1.msra.mxu0 0.0
        %476 = vmatprep.subr.mxu0 0.0
        %477 = vmatpush1.msra.mxu0 0.0
        %478 = vmatprep.subr.mxu0 0.0
        %479 = vmatpush1.msra.mxu0 0.0
        %480 = vmatprep.subr.mxu0 0.0
        %481 = vmatpush1.msra.mxu0 0.0
        %482 = vmatprep.subr.mxu0 0.0
        %483 = vmatpush1.msra.mxu0 0.0
        %484 = vmatprep.subr.mxu0 0.0
        %485 = vmatpush1.msra.mxu0 0.0
        %486 = vmatprep.subr.mxu0 0.0
        %487 = vmatpush1.msra.mxu0 0.0
        %488 = vmatprep.subr.mxu0 0.0
        %489 = vmatpush1.msra.mxu0 0.0
        %490 = vmatprep.subr.mxu0 0.0
        %491 = vmatpush1.msra.mxu0 0.0
        %492 = vmatprep.subr.mxu0 0.0
        %493 = vmatpush1.msra.mxu0 0.0
        %494 = vmatprep.subr.mxu0 0.0
        %495 = vmatpush1.msra.mxu0 0.0
        %496 = vmatprep.mubr.f32.mxu0 0.0
        %497 = vmatmul.mubr.f32.gmra.mrb[0].mxu0 %v273
        %v498 = vpop.f32.mrb[0].mxu0
        %v499 = vadd.f32 %v264, %v498
        %v500 = vpop.f32.mrb[0].mxu0
        %v501 = vadd.f32 %v264, %v500
        %502 = vmatprep.mubr.f32.mxu0 0.0
        %503 = vmatmul.mubr.f32.gmra.mrb[0].mxu0 %v276
        %v504 = vpop.f32.mrb[0].mxu0
        %v505 = vadd.f32 %v269, %v504
        %v506 = vpop.f32.mrb[0].mxu0
        %v507 = vadd.f32 %v269, %v506
        %508 = vdwg.mxu0
        %509 = vmatprep.subr.mxu0 %v242
        %510 = vmatpush1.msra.mxu0 %v241
        %511 = vmatprep.subr.mxu0 %v250
        %512 = vmatpush1.msra.mxu0 %v249
        %513 = vmatprep.subr.mxu0 %v258
        %514 = vmatpush1.msra.mxu0 %v257
        %515 = vmatprep.subr.mxu0 0.0
        %516 = vmatpush1.msra.mxu0 0.0
        %517 = vmatprep.subr.mxu0 0.0
        %518 = vmatpush1.msra.mxu0 0.0
        %519 = vmatprep.subr.mxu0 0.0
        %520 = vmatpush1.msra.mxu0 0.0
        %521 = vmatprep.subr.mxu0 0.0
        %522 = vmatpush1.msra.mxu0 0.0
        %523 = vmatprep.subr.mxu0 0.0
        %524 = vmatpush1.msra.mxu0 0.0
        %525 = vmatprep.subr.mxu0 0.0
        %526 = vmatpush1.msra.mxu0 0.0
        %527 = vmatprep.subr.mxu0 0.0
        %528 = vmatpush1.msra.mxu0 0.0
        %529 = vmatprep.subr.mxu0 0.0
        %530 = vmatpush1.msra.mxu0 0.0
        %531 = vmatprep.subr.mxu0 0.0
        %532 = vmatpush1.msra.mxu0 0.0
        %533 = vmatprep.subr.mxu0 0.0
        %534 = vmatpush1.msra.mxu0 0.0
        %535 = vmatprep.subr.mxu0 0.0
        %536 = vmatpush1.msra.mxu0 0.0
        %537 = vmatprep.subr.mxu0 0.0
        %538 = vmatpush1.msra.mxu0 0.0
        %539 = vmatprep.subr.mxu0 0.0
        %540 = vmatpush1.msra.mxu0 0.0
        %541 = vmatprep.subr.mxu0 0.0
        %542 = vmatpush1.msra.mxu0 0.0
        %543 = vmatprep.subr.mxu0 0.0
        %544 = vmatpush1.msra.mxu0 0.0
        %545 = vmatprep.subr.mxu0 0.0
        %546 = vmatpush1.msra.mxu0 0.0
        %547 = vmatprep.subr.mxu0 0.0
        %548 = vmatpush1.msra.mxu0 0.0
        %549 = vmatprep.subr.mxu0 0.0
        %550 = vmatpush1.msra.mxu0 0.0
        %551 = vmatprep.subr.mxu0 0.0
        %552 = vmatpush1.msra.mxu0 0.0
        %553 = vmatprep.subr.mxu0 0.0
        %554 = vmatpush1.msra.mxu0 0.0
        %555 = vmatprep.subr.mxu0 0.0
        %556 = vmatpush1.msra.mxu0 0.0
        %557 = vmatprep.subr.mxu0 0.0
        %558 = vmatpush1.msra.mxu0 0.0
        %559 = vmatprep.subr.mxu0 0.0
        %560 = vmatpush1.msra.mxu0 0.0
        %561 = vmatprep.subr.mxu0 0.0
        %562 = vmatpush1.msra.mxu0 0.0
        %563 = vmatprep.subr.mxu0 0.0
        %564 = vmatpush1.msra.mxu0 0.0
        %565 = vmatprep.subr.mxu0 0.0
        %566 = vmatpush1.msra.mxu0 0.0
        %567 = vmatprep.subr.mxu0 0.0
        %568 = vmatpush1.msra.mxu0 0.0
        %569 = vmatprep.subr.mxu0 0.0
        %570 = vmatpush1.msra.mxu0 0.0
        %571 = vmatprep.subr.mxu0 0.0
        %572 = vmatpush1.msra.mxu0 0.0
        %573 = vmatprep.mubr.f32.mxu0 0.0
        %574 = vmatmul.mubr.f32.gmra.mrb[0].mxu0 %v273
        %v575 = vpop.f32.mrb[0].mxu0
        %v576 = vadd.f32 %v264, %v575
        %v577 = vpop.f32.mrb[0].mxu0
        %v578 = vadd.f32 %v264, %v577
        %579 = vmatprep.mubr.f32.mxu0 0.0
        %580 = vmatmul.mubr.f32.gmra.mrb[0].mxu0 %v276
        %v581 = vpop.f32.mrb[0].mxu0
        %v582 = vadd.f32 %v269, %v581
        %v583 = vpop.f32.mrb[0].mxu0
        %v584 = vadd.f32 %v269, %v583
        %585 = vdwg.mxu0
        %586 = vst [vmem:[%s230] sm:$0xff] %v345
        %587 = vst [vmem:[%s230 + $0x8] sm:$0xff] %v347
        %588 = vst [vmem:[%s230 + $0x10] sm:$0xff] %v422
        %589 = vst [vmem:[%s230 + $0x18] sm:$0xff] %v424
        %590 = vst [vmem:[%s230 + $0x20] sm:$0xff] %v499
        %591 = vst [vmem:[%s230 + $0x28] sm:$0xff] %v501
        %592 = vst [vmem:[%s230 + $0x30] sm:$0xff] %v576
        %593 = vst [vmem:[%s230 + $0x38] sm:$0xff] %v578
        %594 = vst [vmem:[%s230 + $0x40] sm:$0xf] %v351
        %595 = vst [vmem:[%s230 + $0x48] sm:$0xf] %v353
        %596 = vst [vmem:[%s230 + $0x50] sm:$0xf] %v428
        %597 = vst [vmem:[%s230 + $0x58] sm:$0xf] %v430
        %598 = vst [vmem:[%s230 + $0x60] sm:$0xf] %v505
        %599 = vst [vmem:[%s230 + $0x68] sm:$0xf] %v507
        %600 = vst [vmem:[%s230 + $0x70] sm:$0xf] %v582
        %601 = vst [vmem:[%s230 + $0x78] sm:$0xf] %v584
        %s602 = sand.u32 %s90, 1
        %s603 = sand.u32 %s90, 1
        %s604 = smul.addr %s603, 128
        %s605 = scalar_lea.vmem [#allocation3], %s604
        // Predicated region
        $region56: #{fmdb_basic_fwd.26} parent=50 // pred_check
          %p606 = pneg %p100
        $region57: #{fmdb_basic_fwd.26} parent=50 // pred_check_branch
          %608 = sbr.rel (%p606) target = $region59
        $region58: #{fmdb_basic_fwd.26} parent=50 // pred_region
          %s609 = smul.u32 8, %s14
          %s610 = smul.addr %s609, 8
          %s611 = scalar_lea.vmem %s3, %s610
          // Predicated region
          $region60: #{fmdb_basic_fwd.26} parent=58 // pred_check
            _
          $region61: #{fmdb_basic_fwd.26} parent=58 // pred_check_branch
            %613 = sbr.rel (0) target = $region63
          $region62: #{fmdb_basic_fwd.26} parent=58 // pred_region
            // Predicated region
            $region64: #{fmdb_basic_fwd.26} parent=62 // pred_check
              _
            $region65: #{fmdb_basic_fwd.26} parent=62 // pred_check_branch
              %615 = sbr.rel (0) target = $region67
            $region66: #{fmdb_basic_fwd.26} parent=62 // pred_region
              loop: start=0, step=1, limit=1
              $region68: #{fmdb_basic_fwd.26} parent=66 // loop_pre_header
                _
              $region69: #{fmdb_basic_fwd.26} parent=66 // loop_header
                %s617 = sphi 0, %s621
                %p618 = scmp.ge.s32.totalorder %s617, 1
                %s622 = sphi %s605, %s605
                %s623 = sphi %s611, %s611
              $region70: #{fmdb_basic_fwd.26} parent=66 // loop_header_branch
                %620 = sbr.rel (%p618) target = $region74
              $region71: #{fmdb_basic_fwd.26} parent=66 // loop_body
                %v624 = vld [vmem:[%s622] sm:$0xff]
                %625 = vst [vmem:[%s623] sm:$0xff] %v624
                %v626 = vld [vmem:[%s622 + $0x8] sm:$0xff]
                %627 = vst [vmem:[%s623 + $0x8] sm:$0xff] %v626
                %v628 = vld [vmem:[%s622 + $0x10] sm:$0xff]
                %629 = vst [vmem:[%s623 + $0x10] sm:$0xff] %v628
                %v630 = vld [vmem:[%s622 + $0x18] sm:$0xff]
                %631 = vst [vmem:[%s623 + $0x18] sm:$0xff] %v630
                %v632 = vld [vmem:[%s622 + $0x20] sm:$0xff]
                %633 = vst [vmem:[%s623 + $0x20] sm:$0xff] %v632
                %v634 = vld [vmem:[%s622 + $0x28] sm:$0xff]
                %635 = vst [vmem:[%s623 + $0x28] sm:$0xff] %v634
                %v636 = vld [vmem:[%s622 + $0x30] sm:$0xff]
                %637 = vst [vmem:[%s623 + $0x30] sm:$0xff] %v636
                %v638 = vld [vmem:[%s622 + $0x38] sm:$0xff]
                %639 = vst [vmem:[%s623 + $0x38] sm:$0xff] %v638
                %v640 = vld [vmem:[%s622 + $0x40] sm:$0xff]
                %641 = vst [vmem:[%s623 + $0x80] sm:$0xff] %v640
                %v642 = vld [vmem:[%s622 + $0x48] sm:$0xff]
                %643 = vst [vmem:[%s623 + $0x88] sm:$0xff] %v642
                %v644 = vld [vmem:[%s622 + $0x50] sm:$0xff]
                %645 = vst [vmem:[%s623 + $0x90] sm:$0xff] %v644
                %v646 = vld [vmem:[%s622 + $0x58] sm:$0xff]
                %647 = vst [vmem:[%s623 + $0x98] sm:$0xff] %v646
                %v648 = vld [vmem:[%s622 + $0x60] sm:$0xff]
                %649 = vst [vmem:[%s623 + $0xa0] sm:$0xff] %v648
                %v650 = vld [vmem:[%s622 + $0x68] sm:$0xff]
                %651 = vst [vmem:[%s623 + $0xa8] sm:$0xff] %v650
                %v652 = vld [vmem:[%s622 + $0x70] sm:$0xff]
                %653 = vst [vmem:[%s623 + $0xb0] sm:$0xff] %v652
                %v654 = vld [vmem:[%s622 + $0x78] sm:$0xff]
                %655 = vst [vmem:[%s623 + $0xb8] sm:$0xff] %v654
              $region72: #{fmdb_basic_fwd.26} parent=66 // loop_footer
                %s621 = sadd.s32 1, %s617
              $region73: #{fmdb_basic_fwd.26} parent=66 // loop_footer_branch
                %616 = sbr.rel target = $region69
              $region74: #{fmdb_basic_fwd.26} parent=66 // loop_exit
                _
            $region67: #{fmdb_basic_fwd.26} parent=62 // pred_fallthru
              _
            // Predicated region
            $region75: #{fmdb_basic_fwd.26} parent=62 // pred_check
              _
            $region76: #{fmdb_basic_fwd.26} parent=62 // pred_check_branch
              %657 = sbr.rel target = $region78
            $region77: #{fmdb_basic_fwd.26} parent=62 // pred_region
              _
            $region78: #{fmdb_basic_fwd.26} parent=62 // pred_fallthru
              _
          $region63: #{fmdb_basic_fwd.26} parent=58 // pred_fallthru
            _
          %658 = vnop
        $region59: #{fmdb_basic_fwd.26} parent=50 // pred_fallthru
          _
      $region51: #{fmdb_basic_fwd.26} parent=5 // pred_fallthru
        _
      %p659 = scmp.le.s32.totalorder 2, %s9
      // Predicated region
      $region79: #{fmdb_basic_fwd.26} parent=5 // pred_check
        %p660 = pneg %p659
      $region80: #{fmdb_basic_fwd.26} parent=5 // pred_check_branch
        %662 = sbr.rel (%p660) target = $region82
      $region81: #{fmdb_basic_fwd.26} parent=5 // pred_region
        %s663 = ssub.s32 %s9, 2
        // Predicated region
        $region83: #{fmdb_basic_fwd.26} parent=81 // pred_check
          %p664 = pneg %p106
        $region84: #{fmdb_basic_fwd.26} parent=81 // pred_check_branch
          %666 = sbr.rel (%p664) target = $region86
        $region85: #{fmdb_basic_fwd.26} parent=81 // pred_region
          %s667 = sand.u32 %s91, 1
          %s668 = sand.u32 %s91, 1
          %s669 = smul.addr %s668, 128
          %s670 = scalar_lea.vmem [#allocation3], %s669
        $region86: #{fmdb_basic_fwd.26} parent=81 // pred_fallthru
          _
      $region82: #{fmdb_basic_fwd.26} parent=5 // pred_fallthru
        _
    $region6: #{fmdb_basic_fwd.26} parent=1 // loop_footer
      %s13 = sadd.s32 1, %s9
    $region7: #{fmdb_basic_fwd.26} parent=1 // loop_footer_branch
      %8 = sbr.rel target = $region3
    $region8: #{fmdb_basic_fwd.26} parent=1 // loop_exit
      _

// kernel: fmdb_basic_fwd.27
$region0: #{fmdb_basic_fwd.27}
  #allocation0 [shape = 'u32[]', space=smem, size = 0x4, offset = 0x4, fixed_abs, tag = 'smem constant byte address 0x4 - core index']
  #allocation1 [shape = 'u32[144,128]{1,0:T(1,128)}', space=vmem, size = 0x12000, scoped, tag = 'internal scratch']
  %s0 = inlined_call_operand.vmem [shape: f32[48,2048], index: 0, kind: input, shape index: {}]
  %s1 = inlined_call_operand.vmem [shape: f32[24,48], index: 1, kind: input, shape index: {}]
  %s2 = inlined_call_operand.vmem [shape: f32[24,1], index: 2, kind: input, shape index: {}]
  %s3 = inlined_call_operand.vmem [shape: f32[24,2048], index: 3, kind: output, shape index: {}]
  %s4 = sld [smem:[#allocation0]]
  $region87: #{fmdb_basic_fwd.27} parent=0
    _
  %s6 = ssub.s32 1, %s4
  %s7 = scalar_select 0, %s6, %s4
  $region1: #{fmdb_basic_fwd.27} parent=0
    #allocation2 [shape = 'u8[393216]{0}', space=vmem, size = 0x60000, scoped, tag = 'input window, operand 0']
    #allocation3 [shape = 'u8[196608]{0}', space=vmem, size = 0x30000, scoped, tag = 'output window, operand 0']
    loop: start=0, step=1, limit=4
    $region2: #{fmdb_basic_fwd.27} parent=1 // loop_pre_header
      _
    $region3: #{fmdb_basic_fwd.27} parent=1 // loop_header
      %s9 = sphi 0, %s13
      %p10 = scmp.ge.s32.totalorder %s9, 4
      %s19 = sphi 0, %s21
      %s22 = sphi 0, %s19
      %s23 = sphi 0, %s22
      %s39 = sphi 0, %s23
      %s43 = sphi 0, %s43
      %s45 = sphi 0, %s43
      %s46 = sphi 0, %s45
      %s60 = sphi 0, %s46
      %s64 = sphi 0, %s64
      %s66 = sphi 0, %s64
      %s67 = sphi 0, %s66
      %s81 = sphi 0, %s67
      %s87 = sphi 0, %s89
      %s90 = sphi 0, %s87
      %s91 = sphi 0, %s90
      %s107 = sphi 0, %s91
    $region4: #{fmdb_basic_fwd.27} parent=1 // loop_header_branch
      %12 = sbr.rel (%p10) target = $region8
    $region5: #{fmdb_basic_fwd.27} parent=1 // loop_body
      %s14 = ssub.s32 %s9, 1
      %s15 = ssub.s32 %s9, 2
      %s16 = sadd.s32 %s9, 1
      %s17 = ssub.s32 %s9, %s16
      %p18 = scmp.eq.s32.totalorder %s17, 0
      %s20 = sadd.s32 %s19, 1
      %s21 = scalar_select %p18, %s19, %s20
      %p24 = pneg %p18
      %p25 = scmp.eq.s32.totalorder %s9, 1
      %p26 = por %p24, %p25
      %p27 = scmp.ne.s32.totalorder %s19, %s22
      %p28 = scmp.eq.s32.totalorder %s9, 0
      %p29 = por %p27, %p28
      %p30 = scmp.ne.s32.totalorder %s19, %s22
      %p31 = scmp.eq.s32.totalorder %s14, 1
      %p32 = por %p30, %p31
      %p33 = scmp.ne.s32.totalorder %s22, %s23
      %p34 = scmp.eq.s32.totalorder %s14, 0
      %p35 = por %p33, %p34
      %p36 = scmp.ne.s32.totalorder %s22, %s23
      %p37 = scmp.eq.s32.totalorder %s15, 1
      %p38 = por %p36, %p37
      %p40 = scmp.ne.s32.totalorder %s23, %s39
      %p41 = scmp.eq.s32.totalorder %s15, 0
      %p42 = por %p40, %p41
      %s44 = sadd.s32 %s43, 1
      %p47 = scmp.eq.s32.totalorder %s9, 1
      %p48 = scmp.ne.s32.totalorder %s43, %s45
      %p49 = scmp.eq.s32.totalorder %s9, 0
      %p50 = por %p48, %p49
      %p51 = scmp.ne.s32.totalorder %s43, %s45
      %p52 = scmp.eq.s32.totalorder %s14, 1
      %p53 = por %p51, %p52
      %p54 = scmp.ne.s32.totalorder %s45, %s46
      %p55 = scmp.eq.s32.totalorder %s14, 0
      %p56 = por %p54, %p55
      %p57 = scmp.ne.s32.totalorder %s45, %s46
      %p58 = scmp.eq.s32.totalorder %s15, 1
      %p59 = por %p57, %p58
      %p61 = scmp.ne.s32.totalorder %s46, %s60
      %p62 = scmp.eq.s32.totalorder %s15, 0
      %p63 = por %p61, %p62
      %s65 = sadd.s32 %s64, 1
      %p68 = scmp.eq.s32.totalorder %s9, 1
      %p69 = scmp.ne.s32.totalorder %s64, %s66
      %p70 = scmp.eq.s32.totalorder %s9, 0
      %p71 = por %p69, %p70
      %p72 = scmp.ne.s32.totalorder %s64, %s66
      %p73 = scmp.eq.s32.totalorder %s14, 1
      %p74 = por %p72, %p73
      %p75 = scmp.ne.s32.totalorder %s66, %s67
      %p76 = scmp.eq.s32.totalorder %s14, 0
      %p77 = por %p75, %p76
      %p78 = scmp.ne.s32.totalorder %s66, %s67
      %p79 = scmp.eq.s32.totalorder %s15, 1
      %p80 = por %p78, %p79
      %p82 = scmp.ne.s32.totalorder %s67, %s81
      %p83 = scmp.eq.s32.totalorder %s15, 0
      %p84 = por %p82, %p83
      %s85 = ssub.s32 %s9, %s16
      %p86 = scmp.eq.s32.totalorder %s85, 0
      %s88 = sadd.s32 %s87, 1
      %s89 = scalar_select %p86, %s87, %s88
      %p92 = pneg %p86
      %p93 = scmp.eq.s32.totalorder %s9, 1
      %p94 = por %p92, %p93
      %p95 = scmp.ne.s32.totalorder %s87, %s90
      %p96 = scmp.eq.s32.totalorder %s9, 0
      %p97 = por %p95, %p96
      %p98 = scmp.ne.s32.totalorder %s87, %s90
      %p99 = scmp.eq.s32.totalorder %s14, 1
      %p100 = por %p98, %p99
      %p101 = scmp.ne.s32.totalorder %s90, %s91
      %p102 = scmp.eq.s32.totalorder %s14, 0
      %p103 = por %p101, %p102
      %p104 = scmp.ne.s32.totalorder %s90, %s91
      %p105 = scmp.eq.s32.totalorder %s15, 1
      %p106 = por %p104, %p105
      %p108 = scmp.ne.s32.totalorder %s91, %s107
      %p109 = scmp.eq.s32.totalorder %s15, 0
      %p110 = por %p108, %p109
      %p111 = scmp.le.s32.totalorder 1, %s9
      %p112 = scmp.lt.s32.totalorder %s9, 3
      %p113 = pnand %p111, %p112
      %p114 = pneg %p113
      // Predicated region
      $region9: #{fmdb_basic_fwd.27} parent=5 // pred_check
        _
      $region10: #{fmdb_basic_fwd.27} parent=5 // pred_check_branch
        %116 = sbr.rel (%p113) target = $region12
      $region11: #{fmdb_basic_fwd.27} parent=5 // pred_region
        %s117 = ssub.s32 %s9, 1
        // Predicated region
        $region13: #{fmdb_basic_fwd.27} parent=11 // pred_check
          %p118 = pneg %p56
        $region14: #{fmdb_basic_fwd.27} parent=11 // pred_check_branch
          %120 = sbr.rel (%p118) target = $region16
        $region15: #{fmdb_basic_fwd.27} parent=11 // pred_region
          _
        $region16: #{fmdb_basic_fwd.27} parent=11 // pred_fallthru
          _
        // Predicated region
        $region17: #{fmdb_basic_fwd.27} parent=11 // pred_check
          %p121 = pneg %p77
        $region18: #{fmdb_basic_fwd.27} parent=11 // pred_check_branch
          %123 = sbr.rel (%p121) target = $region20
        $region19: #{fmdb_basic_fwd.27} parent=11 // pred_region
          _
        $region20: #{fmdb_basic_fwd.27} parent=11 // pred_fallthru
          _
      $region12: #{fmdb_basic_fwd.27} parent=5 // pred_fallthru
        _
      %p124 = scmp.lt.s32.totalorder %s9, 2
      // Predicated region
      $region21: #{fmdb_basic_fwd.27} parent=5 // pred_check
        %p125 = pneg %p124
      $region22: #{fmdb_basic_fwd.27} parent=5 // pred_check_branch
        %127 = sbr.rel (%p125) target = $region24
      $region23: #{fmdb_basic_fwd.27} parent=5 // pred_region
        // Predicated region
        $region25: #{fmdb_basic_fwd.27} parent=23 // pred_check
          %p128 = pneg %p29
        $region26: #{fmdb_basic_fwd.27} parent=23 // pred_check_branch
          %130 = sbr.rel (%p128) target = $region28
        $region27: #{fmdb_basic_fwd.27} parent=23 // pred_region
          %s131 = sand.u32 %s19, 1
          %s132 = sand.u32 %s19, 1
          %s133 = smul.addr %s132, 384
          %s134 = scalar_lea.vmem [#allocation2], %s133
          %s135 = smul.u32 8, %s9
          %s136 = smul.addr %s135, 8
          %s137 = scalar_lea.vmem %s0, %s136
          // Predicated region
          $region29: #{fmdb_basic_fwd.27} parent=27 // pred_check
            _
          $region30: #{fmdb_basic_fwd.27} parent=27 // pred_check_branch
            %139 = sbr.rel (0) target = $region32
          $region31: #{fmdb_basic_fwd.27} parent=27 // pred_region
            // Predicated region
            $region33: #{fmdb_basic_fwd.27} parent=31 // pred_check
              _
            $region34: #{fmdb_basic_fwd.27} parent=31 // pred_check_branch
              %141 = sbr.rel (0) target = $region36
            $region35: #{fmdb_basic_fwd.27} parent=31 // pred_region
              loop: start=0, step=1, limit=1
              $region37: #{fmdb_basic_fwd.27} parent=35 // loop_pre_header
                _
              $region38: #{fmdb_basic_fwd.27} parent=35 // loop_header
                %s143 = sphi 0, %s147
                %p144 = scmp.ge.s32.totalorder %s143, 1
                %s148 = sphi %s137, %s137
                %s149 = sphi %s134, %s134
              $region39: #{fmdb_basic_fwd.27} parent=35 // loop_header_branch
                %146 = sbr.rel (%p144) target = $region43
              $region40: #{fmdb_basic_fwd.27} parent=35 // loop_body
                %v150 = vld [vmem:[%s148] sm:$0xff]
                %151 = vst [vmem:[%s149] sm:$0xff] %v150
                %v152 = vld [vmem:[%s148 + $0x8] sm:$0xff]
                %153 = vst [vmem:[%s149 + $0x8] sm:$0xff] %v152
                %v154 = vld [vmem:[%s148 + $0x10] sm:$0xff]
                %155 = vst [vmem:[%s149 + $0x10] sm:$0xff] %v154
                %v156 = vld [vmem:[%s148 + $0x18] sm:$0xff]
                %157 = vst [vmem:[%s149 + $0x18] sm:$0xff] %v156
                %v158 = vld [vmem:[%s148 + $0x20] sm:$0xff]
                %159 = vst [vmem:[%s149 + $0x20] sm:$0xff] %v158
                %v160 = vld [vmem:[%s148 + $0x28] sm:$0xff]
                %161 = vst [vmem:[%s149 + $0x28] sm:$0xff] %v160
                %v162 = vld [vmem:[%s148 + $0x30] sm:$0xff]
                %163 = vst [vmem:[%s149 + $0x30] sm:$0xff] %v162
                %v164 = vld [vmem:[%s148 + $0x38] sm:$0xff]
                %165 = vst [vmem:[%s149 + $0x38] sm:$0xff] %v164
                %v166 = vld [vmem:[%s148 + $0x80] sm:$0xff]
                %167 = vst [vmem:[%s149 + $0x40] sm:$0xff] %v166
                %v168 = vld [vmem:[%s148 + $0x88] sm:$0xff]
                %169 = vst [vmem:[%s149 + $0x48] sm:$0xff] %v168
                %v170 = vld [vmem:[%s148 + $0x90] sm:$0xff]
                %171 = vst [vmem:[%s149 + $0x50] sm:$0xff] %v170
                %v172 = vld [vmem:[%s148 + $0x98] sm:$0xff]
                %173 = vst [vmem:[%s149 + $0x58] sm:$0xff] %v172
                %v174 = vld [vmem:[%s148 + $0xa0] sm:$0xff]
                %175 = vst [vmem:[%s149 + $0x60] sm:$0xff] %v174
                %v176 = vld [vmem:[%s148 + $0xa8] sm:$0xff]
                %177 = vst [vmem:[%s149 + $0x68] sm:$0xff] %v176
                %v178 = vld [vmem:[%s148 + $0xb0] sm:$0xff]
                %179 = vst [vmem:[%s149 + $0x70] sm:$0xff] %v178
                %v180 = vld [vmem:[%s148 + $0xb8] sm:$0xff]
                %181 = vst [vmem:[%s149 + $0x78] sm:$0xff] %v180
                %v182 = vld [vmem:[%s148 + $0x100] sm:$0xff]
                %183 = vst [vmem:[%s149 + $0x80] sm:$0xff] %v182
                %v184 = vld [vmem:[%s148 + $0x108] sm:$0xff]
                %185 = vst [vmem:[%s149 + $0x88] sm:$0xff] %v184
                %v186 = vld [vmem:[%s148 + $0x110] sm:$0xff]
                %187 = vst [vmem:[%s149 + $0x90] sm:$0xff] %v186
                %v188 = vld [vmem:[%s148 + $0x118] sm:$0xff]
                %189 = vst [vmem:[%s149 + $0x98] sm:$0xff] %v188
                %v190 = vld [vmem:[%s148 + $0x120] sm:$0xff]
                %191 = vst [vmem:[%s149 + $0xa0] sm:$0xff] %v190
                %v192 = vld [vmem:[%s148 + $0x128] sm:$0xff]
                %193 = vst [vmem:[%s149 + $0xa8] sm:$0xff] %v192
                %v194 = vld [vmem:[%s148 + $0x130] sm:$0xff]
                %195 = vst [vmem:[%s149 + $0xb0] sm:$0xff] %v194
                %v196 = vld [vmem:[%s148 + $0x138] sm:$0xff]
                %197 = vst [vmem:[%s149 + $0xb8] sm:$0xff] %v196
                %v198 = vld [vmem:[%s148 + $0x180] sm:$0xff]
                %199 = vst [vmem:[%s149 + $0xc0] sm:$0xff] %v198
                %v200 = vld [vmem:[%s148 + $0x188] sm:$0xff]
                %201 = vst [vmem:[%s149 + $0xc8] sm:$0xff] %v200
                %v202 = vld [vmem:[%s148 + $0x190] sm:$0xff]
                %203 = vst [vmem:[%s149 + $0xd0] sm:$0xff] %v202
                %v204 = vld [vmem:[%s148 + $0x198] sm:$0xff]
                %205 = vst [vmem:[%s149 + $0xd8] sm:$0xff] %v204
                %v206 = vld [vmem:[%s148 + $0x1a0] sm:$0xff]
                %207 = vst [vmem:[%s149 + $0xe0] sm:$0xff] %v206
                %v208 = vld [vmem:[%s148 + $0x1a8] sm:$0xff]
                %209 = vst [vmem:[%s149 + $0xe8] sm:$0xff] %v208
                %v210 = vld [vmem:[%s148 + $0x1b0] sm:$0xff]
                %211 = vst [vmem:[%s149 + $0xf0] sm:$0xff] %v210
                %v212 = vld [vmem:[%s148 + $0x1b8] sm:$0xff]
                %213 = vst [vmem:[%s149 + $0xf8] sm:$0xff] %v212
                %v214 = vld [vmem:[%s148 + $0x200] sm:$0xff]
                %215 = vst [vmem:[%s149 + $0x100] sm:$0xff] %v214
                %v216 = vld [vmem:[%s148 + $0x208] sm:$0xff]
                %217 = vst [vmem:[%s149 + $0x108] sm:$0xff] %v216
                %v218 = vld [vmem:[%s148 + $0x210] sm:$0xff]
                %219 = vst [vmem:[%s149 + $0x110] sm:$0xff] %v218
                %v220 = vld [vmem:[%s148 + $0x218] sm:$0xff]
                %221 = vst [vmem:[%s149 + $0x118] sm:$0xff] %v220
                %v222 = vld [vmem:[%s148 + $0x220] sm:$0xff]
                %223 = vst [vmem:[%s149 + $0x120] sm:$0xff] %v222
                %v224 = vld [vmem:[%s148 + $0x228] sm:$0xff]
                %225 = vst [vmem:[%s149 + $0x128] sm:$0xff] %v224
                %v226 = vld [vmem:[%s148 + $0x230] sm:$0xff]
                %227 = vst [vmem:[%s149 + $0x130] sm:$0xff] %v226
                %v228 = vld [vmem:[%s148 + $0x238] sm:$0xff]
                %229 = vst [vmem:[%s149 + $0x138] sm:$0xff] %v228
                %v230 = vld [vmem:[%s148 + $0x280] sm:$0xff]
                %231 = vst [vmem:[%s149 + $0x140] sm:$0xff] %v230
                %v232 = vld [vmem:[%s148 + $0x288] sm:$0xff]
                %233 = vst [vmem:[%s149 + $0x148] sm:$0xff] %v232
                %v234 = vld [vmem:[%s148 + $0x290] sm:$0xff]
                %235 = vst [vmem:[%s149 + $0x150] sm:$0xff] %v234
                %v236 = vld [vmem:[%s148 + $0x298] sm:$0xff]
                %237 = vst [vmem:[%s149 + $0x158] sm:$0xff] %v236
                %v238 = vld [vmem:[%s148 + $0x2a0] sm:$0xff]
                %239 = vst [vmem:[%s149 + $0x160] sm:$0xff] %v238
                %v240 = vld [vmem:[%s148 + $0x2a8] sm:$0xff]
                %241 = vst [vmem:[%s149 + $0x168] sm:$0xff] %v240
                %v242 = vld [vmem:[%s148 + $0x2b0] sm:$0xff]
                %243 = vst [vmem:[%s149 + $0x170] sm:$0xff] %v242
                %v244 = vld [vmem:[%s148 + $0x2b8] sm:$0xff]
                %245 = vst [vmem:[%s149 + $0x178] sm:$0xff] %v244
              $region41: #{fmdb_basic_fwd.27} parent=35 // loop_footer
                %s147 = sadd.s32 1, %s143
              $region42: #{fmdb_basic_fwd.27} parent=35 // loop_footer_branch
                %142 = sbr.rel target = $region38
              $region43: #{fmdb_basic_fwd.27} parent=35 // loop_exit
                _
            $region36: #{fmdb_basic_fwd.27} parent=31 // pred_fallthru
              _
            // Predicated region
            $region44: #{fmdb_basic_fwd.27} parent=31 // pred_check
              _
            $region45: #{fmdb_basic_fwd.27} parent=31 // pred_check_branch
              %247 = sbr.rel target = $region47
            $region46: #{fmdb_basic_fwd.27} parent=31 // pred_region
              _
            $region47: #{fmdb_basic_fwd.27} parent=31 // pred_fallthru
              _
          $region32: #{fmdb_basic_fwd.27} parent=27 // pred_fallthru
            _
          %248 = vnop
        $region28: #{fmdb_basic_fwd.27} parent=23 // pred_fallthru
          _
      $region24: #{fmdb_basic_fwd.27} parent=5 // pred_fallthru
        _
      %p249 = scmp.le.s32.totalorder 1, %s9
      %p250 = scmp.lt.s32.totalorder %s9, 3
      %p251 = pnand %p249, %p250
      %p252 = pneg %p251
      // Predicated region
      $region48: #{fmdb_basic_fwd.27} parent=5 // pred_check
        _
      $region49: #{fmdb_basic_fwd.27} parent=5 // pred_check_branch
        %254 = sbr.rel (%p251) target = $region51
      $region50: #{fmdb_basic_fwd.27} parent=5 // pred_region
        %s255 = ssub.s32 %s9, 1
        %s256 = sand.u32 %s22, 1
        %s257 = sand.u32 %s22, 1
        %s258 = smul.addr %s257, 384
        %s259 = scalar_lea.vmem [#allocation2], %s258
        // Predicated region
        $region52: #{fmdb_basic_fwd.27} parent=50 // pred_check
          %p260 = pneg %p35
        $region53: #{fmdb_basic_fwd.27} parent=50 // pred_check_branch
          %262 = sbr.rel (%p260) target = $region55
        $region54: #{fmdb_basic_fwd.27} parent=50 // pred_region
          _
        $region55: #{fmdb_basic_fwd.27} parent=50 // pred_fallthru
          _
        %s263 = sand.u32 %s22, 1
        %s264 = sand.u32 %s22, 1
        %s265 = smul.addr %s264, 384
        %s266 = scalar_lea.vmem [#allocation2], %s265
        %p267 = pneg %p35
        %p268 = pneg %p32
        %p269 = pneg %p56
        %p270 = pneg %p53
        %p271 = pneg %p77
        %p272 = pneg %p74
        %p273 = pneg %p103
        %p274 = pneg %p100
        %s275 = sand.u32 %s90, 1
        %s276 = sand.u32 %s90, 1
        %s277 = smul.addr %s276, 192
        %s278 = scalar_lea.vmem [#allocation3], %s277
        %s279 = smul.u32 8, %s14
        %s280 = smul.u32 8, %s14
        %v281 = vld [vmem:[%s1] sm:$0xff]
        %v282 = vld [vmem:[%s1 + $0x8] sm:$0xff]
        %v283 = vld [vmem:[%s1 + $0x10] sm:$0xff]
        %v284 = vld [vmem:[%s259] sm:$0xff]
        %v285 = vld [vmem:[%s259 + $0x8] sm:$0xff]
        %v286 = vld [vmem:[%s259 + $0x10] sm:$0xff]
        %v287 = vld [vmem:[%s259 + $0x18] sm:$0xff]
        %v288 = vld [vmem:[%s259 + $0x20] sm:$0xff]
        %v289 = vld [vmem:[%s259 + $0x28] sm:$0xff]
        %v290 = vld [vmem:[%s259 + $0x30] sm:$0xff]
        %v291 = vld [vmem:[%s259 + $0x38] sm:$0xff]
        %v292 = vld [vmem:[%s259 + $0x40] sm:$0xff]
        %v293 = vld [vmem:[%s259 + $0x48] sm:$0xff]
        %v294 = vld [vmem:[%s259 + $0x50] sm:$0xff]
        %v295 = vld [vmem:[%s259 + $0x58] sm:$0xff]
        %v296 = vld [vmem:[%s259 + $0x60] sm:$0xff]
        %v297 = vld [vmem:[%s259 + $0x68] sm:$0xff]
        %v298 = vld [vmem:[%s259 + $0x70] sm:$0xff]
        %v299 = vld [vmem:[%s259 + $0x78] sm:$0xff]
        %v300 = vld [vmem:[%s259 + $0x80] sm:$0xff]
        %v301 = vld [vmem:[%s259 + $0x88] sm:$0xff]
        %v302 = vld [vmem:[%s259 + $0x90] sm:$0xff]
        %v303 = vld [vmem:[%s259 + $0x98] sm:$0xff]
        %v304 = vld [vmem:[%s259 + $0xa0] sm:$0xff]
        %v305 = vld [vmem:[%s259 + $0xa8] sm:$0xff]
        %v306 = vld [vmem:[%s259 + $0xb0] sm:$0xff]
        %v307 = vld [vmem:[%s259 + $0xb8] sm:$0xff]
        %v308 = vld [vmem:[%s259 + $0xc0] sm:$0xff]
        %v309 = vld [vmem:[%s259 + $0xc8] sm:$0xff]
        %v310 = vld [vmem:[%s259 + $0xd0] sm:$0xff]
        %v311 = vld [vmem:[%s259 + $0xd8] sm:$0xff]
        %v312 = vld [vmem:[%s259 + $0xe0] sm:$0xff]
        %v313 = vld [vmem:[%s259 + $0xe8] sm:$0xff]
        %v314 = vld [vmem:[%s259 + $0xf0] sm:$0xff]
        %v315 = vld [vmem:[%s259 + $0xf8] sm:$0xff]
        %v316 = vld [vmem:[%s259 + $0x100] sm:$0xff]
        %v317 = vld [vmem:[%s259 + $0x108] sm:$0xff]
        %v318 = vld [vmem:[%s259 + $0x110] sm:$0xff]
        %v319 = vld [vmem:[%s259 + $0x118] sm:$0xff]
        %v320 = vld [vmem:[%s259 + $0x120] sm:$0xff]
        %v321 = vld [vmem:[%s259 + $0x128] sm:$0xff]
        %v322 = vld [vmem:[%s259 + $0x130] sm:$0xff]
        %v323 = vld [vmem:[%s259 + $0x138] sm:$0xff]
        %v324 = vld [vmem:[%s259 + $0x140] sm:$0xff]
        %v325 = vld [vmem:[%s259 + $0x148] sm:$0xff]
        %v326 = vld [vmem:[%s259 + $0x150] sm:$0xff]
        %v327 = vld [vmem:[%s259 + $0x158] sm:$0xff]
        %v328 = vld [vmem:[%s259 + $0x160] sm:$0xff]
        %v329 = vld [vmem:[%s259 + $0x168] sm:$0xff]
        %v330 = vld [vmem:[%s259 + $0x170] sm:$0xff]
        %v331 = vld [vmem:[%s259 + $0x178] sm:$0xff]
        %v332 = vld [vmem:[%s2] sm:$0xff]
        %v333 = vld [vmem:[%s2 + $0x8] sm:$0xff]
        %v334 = vld [vmem:[%s2 + $0x10] sm:$0xff]
        %336 = vset.pattern.permute.xlu0 0
        %337 = vperm.xlu0 %336, %v332
        %v338 = vpop.permute.xlu0 %337
        %341 = vset.pattern.permute.xlu0 0
        %342 = vperm.xlu0 %341, %v333
        %v343 = vpop.permute.xlu0 %342
        %346 = vset.pattern.permute.xlu0 0
        %347 = vperm.xlu0 %346, %v334
        %v348 = vpop.permute.xlu0 %347
        %vm350 = vcmask 392192
        %v352 = vsel %vm350, %v281, 0
        %v355 = vsel %vm350, %v282, 0
        %v358 = vsel %vm350, %v283, 0
        %360 = vmatprep.subr.mxu0 %v285
        %361 = vmatpush1.msra.mxu0 %v284
        %362 = vmatprep.subr.mxu0 %v293
        %363 = vmatpush1.msra.mxu0 %v292
        %364 = vmatprep.subr.mxu0 %v301
        %365 = vmatpush1.msra.mxu0 %v300
        %366 = vmatprep.subr.mxu0 %v309
        %367 = vmatpush1.msra.mxu0 %v308
        %368 = vmatprep.subr.mxu0 %v317
        %369 = vmatpush1.msra.mxu0 %v316
        %370 = vmatprep.subr.mxu0 %v325
        %371 = vmatpush1.msra.mxu0 %v324
        %372 = vmatprep.subr.mxu0 0.0
        %373 = vmatpush1.msra.mxu0 0.0
        %374 = vmatprep.subr.mxu0 0.0
        %375 = vmatpush1.msra.mxu0 0.0
        %376 = vmatprep.subr.mxu0 0.0
        %377 = vmatpush1.msra.mxu0 0.0
        %378 = vmatprep.subr.mxu0 0.0
        %379 = vmatpush1.msra.mxu0 0.0
        %380 = vmatprep.subr.mxu0 0.0
        %381 = vmatpush1.msra.mxu0 0.0
        %382 = vmatprep.subr.mxu0 0.0
        %383 = vmatpush1.msra.mxu0 0.0
        %384 = vmatprep.subr.mxu0 0.0
        %385 = vmatpush1.msra.mxu0 0.0
        %386 = vmatprep.subr.mxu0 0.0
        %387 = vmatpush1.msra.mxu0 0.0
        %388 = vmatprep.subr.mxu0 0.0
        %389 = vmatpush1.msra.mxu0 0.0
        %390 = vmatprep.subr.mxu0 0.0
        %391 = vmatpush1.msra.mxu0 0.0
        %392 = vmatprep.subr.mxu0 0.0
        %393 = vmatpush1.msra.mxu0 0.0
        %394 = vmatprep.subr.mxu0 0.0
        %395 = vmatpush1.msra.mxu0 0.0
        %396 = vmatprep.subr.mxu0 0.0
        %397 = vmatpush1.msra.mxu0 0.0
        %398 = vmatprep.subr.mxu0 0.0
        %399 = vmatpush1.msra.mxu0 0.0
        %400 = vmatprep.subr.mxu0 0.0
        %401 = vmatpush1.msra.mxu0 0.0
        %402 = vmatprep.subr.mxu0 0.0
        %403 = vmatpush1.msra.mxu0 0.0
        %404 = vmatprep.subr.mxu0 0.0
        %405 = vmatpush1.msra.mxu0 0.0
        %406 = vmatprep.subr.mxu0 0.0
        %407 = vmatpush1.msra.mxu0 0.0
        %408 = vmatprep.subr.mxu0 0.0
        %409 = vmatpush1.msra.mxu0 0.0
        %410 = vmatprep.subr.mxu0 0.0
        %411 = vmatpush1.msra.mxu0 0.0
        %412 = vmatprep.subr.mxu0 0.0
        %413 = vmatpush1.msra.mxu0 0.0
        %414 = vmatprep.subr.mxu0 0.0
        %415 = vmatpush1.msra.mxu0 0.0
        %416 = vmatprep.subr.mxu0 0.0
        %417 = vmatpush1.msra.mxu0 0.0
        %418 = vmatprep.subr.mxu0 0.0
        %419 = vmatpush1.msra.mxu0 0.0
        %420 = vmatprep.subr.mxu0 0.0
        %421 = vmatpush1.msra.mxu0 0.0
        %422 = vmatprep.subr.mxu0 0.0
        %423 = vmatpush1.msra.mxu0 0.0
        %424 = vmatprep.mubr.f32.mxu0 0.0
        %425 = vmatmul.mubr.f32.gmra.mrb[0].mxu0 %v352
        %v426 = vpop.f32.mrb[0].mxu0
        %v427 = vadd.f32 %v338, %v426
        %v428 = vpop.f32.mrb[0].mxu0
        %v429 = vadd.f32 %v338, %v428
        %430 = vmatprep.mubr.f32.mxu0 0.0
        %431 = vmatmul.mubr.f32.gmra.mrb[0].mxu0 %v355
        %v432 = vpop.f32.mrb[0].mxu0
        %v433 = vadd.f32 %v343, %v432
        %v434 = vpop.f32.mrb[0].mxu0
        %v435 = vadd.f32 %v343, %v434
        %436 = vmatprep.mubr.f32.mxu0 0.0
        %437 = vmatmul.mubr.f32.gmra.mrb[0].mxu0 %v358
        %v438 = vpop.f32.mrb[0].mxu0
        %v439 = vadd.f32 %v348, %v438
        %v440 = vpop.f32.mrb[0].mxu0
        %v441 = vadd.f32 %v348, %v440
        %442 = vdwg.mxu0
        %443 = vmatprep.subr.mxu0 %v287
        %444 = vmatpush1.msra.mxu0 %v286
        %445 = vmatprep.subr.mxu0 %v295
        %446 = vmatpush1.msra.mxu0 %v294
        %447 = vmatprep.subr.mxu0 %v303
        %448 = vmatpush1.msra.mxu0 %v302
        %449 = vmatprep.subr.mxu0 %v311
        %450 = vmatpush1.msra.mxu0 %v310
        %451 = vmatprep.subr.mxu0 %v319
        %452 = vmatpush1.msra.mxu0 %v318
        %453 = vmatprep.subr.mxu0 %v327
        %454 = vmatpush1.msra.mxu0 %v326
        %455 = vmatprep.subr.mxu0 0.0
        %456 = vmatpush1.msra.mxu0 0.0
        %457 = vmatprep.subr.mxu0 0.0
        %458 = vmatpush1.msra.mxu0 0.0
        %459 = vmatprep.subr.mxu0 0.0
        %460 = vmatpush1.msra.mxu0 0.0
        %461 = vmatprep.subr.mxu0 0.0
        %462 = vmatpush1.msra.mxu0 0.0
        %463 = vmatprep.subr.mxu0 0.0
        %464 = vmatpush1.msra.mxu0 0.0
        %465 = vmatprep.subr.mxu0 0.0
        %466 = vmatpush1.msra.mxu0 0.0
        %467 = vmatprep.subr.mxu0 0.0
        %468 = vmatpush1.msra.mxu0 0.0
        %469 = vmatprep.subr.mxu0 0.0
        %470 = vmatpush1.msra.mxu0 0.0
        %471 = vmatprep.subr.mxu0 0.0
        %472 = vmatpush1.msra.mxu0 0.0
        %473 = vmatprep.subr.mxu0 0.0
        %474 = vmatpush1.msra.mxu0 0.0
        %475 = vmatprep.subr.mxu0 0.0
        %476 = vmatpush1.msra.mxu0 0.0
        %477 = vmatprep.subr.mxu0 0.0
        %478 = vmatpush1.msra.mxu0 0.0
        %479 = vmatprep.subr.mxu0 0.0
        %480 = vmatpush1.msra.mxu0 0.0
        %481 = vmatprep.subr.mxu0 0.0
        %482 = vmatpush1.msra.mxu0 0.0
        %483 = vmatprep.subr.mxu0 0.0
        %484 = vmatpush1.msra.mxu0 0.0
        %485 = vmatprep.subr.mxu0 0.0
        %486 = vmatpush1.msra.mxu0 0.0
        %487 = vmatprep.subr.mxu0 0.0
        %488 = vmatpush1.msra.mxu0 0.0
        %489 = vmatprep.subr.mxu0 0.0
        %490 = vmatpush1.msra.mxu0 0.0
        %491 = vmatprep.subr.mxu0 0.0
        %492 = vmatpush1.msra.mxu0 0.0
        %493 = vmatprep.subr.mxu0 0.0
        %494 = vmatpush1.msra.mxu0 0.0
        %495 = vmatprep.subr.mxu0 0.0
        %496 = vmatpush1.msra.mxu0 0.0
        %497 = vmatprep.subr.mxu0 0.0
        %498 = vmatpush1.msra.mxu0 0.0
        %499 = vmatprep.subr.mxu0 0.0
        %500 = vmatpush1.msra.mxu0 0.0
        %501 = vmatprep.subr.mxu0 0.0
        %502 = vmatpush1.msra.mxu0 0.0
        %503 = vmatprep.subr.mxu0 0.0
        %504 = vmatpush1.msra.mxu0 0.0
        %505 = vmatprep.subr.mxu0 0.0
        %506 = vmatpush1.msra.mxu0 0.0
        %507 = vmatprep.mubr.f32.mxu0 0.0
        %508 = vmatmul.mubr.f32.gmra.mrb[0].mxu0 %v352
        %v509 = vpop.f32.mrb[0].mxu0
        %v510 = vadd.f32 %v338, %v509
        %v511 = vpop.f32.mrb[0].mxu0
        %v512 = vadd.f32 %v338, %v511
        %513 = vmatprep.mubr.f32.mxu0 0.0
        %514 = vmatmul.mubr.f32.gmra.mrb[0].mxu0 %v355
        %v515 = vpop.f32.mrb[0].mxu0
        %v516 = vadd.f32 %v343, %v515
        %v517 = vpop.f32.mrb[0].mxu0
        %v518 = vadd.f32 %v343, %v517
        %519 = vmatprep.mubr.f32.mxu0 0.0
        %520 = vmatmul.mubr.f32.gmra.mrb[0].mxu0 %v358
        %v521 = vpop.f32.mrb[0].mxu0
        %v522 = vadd.f32 %v348, %v521
        %v523 = vpop.f32.mrb[0].mxu0
        %v524 = vadd.f32 %v348, %v523
        %525 = vdwg.mxu0
        %526 = vmatprep.subr.mxu0 %v289
        %527 = vmatpush1.msra.mxu0 %v288
        %528 = vmatprep.subr.mxu0 %v297
        %529 = vmatpush1.msra.mxu0 %v296
        %530 = vmatprep.subr.mxu0 %v305
        %531 = vmatpush1.msra.mxu0 %v304
        %532 = vmatprep.subr.mxu0 %v313
        %533 = vmatpush1.msra.mxu0 %v312
        %534 = vmatprep.subr.mxu0 %v321
        %535 = vmatpush1.msra.mxu0 %v320
        %536 = vmatprep.subr.mxu0 %v329
        %537 = vmatpush1.msra.mxu0 %v328
        %538 = vmatprep.subr.mxu0 0.0
        %539 = vmatpush1.msra.mxu0 0.0
        %540 = vmatprep.subr.mxu0 0.0
        %541 = vmatpush1.msra.mxu0 0.0
        %542 = vmatprep.subr.mxu0 0.0
        %543 = vmatpush1.msra.mxu0 0.0
        %544 = vmatprep.subr.mxu0 0.0
        %545 = vmatpush1.msra.mxu0 0.0
        %546 = vmatprep.subr.mxu0 0.0
        %547 = vmatpush1.msra.mxu0 0.0
        %548 = vmatprep.subr.mxu0 0.0
        %549 = vmatpush1.msra.mxu0 0.0
        %550 = vmatprep.subr.mxu0 0.0
        %551 = vmatpush1.msra.mxu0 0.0
        %552 = vmatprep.subr.mxu0 0.0
        %553 = vmatpush1.msra.mxu0 0.0
        %554 = vmatprep.subr.mxu0 0.0
        %555 = vmatpush1.msra.mxu0 0.0
        %556 = vmatprep.subr.mxu0 0.0
        %557 = vmatpush1.msra.mxu0 0.0
        %558 = vmatprep.subr.mxu0 0.0
        %559 = vmatpush1.msra.mxu0 0.0
        %560 = vmatprep.subr.mxu0 0.0
        %561 = vmatpush1.msra.mxu0 0.0
        %562 = vmatprep.subr.mxu0 0.0
        %563 = vmatpush1.msra.mxu0 0.0
        %564 = vmatprep.subr.mxu0 0.0
        %565 = vmatpush1.msra.mxu0 0.0
        %566 = vmatprep.subr.mxu0 0.0
        %567 = vmatpush1.msra.mxu0 0.0
        %568 = vmatprep.subr.mxu0 0.0
        %569 = vmatpush1.msra.mxu0 0.0
        %570 = vmatprep.subr.mxu0 0.0
        %571 = vmatpush1.msra.mxu0 0.0
        %572 = vmatprep.subr.mxu0 0.0
        %573 = vmatpush1.msra.mxu0 0.0
        %574 = vmatprep.subr.mxu0 0.0
        %575 = vmatpush1.msra.mxu0 0.0
        %576 = vmatprep.subr.mxu0 0.0
        %577 = vmatpush1.msra.mxu0 0.0
        %578 = vmatprep.subr.mxu0 0.0
        %579 = vmatpush1.msra.mxu0 0.0
        %580 = vmatprep.subr.mxu0 0.0
        %581 = vmatpush1.msra.mxu0 0.0
        %582 = vmatprep.subr.mxu0 0.0
        %583 = vmatpush1.msra.mxu0 0.0
        %584 = vmatprep.subr.mxu0 0.0
        %585 = vmatpush1.msra.mxu0 0.0
        %586 = vmatprep.subr.mxu0 0.0
        %587 = vmatpush1.msra.mxu0 0.0
        %588 = vmatprep.subr.mxu0 0.0
        %589 = vmatpush1.msra.mxu0 0.0
        %590 = vmatprep.mubr.f32.mxu0 0.0
        %591 = vmatmul.mubr.f32.gmra.mrb[0].mxu0 %v352
        %v592 = vpop.f32.mrb[0].mxu0
        %v593 = vadd.f32 %v338, %v592
        %v594 = vpop.f32.mrb[0].mxu0
        %v595 = vadd.f32 %v338, %v594
        %596 = vmatprep.mubr.f32.mxu0 0.0
        %597 = vmatmul.mubr.f32.gmra.mrb[0].mxu0 %v355
        %v598 = vpop.f32.mrb[0].mxu0
        %v599 = vadd.f32 %v343, %v598
        %v600 = vpop.f32.mrb[0].mxu0
        %v601 = vadd.f32 %v343, %v600
        %602 = vmatprep.mubr.f32.mxu0 0.0
        %603 = vmatmul.mubr.f32.gmra.mrb[0].mxu0 %v358
        %v604 = vpop.f32.mrb[0].mxu0
        %v605 = vadd.f32 %v348, %v604
        %v606 = vpop.f32.mrb[0].mxu0
        %v607 = vadd.f32 %v348, %v606
        %608 = vdwg.mxu0
        %609 = vmatprep.subr.mxu0 %v291
        %610 = vmatpush1.msra.mxu0 %v290
        %611 = vmatprep.subr.mxu0 %v299
        %612 = vmatpush1.msra.mxu0 %v298
        %613 = vmatprep.subr.mxu0 %v307
        %614 = vmatpush1.msra.mxu0 %v306
        %615 = vmatprep.subr.mxu0 %v315
        %616 = vmatpush1.msra.mxu0 %v314
        %617 = vmatprep.subr.mxu0 %v323
        %618 = vmatpush1.msra.mxu0 %v322
        %619 = vmatprep.subr.mxu0 %v331
        %620 = vmatpush1.msra.mxu0 %v330
        %621 = vmatprep.subr.mxu0 0.0
        %622 = vmatpush1.msra.mxu0 0.0
        %623 = vmatprep.subr.mxu0 0.0
        %624 = vmatpush1.msra.mxu0 0.0
        %625 = vmatprep.subr.mxu0 0.0
        %626 = vmatpush1.msra.mxu0 0.0
        %627 = vmatprep.subr.mxu0 0.0
        %628 = vmatpush1.msra.mxu0 0.0
        %629 = vmatprep.subr.mxu0 0.0
        %630 = vmatpush1.msra.mxu0 0.0
        %631 = vmatprep.subr.mxu0 0.0
        %632 = vmatpush1.msra.mxu0 0.0
        %633 = vmatprep.subr.mxu0 0.0
        %634 = vmatpush1.msra.mxu0 0.0
        %635 = vmatprep.subr.mxu0 0.0
        %636 = vmatpush1.msra.mxu0 0.0
        %637 = vmatprep.subr.mxu0 0.0
        %638 = vmatpush1.msra.mxu0 0.0
        %639 = vmatprep.subr.mxu0 0.0
        %640 = vmatpush1.msra.mxu0 0.0
        %641 = vmatprep.subr.mxu0 0.0
        %642 = vmatpush1.msra.mxu0 0.0
        %643 = vmatprep.subr.mxu0 0.0
        %644 = vmatpush1.msra.mxu0 0.0
        %645 = vmatprep.subr.mxu0 0.0
        %646 = vmatpush1.msra.mxu0 0.0
        %647 = vmatprep.subr.mxu0 0.0
        %648 = vmatpush1.msra.mxu0 0.0
        %649 = vmatprep.subr.mxu0 0.0
        %650 = vmatpush1.msra.mxu0 0.0
        %651 = vmatprep.subr.mxu0 0.0
        %652 = vmatpush1.msra.mxu0 0.0
        %653 = vmatprep.subr.mxu0 0.0
        %654 = vmatpush1.msra.mxu0 0.0
        %655 = vmatprep.subr.mxu0 0.0
        %656 = vmatpush1.msra.mxu0 0.0
        %657 = vmatprep.subr.mxu0 0.0
        %658 = vmatpush1.msra.mxu0 0.0
        %659 = vmatprep.subr.mxu0 0.0
        %660 = vmatpush1.msra.mxu0 0.0
        %661 = vmatprep.subr.mxu0 0.0
        %662 = vmatpush1.msra.mxu0 0.0
        %663 = vmatprep.subr.mxu0 0.0
        %664 = vmatpush1.msra.mxu0 0.0
        %665 = vmatprep.subr.mxu0 0.0
        %666 = vmatpush1.msra.mxu0 0.0
        %667 = vmatprep.subr.mxu0 0.0
        %668 = vmatpush1.msra.mxu0 0.0
        %669 = vmatprep.subr.mxu0 0.0
        %670 = vmatpush1.msra.mxu0 0.0
        %671 = vmatprep.subr.mxu0 0.0
        %672 = vmatpush1.msra.mxu0 0.0
        %673 = vmatprep.mubr.f32.mxu0 0.0
        %674 = vmatmul.mubr.f32.gmra.mrb[0].mxu0 %v352
        %v675 = vpop.f32.mrb[0].mxu0
        %v676 = vadd.f32 %v338, %v675
        %v677 = vpop.f32.mrb[0].mxu0
        %v678 = vadd.f32 %v338, %v677
        %679 = vmatprep.mubr.f32.mxu0 0.0
        %680 = vmatmul.mubr.f32.gmra.mrb[0].mxu0 %v355
        %v681 = vpop.f32.mrb[0].mxu0
        %v682 = vadd.f32 %v343, %v681
        %v683 = vpop.f32.mrb[0].mxu0
        %v684 = vadd.f32 %v343, %v683
        %685 = vmatprep.mubr.f32.mxu0 0.0
        %686 = vmatmul.mubr.f32.gmra.mrb[0].mxu0 %v358
        %v687 = vpop.f32.mrb[0].mxu0
        %v688 = vadd.f32 %v348, %v687
        %v689 = vpop.f32.mrb[0].mxu0
        %v690 = vadd.f32 %v348, %v689
        %691 = vdwg.mxu0
        %692 = vst [vmem:[%s278] sm:$0xff] %v427
        %693 = vst [vmem:[%s278 + $0x8] sm:$0xff] %v429
        %694 = vst [vmem:[%s278 + $0x10] sm:$0xff] %v510
        %695 = vst [vmem:[%s278 + $0x18] sm:$0xff] %v512
        %696 = vst [vmem:[%s278 + $0x20] sm:$0xff] %v593
        %697 = vst [vmem:[%s278 + $0x28] sm:$0xff] %v595
        %698 = vst [vmem:[%s278 + $0x30] sm:$0xff] %v676
        %699 = vst [vmem:[%s278 + $0x38] sm:$0xff] %v678
        %700 = vst [vmem:[%s278 + $0x40] sm:$0xff] %v433
        %701 = vst [vmem:[%s278 + $0x48] sm:$0xff] %v435
        %702 = vst [vmem:[%s278 + $0x50] sm:$0xff] %v516
        %703 = vst [vmem:[%s278 + $0x58] sm:$0xff] %v518
        %704 = vst [vmem:[%s278 + $0x60] sm:$0xff] %v599
        %705 = vst [vmem:[%s278 + $0x68] sm:$0xff] %v601
        %706 = vst [vmem:[%s278 + $0x70] sm:$0xff] %v682
        %707 = vst [vmem:[%s278 + $0x78] sm:$0xff] %v684
        %708 = vst [vmem:[%s278 + $0x80] sm:$0xff] %v439
        %709 = vst [vmem:[%s278 + $0x88] sm:$0xff] %v441
        %710 = vst [vmem:[%s278 + $0x90] sm:$0xff] %v522
        %711 = vst [vmem:[%s278 + $0x98] sm:$0xff] %v524
        %712 = vst [vmem:[%s278 + $0xa0] sm:$0xff] %v605
        %713 = vst [vmem:[%s278 + $0xa8] sm:$0xff] %v607
        %714 = vst [vmem:[%s278 + $0xb0] sm:$0xff] %v688
        %715 = vst [vmem:[%s278 + $0xb8] sm:$0xff] %v690
        %s716 = sand.u32 %s90, 1
        %s717 = sand.u32 %s90, 1
        %s718 = smul.addr %s717, 192
        %s719 = scalar_lea.vmem [#allocation3], %s718
        // Predicated region
        $region56: #{fmdb_basic_fwd.27} parent=50 // pred_check
          %p720 = pneg %p100
        $region57: #{fmdb_basic_fwd.27} parent=50 // pred_check_branch
          %722 = sbr.rel (%p720) target = $region59
        $region58: #{fmdb_basic_fwd.27} parent=50 // pred_region
          %s723 = smul.u32 8, %s14
          %s724 = smul.addr %s723, 8
          %s725 = scalar_lea.vmem %s3, %s724
          // Predicated region
          $region60: #{fmdb_basic_fwd.27} parent=58 // pred_check
            _
          $region61: #{fmdb_basic_fwd.27} parent=58 // pred_check_branch
            %727 = sbr.rel (0) target = $region63
          $region62: #{fmdb_basic_fwd.27} parent=58 // pred_region
            // Predicated region
            $region64: #{fmdb_basic_fwd.27} parent=62 // pred_check
              _
            $region65: #{fmdb_basic_fwd.27} parent=62 // pred_check_branch
              %729 = sbr.rel (0) target = $region67
            $region66: #{fmdb_basic_fwd.27} parent=62 // pred_region
              loop: start=0, step=1, limit=1
              $region68: #{fmdb_basic_fwd.27} parent=66 // loop_pre_header
                _
              $region69: #{fmdb_basic_fwd.27} parent=66 // loop_header
                %s731 = sphi 0, %s735
                %p732 = scmp.ge.s32.totalorder %s731, 1
                %s736 = sphi %s719, %s719
                %s737 = sphi %s725, %s725
              $region70: #{fmdb_basic_fwd.27} parent=66 // loop_header_branch
                %734 = sbr.rel (%p732) target = $region74
              $region71: #{fmdb_basic_fwd.27} parent=66 // loop_body
                %v738 = vld [vmem:[%s736] sm:$0xff]
                %739 = vst [vmem:[%s737] sm:$0xff] %v738
                %v740 = vld [vmem:[%s736 + $0x8] sm:$0xff]
                %741 = vst [vmem:[%s737 + $0x8] sm:$0xff] %v740
                %v742 = vld [vmem:[%s736 + $0x10] sm:$0xff]
                %743 = vst [vmem:[%s737 + $0x10] sm:$0xff] %v742
                %v744 = vld [vmem:[%s736 + $0x18] sm:$0xff]
                %745 = vst [vmem:[%s737 + $0x18] sm:$0xff] %v744
                %v746 = vld [vmem:[%s736 + $0x20] sm:$0xff]
                %747 = vst [vmem:[%s737 + $0x20] sm:$0xff] %v746
                %v748 = vld [vmem:[%s736 + $0x28] sm:$0xff]
                %749 = vst [vmem:[%s737 + $0x28] sm:$0xff] %v748
                %v750 = vld [vmem:[%s736 + $0x30] sm:$0xff]
                %751 = vst [vmem:[%s737 + $0x30] sm:$0xff] %v750
                %v752 = vld [vmem:[%s736 + $0x38] sm:$0xff]
                %753 = vst [vmem:[%s737 + $0x38] sm:$0xff] %v752
                %v754 = vld [vmem:[%s736 + $0x40] sm:$0xff]
                %755 = vst [vmem:[%s737 + $0x80] sm:$0xff] %v754
                %v756 = vld [vmem:[%s736 + $0x48] sm:$0xff]
                %757 = vst [vmem:[%s737 + $0x88] sm:$0xff] %v756
                %v758 = vld [vmem:[%s736 + $0x50] sm:$0xff]
                %759 = vst [vmem:[%s737 + $0x90] sm:$0xff] %v758
                %v760 = vld [vmem:[%s736 + $0x58] sm:$0xff]
                %761 = vst [vmem:[%s737 + $0x98] sm:$0xff] %v760
                %v762 = vld [vmem:[%s736 + $0x60] sm:$0xff]
                %763 = vst [vmem:[%s737 + $0xa0] sm:$0xff] %v762
                %v764 = vld [vmem:[%s736 + $0x68] sm:$0xff]
                %765 = vst [vmem:[%s737 + $0xa8] sm:$0xff] %v764
                %v766 = vld [vmem:[%s736 + $0x70] sm:$0xff]
                %767 = vst [vmem:[%s737 + $0xb0] sm:$0xff] %v766
                %v768 = vld [vmem:[%s736 + $0x78] sm:$0xff]
                %769 = vst [vmem:[%s737 + $0xb8] sm:$0xff] %v768
                %v770 = vld [vmem:[%s736 + $0x80] sm:$0xff]
                %771 = vst [vmem:[%s737 + $0x100] sm:$0xff] %v770
                %v772 = vld [vmem:[%s736 + $0x88] sm:$0xff]
                %773 = vst [vmem:[%s737 + $0x108] sm:$0xff] %v772
                %v774 = vld [vmem:[%s736 + $0x90] sm:$0xff]
                %775 = vst [vmem:[%s737 + $0x110] sm:$0xff] %v774
                %v776 = vld [vmem:[%s736 + $0x98] sm:$0xff]
                %777 = vst [vmem:[%s737 + $0x118] sm:$0xff] %v776
                %v778 = vld [vmem:[%s736 + $0xa0] sm:$0xff]
                %779 = vst [vmem:[%s737 + $0x120] sm:$0xff] %v778
                %v780 = vld [vmem:[%s736 + $0xa8] sm:$0xff]
                %781 = vst [vmem:[%s737 + $0x128] sm:$0xff] %v780
                %v782 = vld [vmem:[%s736 + $0xb0] sm:$0xff]
                %783 = vst [vmem:[%s737 + $0x130] sm:$0xff] %v782
                %v784 = vld [vmem:[%s736 + $0xb8] sm:$0xff]
                %785 = vst [vmem:[%s737 + $0x138] sm:$0xff] %v784
              $region72: #{fmdb_basic_fwd.27} parent=66 // loop_footer
                %s735 = sadd.s32 1, %s731
              $region73: #{fmdb_basic_fwd.27} parent=66 // loop_footer_branch
                %730 = sbr.rel target = $region69
              $region74: #{fmdb_basic_fwd.27} parent=66 // loop_exit
                _
            $region67: #{fmdb_basic_fwd.27} parent=62 // pred_fallthru
              _
            // Predicated region
            $region75: #{fmdb_basic_fwd.27} parent=62 // pred_check
              _
            $region76: #{fmdb_basic_fwd.27} parent=62 // pred_check_branch
              %787 = sbr.rel target = $region78
            $region77: #{fmdb_basic_fwd.27} parent=62 // pred_region
              _
            $region78: #{fmdb_basic_fwd.27} parent=62 // pred_fallthru
              _
          $region63: #{fmdb_basic_fwd.27} parent=58 // pred_fallthru
            _
          %788 = vnop
        $region59: #{fmdb_basic_fwd.27} parent=50 // pred_fallthru
          _
      $region51: #{fmdb_basic_fwd.27} parent=5 // pred_fallthru
        _
      %p789 = scmp.le.s32.totalorder 2, %s9
      // Predicated region
      $region79: #{fmdb_basic_fwd.27} parent=5 // pred_check
        %p790 = pneg %p789
      $region80: #{fmdb_basic_fwd.27} parent=5 // pred_check_branch
        %792 = sbr.rel (%p790) target = $region82
      $region81: #{fmdb_basic_fwd.27} parent=5 // pred_region
        %s793 = ssub.s32 %s9, 2
        // Predicated region
        $region83: #{fmdb_basic_fwd.27} parent=81 // pred_check
          %p794 = pneg %p106
        $region84: #{fmdb_basic_fwd.27} parent=81 // pred_check_branch
          %796 = sbr.rel (%p794) target = $region86
        $region85: #{fmdb_basic_fwd.27} parent=81 // pred_region
          %s797 = sand.u32 %s91, 1
          %s798 = sand.u32 %s91, 1
          %s799 = smul.addr %s798, 192
          %s800 = scalar_lea.vmem [#allocation3], %s799
        $region86: #{fmdb_basic_fwd.27} parent=81 // pred_fallthru
          _
      $region82: #{fmdb_basic_fwd.27} parent=5 // pred_fallthru
        _
    $region6: #{fmdb_basic_fwd.27} parent=1 // loop_footer
      %s13 = sadd.s32 1, %s9
    $region7: #{fmdb_basic_fwd.27} parent=1 // loop_footer_branch
      %8 = sbr.rel target = $region3
    $region8: #{fmdb_basic_fwd.27} parent=1 // loop_exit
      _

// kernel: fmdb_basic_fwd.28
$region0: #{fmdb_basic_fwd.28}
  #allocation0 [shape = 'u32[]', space=smem, size = 0x4, offset = 0x4, fixed_abs, tag = 'smem constant byte address 0x4 - core index']
  #allocation1 [shape = 'u32[144,128]{1,0:T(1,128)}', space=vmem, size = 0x12000, scoped, tag = 'internal scratch']
  %s0 = inlined_call_operand.vmem [shape: f32[24,2048], index: 0, kind: input, shape index: {}]
  %s1 = inlined_call_operand.vmem [shape: f32[6,24], index: 1, kind: input, shape index: {}]
  %s2 = inlined_call_operand.vmem [shape: f32[6,1], index: 2, kind: input, shape index: {}]
  %s3 = inlined_call_operand.vmem [shape: f32[6,2048], index: 3, kind: output, shape index: {}]
  %s4 = sld [smem:[#allocation0]]
  $region68: #{fmdb_basic_fwd.28} parent=0
    _
  %s6 = ssub.s32 1, %s4
  %s7 = scalar_select 0, %s6, %s4
  $region1: #{fmdb_basic_fwd.28} parent=0
    #allocation2 [shape = 'u8[196608]{0}', space=vmem, size = 0x30000, scoped, tag = 'input window, operand 0']
    loop: start=0, step=1, limit=4
    $region2: #{fmdb_basic_fwd.28} parent=1 // loop_pre_header
      _
    $region3: #{fmdb_basic_fwd.28} parent=1 // loop_header
      %s9 = sphi 0, %s13
      %p10 = scmp.ge.s32.totalorder %s9, 4
      %s19 = sphi 0, %s21
      %s22 = sphi 0, %s19
      %s23 = sphi 0, %s22
      %s39 = sphi 0, %s23
      %s43 = sphi 0, %s43
      %s45 = sphi 0, %s43
      %s46 = sphi 0, %s45
      %s60 = sphi 0, %s46
      %s64 = sphi 0, %s64
      %s66 = sphi 0, %s64
      %s67 = sphi 0, %s66
      %s81 = sphi 0, %s67
      %s87 = sphi 0, %s89
      %s90 = sphi 0, %s87
      %s91 = sphi 0, %s90
      %s107 = sphi 0, %s91
    $region4: #{fmdb_basic_fwd.28} parent=1 // loop_header_branch
      %12 = sbr.rel (%p10) target = $region8
    $region5: #{fmdb_basic_fwd.28} parent=1 // loop_body
      %s14 = ssub.s32 %s9, 1
      %s15 = ssub.s32 %s9, 2
      %s16 = sadd.s32 %s9, 1
      %s17 = ssub.s32 %s9, %s16
      %p18 = scmp.eq.s32.totalorder %s17, 0
      %s20 = sadd.s32 %s19, 1
      %s21 = scalar_select %p18, %s19, %s20
      %p24 = pneg %p18
      %p25 = scmp.eq.s32.totalorder %s9, 1
      %p26 = por %p24, %p25
      %p27 = scmp.ne.s32.totalorder %s19, %s22
      %p28 = scmp.eq.s32.totalorder %s9, 0
      %p29 = por %p27, %p28
      %p30 = scmp.ne.s32.totalorder %s19, %s22
      %p31 = scmp.eq.s32.totalorder %s14, 1
      %p32 = por %p30, %p31
      %p33 = scmp.ne.s32.totalorder %s22, %s23
      %p34 = scmp.eq.s32.totalorder %s14, 0
      %p35 = por %p33, %p34
      %p36 = scmp.ne.s32.totalorder %s22, %s23
      %p37 = scmp.eq.s32.totalorder %s15, 1
      %p38 = por %p36, %p37
      %p40 = scmp.ne.s32.totalorder %s23, %s39
      %p41 = scmp.eq.s32.totalorder %s15, 0
      %p42 = por %p40, %p41
      %s44 = sadd.s32 %s43, 1
      %p47 = scmp.eq.s32.totalorder %s9, 1
      %p48 = scmp.ne.s32.totalorder %s43, %s45
      %p49 = scmp.eq.s32.totalorder %s9, 0
      %p50 = por %p48, %p49
      %p51 = scmp.ne.s32.totalorder %s43, %s45
      %p52 = scmp.eq.s32.totalorder %s14, 1
      %p53 = por %p51, %p52
      %p54 = scmp.ne.s32.totalorder %s45, %s46
      %p55 = scmp.eq.s32.totalorder %s14, 0
      %p56 = por %p54, %p55
      %p57 = scmp.ne.s32.totalorder %s45, %s46
      %p58 = scmp.eq.s32.totalorder %s15, 1
      %p59 = por %p57, %p58
      %p61 = scmp.ne.s32.totalorder %s46, %s60
      %p62 = scmp.eq.s32.totalorder %s15, 0
      %p63 = por %p61, %p62
      %s65 = sadd.s32 %s64, 1
      %p68 = scmp.eq.s32.totalorder %s9, 1
      %p69 = scmp.ne.s32.totalorder %s64, %s66
      %p70 = scmp.eq.s32.totalorder %s9, 0
      %p71 = por %p69, %p70
      %p72 = scmp.ne.s32.totalorder %s64, %s66
      %p73 = scmp.eq.s32.totalorder %s14, 1
      %p74 = por %p72, %p73
      %p75 = scmp.ne.s32.totalorder %s66, %s67
      %p76 = scmp.eq.s32.totalorder %s14, 0
      %p77 = por %p75, %p76
      %p78 = scmp.ne.s32.totalorder %s66, %s67
      %p79 = scmp.eq.s32.totalorder %s15, 1
      %p80 = por %p78, %p79
      %p82 = scmp.ne.s32.totalorder %s67, %s81
      %p83 = scmp.eq.s32.totalorder %s15, 0
      %p84 = por %p82, %p83
      %s85 = ssub.s32 %s9, %s16
      %p86 = scmp.eq.s32.totalorder %s85, 0
      %s88 = sadd.s32 %s87, 1
      %s89 = scalar_select %p86, %s87, %s88
      %p92 = pneg %p86
      %p93 = scmp.eq.s32.totalorder %s9, 1
      %p94 = por %p92, %p93
      %p95 = scmp.ne.s32.totalorder %s87, %s90
      %p96 = scmp.eq.s32.totalorder %s9, 0
      %p97 = por %p95, %p96
      %p98 = scmp.ne.s32.totalorder %s87, %s90
      %p99 = scmp.eq.s32.totalorder %s14, 1
      %p100 = por %p98, %p99
      %p101 = scmp.ne.s32.totalorder %s90, %s91
      %p102 = scmp.eq.s32.totalorder %s14, 0
      %p103 = por %p101, %p102
      %p104 = scmp.ne.s32.totalorder %s90, %s91
      %p105 = scmp.eq.s32.totalorder %s15, 1
      %p106 = por %p104, %p105
      %p108 = scmp.ne.s32.totalorder %s91, %s107
      %p109 = scmp.eq.s32.totalorder %s15, 0
      %p110 = por %p108, %p109
      %p111 = scmp.le.s32.totalorder 1, %s9
      %p112 = scmp.lt.s32.totalorder %s9, 3
      %p113 = pnand %p111, %p112
      %p114 = pneg %p113
      // Predicated region
      $region9: #{fmdb_basic_fwd.28} parent=5 // pred_check
        _
      $region10: #{fmdb_basic_fwd.28} parent=5 // pred_check_branch
        %116 = sbr.rel (%p113) target = $region12
      $region11: #{fmdb_basic_fwd.28} parent=5 // pred_region
        %s117 = ssub.s32 %s9, 1
        // Predicated region
        $region13: #{fmdb_basic_fwd.28} parent=11 // pred_check
          %p118 = pneg %p56
        $region14: #{fmdb_basic_fwd.28} parent=11 // pred_check_branch
          %120 = sbr.rel (%p118) target = $region16
        $region15: #{fmdb_basic_fwd.28} parent=11 // pred_region
          _
        $region16: #{fmdb_basic_fwd.28} parent=11 // pred_fallthru
          _
        // Predicated region
        $region17: #{fmdb_basic_fwd.28} parent=11 // pred_check
          %p121 = pneg %p77
        $region18: #{fmdb_basic_fwd.28} parent=11 // pred_check_branch
          %123 = sbr.rel (%p121) target = $region20
        $region19: #{fmdb_basic_fwd.28} parent=11 // pred_region
          _
        $region20: #{fmdb_basic_fwd.28} parent=11 // pred_fallthru
          _
      $region12: #{fmdb_basic_fwd.28} parent=5 // pred_fallthru
        _
      %p124 = scmp.lt.s32.totalorder %s9, 2
      // Predicated region
      $region21: #{fmdb_basic_fwd.28} parent=5 // pred_check
        %p125 = pneg %p124
      $region22: #{fmdb_basic_fwd.28} parent=5 // pred_check_branch
        %127 = sbr.rel (%p125) target = $region24
      $region23: #{fmdb_basic_fwd.28} parent=5 // pred_region
        // Predicated region
        $region25: #{fmdb_basic_fwd.28} parent=23 // pred_check
          %p128 = pneg %p29
        $region26: #{fmdb_basic_fwd.28} parent=23 // pred_check_branch
          %130 = sbr.rel (%p128) target = $region28
        $region27: #{fmdb_basic_fwd.28} parent=23 // pred_region
          %s131 = sand.u32 %s19, 1
          %s132 = sand.u32 %s19, 1
          %s133 = smul.addr %s132, 192
          %s134 = scalar_lea.vmem [#allocation2], %s133
          %s135 = smul.u32 8, %s9
          %s136 = smul.addr %s135, 8
          %s137 = scalar_lea.vmem %s0, %s136
          // Predicated region
          $region29: #{fmdb_basic_fwd.28} parent=27 // pred_check
            _
          $region30: #{fmdb_basic_fwd.28} parent=27 // pred_check_branch
            %139 = sbr.rel (0) target = $region32
          $region31: #{fmdb_basic_fwd.28} parent=27 // pred_region
            // Predicated region
            $region33: #{fmdb_basic_fwd.28} parent=31 // pred_check
              _
            $region34: #{fmdb_basic_fwd.28} parent=31 // pred_check_branch
              %141 = sbr.rel (0) target = $region36
            $region35: #{fmdb_basic_fwd.28} parent=31 // pred_region
              loop: start=0, step=1, limit=1
              $region37: #{fmdb_basic_fwd.28} parent=35 // loop_pre_header
                _
              $region38: #{fmdb_basic_fwd.28} parent=35 // loop_header
                %s143 = sphi 0, %s147
                %p144 = scmp.ge.s32.totalorder %s143, 1
                %s148 = sphi %s137, %s137
                %s149 = sphi %s134, %s134
              $region39: #{fmdb_basic_fwd.28} parent=35 // loop_header_branch
                %146 = sbr.rel (%p144) target = $region43
              $region40: #{fmdb_basic_fwd.28} parent=35 // loop_body
                %v150 = vld [vmem:[%s148] sm:$0xff]
                %151 = vst [vmem:[%s149] sm:$0xff] %v150
                %v152 = vld [vmem:[%s148 + $0x8] sm:$0xff]
                %153 = vst [vmem:[%s149 + $0x8] sm:$0xff] %v152
                %v154 = vld [vmem:[%s148 + $0x10] sm:$0xff]
                %155 = vst [vmem:[%s149 + $0x10] sm:$0xff] %v154
                %v156 = vld [vmem:[%s148 + $0x18] sm:$0xff]
                %157 = vst [vmem:[%s149 + $0x18] sm:$0xff] %v156
                %v158 = vld [vmem:[%s148 + $0x20] sm:$0xff]
                %159 = vst [vmem:[%s149 + $0x20] sm:$0xff] %v158
                %v160 = vld [vmem:[%s148 + $0x28] sm:$0xff]
                %161 = vst [vmem:[%s149 + $0x28] sm:$0xff] %v160
                %v162 = vld [vmem:[%s148 + $0x30] sm:$0xff]
                %163 = vst [vmem:[%s149 + $0x30] sm:$0xff] %v162
                %v164 = vld [vmem:[%s148 + $0x38] sm:$0xff]
                %165 = vst [vmem:[%s149 + $0x38] sm:$0xff] %v164
                %v166 = vld [vmem:[%s148 + $0x80] sm:$0xff]
                %167 = vst [vmem:[%s149 + $0x40] sm:$0xff] %v166
                %v168 = vld [vmem:[%s148 + $0x88] sm:$0xff]
                %169 = vst [vmem:[%s149 + $0x48] sm:$0xff] %v168
                %v170 = vld [vmem:[%s148 + $0x90] sm:$0xff]
                %171 = vst [vmem:[%s149 + $0x50] sm:$0xff] %v170
                %v172 = vld [vmem:[%s148 + $0x98] sm:$0xff]
                %173 = vst [vmem:[%s149 + $0x58] sm:$0xff] %v172
                %v174 = vld [vmem:[%s148 + $0xa0] sm:$0xff]
                %175 = vst [vmem:[%s149 + $0x60] sm:$0xff] %v174
                %v176 = vld [vmem:[%s148 + $0xa8] sm:$0xff]
                %177 = vst [vmem:[%s149 + $0x68] sm:$0xff] %v176
                %v178 = vld [vmem:[%s148 + $0xb0] sm:$0xff]
                %179 = vst [vmem:[%s149 + $0x70] sm:$0xff] %v178
                %v180 = vld [vmem:[%s148 + $0xb8] sm:$0xff]
                %181 = vst [vmem:[%s149 + $0x78] sm:$0xff] %v180
                %v182 = vld [vmem:[%s148 + $0x100] sm:$0xff]
                %183 = vst [vmem:[%s149 + $0x80] sm:$0xff] %v182
                %v184 = vld [vmem:[%s148 + $0x108] sm:$0xff]
                %185 = vst [vmem:[%s149 + $0x88] sm:$0xff] %v184
                %v186 = vld [vmem:[%s148 + $0x110] sm:$0xff]
                %187 = vst [vmem:[%s149 + $0x90] sm:$0xff] %v186
                %v188 = vld [vmem:[%s148 + $0x118] sm:$0xff]
                %189 = vst [vmem:[%s149 + $0x98] sm:$0xff] %v188
                %v190 = vld [vmem:[%s148 + $0x120] sm:$0xff]
                %191 = vst [vmem:[%s149 + $0xa0] sm:$0xff] %v190
                %v192 = vld [vmem:[%s148 + $0x128] sm:$0xff]
                %193 = vst [vmem:[%s149 + $0xa8] sm:$0xff] %v192
                %v194 = vld [vmem:[%s148 + $0x130] sm:$0xff]
                %195 = vst [vmem:[%s149 + $0xb0] sm:$0xff] %v194
                %v196 = vld [vmem:[%s148 + $0x138] sm:$0xff]
                %197 = vst [vmem:[%s149 + $0xb8] sm:$0xff] %v196
              $region41: #{fmdb_basic_fwd.28} parent=35 // loop_footer
                %s147 = sadd.s32 1, %s143
              $region42: #{fmdb_basic_fwd.28} parent=35 // loop_footer_branch
                %142 = sbr.rel target = $region38
              $region43: #{fmdb_basic_fwd.28} parent=35 // loop_exit
                _
            $region36: #{fmdb_basic_fwd.28} parent=31 // pred_fallthru
              _
            // Predicated region
            $region44: #{fmdb_basic_fwd.28} parent=31 // pred_check
              _
            $region45: #{fmdb_basic_fwd.28} parent=31 // pred_check_branch
              %199 = sbr.rel target = $region47
            $region46: #{fmdb_basic_fwd.28} parent=31 // pred_region
              _
            $region47: #{fmdb_basic_fwd.28} parent=31 // pred_fallthru
              _
          $region32: #{fmdb_basic_fwd.28} parent=27 // pred_fallthru
            _
          %200 = vnop
        $region28: #{fmdb_basic_fwd.28} parent=23 // pred_fallthru
          _
      $region24: #{fmdb_basic_fwd.28} parent=5 // pred_fallthru
        _
      %p201 = scmp.le.s32.totalorder 1, %s9
      %p202 = scmp.lt.s32.totalorder %s9, 3
      %p203 = pnand %p201, %p202
      %p204 = pneg %p203
      // Predicated region
      $region48: #{fmdb_basic_fwd.28} parent=5 // pred_check
        _
      $region49: #{fmdb_basic_fwd.28} parent=5 // pred_check_branch
        %206 = sbr.rel (%p203) target = $region51
      $region50: #{fmdb_basic_fwd.28} parent=5 // pred_region
        %s207 = ssub.s32 %s9, 1
        %s208 = sand.u32 %s22, 1
        %s209 = sand.u32 %s22, 1
        %s210 = smul.addr %s209, 192
        %s211 = scalar_lea.vmem [#allocation2], %s210
        // Predicated region
        $region52: #{fmdb_basic_fwd.28} parent=50 // pred_check
          %p212 = pneg %p35
        $region53: #{fmdb_basic_fwd.28} parent=50 // pred_check_branch
          %214 = sbr.rel (%p212) target = $region55
        $region54: #{fmdb_basic_fwd.28} parent=50 // pred_region
          _
        $region55: #{fmdb_basic_fwd.28} parent=50 // pred_fallthru
          _
        %s215 = sand.u32 %s22, 1
        %s216 = sand.u32 %s22, 1
        %s217 = smul.addr %s216, 192
        %s218 = scalar_lea.vmem [#allocation2], %s217
        %p219 = pneg %p35
        %p220 = pneg %p32
        %p221 = pneg %p56
        %p222 = pneg %p53
        %p223 = pneg %p77
        %p224 = pneg %p74
        %p225 = pneg %p103
        %p226 = pneg %p100
        %s227 = smul.u32 8, %s14
        %p228 = scmp.lt.s32.totalorder %s227, 15
        %s229 = scalar_select %p228, %s227, 15
        %s230 = smul.addr %s229, 8
        %s231 = scalar_lea.vmem %s3, %s230
        %s232 = smul.u32 8, %s14
        %s233 = smul.u32 8, %s14
        %p234 = scmp.lt.s32.totalorder %s233, 15
        %s235 = scalar_select %p234, %s233, 15
        %s236 = smul.addr %s235, 8
        %s237 = scalar_lea.vmem %s3, %s236
        %s238 = smul.u32 8, %s14
        %v239 = vld [vmem:[%s1] sm:$0x3f]
        %v240 = vld [vmem:[%s211] sm:$0xff]
        %v241 = vld [vmem:[%s211 + $0x8] sm:$0xff]
        %v242 = vld [vmem:[%s211 + $0x10] sm:$0xff]
        %v243 = vld [vmem:[%s211 + $0x18] sm:$0xff]
        %v244 = vld [vmem:[%s211 + $0x20] sm:$0xff]
        %v245 = vld [vmem:[%s211 + $0x28] sm:$0xff]
        %v246 = vld [vmem:[%s211 + $0x30] sm:$0xff]
        %v247 = vld [vmem:[%s211 + $0x38] sm:$0xff]
        %v248 = vld [vmem:[%s211 + $0x40] sm:$0xff]
        %v249 = vld [vmem:[%s211 + $0x48] sm:$0xff]
        %v250 = vld [vmem:[%s211 + $0x50] sm:$0xff]
        %v251 = vld [vmem:[%s211 + $0x58] sm:$0xff]
        %v252 = vld [vmem:[%s211 + $0x60] sm:$0xff]
        %v253 = vld [vmem:[%s211 + $0x68] sm:$0xff]
        %v254 = vld [vmem:[%s211 + $0x70] sm:$0xff]
        %v255 = vld [vmem:[%s211 + $0x78] sm:$0xff]
        %v256 = vld [vmem:[%s211 + $0x80] sm:$0xff]
        %v257 = vld [vmem:[%s211 + $0x88] sm:$0xff]
        %v258 = vld [vmem:[%s211 + $0x90] sm:$0xff]
        %v259 = vld [vmem:[%s211 + $0x98] sm:$0xff]
        %v260 = vld [vmem:[%s211 + $0xa0] sm:$0xff]
        %v261 = vld [vmem:[%s211 + $0xa8] sm:$0xff]
        %v262 = vld [vmem:[%s211 + $0xb0] sm:$0xff]
        %v263 = vld [vmem:[%s211 + $0xb8] sm:$0xff]
        %v264 = vld [vmem:[%s2] sm:$0x3f]
        %266 = vset.pattern.permute.xlu0 0
        %267 = vperm.xlu0 %266, %v264
        %v268 = vpop.permute.xlu0 %267
        %vm270 = vcmask 195584
        %v272 = vsel %vm270, %v239, 0
        %274 = vmatprep.subr.mxu0 %v241
        %275 = vmatpush1.msra.mxu0 %v240
        %276 = vmatprep.subr.mxu0 %v249
        %277 = vmatpush1.msra.mxu0 %v248
        %278 = vmatprep.subr.mxu0 %v257
        %279 = vmatpush1.msra.mxu0 %v256
        %280 = vmatprep.subr.mxu0 0.0
        %281 = vmatpush1.msra.mxu0 0.0
        %282 = vmatprep.subr.mxu0 0.0
        %283 = vmatpush1.msra.mxu0 0.0
        %284 = vmatprep.subr.mxu0 0.0
        %285 = vmatpush1.msra.mxu0 0.0
        %286 = vmatprep.subr.mxu0 0.0
        %287 = vmatpush1.msra.mxu0 0.0
        %288 = vmatprep.subr.mxu0 0.0
        %289 = vmatpush1.msra.mxu0 0.0
        %290 = vmatprep.subr.mxu0 0.0
        %291 = vmatpush1.msra.mxu0 0.0
        %292 = vmatprep.subr.mxu0 0.0
        %293 = vmatpush1.msra.mxu0 0.0
        %294 = vmatprep.subr.mxu0 0.0
        %295 = vmatpush1.msra.mxu0 0.0
        %296 = vmatprep.subr.mxu0 0.0
        %297 = vmatpush1.msra.mxu0 0.0
        %298 = vmatprep.subr.mxu0 0.0
        %299 = vmatpush1.msra.mxu0 0.0
        %300 = vmatprep.subr.mxu0 0.0
        %301 = vmatpush1.msra.mxu0 0.0
        %302 = vmatprep.subr.mxu0 0.0
        %303 = vmatpush1.msra.mxu0 0.0
        %304 = vmatprep.subr.mxu0 0.0
        %305 = vmatpush1.msra.mxu0 0.0
        %306 = vmatprep.subr.mxu0 0.0
        %307 = vmatpush1.msra.mxu0 0.0
        %308 = vmatprep.subr.mxu0 0.0
        %309 = vmatpush1.msra.mxu0 0.0
        %310 = vmatprep.subr.mxu0 0.0
        %311 = vmatpush1.msra.mxu0 0.0
        %312 = vmatprep.subr.mxu0 0.0
        %313 = vmatpush1.msra.mxu0 0.0
        %314 = vmatprep.subr.mxu0 0.0
        %315 = vmatpush1.msra.mxu0 0.0
        %316 = vmatprep.subr.mxu0 0.0
        %317 = vmatpush1.msra.mxu0 0.0
        %318 = vmatprep.subr.mxu0 0.0
        %319 = vmatpush1.msra.mxu0 0.0
        %320 = vmatprep.subr.mxu0 0.0
        %321 = vmatpush1.msra.mxu0 0.0
        %322 = vmatprep.subr.mxu0 0.0
        %323 = vmatpush1.msra.mxu0 0.0
        %324 = vmatprep.subr.mxu0 0.0
        %325 = vmatpush1.msra.mxu0 0.0
        %326 = vmatprep.subr.mxu0 0.0
        %327 = vmatpush1.msra.mxu0 0.0
        %328 = vmatprep.subr.mxu0 0.0
        %329 = vmatpush1.msra.mxu0 0.0
        %330 = vmatprep.subr.mxu0 0.0
        %331 = vmatpush1.msra.mxu0 0.0
        %332 = vmatprep.subr.mxu0 0.0
        %333 = vmatpush1.msra.mxu0 0.0
        %334 = vmatprep.subr.mxu0 0.0
        %335 = vmatpush1.msra.mxu0 0.0
        %336 = vmatprep.subr.mxu0 0.0
        %337 = vmatpush1.msra.mxu0 0.0
        %338 = vmatprep.mubr.f32.mxu0 0.0
        %339 = vmatmul.mubr.f32.gmra.mrb[0].mxu0 %v272
        %v340 = vpop.f32.mrb[0].mxu0
        %v341 = vadd.f32 %v268, %v340
        %v342 = vpop.f32.mrb[0].mxu0
        %v343 = vadd.f32 %v268, %v342
        %344 = vdwg.mxu0
        %345 = vmatprep.subr.mxu0 %v243
        %346 = vmatpush1.msra.mxu0 %v242
        %347 = vmatprep.subr.mxu0 %v251
        %348 = vmatpush1.msra.mxu0 %v250
        %349 = vmatprep.subr.mxu0 %v259
        %350 = vmatpush1.msra.mxu0 %v258
        %351 = vmatprep.subr.mxu0 0.0
        %352 = vmatpush1.msra.mxu0 0.0
        %353 = vmatprep.subr.mxu0 0.0
        %354 = vmatpush1.msra.mxu0 0.0
        %355 = vmatprep.subr.mxu0 0.0
        %356 = vmatpush1.msra.mxu0 0.0
        %357 = vmatprep.subr.mxu0 0.0
        %358 = vmatpush1.msra.mxu0 0.0
        %359 = vmatprep.subr.mxu0 0.0
        %360 = vmatpush1.msra.mxu0 0.0
        %361 = vmatprep.subr.mxu0 0.0
        %362 = vmatpush1.msra.mxu0 0.0
        %363 = vmatprep.subr.mxu0 0.0
        %364 = vmatpush1.msra.mxu0 0.0
        %365 = vmatprep.subr.mxu0 0.0
        %366 = vmatpush1.msra.mxu0 0.0
        %367 = vmatprep.subr.mxu0 0.0
        %368 = vmatpush1.msra.mxu0 0.0
        %369 = vmatprep.subr.mxu0 0.0
        %370 = vmatpush1.msra.mxu0 0.0
        %371 = vmatprep.subr.mxu0 0.0
        %372 = vmatpush1.msra.mxu0 0.0
        %373 = vmatprep.subr.mxu0 0.0
        %374 = vmatpush1.msra.mxu0 0.0
        %375 = vmatprep.subr.mxu0 0.0
        %376 = vmatpush1.msra.mxu0 0.0
        %377 = vmatprep.subr.mxu0 0.0
        %378 = vmatpush1.msra.mxu0 0.0
        %379 = vmatprep.subr.mxu0 0.0
        %380 = vmatpush1.msra.mxu0 0.0
        %381 = vmatprep.subr.mxu0 0.0
        %382 = vmatpush1.msra.mxu0 0.0
        %383 = vmatprep.subr.mxu0 0.0
        %384 = vmatpush1.msra.mxu0 0.0
        %385 = vmatprep.subr.mxu0 0.0
        %386 = vmatpush1.msra.mxu0 0.0
        %387 = vmatprep.subr.mxu0 0.0
        %388 = vmatpush1.msra.mxu0 0.0
        %389 = vmatprep.subr.mxu0 0.0
        %390 = vmatpush1.msra.mxu0 0.0
        %391 = vmatprep.subr.mxu0 0.0
        %392 = vmatpush1.msra.mxu0 0.0
        %393 = vmatprep.subr.mxu0 0.0
        %394 = vmatpush1.msra.mxu0 0.0
        %395 = vmatprep.subr.mxu0 0.0
        %396 = vmatpush1.msra.mxu0 0.0
        %397 = vmatprep.subr.mxu0 0.0
        %398 = vmatpush1.msra.mxu0 0.0
        %399 = vmatprep.subr.mxu0 0.0
        %400 = vmatpush1.msra.mxu0 0.0
        %401 = vmatprep.subr.mxu0 0.0
        %402 = vmatpush1.msra.mxu0 0.0
        %403 = vmatprep.subr.mxu0 0.0
        %404 = vmatpush1.msra.mxu0 0.0
        %405 = vmatprep.subr.mxu0 0.0
        %406 = vmatpush1.msra.mxu0 0.0
        %407 = vmatprep.subr.mxu0 0.0
        %408 = vmatpush1.msra.mxu0 0.0
        %409 = vmatprep.mubr.f32.mxu0 0.0
        %410 = vmatmul.mubr.f32.gmra.mrb[0].mxu0 %v272
        %v411 = vpop.f32.mrb[0].mxu0
        %v412 = vadd.f32 %v268, %v411
        %v413 = vpop.f32.mrb[0].mxu0
        %v414 = vadd.f32 %v268, %v413
        %415 = vdwg.mxu0
        %416 = vmatprep.subr.mxu0 %v245
        %417 = vmatpush1.msra.mxu0 %v244
        %418 = vmatprep.subr.mxu0 %v253
        %419 = vmatpush1.msra.mxu0 %v252
        %420 = vmatprep.subr.mxu0 %v261
        %421 = vmatpush1.msra.mxu0 %v260
        %422 = vmatprep.subr.mxu0 0.0
        %423 = vmatpush1.msra.mxu0 0.0
        %424 = vmatprep.subr.mxu0 0.0
        %425 = vmatpush1.msra.mxu0 0.0
        %426 = vmatprep.subr.mxu0 0.0
        %427 = vmatpush1.msra.mxu0 0.0
        %428 = vmatprep.subr.mxu0 0.0
        %429 = vmatpush1.msra.mxu0 0.0
        %430 = vmatprep.subr.mxu0 0.0
        %431 = vmatpush1.msra.mxu0 0.0
        %432 = vmatprep.subr.mxu0 0.0
        %433 = vmatpush1.msra.mxu0 0.0
        %434 = vmatprep.subr.mxu0 0.0
        %435 = vmatpush1.msra.mxu0 0.0
        %436 = vmatprep.subr.mxu0 0.0
        %437 = vmatpush1.msra.mxu0 0.0
        %438 = vmatprep.subr.mxu0 0.0
        %439 = vmatpush1.msra.mxu0 0.0
        %440 = vmatprep.subr.mxu0 0.0
        %441 = vmatpush1.msra.mxu0 0.0
        %442 = vmatprep.subr.mxu0 0.0
        %443 = vmatpush1.msra.mxu0 0.0
        %444 = vmatprep.subr.mxu0 0.0
        %445 = vmatpush1.msra.mxu0 0.0
        %446 = vmatprep.subr.mxu0 0.0
        %447 = vmatpush1.msra.mxu0 0.0
        %448 = vmatprep.subr.mxu0 0.0
        %449 = vmatpush1.msra.mxu0 0.0
        %450 = vmatprep.subr.mxu0 0.0
        %451 = vmatpush1.msra.mxu0 0.0
        %452 = vmatprep.subr.mxu0 0.0
        %453 = vmatpush1.msra.mxu0 0.0
        %454 = vmatprep.subr.mxu0 0.0
        %455 = vmatpush1.msra.mxu0 0.0
        %456 = vmatprep.subr.mxu0 0.0
        %457 = vmatpush1.msra.mxu0 0.0
        %458 = vmatprep.subr.mxu0 0.0
        %459 = vmatpush1.msra.mxu0 0.0
        %460 = vmatprep.subr.mxu0 0.0
        %461 = vmatpush1.msra.mxu0 0.0
        %462 = vmatprep.subr.mxu0 0.0
        %463 = vmatpush1.msra.mxu0 0.0
        %464 = vmatprep.subr.mxu0 0.0
        %465 = vmatpush1.msra.mxu0 0.0
        %466 = vmatprep.subr.mxu0 0.0
        %467 = vmatpush1.msra.mxu0 0.0
        %468 = vmatprep.subr.mxu0 0.0
        %469 = vmatpush1.msra.mxu0 0.0
        %470 = vmatprep.subr.mxu0 0.0
        %471 = vmatpush1.msra.mxu0 0.0
        %472 = vmatprep.subr.mxu0 0.0
        %473 = vmatpush1.msra.mxu0 0.0
        %474 = vmatprep.subr.mxu0 0.0
        %475 = vmatpush1.msra.mxu0 0.0
        %476 = vmatprep.subr.mxu0 0.0
        %477 = vmatpush1.msra.mxu0 0.0
        %478 = vmatprep.subr.mxu0 0.0
        %479 = vmatpush1.msra.mxu0 0.0
        %480 = vmatprep.mubr.f32.mxu0 0.0
        %481 = vmatmul.mubr.f32.gmra.mrb[0].mxu0 %v272
        %v482 = vpop.f32.mrb[0].mxu0
        %v483 = vadd.f32 %v268, %v482
        %v484 = vpop.f32.mrb[0].mxu0
        %v485 = vadd.f32 %v268, %v484
        %486 = vdwg.mxu0
        %487 = vmatprep.subr.mxu0 %v247
        %488 = vmatpush1.msra.mxu0 %v246
        %489 = vmatprep.subr.mxu0 %v255
        %490 = vmatpush1.msra.mxu0 %v254
        %491 = vmatprep.subr.mxu0 %v263
        %492 = vmatpush1.msra.mxu0 %v262
        %493 = vmatprep.subr.mxu0 0.0
        %494 = vmatpush1.msra.mxu0 0.0
        %495 = vmatprep.subr.mxu0 0.0
        %496 = vmatpush1.msra.mxu0 0.0
        %497 = vmatprep.subr.mxu0 0.0
        %498 = vmatpush1.msra.mxu0 0.0
        %499 = vmatprep.subr.mxu0 0.0
        %500 = vmatpush1.msra.mxu0 0.0
        %501 = vmatprep.subr.mxu0 0.0
        %502 = vmatpush1.msra.mxu0 0.0
        %503 = vmatprep.subr.mxu0 0.0
        %504 = vmatpush1.msra.mxu0 0.0
        %505 = vmatprep.subr.mxu0 0.0
        %506 = vmatpush1.msra.mxu0 0.0
        %507 = vmatprep.subr.mxu0 0.0
        %508 = vmatpush1.msra.mxu0 0.0
        %509 = vmatprep.subr.mxu0 0.0
        %510 = vmatpush1.msra.mxu0 0.0
        %511 = vmatprep.subr.mxu0 0.0
        %512 = vmatpush1.msra.mxu0 0.0
        %513 = vmatprep.subr.mxu0 0.0
        %514 = vmatpush1.msra.mxu0 0.0
        %515 = vmatprep.subr.mxu0 0.0
        %516 = vmatpush1.msra.mxu0 0.0
        %517 = vmatprep.subr.mxu0 0.0
        %518 = vmatpush1.msra.mxu0 0.0
        %519 = vmatprep.subr.mxu0 0.0
        %520 = vmatpush1.msra.mxu0 0.0
        %521 = vmatprep.subr.mxu0 0.0
        %522 = vmatpush1.msra.mxu0 0.0
        %523 = vmatprep.subr.mxu0 0.0
        %524 = vmatpush1.msra.mxu0 0.0
        %525 = vmatprep.subr.mxu0 0.0
        %526 = vmatpush1.msra.mxu0 0.0
        %527 = vmatprep.subr.mxu0 0.0
        %528 = vmatpush1.msra.mxu0 0.0
        %529 = vmatprep.subr.mxu0 0.0
        %530 = vmatpush1.msra.mxu0 0.0
        %531 = vmatprep.subr.mxu0 0.0
        %532 = vmatpush1.msra.mxu0 0.0
        %533 = vmatprep.subr.mxu0 0.0
        %534 = vmatpush1.msra.mxu0 0.0
        %535 = vmatprep.subr.mxu0 0.0
        %536 = vmatpush1.msra.mxu0 0.0
        %537 = vmatprep.subr.mxu0 0.0
        %538 = vmatpush1.msra.mxu0 0.0
        %539 = vmatprep.subr.mxu0 0.0
        %540 = vmatpush1.msra.mxu0 0.0
        %541 = vmatprep.subr.mxu0 0.0
        %542 = vmatpush1.msra.mxu0 0.0
        %543 = vmatprep.subr.mxu0 0.0
        %544 = vmatpush1.msra.mxu0 0.0
        %545 = vmatprep.subr.mxu0 0.0
        %546 = vmatpush1.msra.mxu0 0.0
        %547 = vmatprep.subr.mxu0 0.0
        %548 = vmatpush1.msra.mxu0 0.0
        %549 = vmatprep.subr.mxu0 0.0
        %550 = vmatpush1.msra.mxu0 0.0
        %551 = vmatprep.mubr.f32.mxu0 0.0
        %552 = vmatmul.mubr.f32.gmra.mrb[0].mxu0 %v272
        %v553 = vpop.f32.mrb[0].mxu0
        %v554 = vadd.f32 %v268, %v553
        %v555 = vpop.f32.mrb[0].mxu0
        %v556 = vadd.f32 %v268, %v555
        %557 = vdwg.mxu0
        %558 = vst [vmem:[%s237] sm:$0x3f] %v341
        %559 = vst [vmem:[%s237 + $0x8] sm:$0x3f] %v343
        %560 = vst [vmem:[%s237 + $0x10] sm:$0x3f] %v412
        %561 = vst [vmem:[%s237 + $0x18] sm:$0x3f] %v414
        %562 = vst [vmem:[%s237 + $0x20] sm:$0x3f] %v483
        %563 = vst [vmem:[%s237 + $0x28] sm:$0x3f] %v485
        %564 = vst [vmem:[%s237 + $0x30] sm:$0x3f] %v554
        %565 = vst [vmem:[%s237 + $0x38] sm:$0x3f] %v556
        %s566 = smul.u32 8, %s14
        %p567 = scmp.lt.s32.totalorder %s566, 15
        %s568 = scalar_select %p567, %s566, 15
        %s569 = smul.addr %s568, 8
        %s570 = scalar_lea.vmem %s3, %s569
        // Predicated region
        $region56: #{fmdb_basic_fwd.28} parent=50 // pred_check
          %p571 = pneg %p100
        $region57: #{fmdb_basic_fwd.28} parent=50 // pred_check_branch
          %573 = sbr.rel (%p571) target = $region59
        $region58: #{fmdb_basic_fwd.28} parent=50 // pred_region
          %s574 = smul.u32 8, %s14
        $region59: #{fmdb_basic_fwd.28} parent=50 // pred_fallthru
          _
      $region51: #{fmdb_basic_fwd.28} parent=5 // pred_fallthru
        _
      %p575 = scmp.le.s32.totalorder 2, %s9
      // Predicated region
      $region60: #{fmdb_basic_fwd.28} parent=5 // pred_check
        %p576 = pneg %p575
      $region61: #{fmdb_basic_fwd.28} parent=5 // pred_check_branch
        %578 = sbr.rel (%p576) target = $region63
      $region62: #{fmdb_basic_fwd.28} parent=5 // pred_region
        %s579 = ssub.s32 %s9, 2
        // Predicated region
        $region64: #{fmdb_basic_fwd.28} parent=62 // pred_check
          %p580 = pneg %p106
        $region65: #{fmdb_basic_fwd.28} parent=62 // pred_check_branch
          %582 = sbr.rel (%p580) target = $region67
        $region66: #{fmdb_basic_fwd.28} parent=62 // pred_region
          %s583 = smul.u32 8, %s15
          %p584 = scmp.lt.s32.totalorder %s583, 15
          %s585 = scalar_select %p584, %s583, 15
          %s586 = smul.addr %s585, 8
          %s587 = scalar_lea.vmem %s3, %s586
        $region67: #{fmdb_basic_fwd.28} parent=62 // pred_fallthru
          _
      $region63: #{fmdb_basic_fwd.28} parent=5 // pred_fallthru
        _
    $region6: #{fmdb_basic_fwd.28} parent=1 // loop_footer
      %s13 = sadd.s32 1, %s9
    $region7: #{fmdb_basic_fwd.28} parent=1 // loop_footer_branch
      %8 = sbr.rel target = $region3
    $region8: #{fmdb_basic_fwd.28} parent=1 // loop_exit
      _

// kernel: fmdb_basic_fwd.29
$region0: #{fmdb_basic_fwd.29}
  #allocation0 [shape = 'u32[]', space=smem, size = 0x4, offset = 0x4, fixed_abs, tag = 'smem constant byte address 0x4 - core index']
  #allocation1 [shape = 'u32[144,128]{1,0:T(1,128)}', space=vmem, size = 0x12000, scoped, tag = 'internal scratch']
  %s0 = inlined_call_operand.vmem [shape: f32[54,512], index: 0, kind: input, shape index: {}]
  %s1 = inlined_call_operand.vmem [shape: f32[24,54], index: 1, kind: input, shape index: {}]
  %s2 = inlined_call_operand.vmem [shape: f32[24,1], index: 2, kind: input, shape index: {}]
  %s3 = inlined_call_operand.vmem [shape: f32[24,512], index: 3, kind: output, shape index: {}]
  %s4 = sld [smem:[#allocation0]]
  $region22: #{fmdb_basic_fwd.29} parent=0
    _
  %s6 = ssub.s32 1, %s4
  %s7 = scalar_select 0, %s6, %s4
  // Predicated region
  $region2: #{fmdb_basic_fwd.29} parent=0 // pred_check
    _
  $region3: #{fmdb_basic_fwd.29} parent=0 // pred_check_branch
    %9 = sbr.rel (0) target = $region5
  $region4: #{fmdb_basic_fwd.29} parent=0 // pred_region
    _
  $region5: #{fmdb_basic_fwd.29} parent=0 // pred_fallthru
    _
  // Predicated region
  $region6: #{fmdb_basic_fwd.29} parent=0 // pred_check
    _
  $region7: #{fmdb_basic_fwd.29} parent=0 // pred_check_branch
    %11 = sbr.rel (0) target = $region9
  $region8: #{fmdb_basic_fwd.29} parent=0 // pred_region
    _
  $region9: #{fmdb_basic_fwd.29} parent=0 // pred_fallthru
    _
  // Predicated region
  $region10: #{fmdb_basic_fwd.29} parent=0 // pred_check
    _
  $region11: #{fmdb_basic_fwd.29} parent=0 // pred_check_branch
    %13 = sbr.rel (0) target = $region13
  $region12: #{fmdb_basic_fwd.29} parent=0 // pred_region
    _
  $region13: #{fmdb_basic_fwd.29} parent=0 // pred_fallthru
    _
  %v14 = vld [vmem:[%s1] sm:$0xff]
  %v15 = vld [vmem:[%s1 + $0x8] sm:$0xff]
  %v16 = vld [vmem:[%s1 + $0x10] sm:$0xff]
  %v17 = vld [vmem:[%s0] sm:$0xff]
  %v18 = vld [vmem:[%s0 + $0x8] sm:$0xff]
  %v19 = vld [vmem:[%s0 + $0x10] sm:$0xff]
  %v20 = vld [vmem:[%s0 + $0x18] sm:$0xff]
  %v21 = vld [vmem:[%s0 + $0x20] sm:$0xff]
  %v22 = vld [vmem:[%s0 + $0x28] sm:$0xff]
  %v23 = vld [vmem:[%s0 + $0x30] sm:$0xff]
  %v24 = vld [vmem:[%s0 + $0x38] sm:$0xff]
  %v25 = vld [vmem:[%s0 + $0x40] sm:$0xff]
  %v26 = vld [vmem:[%s0 + $0x48] sm:$0xff]
  %v27 = vld [vmem:[%s0 + $0x50] sm:$0xff]
  %v28 = vld [vmem:[%s0 + $0x58] sm:$0xff]
  %v29 = vld [vmem:[%s0 + $0x60] sm:$0xff]
  %v30 = vld [vmem:[%s0 + $0x68] sm:$0xff]
  %v31 = vld [vmem:[%s0 + $0x70] sm:$0xff]
  %v32 = vld [vmem:[%s0 + $0x78] sm:$0xff]
  %v33 = vld [vmem:[%s0 + $0x80] sm:$0xff]
  %v34 = vld [vmem:[%s0 + $0x88] sm:$0xff]
  %v35 = vld [vmem:[%s0 + $0x90] sm:$0xff]
  %v36 = vld [vmem:[%s0 + $0x98] sm:$0xff]
  %v37 = vld [vmem:[%s0 + $0xa0] sm:$0xff]
  %v38 = vld [vmem:[%s0 + $0xa8] sm:$0xff]
  %v39 = vld [vmem:[%s0 + $0xb0] sm:$0xff]
  %v40 = vld [vmem:[%s0 + $0xb8] sm:$0xff]
  %v41 = vld [vmem:[%s0 + $0xc0] sm:$0x3f]
  %v42 = vld [vmem:[%s0 + $0xc8] sm:$0x3f]
  %v43 = vld [vmem:[%s0 + $0xd0] sm:$0x3f]
  %v44 = vld [vmem:[%s0 + $0xd8] sm:$0x3f]
  %v45 = vld [vmem:[%s2] sm:$0xff]
  %v46 = vld [vmem:[%s2 + $0x8] sm:$0xff]
  %v47 = vld [vmem:[%s2 + $0x10] sm:$0xff]
  %49 = vset.pattern.permute.xlu0 0
  %50 = vperm.xlu0 %49, %v45
  %v51 = vpop.permute.xlu0 %50
  %54 = vset.pattern.permute.xlu0 0
  %55 = vperm.xlu0 %54, %v46
  %v56 = vpop.permute.xlu0 %55
  %59 = vset.pattern.permute.xlu0 0
  %60 = vperm.xlu0 %59, %v47
  %v61 = vpop.permute.xlu0 %60
  %vm63 = vcmask 441344
  %v65 = vsel %vm63, %v14, 0
  %v68 = vsel %vm63, %v15, 0
  %v71 = vsel %vm63, %v16, 0
  %vm73 = vcmask 1045504
  %v75 = vsel %vm73, %v41, 0
  %v78 = vsel %vm73, %v42, 0
  %v81 = vsel %vm73, %v43, 0
  %v84 = vsel %vm73, %v44, 0
  %86 = vmatprep.subr.mxu0 %v18
  %87 = vmatpush1.msra.mxu0 %v17
  %88 = vmatprep.subr.mxu0 %v22
  %89 = vmatpush1.msra.mxu0 %v21
  %90 = vmatprep.subr.mxu0 %v26
  %91 = vmatpush1.msra.mxu0 %v25
  %92 = vmatprep.subr.mxu0 %v30
  %93 = vmatpush1.msra.mxu0 %v29
  %94 = vmatprep.subr.mxu0 %v34
  %95 = vmatpush1.msra.mxu0 %v33
  %96 = vmatprep.subr.mxu0 %v38
  %97 = vmatpush1.msra.mxu0 %v37
  %98 = vmatprep.subr.mxu0 %v78
  %99 = vmatpush1.msra.mxu0 %v75
  %100 = vmatprep.subr.mxu0 0.0
  %101 = vmatpush1.msra.mxu0 0.0
  %102 = vmatprep.subr.mxu0 0.0
  %103 = vmatpush1.msra.mxu0 0.0
  %104 = vmatprep.subr.mxu0 0.0
  %105 = vmatpush1.msra.mxu0 0.0
  %106 = vmatprep.subr.mxu0 0.0
  %107 = vmatpush1.msra.mxu0 0.0
  %108 = vmatprep.subr.mxu0 0.0
  %109 = vmatpush1.msra.mxu0 0.0
  %110 = vmatprep.subr.mxu0 0.0
  %111 = vmatpush1.msra.mxu0 0.0
  %112 = vmatprep.subr.mxu0 0.0
  %113 = vmatpush1.msra.mxu0 0.0
  %114 = vmatprep.subr.mxu0 0.0
  %115 = vmatpush1.msra.mxu0 0.0
  %116 = vmatprep.subr.mxu0 0.0
  %117 = vmatpush1.msra.mxu0 0.0
  %118 = vmatprep.subr.mxu0 0.0
  %119 = vmatpush1.msra.mxu0 0.0
  %120 = vmatprep.subr.mxu0 0.0
  %121 = vmatpush1.msra.mxu0 0.0
  %122 = vmatprep.subr.mxu0 0.0
  %123 = vmatpush1.msra.mxu0 0.0
  %124 = vmatprep.subr.mxu0 0.0
  %125 = vmatpush1.msra.mxu0 0.0
  %126 = vmatprep.subr.mxu0 0.0
  %127 = vmatpush1.msra.mxu0 0.0
  %128 = vmatprep.subr.mxu0 0.0
  %129 = vmatpush1.msra.mxu0 0.0
  %130 = vmatprep.subr.mxu0 0.0
  %131 = vmatpush1.msra.mxu0 0.0
  %132 = vmatprep.subr.mxu0 0.0
  %133 = vmatpush1.msra.mxu0 0.0
  %134 = vmatprep.subr.mxu0 0.0
  %135 = vmatpush1.msra.mxu0 0.0
  %136 = vmatprep.subr.mxu0 0.0
  %137 = vmatpush1.msra.mxu0 0.0
  %138 = vmatprep.subr.mxu0 0.0
  %139 = vmatpush1.msra.mxu0 0.0
  %140 = vmatprep.subr.mxu0 0.0
  %141 = vmatpush1.msra.mxu0 0.0
  %142 = vmatprep.subr.mxu0 0.0
  %143 = vmatpush1.msra.mxu0 0.0
  %144 = vmatprep.subr.mxu0 0.0
  %145 = vmatpush1.msra.mxu0 0.0
  %146 = vmatprep.subr.mxu0 0.0
  %147 = vmatpush1.msra.mxu0 0.0
  %148 = vmatprep.subr.mxu0 0.0
  %149 = vmatpush1.msra.mxu0 0.0
  %150 = vmatprep.mubr.f32.mxu0 0.0
  %151 = vmatmul.mubr.f32.gmra.mrb[0].mxu0 %v65
  %v152 = vpop.f32.mrb[0].mxu0
  %v153 = vadd.f32 %v51, %v152
  %v154 = vpop.f32.mrb[0].mxu0
  %v155 = vadd.f32 %v51, %v154
  %156 = vmatprep.mubr.f32.mxu0 0.0
  %157 = vmatmul.mubr.f32.gmra.mrb[0].mxu0 %v68
  %v158 = vpop.f32.mrb[0].mxu0
  %v159 = vadd.f32 %v56, %v158
  %v160 = vpop.f32.mrb[0].mxu0
  %v161 = vadd.f32 %v56, %v160
  %162 = vmatprep.mubr.f32.mxu0 0.0
  %163 = vmatmul.mubr.f32.gmra.mrb[0].mxu0 %v71
  %v164 = vpop.f32.mrb[0].mxu0
  %v165 = vadd.f32 %v61, %v164
  %v166 = vpop.f32.mrb[0].mxu0
  %v167 = vadd.f32 %v61, %v166
  %168 = vdwg.mxu0
  %169 = vmatprep.subr.mxu0 %v20
  %170 = vmatpush1.msra.mxu0 %v19
  %171 = vmatprep.subr.mxu0 %v24
  %172 = vmatpush1.msra.mxu0 %v23
  %173 = vmatprep.subr.mxu0 %v28
  %174 = vmatpush1.msra.mxu0 %v27
  %175 = vmatprep.subr.mxu0 %v32
  %176 = vmatpush1.msra.mxu0 %v31
  %177 = vmatprep.subr.mxu0 %v36
  %178 = vmatpush1.msra.mxu0 %v35
  %179 = vmatprep.subr.mxu0 %v40
  %180 = vmatpush1.msra.mxu0 %v39
  %181 = vmatprep.subr.mxu0 %v84
  %182 = vmatpush1.msra.mxu0 %v81
  %183 = vmatprep.subr.mxu0 0.0
  %184 = vmatpush1.msra.mxu0 0.0
  %185 = vmatprep.subr.mxu0 0.0
  %186 = vmatpush1.msra.mxu0 0.0
  %187 = vmatprep.subr.mxu0 0.0
  %188 = vmatpush1.msra.mxu0 0.0
  %189 = vmatprep.subr.mxu0 0.0
  %190 = vmatpush1.msra.mxu0 0.0
  %191 = vmatprep.subr.mxu0 0.0
  %192 = vmatpush1.msra.mxu0 0.0
  %193 = vmatprep.subr.mxu0 0.0
  %194 = vmatpush1.msra.mxu0 0.0
  %195 = vmatprep.subr.mxu0 0.0
  %196 = vmatpush1.msra.mxu0 0.0
  %197 = vmatprep.subr.mxu0 0.0
  %198 = vmatpush1.msra.mxu0 0.0
  %199 = vmatprep.subr.mxu0 0.0
  %200 = vmatpush1.msra.mxu0 0.0
  %201 = vmatprep.subr.mxu0 0.0
  %202 = vmatpush1.msra.mxu0 0.0
  %203 = vmatprep.subr.mxu0 0.0
  %204 = vmatpush1.msra.mxu0 0.0
  %205 = vmatprep.subr.mxu0 0.0
  %206 = vmatpush1.msra.mxu0 0.0
  %207 = vmatprep.subr.mxu0 0.0
  %208 = vmatpush1.msra.mxu0 0.0
  %209 = vmatprep.subr.mxu0 0.0
  %210 = vmatpush1.msra.mxu0 0.0
  %211 = vmatprep.subr.mxu0 0.0
  %212 = vmatpush1.msra.mxu0 0.0
  %213 = vmatprep.subr.mxu0 0.0
  %214 = vmatpush1.msra.mxu0 0.0
  %215 = vmatprep.subr.mxu0 0.0
  %216 = vmatpush1.msra.mxu0 0.0
  %217 = vmatprep.subr.mxu0 0.0
  %218 = vmatpush1.msra.mxu0 0.0
  %219 = vmatprep.subr.mxu0 0.0
  %220 = vmatpush1.msra.mxu0 0.0
  %221 = vmatprep.subr.mxu0 0.0
  %222 = vmatpush1.msra.mxu0 0.0
  %223 = vmatprep.subr.mxu0 0.0
  %224 = vmatpush1.msra.mxu0 0.0
  %225 = vmatprep.subr.mxu0 0.0
  %226 = vmatpush1.msra.mxu0 0.0
  %227 = vmatprep.subr.mxu0 0.0
  %228 = vmatpush1.msra.mxu0 0.0
  %229 = vmatprep.subr.mxu0 0.0
  %230 = vmatpush1.msra.mxu0 0.0
  %231 = vmatprep.subr.mxu0 0.0
  %232 = vmatpush1.msra.mxu0 0.0
  %233 = vmatprep.mubr.f32.mxu0 0.0
  %234 = vmatmul.mubr.f32.gmra.mrb[0].mxu0 %v65
  %v235 = vpop.f32.mrb[0].mxu0
  %v236 = vadd.f32 %v51, %v235
  %v237 = vpop.f32.mrb[0].mxu0
  %v238 = vadd.f32 %v51, %v237
  %239 = vmatprep.mubr.f32.mxu0 0.0
  %240 = vmatmul.mubr.f32.gmra.mrb[0].mxu0 %v68
  %v241 = vpop.f32.mrb[0].mxu0
  %v242 = vadd.f32 %v56, %v241
  %v243 = vpop.f32.mrb[0].mxu0
  %v244 = vadd.f32 %v56, %v243
  %245 = vmatprep.mubr.f32.mxu0 0.0
  %246 = vmatmul.mubr.f32.gmra.mrb[0].mxu0 %v71
  %v247 = vpop.f32.mrb[0].mxu0
  %v248 = vadd.f32 %v61, %v247
  %v249 = vpop.f32.mrb[0].mxu0
  %v250 = vadd.f32 %v61, %v249
  %251 = vdwg.mxu0
  %252 = vst [vmem:[%s3] sm:$0xff] %v153
  %253 = vst [vmem:[%s3 + $0x8] sm:$0xff] %v155
  %254 = vst [vmem:[%s3 + $0x10] sm:$0xff] %v236
  %255 = vst [vmem:[%s3 + $0x18] sm:$0xff] %v238
  %256 = vst [vmem:[%s3 + $0x20] sm:$0xff] %v159
  %257 = vst [vmem:[%s3 + $0x28] sm:$0xff] %v161
  %258 = vst [vmem:[%s3 + $0x30] sm:$0xff] %v242
  %259 = vst [vmem:[%s3 + $0x38] sm:$0xff] %v244
  %260 = vst [vmem:[%s3 + $0x40] sm:$0xff] %v165
  %261 = vst [vmem:[%s3 + $0x48] sm:$0xff] %v167
  %262 = vst [vmem:[%s3 + $0x50] sm:$0xff] %v248
  %263 = vst [vmem:[%s3 + $0x58] sm:$0xff] %v250
  // Predicated region
  $region14: #{fmdb_basic_fwd.29} parent=0 // pred_check
    _
  $region15: #{fmdb_basic_fwd.29} parent=0 // pred_check_branch
    %265 = sbr.rel (0) target = $region17
  $region16: #{fmdb_basic_fwd.29} parent=0 // pred_region
    _
  $region17: #{fmdb_basic_fwd.29} parent=0 // pred_fallthru
    _
  // Predicated region
  $region18: #{fmdb_basic_fwd.29} parent=0 // pred_check
    _
  $region19: #{fmdb_basic_fwd.29} parent=0 // pred_check_branch
    %267 = sbr.rel (0) target = $region21
  $region20: #{fmdb_basic_fwd.29} parent=0 // pred_region
    _
  $region21: #{fmdb_basic_fwd.29} parent=0 // pred_fallthru
    _

// kernel: fmdb_basic_fwd.32
$region0: #{fmdb_basic_fwd.32}
  #allocation0 [shape = 'u32[]', space=smem, size = 0x4, offset = 0x4, fixed_abs, tag = 'smem constant byte address 0x4 - core index']
  #allocation1 [shape = 'u32[144,128]{1,0:T(1,128)}', space=vmem, size = 0x12000, scoped, tag = 'internal scratch']
  %s0 = inlined_call_operand.vmem [shape: f32[6,32], index: 0, kind: input, shape index: {}]
  %s1 = inlined_call_operand.vmem [shape: f32[6,6], index: 1, kind: input, shape index: {}]
  %s2 = inlined_call_operand.vmem [shape: f32[6,1], index: 2, kind: input, shape index: {}]
  %s3 = inlined_call_operand.vmem [shape: f32[6,32], index: 3, kind: output, shape index: {}]
  %s4 = sld [smem:[#allocation0]]
  $region22: #{fmdb_basic_fwd.32} parent=0
    _
  %s6 = ssub.s32 1, %s4
  %s7 = scalar_select 0, %s6, %s4
  // Predicated region
  $region2: #{fmdb_basic_fwd.32} parent=0 // pred_check
    _
  $region3: #{fmdb_basic_fwd.32} parent=0 // pred_check_branch
    %9 = sbr.rel (0) target = $region5
  $region4: #{fmdb_basic_fwd.32} parent=0 // pred_region
    _
  $region5: #{fmdb_basic_fwd.32} parent=0 // pred_fallthru
    _
  // Predicated region
  $region6: #{fmdb_basic_fwd.32} parent=0 // pred_check
    _
  $region7: #{fmdb_basic_fwd.32} parent=0 // pred_check_branch
    %11 = sbr.rel (0) target = $region9
  $region8: #{fmdb_basic_fwd.32} parent=0 // pred_region
    _
  $region9: #{fmdb_basic_fwd.32} parent=0 // pred_fallthru
    _
  // Predicated region
  $region10: #{fmdb_basic_fwd.32} parent=0 // pred_check
    _
  $region11: #{fmdb_basic_fwd.32} parent=0 // pred_check_branch
    %13 = sbr.rel (0) target = $region13
  $region12: #{fmdb_basic_fwd.32} parent=0 // pred_region
    _
  $region13: #{fmdb_basic_fwd.32} parent=0 // pred_fallthru
    _
  %v14 = vld [vmem:[%s1] sm:$0x3f]
  %v15 = vld [vmem:[%s0] sm:$0x3f]
  %v16 = vld [vmem:[%s2] sm:$0x3f]
  %18 = vset.pattern.permute.xlu0 0
  %19 = vperm.xlu0 %18, %v16
  %v20 = vpop.permute.xlu0 %19
  %vm22 = vcmask 48128
  %v24 = vsel %vm22, %v14, 0
  %vm26 = vcmask 1045504
  %v28 = vsel %vm26, %v15, 0
  %30 = vmatprep.subr.mxu0 0.0
  %31 = vmatpush1.msra.mxu0 %v28
  %32 = vmatprep.subr.mxu0 0.0
  %33 = vmatpush1.msra.mxu0 0.0
  %34 = vmatprep.subr.mxu0 0.0
  %35 = vmatpush1.msra.mxu0 0.0
  %36 = vmatprep.subr.mxu0 0.0
  %37 = vmatpush1.msra.mxu0 0.0
  %38 = vmatprep.subr.mxu0 0.0
  %39 = vmatpush1.msra.mxu0 0.0
  %40 = vmatprep.subr.mxu0 0.0
  %41 = vmatpush1.msra.mxu0 0.0
  %42 = vmatprep.subr.mxu0 0.0
  %43 = vmatpush1.msra.mxu0 0.0
  %44 = vmatprep.subr.mxu0 0.0
  %45 = vmatpush1.msra.mxu0 0.0
  %46 = vmatprep.subr.mxu0 0.0
  %47 = vmatpush1.msra.mxu0 0.0
  %48 = vmatprep.subr.mxu0 0.0
  %49 = vmatpush1.msra.mxu0 0.0
  %50 = vmatprep.subr.mxu0 0.0
  %51 = vmatpush1.msra.mxu0 0.0
  %52 = vmatprep.subr.mxu0 0.0
  %53 = vmatpush1.msra.mxu0 0.0
  %54 = vmatprep.subr.mxu0 0.0
  %55 = vmatpush1.msra.mxu0 0.0
  %56 = vmatprep.subr.mxu0 0.0
  %57 = vmatpush1.msra.mxu0 0.0
  %58 = vmatprep.subr.mxu0 0.0
  %59 = vmatpush1.msra.mxu0 0.0
  %60 = vmatprep.subr.mxu0 0.0
  %61 = vmatpush1.msra.mxu0 0.0
  %62 = vmatprep.subr.mxu0 0.0
  %63 = vmatpush1.msra.mxu0 0.0
  %64 = vmatprep.subr.mxu0 0.0
  %65 = vmatpush1.msra.mxu0 0.0
  %66 = vmatprep.subr.mxu0 0.0
  %67 = vmatpush1.msra.mxu0 0.0
  %68 = vmatprep.subr.mxu0 0.0
  %69 = vmatpush1.msra.mxu0 0.0
  %70 = vmatprep.subr.mxu0 0.0
  %71 = vmatpush1.msra.mxu0 0.0
  %72 = vmatprep.subr.mxu0 0.0
  %73 = vmatpush1.msra.mxu0 0.0
  %74 = vmatprep.subr.mxu0 0.0
  %75 = vmatpush1.msra.mxu0 0.0
  %76 = vmatprep.subr.mxu0 0.0
  %77 = vmatpush1.msra.mxu0 0.0
  %78 = vmatprep.subr.mxu0 0.0
  %79 = vmatpush1.msra.mxu0 0.0
  %80 = vmatprep.subr.mxu0 0.0
  %81 = vmatpush1.msra.mxu0 0.0
  %82 = vmatprep.subr.mxu0 0.0
  %83 = vmatpush1.msra.mxu0 0.0
  %84 = vmatprep.subr.mxu0 0.0
  %85 = vmatpush1.msra.mxu0 0.0
  %86 = vmatprep.subr.mxu0 0.0
  %87 = vmatpush1.msra.mxu0 0.0
  %88 = vmatprep.subr.mxu0 0.0
  %89 = vmatpush1.msra.mxu0 0.0
  %90 = vmatprep.subr.mxu0 0.0
  %91 = vmatpush1.msra.mxu0 0.0
  %92 = vmatprep.subr.mxu0 0.0
  %93 = vmatpush1.msra.mxu0 0.0
  %94 = vmatprep.mubr.f32.mxu0 0.0
  %95 = vmatmul.mubr.f32.gmra.mrb[0].mxu0 %v24
  %v96 = vpop.f32.mrb[0].mxu0
  %v97 = vadd.f32 %v20, %v96
  %v98 = vpop.f32.mrb[0].mxu0
  %99 = vdwg.mxu0
  %vm100 = vcmask 259072
  %101 = vst.msk [vmem:[%s3] sm:$0x3f] %vm100, %v97
  // Predicated region
  $region14: #{fmdb_basic_fwd.32} parent=0 // pred_check
    _
  $region15: #{fmdb_basic_fwd.32} parent=0 // pred_check_branch
    %103 = sbr.rel (0) target = $region17
  $region16: #{fmdb_basic_fwd.32} parent=0 // pred_region
    _
  $region17: #{fmdb_basic_fwd.32} parent=0 // pred_fallthru
    _
  // Predicated region
  $region18: #{fmdb_basic_fwd.32} parent=0 // pred_check
    _
  $region19: #{fmdb_basic_fwd.32} parent=0 // pred_check_branch
    %105 = sbr.rel (0) target = $region21
  $region20: #{fmdb_basic_fwd.32} parent=0 // pred_region
    _
  $region21: #{fmdb_basic_fwd.32} parent=0 // pred_fallthru
    _

// kernel: fmdb_basic_fwd.30
$region0: #{fmdb_basic_fwd.30}
  #allocation0 [shape = 'u32[]', space=smem, size = 0x4, offset = 0x4, fixed_abs, tag = 'smem constant byte address 0x4 - core index']
  #allocation1 [shape = 'u32[144,128]{1,0:T(1,128)}', space=vmem, size = 0x12000, scoped, tag = 'internal scratch']
  %s0 = inlined_call_operand.vmem [shape: f32[6,50], index: 0, kind: input, shape index: {}]
  %s1 = inlined_call_operand.vmem [shape: f32[6,6], index: 1, kind: input, shape index: {}]
  %s2 = inlined_call_operand.vmem [shape: f32[6,1], index: 2, kind: input, shape index: {}]
  %s3 = inlined_call_operand.vmem [shape: f32[6,50], index: 3, kind: output, shape index: {}]
  %s4 = sld [smem:[#allocation0]]
  $region22: #{fmdb_basic_fwd.30} parent=0
    _
  %s6 = ssub.s32 1, %s4
  %s7 = scalar_select 0, %s6, %s4
  // Predicated region
  $region2: #{fmdb_basic_fwd.30} parent=0 // pred_check
    _
  $region3: #{fmdb_basic_fwd.30} parent=0 // pred_check_branch
    %9 = sbr.rel (0) target = $region5
  $region4: #{fmdb_basic_fwd.30} parent=0 // pred_region
    _
  $region5: #{fmdb_basic_fwd.30} parent=0 // pred_fallthru
    _
  // Predicated region
  $region6: #{fmdb_basic_fwd.30} parent=0 // pred_check
    _
  $region7: #{fmdb_basic_fwd.30} parent=0 // pred_check_branch
    %11 = sbr.rel (0) target = $region9
  $region8: #{fmdb_basic_fwd.30} parent=0 // pred_region
    _
  $region9: #{fmdb_basic_fwd.30} parent=0 // pred_fallthru
    _
  // Predicated region
  $region10: #{fmdb_basic_fwd.30} parent=0 // pred_check
    _
  $region11: #{fmdb_basic_fwd.30} parent=0 // pred_check_branch
    %13 = sbr.rel (0) target = $region13
  $region12: #{fmdb_basic_fwd.30} parent=0 // pred_region
    _
  $region13: #{fmdb_basic_fwd.30} parent=0 // pred_fallthru
    _
  %v14 = vld [vmem:[%s1] sm:$0x3f]
  %v15 = vld [vmem:[%s0] sm:$0x3f]
  %v16 = vld [vmem:[%s2] sm:$0x3f]
  %18 = vset.pattern.permute.xlu0 0
  %19 = vperm.xlu0 %18, %v16
  %v20 = vpop.permute.xlu0 %19
  %vm22 = vcmask 48128
  %v24 = vsel %vm22, %v14, 0
  %vm26 = vcmask 1045504
  %v28 = vsel %vm26, %v15, 0
  %30 = vmatprep.subr.mxu0 0.0
  %31 = vmatpush1.msra.mxu0 %v28
  %32 = vmatprep.subr.mxu0 0.0
  %33 = vmatpush1.msra.mxu0 0.0
  %34 = vmatprep.subr.mxu0 0.0
  %35 = vmatpush1.msra.mxu0 0.0
  %36 = vmatprep.subr.mxu0 0.0
  %37 = vmatpush1.msra.mxu0 0.0
  %38 = vmatprep.subr.mxu0 0.0
  %39 = vmatpush1.msra.mxu0 0.0
  %40 = vmatprep.subr.mxu0 0.0
  %41 = vmatpush1.msra.mxu0 0.0
  %42 = vmatprep.subr.mxu0 0.0
  %43 = vmatpush1.msra.mxu0 0.0
  %44 = vmatprep.subr.mxu0 0.0
  %45 = vmatpush1.msra.mxu0 0.0
  %46 = vmatprep.subr.mxu0 0.0
  %47 = vmatpush1.msra.mxu0 0.0
  %48 = vmatprep.subr.mxu0 0.0
  %49 = vmatpush1.msra.mxu0 0.0
  %50 = vmatprep.subr.mxu0 0.0
  %51 = vmatpush1.msra.mxu0 0.0
  %52 = vmatprep.subr.mxu0 0.0
  %53 = vmatpush1.msra.mxu0 0.0
  %54 = vmatprep.subr.mxu0 0.0
  %55 = vmatpush1.msra.mxu0 0.0
  %56 = vmatprep.subr.mxu0 0.0
  %57 = vmatpush1.msra.mxu0 0.0
  %58 = vmatprep.subr.mxu0 0.0
  %59 = vmatpush1.msra.mxu0 0.0
  %60 = vmatprep.subr.mxu0 0.0
  %61 = vmatpush1.msra.mxu0 0.0
  %62 = vmatprep.subr.mxu0 0.0
  %63 = vmatpush1.msra.mxu0 0.0
  %64 = vmatprep.subr.mxu0 0.0
  %65 = vmatpush1.msra.mxu0 0.0
  %66 = vmatprep.subr.mxu0 0.0
  %67 = vmatpush1.msra.mxu0 0.0
  %68 = vmatprep.subr.mxu0 0.0
  %69 = vmatpush1.msra.mxu0 0.0
  %70 = vmatprep.subr.mxu0 0.0
  %71 = vmatpush1.msra.mxu0 0.0
  %72 = vmatprep.subr.mxu0 0.0
  %73 = vmatpush1.msra.mxu0 0.0
  %74 = vmatprep.subr.mxu0 0.0
  %75 = vmatpush1.msra.mxu0 0.0
  %76 = vmatprep.subr.mxu0 0.0
  %77 = vmatpush1.msra.mxu0 0.0
  %78 = vmatprep.subr.mxu0 0.0
  %79 = vmatpush1.msra.mxu0 0.0
  %80 = vmatprep.subr.mxu0 0.0
  %81 = vmatpush1.msra.mxu0 0.0
  %82 = vmatprep.subr.mxu0 0.0
  %83 = vmatpush1.msra.mxu0 0.0
  %84 = vmatprep.subr.mxu0 0.0
  %85 = vmatpush1.msra.mxu0 0.0
  %86 = vmatprep.subr.mxu0 0.0
  %87 = vmatpush1.msra.mxu0 0.0
  %88 = vmatprep.subr.mxu0 0.0
  %89 = vmatpush1.msra.mxu0 0.0
  %90 = vmatprep.subr.mxu0 0.0
  %91 = vmatpush1.msra.mxu0 0.0
  %92 = vmatprep.subr.mxu0 0.0
  %93 = vmatpush1.msra.mxu0 0.0
  %94 = vmatprep.mubr.f32.mxu0 0.0
  %95 = vmatmul.mubr.f32.gmra.mrb[0].mxu0 %v24
  %v96 = vpop.f32.mrb[0].mxu0
  %v97 = vadd.f32 %v20, %v96
  %v98 = vpop.f32.mrb[0].mxu0
  %99 = vdwg.mxu0
  %vm100 = vcmask 406528
  %101 = vst.msk [vmem:[%s3] sm:$0x3f] %vm100, %v97
  // Predicated region
  $region14: #{fmdb_basic_fwd.30} parent=0 // pred_check
    _
  $region15: #{fmdb_basic_fwd.30} parent=0 // pred_check_branch
    %103 = sbr.rel (0) target = $region17
  $region16: #{fmdb_basic_fwd.30} parent=0 // pred_region
    _
  $region17: #{fmdb_basic_fwd.30} parent=0 // pred_fallthru
    _
  // Predicated region
  $region18: #{fmdb_basic_fwd.30} parent=0 // pred_check
    _
  $region19: #{fmdb_basic_fwd.30} parent=0 // pred_check_branch
    %105 = sbr.rel (0) target = $region21
  $region20: #{fmdb_basic_fwd.30} parent=0 // pred_region
    _
  $region21: #{fmdb_basic_fwd.30} parent=0 // pred_fallthru
    _

// kernel: fmdb_basic_fwd.34
$region0: #{fmdb_basic_fwd.34}
  #allocation0 [shape = 'u32[]', space=smem, size = 0x4, offset = 0x4, fixed_abs, tag = 'smem constant byte address 0x4 - core index']
  #allocation1 [shape = 'u32[144,128]{1,0:T(1,128)}', space=vmem, size = 0x12000, scoped, tag = 'internal scratch']
  %s0 = inlined_call_operand.vmem [shape: f32[6,2048], index: 0, kind: input, shape index: {}]
  %s1 = inlined_call_operand.vmem [shape: f32[6,2048], index: 1, kind: input, shape index: {}]
  %s2 = inlined_call_operand.vmem [shape: f32[6,2048], index: 2, kind: input, shape index: {}]
  %s3 = inlined_call_operand.vmem [shape: f32[24,2048], index: 3, kind: input, shape index: {}]
  %s4 = inlined_call_operand.vmem [shape: f32[6,6], index: 4, kind: input, shape index: {}]
  %s5 = inlined_call_operand.vmem [shape: f32[6,1], index: 5, kind: input, shape index: {}]
  %s6 = inlined_call_operand.vmem [shape: f32[24,6], index: 6, kind: input, shape index: {}]
  %s7 = inlined_call_operand.vmem [shape: f32[24,1], index: 7, kind: input, shape index: {}]
  %s8 = inlined_call_operand.vmem [shape: f32[24,2048], index: 8, kind: output, shape index: {}]
  %s9 = sld [smem:[#allocation0]]
  $region107: #{fmdb_basic_fwd.34} parent=0
    _
  %s11 = ssub.s32 1, %s9
  %s12 = scalar_select 0, %s11, %s9
  $region1: #{fmdb_basic_fwd.34} parent=0
    #allocation2 [shape = 'u8[196608]{0}', space=vmem, size = 0x30000, scoped, tag = 'input window, operand 3']
    #allocation3 [shape = 'u8[196608]{0}', space=vmem, size = 0x30000, scoped, tag = 'output window, operand 0']
    loop: start=0, step=1, limit=4
    $region2: #{fmdb_basic_fwd.34} parent=1 // loop_pre_header
      _
    $region3: #{fmdb_basic_fwd.34} parent=1 // loop_header
      %s14 = sphi 0, %s18
      %p15 = scmp.ge.s32.totalorder %s14, 4
      %s24 = sphi 0, %s26
      %s27 = sphi 0, %s24
      %s28 = sphi 0, %s27
      %s44 = sphi 0, %s28
      %s50 = sphi 0, %s52
      %s53 = sphi 0, %s50
      %s54 = sphi 0, %s53
      %s70 = sphi 0, %s54
      %s76 = sphi 0, %s78
      %s79 = sphi 0, %s76
      %s80 = sphi 0, %s79
      %s96 = sphi 0, %s80
      %s102 = sphi 0, %s104
      %s105 = sphi 0, %s102
      %s106 = sphi 0, %s105
      %s122 = sphi 0, %s106
      %s126 = sphi 0, %s126
      %s128 = sphi 0, %s126
      %s129 = sphi 0, %s128
      %s143 = sphi 0, %s129
      %s147 = sphi 0, %s147
      %s149 = sphi 0, %s147
      %s150 = sphi 0, %s149
      %s164 = sphi 0, %s150
      %s168 = sphi 0, %s168
      %s170 = sphi 0, %s168
      %s171 = sphi 0, %s170
      %s185 = sphi 0, %s171
      %s189 = sphi 0, %s189
      %s191 = sphi 0, %s189
      %s192 = sphi 0, %s191
      %s206 = sphi 0, %s192
      %s212 = sphi 0, %s214
      %s215 = sphi 0, %s212
      %s216 = sphi 0, %s215
      %s232 = sphi 0, %s216
    $region4: #{fmdb_basic_fwd.34} parent=1 // loop_header_branch
      %17 = sbr.rel (%p15) target = $region8
    $region5: #{fmdb_basic_fwd.34} parent=1 // loop_body
      %s19 = ssub.s32 %s14, 1
      %s20 = ssub.s32 %s14, 2
      %s21 = sadd.s32 %s14, 1
      %s22 = ssub.s32 %s14, %s21
      %p23 = scmp.eq.s32.totalorder %s22, 0
      %s25 = sadd.s32 %s24, 1
      %s26 = scalar_select %p23, %s24, %s25
      %p29 = pneg %p23
      %p30 = scmp.eq.s32.totalorder %s14, 1
      %p31 = por %p29, %p30
      %p32 = scmp.ne.s32.totalorder %s24, %s27
      %p33 = scmp.eq.s32.totalorder %s14, 0
      %p34 = por %p32, %p33
      %p35 = scmp.ne.s32.totalorder %s24, %s27
      %p36 = scmp.eq.s32.totalorder %s19, 1
      %p37 = por %p35, %p36
      %p38 = scmp.ne.s32.totalorder %s27, %s28
      %p39 = scmp.eq.s32.totalorder %s19, 0
      %p40 = por %p38, %p39
      %p41 = scmp.ne.s32.totalorder %s27, %s28
      %p42 = scmp.eq.s32.totalorder %s20, 1
      %p43 = por %p41, %p42
      %p45 = scmp.ne.s32.totalorder %s28, %s44
      %p46 = scmp.eq.s32.totalorder %s20, 0
      %p47 = por %p45, %p46
      %s48 = ssub.s32 %s14, %s21
      %p49 = scmp.eq.s32.totalorder %s48, 0
      %s51 = sadd.s32 %s50, 1
      %s52 = scalar_select %p49, %s50, %s51
      %p55 = pneg %p49
      %p56 = scmp.eq.s32.totalorder %s14, 1
      %p57 = por %p55, %p56
      %p58 = scmp.ne.s32.totalorder %s50, %s53
      %p59 = scmp.eq.s32.totalorder %s14, 0
      %p60 = por %p58, %p59
      %p61 = scmp.ne.s32.totalorder %s50, %s53
      %p62 = scmp.eq.s32.totalorder %s19, 1
      %p63 = por %p61, %p62
      %p64 = scmp.ne.s32.totalorder %s53, %s54
      %p65 = scmp.eq.s32.totalorder %s19, 0
      %p66 = por %p64, %p65
      %p67 = scmp.ne.s32.totalorder %s53, %s54
      %p68 = scmp.eq.s32.totalorder %s20, 1
      %p69 = por %p67, %p68
      %p71 = scmp.ne.s32.totalorder %s54, %s70
      %p72 = scmp.eq.s32.totalorder %s20, 0
      %p73 = por %p71, %p72
      %s74 = ssub.s32 %s14, %s21
      %p75 = scmp.eq.s32.totalorder %s74, 0
      %s77 = sadd.s32 %s76, 1
      %s78 = scalar_select %p75, %s76, %s77
      %p81 = pneg %p75
      %p82 = scmp.eq.s32.totalorder %s14, 1
      %p83 = por %p81, %p82
      %p84 = scmp.ne.s32.totalorder %s76, %s79
      %p85 = scmp.eq.s32.totalorder %s14, 0
      %p86 = por %p84, %p85
      %p87 = scmp.ne.s32.totalorder %s76, %s79
      %p88 = scmp.eq.s32.totalorder %s19, 1
      %p89 = por %p87, %p88
      %p90 = scmp.ne.s32.totalorder %s79, %s80
      %p91 = scmp.eq.s32.totalorder %s19, 0
      %p92 = por %p90, %p91
      %p93 = scmp.ne.s32.totalorder %s79, %s80
      %p94 = scmp.eq.s32.totalorder %s20, 1
      %p95 = por %p93, %p94
      %p97 = scmp.ne.s32.totalorder %s80, %s96
      %p98 = scmp.eq.s32.totalorder %s20, 0
      %p99 = por %p97, %p98
      %s100 = ssub.s32 %s14, %s21
      %p101 = scmp.eq.s32.totalorder %s100, 0
      %s103 = sadd.s32 %s102, 1
      %s104 = scalar_select %p101, %s102, %s103
      %p107 = pneg %p101
      %p108 = scmp.eq.s32.totalorder %s14, 1
      %p109 = por %p107, %p108
      %p110 = scmp.ne.s32.totalorder %s102, %s105
      %p111 = scmp.eq.s32.totalorder %s14, 0
      %p112 = por %p110, %p111
      %p113 = scmp.ne.s32.totalorder %s102, %s105
      %p114 = scmp.eq.s32.totalorder %s19, 1
      %p115 = por %p113, %p114
      %p116 = scmp.ne.s32.totalorder %s105, %s106
      %p117 = scmp.eq.s32.totalorder %s19, 0
      %p118 = por %p116, %p117
      %p119 = scmp.ne.s32.totalorder %s105, %s106
      %p120 = scmp.eq.s32.totalorder %s20, 1
      %p121 = por %p119, %p120
      %p123 = scmp.ne.s32.totalorder %s106, %s122
      %p124 = scmp.eq.s32.totalorder %s20, 0
      %p125 = por %p123, %p124
      %s127 = sadd.s32 %s126, 1
      %p130 = scmp.eq.s32.totalorder %s14, 1
      %p131 = scmp.ne.s32.totalorder %s126, %s128
      %p132 = scmp.eq.s32.totalorder %s14, 0
      %p133 = por %p131, %p132
      %p134 = scmp.ne.s32.totalorder %s126, %s128
      %p135 = scmp.eq.s32.totalorder %s19, 1
      %p136 = por %p134, %p135
      %p137 = scmp.ne.s32.totalorder %s128, %s129
      %p138 = scmp.eq.s32.totalorder %s19, 0
      %p139 = por %p137, %p138
      %p140 = scmp.ne.s32.totalorder %s128, %s129
      %p141 = scmp.eq.s32.totalorder %s20, 1
      %p142 = por %p140, %p141
      %p144 = scmp.ne.s32.totalorder %s129, %s143
      %p145 = scmp.eq.s32.totalorder %s20, 0
      %p146 = por %p144, %p145
      %s148 = sadd.s32 %s147, 1
      %p151 = scmp.eq.s32.totalorder %s14, 1
      %p152 = scmp.ne.s32.totalorder %s147, %s149
      %p153 = scmp.eq.s32.totalorder %s14, 0
      %p154 = por %p152, %p153
      %p155 = scmp.ne.s32.totalorder %s147, %s149
      %p156 = scmp.eq.s32.totalorder %s19, 1
      %p157 = por %p155, %p156
      %p158 = scmp.ne.s32.totalorder %s149, %s150
      %p159 = scmp.eq.s32.totalorder %s19, 0
      %p160 = por %p158, %p159
      %p161 = scmp.ne.s32.totalorder %s149, %s150
      %p162 = scmp.eq.s32.totalorder %s20, 1
      %p163 = por %p161, %p162
      %p165 = scmp.ne.s32.totalorder %s150, %s164
      %p166 = scmp.eq.s32.totalorder %s20, 0
      %p167 = por %p165, %p166
      %s169 = sadd.s32 %s168, 1
      %p172 = scmp.eq.s32.totalorder %s14, 1
      %p173 = scmp.ne.s32.totalorder %s168, %s170
      %p174 = scmp.eq.s32.totalorder %s14, 0
      %p175 = por %p173, %p174
      %p176 = scmp.ne.s32.totalorder %s168, %s170
      %p177 = scmp.eq.s32.totalorder %s19, 1
      %p178 = por %p176, %p177
      %p179 = scmp.ne.s32.totalorder %s170, %s171
      %p180 = scmp.eq.s32.totalorder %s19, 0
      %p181 = por %p179, %p180
      %p182 = scmp.ne.s32.totalorder %s170, %s171
      %p183 = scmp.eq.s32.totalorder %s20, 1
      %p184 = por %p182, %p183
      %p186 = scmp.ne.s32.totalorder %s171, %s185
      %p187 = scmp.eq.s32.totalorder %s20, 0
      %p188 = por %p186, %p187
      %s190 = sadd.s32 %s189, 1
      %p193 = scmp.eq.s32.totalorder %s14, 1
      %p194 = scmp.ne.s32.totalorder %s189, %s191
      %p195 = scmp.eq.s32.totalorder %s14, 0
      %p196 = por %p194, %p195
      %p197 = scmp.ne.s32.totalorder %s189, %s191
      %p198 = scmp.eq.s32.totalorder %s19, 1
      %p199 = por %p197, %p198
      %p200 = scmp.ne.s32.totalorder %s191, %s192
      %p201 = scmp.eq.s32.totalorder %s19, 0
      %p202 = por %p200, %p201
      %p203 = scmp.ne.s32.totalorder %s191, %s192
      %p204 = scmp.eq.s32.totalorder %s20, 1
      %p205 = por %p203, %p204
      %p207 = scmp.ne.s32.totalorder %s192, %s206
      %p208 = scmp.eq.s32.totalorder %s20, 0
      %p209 = por %p207, %p208
      %s210 = ssub.s32 %s14, %s21
      %p211 = scmp.eq.s32.totalorder %s210, 0
      %s213 = sadd.s32 %s212, 1
      %s214 = scalar_select %p211, %s212, %s213
      %p217 = pneg %p211
      %p218 = scmp.eq.s32.totalorder %s14, 1
      %p219 = por %p217, %p218
      %p220 = scmp.ne.s32.totalorder %s212, %s215
      %p221 = scmp.eq.s32.totalorder %s14, 0
      %p222 = por %p220, %p221
      %p223 = scmp.ne.s32.totalorder %s212, %s215
      %p224 = scmp.eq.s32.totalorder %s19, 1
      %p225 = por %p223, %p224
      %p226 = scmp.ne.s32.totalorder %s215, %s216
      %p227 = scmp.eq.s32.totalorder %s19, 0
      %p228 = por %p226, %p227
      %p229 = scmp.ne.s32.totalorder %s215, %s216
      %p230 = scmp.eq.s32.totalorder %s20, 1
      %p231 = por %p229, %p230
      %p233 = scmp.ne.s32.totalorder %s216, %s232
      %p234 = scmp.eq.s32.totalorder %s20, 0
      %p235 = por %p233, %p234
      %p236 = scmp.le.s32.totalorder 1, %s14
      %p237 = scmp.lt.s32.totalorder %s14, 3
      %p238 = pnand %p236, %p237
      %p239 = pneg %p238
      // Predicated region
      $region9: #{fmdb_basic_fwd.34} parent=5 // pred_check
        _
      $region10: #{fmdb_basic_fwd.34} parent=5 // pred_check_branch
        %241 = sbr.rel (%p238) target = $region12
      $region11: #{fmdb_basic_fwd.34} parent=5 // pred_region
        %s242 = ssub.s32 %s14, 1
        // Predicated region
        $region13: #{fmdb_basic_fwd.34} parent=11 // pred_check
          %p243 = pneg %p139
        $region14: #{fmdb_basic_fwd.34} parent=11 // pred_check_branch
          %245 = sbr.rel (%p243) target = $region16
        $region15: #{fmdb_basic_fwd.34} parent=11 // pred_region
          _
        $region16: #{fmdb_basic_fwd.34} parent=11 // pred_fallthru
          _
        // Predicated region
        $region17: #{fmdb_basic_fwd.34} parent=11 // pred_check
          %p246 = pneg %p160
        $region18: #{fmdb_basic_fwd.34} parent=11 // pred_check_branch
          %248 = sbr.rel (%p246) target = $region20
        $region19: #{fmdb_basic_fwd.34} parent=11 // pred_region
          _
        $region20: #{fmdb_basic_fwd.34} parent=11 // pred_fallthru
          _
        // Predicated region
        $region21: #{fmdb_basic_fwd.34} parent=11 // pred_check
          %p249 = pneg %p181
        $region22: #{fmdb_basic_fwd.34} parent=11 // pred_check_branch
          %251 = sbr.rel (%p249) target = $region24
        $region23: #{fmdb_basic_fwd.34} parent=11 // pred_region
          _
        $region24: #{fmdb_basic_fwd.34} parent=11 // pred_fallthru
          _
        // Predicated region
        $region25: #{fmdb_basic_fwd.34} parent=11 // pred_check
          %p252 = pneg %p202
        $region26: #{fmdb_basic_fwd.34} parent=11 // pred_check_branch
          %254 = sbr.rel (%p252) target = $region28
        $region27: #{fmdb_basic_fwd.34} parent=11 // pred_region
          _
        $region28: #{fmdb_basic_fwd.34} parent=11 // pred_fallthru
          _
      $region12: #{fmdb_basic_fwd.34} parent=5 // pred_fallthru
        _
      %p255 = scmp.lt.s32.totalorder %s14, 2
      // Predicated region
      $region29: #{fmdb_basic_fwd.34} parent=5 // pred_check
        %p256 = pneg %p255
      $region30: #{fmdb_basic_fwd.34} parent=5 // pred_check_branch
        %258 = sbr.rel (%p256) target = $region32
      $region31: #{fmdb_basic_fwd.34} parent=5 // pred_region
        // Predicated region
        $region33: #{fmdb_basic_fwd.34} parent=31 // pred_check
          %p259 = pneg %p34
        $region34: #{fmdb_basic_fwd.34} parent=31 // pred_check_branch
          %261 = sbr.rel (%p259) target = $region36
        $region35: #{fmdb_basic_fwd.34} parent=31 // pred_region
          %s262 = smul.u32 8, %s14
          %p263 = scmp.lt.s32.totalorder %s262, 15
          %s264 = scalar_select %p263, %s262, 15
          %s265 = smul.addr %s264, 8
          %s266 = scalar_lea.vmem %s0, %s265
          %s267 = smul.u32 8, %s14
        $region36: #{fmdb_basic_fwd.34} parent=31 // pred_fallthru
          _
        // Predicated region
        $region37: #{fmdb_basic_fwd.34} parent=31 // pred_check
          %p268 = pneg %p60
        $region38: #{fmdb_basic_fwd.34} parent=31 // pred_check_branch
          %270 = sbr.rel (%p268) target = $region40
        $region39: #{fmdb_basic_fwd.34} parent=31 // pred_region
          %s271 = smul.u32 8, %s14
          %p272 = scmp.lt.s32.totalorder %s271, 15
          %s273 = scalar_select %p272, %s271, 15
          %s274 = smul.addr %s273, 8
          %s275 = scalar_lea.vmem %s1, %s274
          %s276 = smul.u32 8, %s14
        $region40: #{fmdb_basic_fwd.34} parent=31 // pred_fallthru
          _
        // Predicated region
        $region41: #{fmdb_basic_fwd.34} parent=31 // pred_check
          %p277 = pneg %p86
        $region42: #{fmdb_basic_fwd.34} parent=31 // pred_check_branch
          %279 = sbr.rel (%p277) target = $region44
        $region43: #{fmdb_basic_fwd.34} parent=31 // pred_region
          %s280 = smul.u32 8, %s14
          %p281 = scmp.lt.s32.totalorder %s280, 15
          %s282 = scalar_select %p281, %s280, 15
          %s283 = smul.addr %s282, 8
          %s284 = scalar_lea.vmem %s2, %s283
          %s285 = smul.u32 8, %s14
        $region44: #{fmdb_basic_fwd.34} parent=31 // pred_fallthru
          _
        // Predicated region
        $region45: #{fmdb_basic_fwd.34} parent=31 // pred_check
          %p286 = pneg %p112
        $region46: #{fmdb_basic_fwd.34} parent=31 // pred_check_branch
          %288 = sbr.rel (%p286) target = $region48
        $region47: #{fmdb_basic_fwd.34} parent=31 // pred_region
          %s289 = sand.u32 %s102, 1
          %s290 = sand.u32 %s102, 1
          %s291 = smul.addr %s290, 192
          %s292 = scalar_lea.vmem [#allocation2], %s291
          %s293 = smul.u32 8, %s14
          %s294 = smul.addr %s293, 8
          %s295 = scalar_lea.vmem %s3, %s294
          // Predicated region
          $region49: #{fmdb_basic_fwd.34} parent=47 // pred_check
            _
          $region50: #{fmdb_basic_fwd.34} parent=47 // pred_check_branch
            %297 = sbr.rel (0) target = $region52
          $region51: #{fmdb_basic_fwd.34} parent=47 // pred_region
            // Predicated region
            $region53: #{fmdb_basic_fwd.34} parent=51 // pred_check
              _
            $region54: #{fmdb_basic_fwd.34} parent=51 // pred_check_branch
              %299 = sbr.rel (0) target = $region56
            $region55: #{fmdb_basic_fwd.34} parent=51 // pred_region
              loop: start=0, step=1, limit=1
              $region57: #{fmdb_basic_fwd.34} parent=55 // loop_pre_header
                _
              $region58: #{fmdb_basic_fwd.34} parent=55 // loop_header
                %s301 = sphi 0, %s305
                %p302 = scmp.ge.s32.totalorder %s301, 1
                %s306 = sphi %s295, %s295
                %s307 = sphi %s292, %s292
              $region59: #{fmdb_basic_fwd.34} parent=55 // loop_header_branch
                %304 = sbr.rel (%p302) target = $region63
              $region60: #{fmdb_basic_fwd.34} parent=55 // loop_body
                %v308 = vld [vmem:[%s306] sm:$0xff]
                %309 = vst [vmem:[%s307] sm:$0xff] %v308
                %v310 = vld [vmem:[%s306 + $0x8] sm:$0xff]
                %311 = vst [vmem:[%s307 + $0x8] sm:$0xff] %v310
                %v312 = vld [vmem:[%s306 + $0x10] sm:$0xff]
                %313 = vst [vmem:[%s307 + $0x10] sm:$0xff] %v312
                %v314 = vld [vmem:[%s306 + $0x18] sm:$0xff]
                %315 = vst [vmem:[%s307 + $0x18] sm:$0xff] %v314
                %v316 = vld [vmem:[%s306 + $0x20] sm:$0xff]
                %317 = vst [vmem:[%s307 + $0x20] sm:$0xff] %v316
                %v318 = vld [vmem:[%s306 + $0x28] sm:$0xff]
                %319 = vst [vmem:[%s307 + $0x28] sm:$0xff] %v318
                %v320 = vld [vmem:[%s306 + $0x30] sm:$0xff]
                %321 = vst [vmem:[%s307 + $0x30] sm:$0xff] %v320
                %v322 = vld [vmem:[%s306 + $0x38] sm:$0xff]
                %323 = vst [vmem:[%s307 + $0x38] sm:$0xff] %v322
                %v324 = vld [vmem:[%s306 + $0x80] sm:$0xff]
                %325 = vst [vmem:[%s307 + $0x40] sm:$0xff] %v324
                %v326 = vld [vmem:[%s306 + $0x88] sm:$0xff]
                %327 = vst [vmem:[%s307 + $0x48] sm:$0xff] %v326
                %v328 = vld [vmem:[%s306 + $0x90] sm:$0xff]
                %329 = vst [vmem:[%s307 + $0x50] sm:$0xff] %v328
                %v330 = vld [vmem:[%s306 + $0x98] sm:$0xff]
                %331 = vst [vmem:[%s307 + $0x58] sm:$0xff] %v330
                %v332 = vld [vmem:[%s306 + $0xa0] sm:$0xff]
                %333 = vst [vmem:[%s307 + $0x60] sm:$0xff] %v332
                %v334 = vld [vmem:[%s306 + $0xa8] sm:$0xff]
                %335 = vst [vmem:[%s307 + $0x68] sm:$0xff] %v334
                %v336 = vld [vmem:[%s306 + $0xb0] sm:$0xff]
                %337 = vst [vmem:[%s307 + $0x70] sm:$0xff] %v336
                %v338 = vld [vmem:[%s306 + $0xb8] sm:$0xff]
                %339 = vst [vmem:[%s307 + $0x78] sm:$0xff] %v338
                %v340 = vld [vmem:[%s306 + $0x100] sm:$0xff]
                %341 = vst [vmem:[%s307 + $0x80] sm:$0xff] %v340
                %v342 = vld [vmem:[%s306 + $0x108] sm:$0xff]
                %343 = vst [vmem:[%s307 + $0x88] sm:$0xff] %v342
                %v344 = vld [vmem:[%s306 + $0x110] sm:$0xff]
                %345 = vst [vmem:[%s307 + $0x90] sm:$0xff] %v344
                %v346 = vld [vmem:[%s306 + $0x118] sm:$0xff]
                %347 = vst [vmem:[%s307 + $0x98] sm:$0xff] %v346
                %v348 = vld [vmem:[%s306 + $0x120] sm:$0xff]
                %349 = vst [vmem:[%s307 + $0xa0] sm:$0xff] %v348
                %v350 = vld [vmem:[%s306 + $0x128] sm:$0xff]
                %351 = vst [vmem:[%s307 + $0xa8] sm:$0xff] %v350
                %v352 = vld [vmem:[%s306 + $0x130] sm:$0xff]
                %353 = vst [vmem:[%s307 + $0xb0] sm:$0xff] %v352
                %v354 = vld [vmem:[%s306 + $0x138] sm:$0xff]
                %355 = vst [vmem:[%s307 + $0xb8] sm:$0xff] %v354
              $region61: #{fmdb_basic_fwd.34} parent=55 // loop_footer
                %s305 = sadd.s32 1, %s301
              $region62: #{fmdb_basic_fwd.34} parent=55 // loop_footer_branch
                %300 = sbr.rel target = $region58
              $region63: #{fmdb_basic_fwd.34} parent=55 // loop_exit
                _
            $region56: #{fmdb_basic_fwd.34} parent=51 // pred_fallthru
              _
            // Predicated region
            $region64: #{fmdb_basic_fwd.34} parent=51 // pred_check
              _
            $region65: #{fmdb_basic_fwd.34} parent=51 // pred_check_branch
              %357 = sbr.rel target = $region67
            $region66: #{fmdb_basic_fwd.34} parent=51 // pred_region
              _
            $region67: #{fmdb_basic_fwd.34} parent=51 // pred_fallthru
              _
          $region52: #{fmdb_basic_fwd.34} parent=47 // pred_fallthru
            _
          %358 = vnop
        $region48: #{fmdb_basic_fwd.34} parent=31 // pred_fallthru
          _
      $region32: #{fmdb_basic_fwd.34} parent=5 // pred_fallthru
        _
      %p359 = scmp.le.s32.totalorder 1, %s14
      %p360 = scmp.lt.s32.totalorder %s14, 3
      %p361 = pnand %p359, %p360
      %p362 = pneg %p361
      // Predicated region
      $region68: #{fmdb_basic_fwd.34} parent=5 // pred_check
        _
      $region69: #{fmdb_basic_fwd.34} parent=5 // pred_check_branch
        %364 = sbr.rel (%p361) target = $region71
      $region70: #{fmdb_basic_fwd.34} parent=5 // pred_region
        %s365 = ssub.s32 %s14, 1
        %s366 = sand.u32 %s105, 1
        %s367 = sand.u32 %s105, 1
        %s368 = smul.addr %s367, 192
        %s369 = scalar_lea.vmem [#allocation2], %s368
        // Predicated region
        $region72: #{fmdb_basic_fwd.34} parent=70 // pred_check
          %p370 = pneg %p118
        $region73: #{fmdb_basic_fwd.34} parent=70 // pred_check_branch
          %372 = sbr.rel (%p370) target = $region75
        $region74: #{fmdb_basic_fwd.34} parent=70 // pred_region
          _
        $region75: #{fmdb_basic_fwd.34} parent=70 // pred_fallthru
          _
        %s373 = smul.u32 8, %s19
        %p374 = scmp.lt.s32.totalorder %s373, 15
        %s375 = scalar_select %p374, %s373, 15
        %s376 = smul.addr %s375, 8
        %s377 = scalar_lea.vmem %s0, %s376
        %p378 = pneg %p40
        %p379 = pneg %p37
        %s380 = smul.u32 8, %s19
        %p381 = scmp.lt.s32.totalorder %s380, 15
        %s382 = scalar_select %p381, %s380, 15
        %s383 = smul.addr %s382, 8
        %s384 = scalar_lea.vmem %s1, %s383
        %p385 = pneg %p66
        %p386 = pneg %p63
        %s387 = smul.u32 8, %s19
        %p388 = scmp.lt.s32.totalorder %s387, 15
        %s389 = scalar_select %p388, %s387, 15
        %s390 = smul.addr %s389, 8
        %s391 = scalar_lea.vmem %s2, %s390
        %p392 = pneg %p92
        %p393 = pneg %p89
        %s394 = sand.u32 %s105, 1
        %s395 = sand.u32 %s105, 1
        %s396 = smul.addr %s395, 192
        %s397 = scalar_lea.vmem [#allocation2], %s396
        %p398 = pneg %p118
        %p399 = pneg %p115
        %p400 = pneg %p139
        %p401 = pneg %p136
        %p402 = pneg %p160
        %p403 = pneg %p157
        %p404 = pneg %p181
        %p405 = pneg %p178
        %p406 = pneg %p202
        %p407 = pneg %p199
        %p408 = pneg %p228
        %p409 = pneg %p225
        %s410 = sand.u32 %s215, 1
        %s411 = sand.u32 %s215, 1
        %s412 = smul.addr %s411, 192
        %s413 = scalar_lea.vmem [#allocation3], %s412
        %s414 = smul.u32 8, %s19
        %p415 = scmp.lt.s32.totalorder %s414, 15
        %s416 = scalar_select %p415, %s414, 15
        %s417 = smul.addr %s416, 8
        %s418 = scalar_lea.vmem %s0, %s417
        %s419 = smul.u32 8, %s19
        %s420 = smul.u32 8, %s19
        %p421 = scmp.lt.s32.totalorder %s420, 15
        %s422 = scalar_select %p421, %s420, 15
        %s423 = smul.addr %s422, 8
        %s424 = scalar_lea.vmem %s1, %s423
        %s425 = smul.u32 8, %s19
        %s426 = smul.u32 8, %s19
        %p427 = scmp.lt.s32.totalorder %s426, 15
        %s428 = scalar_select %p427, %s426, 15
        %s429 = smul.addr %s428, 8
        %s430 = scalar_lea.vmem %s2, %s429
        %s431 = smul.u32 8, %s19
        %s432 = smul.u32 8, %s19
        %s433 = smul.u32 8, %s19
        %v434 = vld [vmem:[%s4] sm:$0x3f]
        %v435 = vld [vmem:[%s430] sm:$0x3f]
        %v436 = vld [vmem:[%s430 + $0x8] sm:$0x3f]
        %v437 = vld [vmem:[%s430 + $0x10] sm:$0x3f]
        %v438 = vld [vmem:[%s430 + $0x18] sm:$0x3f]
        %v439 = vld [vmem:[%s430 + $0x20] sm:$0x3f]
        %v440 = vld [vmem:[%s430 + $0x28] sm:$0x3f]
        %v441 = vld [vmem:[%s430 + $0x30] sm:$0x3f]
        %v442 = vld [vmem:[%s430 + $0x38] sm:$0x3f]
        %v443 = vld [vmem:[%s5] sm:$0x3f]
        %445 = vset.pattern.permute.xlu0 0
        %446 = vperm.xlu0 %445, %v443
        %v447 = vpop.permute.xlu0 %446
        %vm449 = vcmask 48128
        %v451 = vsel %vm449, %v434, 0
        %vm453 = vcmask 1045504
        %v455 = vsel %vm453, %v435, 0
        %v458 = vsel %vm453, %v436, 0
        %v461 = vsel %vm453, %v437, 0
        %v464 = vsel %vm453, %v438, 0
        %v467 = vsel %vm453, %v439, 0
        %v470 = vsel %vm453, %v440, 0
        %v473 = vsel %vm453, %v441, 0
        %v476 = vsel %vm453, %v442, 0
        %478 = vmatprep.subr.mxu0 %v458
        %479 = vmatpush1.msra.mxu0 %v455
        %480 = vmatprep.subr.mxu0 0.0
        %481 = vmatpush1.msra.mxu0 0.0
        %482 = vmatprep.subr.mxu0 0.0
        %483 = vmatpush1.msra.mxu0 0.0
        %484 = vmatprep.subr.mxu0 0.0
        %485 = vmatpush1.msra.mxu0 0.0
        %486 = vmatprep.subr.mxu0 0.0
        %487 = vmatpush1.msra.mxu0 0.0
        %488 = vmatprep.subr.mxu0 0.0
        %489 = vmatpush1.msra.mxu0 0.0
        %490 = vmatprep.subr.mxu0 0.0
        %491 = vmatpush1.msra.mxu0 0.0
        %492 = vmatprep.subr.mxu0 0.0
        %493 = vmatpush1.msra.mxu0 0.0
        %494 = vmatprep.subr.mxu0 0.0
        %495 = vmatpush1.msra.mxu0 0.0
        %496 = vmatprep.subr.mxu0 0.0
        %497 = vmatpush1.msra.mxu0 0.0
        %498 = vmatprep.subr.mxu0 0.0
        %499 = vmatpush1.msra.mxu0 0.0
        %500 = vmatprep.subr.mxu0 0.0
        %501 = vmatpush1.msra.mxu0 0.0
        %502 = vmatprep.subr.mxu0 0.0
        %503 = vmatpush1.msra.mxu0 0.0
        %504 = vmatprep.subr.mxu0 0.0
        %505 = vmatpush1.msra.mxu0 0.0
        %506 = vmatprep.subr.mxu0 0.0
        %507 = vmatpush1.msra.mxu0 0.0
        %508 = vmatprep.subr.mxu0 0.0
        %509 = vmatpush1.msra.mxu0 0.0
        %510 = vmatprep.subr.mxu0 0.0
        %511 = vmatpush1.msra.mxu0 0.0
        %512 = vmatprep.subr.mxu0 0.0
        %513 = vmatpush1.msra.mxu0 0.0
        %514 = vmatprep.subr.mxu0 0.0
        %515 = vmatpush1.msra.mxu0 0.0
        %516 = vmatprep.subr.mxu0 0.0
        %517 = vmatpush1.msra.mxu0 0.0
        %518 = vmatprep.subr.mxu0 0.0
        %519 = vmatpush1.msra.mxu0 0.0
        %520 = vmatprep.subr.mxu0 0.0
        %521 = vmatpush1.msra.mxu0 0.0
        %522 = vmatprep.subr.mxu0 0.0
        %523 = vmatpush1.msra.mxu0 0.0
        %524 = vmatprep.subr.mxu0 0.0
        %525 = vmatpush1.msra.mxu0 0.0
        %526 = vmatprep.subr.mxu0 0.0
        %527 = vmatpush1.msra.mxu0 0.0
        %528 = vmatprep.subr.mxu0 0.0
        %529 = vmatpush1.msra.mxu0 0.0
        %530 = vmatprep.subr.mxu0 0.0
        %531 = vmatpush1.msra.mxu0 0.0
        %532 = vmatprep.subr.mxu0 0.0
        %533 = vmatpush1.msra.mxu0 0.0
        %534 = vmatprep.subr.mxu0 0.0
        %535 = vmatpush1.msra.mxu0 0.0
        %536 = vmatprep.subr.mxu0 0.0
        %537 = vmatpush1.msra.mxu0 0.0
        %538 = vmatprep.subr.mxu0 0.0
        %539 = vmatpush1.msra.mxu0 0.0
        %540 = vmatprep.subr.mxu0 0.0
        %541 = vmatpush1.msra.mxu0 0.0
        %542 = vmatprep.mubr.f32.mxu0 0.0
        %543 = vmatmul.mubr.f32.gmra.mrb[0].mxu0 %v451
        %v544 = vpop.f32.mrb[0].mxu0
        %v545 = vadd.f32 %v447, %v544
        %v546 = vpop.f32.mrb[0].mxu0
        %v547 = vadd.f32 %v447, %v546
        %548 = vdwg.mxu0
        %549 = vmatprep.subr.mxu0 %v464
        %550 = vmatpush1.msra.mxu0 %v461
        %551 = vmatprep.subr.mxu0 0.0
        %552 = vmatpush1.msra.mxu0 0.0
        %553 = vmatprep.subr.mxu0 0.0
        %554 = vmatpush1.msra.mxu0 0.0
        %555 = vmatprep.subr.mxu0 0.0
        %556 = vmatpush1.msra.mxu0 0.0
        %557 = vmatprep.subr.mxu0 0.0
        %558 = vmatpush1.msra.mxu0 0.0
        %559 = vmatprep.subr.mxu0 0.0
        %560 = vmatpush1.msra.mxu0 0.0
        %561 = vmatprep.subr.mxu0 0.0
        %562 = vmatpush1.msra.mxu0 0.0
        %563 = vmatprep.subr.mxu0 0.0
        %564 = vmatpush1.msra.mxu0 0.0
        %565 = vmatprep.subr.mxu0 0.0
        %566 = vmatpush1.msra.mxu0 0.0
        %567 = vmatprep.subr.mxu0 0.0
        %568 = vmatpush1.msra.mxu0 0.0
        %569 = vmatprep.subr.mxu0 0.0
        %570 = vmatpush1.msra.mxu0 0.0
        %571 = vmatprep.subr.mxu0 0.0
        %572 = vmatpush1.msra.mxu0 0.0
        %573 = vmatprep.subr.mxu0 0.0
        %574 = vmatpush1.msra.mxu0 0.0
        %575 = vmatprep.subr.mxu0 0.0
        %576 = vmatpush1.msra.mxu0 0.0
        %577 = vmatprep.subr.mxu0 0.0
        %578 = vmatpush1.msra.mxu0 0.0
        %579 = vmatprep.subr.mxu0 0.0
        %580 = vmatpush1.msra.mxu0 0.0
        %581 = vmatprep.subr.mxu0 0.0
        %582 = vmatpush1.msra.mxu0 0.0
        %583 = vmatprep.subr.mxu0 0.0
        %584 = vmatpush1.msra.mxu0 0.0
        %585 = vmatprep.subr.mxu0 0.0
        %586 = vmatpush1.msra.mxu0 0.0
        %587 = vmatprep.subr.mxu0 0.0
        %588 = vmatpush1.msra.mxu0 0.0
        %589 = vmatprep.subr.mxu0 0.0
        %590 = vmatpush1.msra.mxu0 0.0
        %591 = vmatprep.subr.mxu0 0.0
        %592 = vmatpush1.msra.mxu0 0.0
        %593 = vmatprep.subr.mxu0 0.0
        %594 = vmatpush1.msra.mxu0 0.0
        %595 = vmatprep.subr.mxu0 0.0
        %596 = vmatpush1.msra.mxu0 0.0
        %597 = vmatprep.subr.mxu0 0.0
        %598 = vmatpush1.msra.mxu0 0.0
        %599 = vmatprep.subr.mxu0 0.0
        %600 = vmatpush1.msra.mxu0 0.0
        %601 = vmatprep.subr.mxu0 0.0
        %602 = vmatpush1.msra.mxu0 0.0
        %603 = vmatprep.subr.mxu0 0.0
        %604 = vmatpush1.msra.mxu0 0.0
        %605 = vmatprep.subr.mxu0 0.0
        %606 = vmatpush1.msra.mxu0 0.0
        %607 = vmatprep.subr.mxu0 0.0
        %608 = vmatpush1.msra.mxu0 0.0
        %609 = vmatprep.subr.mxu0 0.0
        %610 = vmatpush1.msra.mxu0 0.0
        %611 = vmatprep.subr.mxu0 0.0
        %612 = vmatpush1.msra.mxu0 0.0
        %613 = vmatprep.mubr.f32.mxu0 0.0
        %614 = vmatmul.mubr.f32.gmra.mrb[0].mxu0 %v451
        %v615 = vpop.f32.mrb[0].mxu0
        %v616 = vadd.f32 %v447, %v615
        %v617 = vpop.f32.mrb[0].mxu0
        %v618 = vadd.f32 %v447, %v617
        %619 = vdwg.mxu0
        %620 = vmatprep.subr.mxu0 %v470
        %621 = vmatpush1.msra.mxu0 %v467
        %622 = vmatprep.subr.mxu0 0.0
        %623 = vmatpush1.msra.mxu0 0.0
        %624 = vmatprep.subr.mxu0 0.0
        %625 = vmatpush1.msra.mxu0 0.0
        %626 = vmatprep.subr.mxu0 0.0
        %627 = vmatpush1.msra.mxu0 0.0
        %628 = vmatprep.subr.mxu0 0.0
        %629 = vmatpush1.msra.mxu0 0.0
        %630 = vmatprep.subr.mxu0 0.0
        %631 = vmatpush1.msra.mxu0 0.0
        %632 = vmatprep.subr.mxu0 0.0
        %633 = vmatpush1.msra.mxu0 0.0
        %634 = vmatprep.subr.mxu0 0.0
        %635 = vmatpush1.msra.mxu0 0.0
        %636 = vmatprep.subr.mxu0 0.0
        %637 = vmatpush1.msra.mxu0 0.0
        %638 = vmatprep.subr.mxu0 0.0
        %639 = vmatpush1.msra.mxu0 0.0
        %640 = vmatprep.subr.mxu0 0.0
        %641 = vmatpush1.msra.mxu0 0.0
        %642 = vmatprep.subr.mxu0 0.0
        %643 = vmatpush1.msra.mxu0 0.0
        %644 = vmatprep.subr.mxu0 0.0
        %645 = vmatpush1.msra.mxu0 0.0
        %646 = vmatprep.subr.mxu0 0.0
        %647 = vmatpush1.msra.mxu0 0.0
        %648 = vmatprep.subr.mxu0 0.0
        %649 = vmatpush1.msra.mxu0 0.0
        %650 = vmatprep.subr.mxu0 0.0
        %651 = vmatpush1.msra.mxu0 0.0
        %652 = vmatprep.subr.mxu0 0.0
        %653 = vmatpush1.msra.mxu0 0.0
        %654 = vmatprep.subr.mxu0 0.0
        %655 = vmatpush1.msra.mxu0 0.0
        %656 = vmatprep.subr.mxu0 0.0
        %657 = vmatpush1.msra.mxu0 0.0
        %658 = vmatprep.subr.mxu0 0.0
        %659 = vmatpush1.msra.mxu0 0.0
        %660 = vmatprep.subr.mxu0 0.0
        %661 = vmatpush1.msra.mxu0 0.0
        %662 = vmatprep.subr.mxu0 0.0
        %663 = vmatpush1.msra.mxu0 0.0
        %664 = vmatprep.subr.mxu0 0.0
        %665 = vmatpush1.msra.mxu0 0.0
        %666 = vmatprep.subr.mxu0 0.0
        %667 = vmatpush1.msra.mxu0 0.0
        %668 = vmatprep.subr.mxu0 0.0
        %669 = vmatpush1.msra.mxu0 0.0
        %670 = vmatprep.subr.mxu0 0.0
        %671 = vmatpush1.msra.mxu0 0.0
        %672 = vmatprep.subr.mxu0 0.0
        %673 = vmatpush1.msra.mxu0 0.0
        %674 = vmatprep.subr.mxu0 0.0
        %675 = vmatpush1.msra.mxu0 0.0
        %676 = vmatprep.subr.mxu0 0.0
        %677 = vmatpush1.msra.mxu0 0.0
        %678 = vmatprep.subr.mxu0 0.0
        %679 = vmatpush1.msra.mxu0 0.0
        %680 = vmatprep.subr.mxu0 0.0
        %681 = vmatpush1.msra.mxu0 0.0
        %682 = vmatprep.subr.mxu0 0.0
        %683 = vmatpush1.msra.mxu0 0.0
        %684 = vmatprep.mubr.f32.mxu0 0.0
        %685 = vmatmul.mubr.f32.gmra.mrb[0].mxu0 %v451
        %v686 = vpop.f32.mrb[0].mxu0
        %v687 = vadd.f32 %v447, %v686
        %v688 = vpop.f32.mrb[0].mxu0
        %v689 = vadd.f32 %v447, %v688
        %690 = vdwg.mxu0
        %691 = vmatprep.subr.mxu0 %v476
        %692 = vmatpush1.msra.mxu0 %v473
        %693 = vmatprep.subr.mxu0 0.0
        %694 = vmatpush1.msra.mxu0 0.0
        %695 = vmatprep.subr.mxu0 0.0
        %696 = vmatpush1.msra.mxu0 0.0
        %697 = vmatprep.subr.mxu0 0.0
        %698 = vmatpush1.msra.mxu0 0.0
        %699 = vmatprep.subr.mxu0 0.0
        %700 = vmatpush1.msra.mxu0 0.0
        %701 = vmatprep.subr.mxu0 0.0
        %702 = vmatpush1.msra.mxu0 0.0
        %703 = vmatprep.subr.mxu0 0.0
        %704 = vmatpush1.msra.mxu0 0.0
        %705 = vmatprep.subr.mxu0 0.0
        %706 = vmatpush1.msra.mxu0 0.0
        %707 = vmatprep.subr.mxu0 0.0
        %708 = vmatpush1.msra.mxu0 0.0
        %709 = vmatprep.subr.mxu0 0.0
        %710 = vmatpush1.msra.mxu0 0.0
        %711 = vmatprep.subr.mxu0 0.0
        %712 = vmatpush1.msra.mxu0 0.0
        %713 = vmatprep.subr.mxu0 0.0
        %714 = vmatpush1.msra.mxu0 0.0
        %715 = vmatprep.subr.mxu0 0.0
        %716 = vmatpush1.msra.mxu0 0.0
        %717 = vmatprep.subr.mxu0 0.0
        %718 = vmatpush1.msra.mxu0 0.0
        %719 = vmatprep.subr.mxu0 0.0
        %720 = vmatpush1.msra.mxu0 0.0
        %721 = vmatprep.subr.mxu0 0.0
        %722 = vmatpush1.msra.mxu0 0.0
        %723 = vmatprep.subr.mxu0 0.0
        %724 = vmatpush1.msra.mxu0 0.0
        %725 = vmatprep.subr.mxu0 0.0
        %726 = vmatpush1.msra.mxu0 0.0
        %727 = vmatprep.subr.mxu0 0.0
        %728 = vmatpush1.msra.mxu0 0.0
        %729 = vmatprep.subr.mxu0 0.0
        %730 = vmatpush1.msra.mxu0 0.0
        %731 = vmatprep.subr.mxu0 0.0
        %732 = vmatpush1.msra.mxu0 0.0
        %733 = vmatprep.subr.mxu0 0.0
        %734 = vmatpush1.msra.mxu0 0.0
        %735 = vmatprep.subr.mxu0 0.0
        %736 = vmatpush1.msra.mxu0 0.0
        %737 = vmatprep.subr.mxu0 0.0
        %738 = vmatpush1.msra.mxu0 0.0
        %739 = vmatprep.subr.mxu0 0.0
        %740 = vmatpush1.msra.mxu0 0.0
        %741 = vmatprep.subr.mxu0 0.0
        %742 = vmatpush1.msra.mxu0 0.0
        %743 = vmatprep.subr.mxu0 0.0
        %744 = vmatpush1.msra.mxu0 0.0
        %745 = vmatprep.subr.mxu0 0.0
        %746 = vmatpush1.msra.mxu0 0.0
        %747 = vmatprep.subr.mxu0 0.0
        %748 = vmatpush1.msra.mxu0 0.0
        %749 = vmatprep.subr.mxu0 0.0
        %750 = vmatpush1.msra.mxu0 0.0
        %751 = vmatprep.subr.mxu0 0.0
        %752 = vmatpush1.msra.mxu0 0.0
        %753 = vmatprep.subr.mxu0 0.0
        %754 = vmatpush1.msra.mxu0 0.0
        %755 = vmatprep.mubr.f32.mxu0 0.0
        %756 = vmatmul.mubr.f32.gmra.mrb[0].mxu0 %v451
        %v757 = vpop.f32.mrb[0].mxu0
        %v758 = vadd.f32 %v447, %v757
        %v759 = vpop.f32.mrb[0].mxu0
        %v760 = vadd.f32 %v447, %v759
        %761 = vdwg.mxu0
        %v762 = vld [vmem:[%s418] sm:$0x3f]
        %v763 = vld [vmem:[%s418 + $0x8] sm:$0x3f]
        %v764 = vld [vmem:[%s418 + $0x10] sm:$0x3f]
        %v765 = vld [vmem:[%s418 + $0x18] sm:$0x3f]
        %v766 = vld [vmem:[%s418 + $0x20] sm:$0x3f]
        %v767 = vld [vmem:[%s418 + $0x28] sm:$0x3f]
        %v768 = vld [vmem:[%s418 + $0x30] sm:$0x3f]
        %v769 = vld [vmem:[%s418 + $0x38] sm:$0x3f]
        %v770 = vld [vmem:[%s424] sm:$0x3f]
        %v771 = vld [vmem:[%s424 + $0x8] sm:$0x3f]
        %v772 = vld [vmem:[%s424 + $0x10] sm:$0x3f]
        %v773 = vld [vmem:[%s424 + $0x18] sm:$0x3f]
        %v774 = vld [vmem:[%s424 + $0x20] sm:$0x3f]
        %v775 = vld [vmem:[%s424 + $0x28] sm:$0x3f]
        %v776 = vld [vmem:[%s424 + $0x30] sm:$0x3f]
        %v777 = vld [vmem:[%s424 + $0x38] sm:$0x3f]
        %v778 = vadd.f32 %v762, %v770
        %v779 = vadd.f32 %v763, %v771
        %v780 = vadd.f32 %v764, %v772
        %v781 = vadd.f32 %v765, %v773
        %v782 = vadd.f32 %v766, %v774
        %v783 = vadd.f32 %v767, %v775
        %v784 = vadd.f32 %v768, %v776
        %v785 = vadd.f32 %v769, %v777
        %v786 = vadd.f32 %v778, %v545
        %v787 = vadd.f32 %v779, %v547
        %v788 = vadd.f32 %v780, %v616
        %v789 = vadd.f32 %v781, %v618
        %v790 = vadd.f32 %v782, %v687
        %v791 = vadd.f32 %v783, %v689
        %v792 = vadd.f32 %v784, %v758
        %v793 = vadd.f32 %v785, %v760
        %v794 = vld [vmem:[%s6] sm:$0xff]
        %v795 = vld [vmem:[%s6 + $0x8] sm:$0xff]
        %v796 = vld [vmem:[%s6 + $0x10] sm:$0xff]
        %v797 = vld [vmem:[%s7] sm:$0xff]
        %v798 = vld [vmem:[%s7 + $0x8] sm:$0xff]
        %v799 = vld [vmem:[%s7 + $0x10] sm:$0xff]
        %801 = vset.pattern.permute.xlu0 0
        %802 = vperm.xlu0 %801, %v797
        %v803 = vpop.permute.xlu0 %802
        %806 = vset.pattern.permute.xlu0 0
        %807 = vperm.xlu0 %806, %v798
        %v808 = vpop.permute.xlu0 %807
        %811 = vset.pattern.permute.xlu0 0
        %812 = vperm.xlu0 %811, %v799
        %v813 = vpop.permute.xlu0 %812
        %v816 = vsel %vm449, %v794, 0
        %v819 = vsel %vm449, %v795, 0
        %v822 = vsel %vm449, %v796, 0
        %v825 = vsel %vm453, %v786, 0
        %v828 = vsel %vm453, %v787, 0
        %v831 = vsel %vm453, %v788, 0
        %v834 = vsel %vm453, %v789, 0
        %v837 = vsel %vm453, %v790, 0
        %v840 = vsel %vm453, %v791, 0
        %v843 = vsel %vm453, %v792, 0
        %v846 = vsel %vm453, %v793, 0
        %848 = vmatprep.subr.mxu0 %v828
        %849 = vmatpush1.msra.mxu0 %v825
        %850 = vmatprep.subr.mxu0 0.0
        %851 = vmatpush1.msra.mxu0 0.0
        %852 = vmatprep.subr.mxu0 0.0
        %853 = vmatpush1.msra.mxu0 0.0
        %854 = vmatprep.subr.mxu0 0.0
        %855 = vmatpush1.msra.mxu0 0.0
        %856 = vmatprep.subr.mxu0 0.0
        %857 = vmatpush1.msra.mxu0 0.0
        %858 = vmatprep.subr.mxu0 0.0
        %859 = vmatpush1.msra.mxu0 0.0
        %860 = vmatprep.subr.mxu0 0.0
        %861 = vmatpush1.msra.mxu0 0.0
        %862 = vmatprep.subr.mxu0 0.0
        %863 = vmatpush1.msra.mxu0 0.0
        %864 = vmatprep.subr.mxu0 0.0
        %865 = vmatpush1.msra.mxu0 0.0
        %866 = vmatprep.subr.mxu0 0.0
        %867 = vmatpush1.msra.mxu0 0.0
        %868 = vmatprep.subr.mxu0 0.0
        %869 = vmatpush1.msra.mxu0 0.0
        %870 = vmatprep.subr.mxu0 0.0
        %871 = vmatpush1.msra.mxu0 0.0
        %872 = vmatprep.subr.mxu0 0.0
        %873 = vmatpush1.msra.mxu0 0.0
        %874 = vmatprep.subr.mxu0 0.0
        %875 = vmatpush1.msra.mxu0 0.0
        %876 = vmatprep.subr.mxu0 0.0
        %877 = vmatpush1.msra.mxu0 0.0
        %878 = vmatprep.subr.mxu0 0.0
        %879 = vmatpush1.msra.mxu0 0.0
        %880 = vmatprep.subr.mxu0 0.0
        %881 = vmatpush1.msra.mxu0 0.0
        %882 = vmatprep.subr.mxu0 0.0
        %883 = vmatpush1.msra.mxu0 0.0
        %884 = vmatprep.subr.mxu0 0.0
        %885 = vmatpush1.msra.mxu0 0.0
        %886 = vmatprep.subr.mxu0 0.0
        %887 = vmatpush1.msra.mxu0 0.0
        %888 = vmatprep.subr.mxu0 0.0
        %889 = vmatpush1.msra.mxu0 0.0
        %890 = vmatprep.subr.mxu0 0.0
        %891 = vmatpush1.msra.mxu0 0.0
        %892 = vmatprep.subr.mxu0 0.0
        %893 = vmatpush1.msra.mxu0 0.0
        %894 = vmatprep.subr.mxu0 0.0
        %895 = vmatpush1.msra.mxu0 0.0
        %896 = vmatprep.subr.mxu0 0.0
        %897 = vmatpush1.msra.mxu0 0.0
        %898 = vmatprep.subr.mxu0 0.0
        %899 = vmatpush1.msra.mxu0 0.0
        %900 = vmatprep.subr.mxu0 0.0
        %901 = vmatpush1.msra.mxu0 0.0
        %902 = vmatprep.subr.mxu0 0.0
        %903 = vmatpush1.msra.mxu0 0.0
        %904 = vmatprep.subr.mxu0 0.0
        %905 = vmatpush1.msra.mxu0 0.0
        %906 = vmatprep.subr.mxu0 0.0
        %907 = vmatpush1.msra.mxu0 0.0
        %908 = vmatprep.subr.mxu0 0.0
        %909 = vmatpush1.msra.mxu0 0.0
        %910 = vmatprep.subr.mxu0 0.0
        %911 = vmatpush1.msra.mxu0 0.0
        %912 = vmatprep.mubr.f32.mxu0 0.0
        %913 = vmatmul.mubr.f32.gmra.mrb[0].mxu0 %v816
        %v914 = vpop.f32.mrb[0].mxu0
        %v915 = vadd.f32 %v803, %v914
        %v916 = vpop.f32.mrb[0].mxu0
        %v917 = vadd.f32 %v803, %v916
        %918 = vmatprep.mubr.f32.mxu0 0.0
        %919 = vmatmul.mubr.f32.gmra.mrb[0].mxu0 %v819
        %v920 = vpop.f32.mrb[0].mxu0
        %v921 = vadd.f32 %v808, %v920
        %v922 = vpop.f32.mrb[0].mxu0
        %v923 = vadd.f32 %v808, %v922
        %924 = vmatprep.mubr.f32.mxu0 0.0
        %925 = vmatmul.mubr.f32.gmra.mrb[0].mxu0 %v822
        %v926 = vpop.f32.mrb[0].mxu0
        %v927 = vadd.f32 %v813, %v926
        %v928 = vpop.f32.mrb[0].mxu0
        %v929 = vadd.f32 %v813, %v928
        %930 = vdwg.mxu0
        %931 = vmatprep.subr.mxu0 %v834
        %932 = vmatpush1.msra.mxu0 %v831
        %933 = vmatprep.subr.mxu0 0.0
        %934 = vmatpush1.msra.mxu0 0.0
        %935 = vmatprep.subr.mxu0 0.0
        %936 = vmatpush1.msra.mxu0 0.0
        %937 = vmatprep.subr.mxu0 0.0
        %938 = vmatpush1.msra.mxu0 0.0
        %939 = vmatprep.subr.mxu0 0.0
        %940 = vmatpush1.msra.mxu0 0.0
        %941 = vmatprep.subr.mxu0 0.0
        %942 = vmatpush1.msra.mxu0 0.0
        %943 = vmatprep.subr.mxu0 0.0
        %944 = vmatpush1.msra.mxu0 0.0
        %945 = vmatprep.subr.mxu0 0.0
        %946 = vmatpush1.msra.mxu0 0.0
        %947 = vmatprep.subr.mxu0 0.0
        %948 = vmatpush1.msra.mxu0 0.0
        %949 = vmatprep.subr.mxu0 0.0
        %950 = vmatpush1.msra.mxu0 0.0
        %951 = vmatprep.subr.mxu0 0.0
        %952 = vmatpush1.msra.mxu0 0.0
        %953 = vmatprep.subr.mxu0 0.0
        %954 = vmatpush1.msra.mxu0 0.0
        %955 = vmatprep.subr.mxu0 0.0
        %956 = vmatpush1.msra.mxu0 0.0
        %957 = vmatprep.subr.mxu0 0.0
        %958 = vmatpush1.msra.mxu0 0.0
        %959 = vmatprep.subr.mxu0 0.0
        %960 = vmatpush1.msra.mxu0 0.0
        %961 = vmatprep.subr.mxu0 0.0
        %962 = vmatpush1.msra.mxu0 0.0
        %963 = vmatprep.subr.mxu0 0.0
        %964 = vmatpush1.msra.mxu0 0.0
        %965 = vmatprep.subr.mxu0 0.0
        %966 = vmatpush1.msra.mxu0 0.0
        %967 = vmatprep.subr.mxu0 0.0
        %968 = vmatpush1.msra.mxu0 0.0
        %969 = vmatprep.subr.mxu0 0.0
        %970 = vmatpush1.msra.mxu0 0.0
        %971 = vmatprep.subr.mxu0 0.0
        %972 = vmatpush1.msra.mxu0 0.0
        %973 = vmatprep.subr.mxu0 0.0
        %974 = vmatpush1.msra.mxu0 0.0
        %975 = vmatprep.subr.mxu0 0.0
        %976 = vmatpush1.msra.mxu0 0.0
        %977 = vmatprep.subr.mxu0 0.0
        %978 = vmatpush1.msra.mxu0 0.0
        %979 = vmatprep.subr.mxu0 0.0
        %980 = vmatpush1.msra.mxu0 0.0
        %981 = vmatprep.subr.mxu0 0.0
        %982 = vmatpush1.msra.mxu0 0.0
        %983 = vmatprep.subr.mxu0 0.0
        %984 = vmatpush1.msra.mxu0 0.0
        %985 = vmatprep.subr.mxu0 0.0
        %986 = vmatpush1.msra.mxu0 0.0
        %987 = vmatprep.subr.mxu0 0.0
        %988 = vmatpush1.msra.mxu0 0.0
        %989 = vmatprep.subr.mxu0 0.0
        %990 = vmatpush1.msra.mxu0 0.0
        %991 = vmatprep.subr.mxu0 0.0
        %992 = vmatpush1.msra.mxu0 0.0
        %993 = vmatprep.subr.mxu0 0.0
        %994 = vmatpush1.msra.mxu0 0.0
        %995 = vmatprep.mubr.f32.mxu0 0.0
        %996 = vmatmul.mubr.f32.gmra.mrb[0].mxu0 %v816
        %v997 = vpop.f32.mrb[0].mxu0
        %v998 = vadd.f32 %v803, %v997
        %v999 = vpop.f32.mrb[0].mxu0
        %v1000 = vadd.f32 %v803, %v999
        %1001 = vmatprep.mubr.f32.mxu0 0.0
        %1002 = vmatmul.mubr.f32.gmra.mrb[0].mxu0 %v819
        %v1003 = vpop.f32.mrb[0].mxu0
        %v1004 = vadd.f32 %v808, %v1003
        %v1005 = vpop.f32.mrb[0].mxu0
        %v1006 = vadd.f32 %v808, %v1005
        %1007 = vmatprep.mubr.f32.mxu0 0.0
        %1008 = vmatmul.mubr.f32.gmra.mrb[0].mxu0 %v822
        %v1009 = vpop.f32.mrb[0].mxu0
        %v1010 = vadd.f32 %v813, %v1009
        %v1011 = vpop.f32.mrb[0].mxu0
        %v1012 = vadd.f32 %v813, %v1011
        %1013 = vdwg.mxu0
        %1014 = vmatprep.subr.mxu0 %v840
        %1015 = vmatpush1.msra.mxu0 %v837
        %1016 = vmatprep.subr.mxu0 0.0
        %1017 = vmatpush1.msra.mxu0 0.0
        %1018 = vmatprep.subr.mxu0 0.0
        %1019 = vmatpush1.msra.mxu0 0.0
        %1020 = vmatprep.subr.mxu0 0.0
        %1021 = vmatpush1.msra.mxu0 0.0
        %1022 = vmatprep.subr.mxu0 0.0
        %1023 = vmatpush1.msra.mxu0 0.0
        %1024 = vmatprep.subr.mxu0 0.0
        %1025 = vmatpush1.msra.mxu0 0.0
        %1026 = vmatprep.subr.mxu0 0.0
        %1027 = vmatpush1.msra.mxu0 0.0
        %1028 = vmatprep.subr.mxu0 0.0
        %1029 = vmatpush1.msra.mxu0 0.0
        %1030 = vmatprep.subr.mxu0 0.0
        %1031 = vmatpush1.msra.mxu0 0.0
        %1032 = vmatprep.subr.mxu0 0.0
        %1033 = vmatpush1.msra.mxu0 0.0
        %1034 = vmatprep.subr.mxu0 0.0
        %1035 = vmatpush1.msra.mxu0 0.0
        %1036 = vmatprep.subr.mxu0 0.0
        %1037 = vmatpush1.msra.mxu0 0.0
        %1038 = vmatprep.subr.mxu0 0.0
        %1039 = vmatpush1.msra.mxu0 0.0
        %1040 = vmatprep.subr.mxu0 0.0
        %1041 = vmatpush1.msra.mxu0 0.0
        %1042 = vmatprep.subr.mxu0 0.0
        %1043 = vmatpush1.msra.mxu0 0.0
        %1044 = vmatprep.subr.mxu0 0.0
        %1045 = vmatpush1.msra.mxu0 0.0
        %1046 = vmatprep.subr.mxu0 0.0
        %1047 = vmatpush1.msra.mxu0 0.0
        %1048 = vmatprep.subr.mxu0 0.0
        %1049 = vmatpush1.msra.mxu0 0.0
        %1050 = vmatprep.subr.mxu0 0.0
        %1051 = vmatpush1.msra.mxu0 0.0
        %1052 = vmatprep.subr.mxu0 0.0
        %1053 = vmatpush1.msra.mxu0 0.0
        %1054 = vmatprep.subr.mxu0 0.0
        %1055 = vmatpush1.msra.mxu0 0.0
        %1056 = vmatprep.subr.mxu0 0.0
        %1057 = vmatpush1.msra.mxu0 0.0
        %1058 = vmatprep.subr.mxu0 0.0
        %1059 = vmatpush1.msra.mxu0 0.0
        %1060 = vmatprep.subr.mxu0 0.0
        %1061 = vmatpush1.msra.mxu0 0.0
        %1062 = vmatprep.subr.mxu0 0.0
        %1063 = vmatpush1.msra.mxu0 0.0
        %1064 = vmatprep.subr.mxu0 0.0
        %1065 = vmatpush1.msra.mxu0 0.0
        %1066 = vmatprep.subr.mxu0 0.0
        %1067 = vmatpush1.msra.mxu0 0.0
        %1068 = vmatprep.subr.mxu0 0.0
        %1069 = vmatpush1.msra.mxu0 0.0
        %1070 = vmatprep.subr.mxu0 0.0
        %1071 = vmatpush1.msra.mxu0 0.0
        %1072 = vmatprep.subr.mxu0 0.0
        %1073 = vmatpush1.msra.mxu0 0.0
        %1074 = vmatprep.subr.mxu0 0.0
        %1075 = vmatpush1.msra.mxu0 0.0
        %1076 = vmatprep.subr.mxu0 0.0
        %1077 = vmatpush1.msra.mxu0 0.0
        %1078 = vmatprep.mubr.f32.mxu0 0.0
        %1079 = vmatmul.mubr.f32.gmra.mrb[0].mxu0 %v816
        %v1080 = vpop.f32.mrb[0].mxu0
        %v1081 = vadd.f32 %v803, %v1080
        %v1082 = vpop.f32.mrb[0].mxu0
        %v1083 = vadd.f32 %v803, %v1082
        %1084 = vmatprep.mubr.f32.mxu0 0.0
        %1085 = vmatmul.mubr.f32.gmra.mrb[0].mxu0 %v819
        %v1086 = vpop.f32.mrb[0].mxu0
        %v1087 = vadd.f32 %v808, %v1086
        %v1088 = vpop.f32.mrb[0].mxu0
        %v1089 = vadd.f32 %v808, %v1088
        %1090 = vmatprep.mubr.f32.mxu0 0.0
        %1091 = vmatmul.mubr.f32.gmra.mrb[0].mxu0 %v822
        %v1092 = vpop.f32.mrb[0].mxu0
        %v1093 = vadd.f32 %v813, %v1092
        %v1094 = vpop.f32.mrb[0].mxu0
        %v1095 = vadd.f32 %v813, %v1094
        %1096 = vdwg.mxu0
        %1097 = vmatprep.subr.mxu0 %v846
        %1098 = vmatpush1.msra.mxu0 %v843
        %1099 = vmatprep.subr.mxu0 0.0
        %1100 = vmatpush1.msra.mxu0 0.0
        %1101 = vmatprep.subr.mxu0 0.0
        %1102 = vmatpush1.msra.mxu0 0.0
        %1103 = vmatprep.subr.mxu0 0.0
        %1104 = vmatpush1.msra.mxu0 0.0
        %1105 = vmatprep.subr.mxu0 0.0
        %1106 = vmatpush1.msra.mxu0 0.0
        %1107 = vmatprep.subr.mxu0 0.0
        %1108 = vmatpush1.msra.mxu0 0.0
        %1109 = vmatprep.subr.mxu0 0.0
        %1110 = vmatpush1.msra.mxu0 0.0
        %1111 = vmatprep.subr.mxu0 0.0
        %1112 = vmatpush1.msra.mxu0 0.0
        %1113 = vmatprep.subr.mxu0 0.0
        %1114 = vmatpush1.msra.mxu0 0.0
        %1115 = vmatprep.subr.mxu0 0.0
        %1116 = vmatpush1.msra.mxu0 0.0
        %1117 = vmatprep.subr.mxu0 0.0
        %1118 = vmatpush1.msra.mxu0 0.0
        %1119 = vmatprep.subr.mxu0 0.0
        %1120 = vmatpush1.msra.mxu0 0.0
        %1121 = vmatprep.subr.mxu0 0.0
        %1122 = vmatpush1.msra.mxu0 0.0
        %1123 = vmatprep.subr.mxu0 0.0
        %1124 = vmatpush1.msra.mxu0 0.0
        %1125 = vmatprep.subr.mxu0 0.0
        %1126 = vmatpush1.msra.mxu0 0.0
        %1127 = vmatprep.subr.mxu0 0.0
        %1128 = vmatpush1.msra.mxu0 0.0
        %1129 = vmatprep.subr.mxu0 0.0
        %1130 = vmatpush1.msra.mxu0 0.0
        %1131 = vmatprep.subr.mxu0 0.0
        %1132 = vmatpush1.msra.mxu0 0.0
        %1133 = vmatprep.subr.mxu0 0.0
        %1134 = vmatpush1.msra.mxu0 0.0
        %1135 = vmatprep.subr.mxu0 0.0
        %1136 = vmatpush1.msra.mxu0 0.0
        %1137 = vmatprep.subr.mxu0 0.0
        %1138 = vmatpush1.msra.mxu0 0.0
        %1139 = vmatprep.subr.mxu0 0.0
        %1140 = vmatpush1.msra.mxu0 0.0
        %1141 = vmatprep.subr.mxu0 0.0
        %1142 = vmatpush1.msra.mxu0 0.0
        %1143 = vmatprep.subr.mxu0 0.0
        %1144 = vmatpush1.msra.mxu0 0.0
        %1145 = vmatprep.subr.mxu0 0.0
        %1146 = vmatpush1.msra.mxu0 0.0
        %1147 = vmatprep.subr.mxu0 0.0
        %1148 = vmatpush1.msra.mxu0 0.0
        %1149 = vmatprep.subr.mxu0 0.0
        %1150 = vmatpush1.msra.mxu0 0.0
        %1151 = vmatprep.subr.mxu0 0.0
        %1152 = vmatpush1.msra.mxu0 0.0
        %1153 = vmatprep.subr.mxu0 0.0
        %1154 = vmatpush1.msra.mxu0 0.0
        %1155 = vmatprep.subr.mxu0 0.0
        %1156 = vmatpush1.msra.mxu0 0.0
        %1157 = vmatprep.subr.mxu0 0.0
        %1158 = vmatpush1.msra.mxu0 0.0
        %1159 = vmatprep.subr.mxu0 0.0
        %1160 = vmatpush1.msra.mxu0 0.0
        %1161 = vmatprep.mubr.f32.mxu0 0.0
        %1162 = vmatmul.mubr.f32.gmra.mrb[0].mxu0 %v816
        %v1163 = vpop.f32.mrb[0].mxu0
        %v1164 = vadd.f32 %v803, %v1163
        %v1165 = vpop.f32.mrb[0].mxu0
        %v1166 = vadd.f32 %v803, %v1165
        %1167 = vmatprep.mubr.f32.mxu0 0.0
        %1168 = vmatmul.mubr.f32.gmra.mrb[0].mxu0 %v819
        %v1169 = vpop.f32.mrb[0].mxu0
        %v1170 = vadd.f32 %v808, %v1169
        %v1171 = vpop.f32.mrb[0].mxu0
        %v1172 = vadd.f32 %v808, %v1171
        %1173 = vmatprep.mubr.f32.mxu0 0.0
        %1174 = vmatmul.mubr.f32.gmra.mrb[0].mxu0 %v822
        %v1175 = vpop.f32.mrb[0].mxu0
        %v1176 = vadd.f32 %v813, %v1175
        %v1177 = vpop.f32.mrb[0].mxu0
        %v1178 = vadd.f32 %v813, %v1177
        %1179 = vdwg.mxu0
        %v1180 = vld [vmem:[%s369] sm:$0xff]
        %v1181 = vld [vmem:[%s369 + $0x8] sm:$0xff]
        %v1182 = vld [vmem:[%s369 + $0x10] sm:$0xff]
        %v1183 = vld [vmem:[%s369 + $0x18] sm:$0xff]
        %v1184 = vld [vmem:[%s369 + $0x20] sm:$0xff]
        %v1185 = vld [vmem:[%s369 + $0x28] sm:$0xff]
        %v1186 = vld [vmem:[%s369 + $0x30] sm:$0xff]
        %v1187 = vld [vmem:[%s369 + $0x38] sm:$0xff]
        %v1188 = vld [vmem:[%s369 + $0x40] sm:$0xff]
        %v1189 = vld [vmem:[%s369 + $0x48] sm:$0xff]
        %v1190 = vld [vmem:[%s369 + $0x50] sm:$0xff]
        %v1191 = vld [vmem:[%s369 + $0x58] sm:$0xff]
        %v1192 = vld [vmem:[%s369 + $0x60] sm:$0xff]
        %v1193 = vld [vmem:[%s369 + $0x68] sm:$0xff]
        %v1194 = vld [vmem:[%s369 + $0x70] sm:$0xff]
        %v1195 = vld [vmem:[%s369 + $0x78] sm:$0xff]
        %v1196 = vld [vmem:[%s369 + $0x80] sm:$0xff]
        %v1197 = vld [vmem:[%s369 + $0x88] sm:$0xff]
        %v1198 = vld [vmem:[%s369 + $0x90] sm:$0xff]
        %v1199 = vld [vmem:[%s369 + $0x98] sm:$0xff]
        %v1200 = vld [vmem:[%s369 + $0xa0] sm:$0xff]
        %v1201 = vld [vmem:[%s369 + $0xa8] sm:$0xff]
        %v1202 = vld [vmem:[%s369 + $0xb0] sm:$0xff]
        %v1203 = vld [vmem:[%s369 + $0xb8] sm:$0xff]
        %v1204 = vxor.u32 %v915, 2147483648
        %v1205 = vxor.u32 %v917, 2147483648
        %v1206 = vxor.u32 %v998, 2147483648
        %v1207 = vxor.u32 %v1000, 2147483648
        %v1208 = vxor.u32 %v1081, 2147483648
        %v1209 = vxor.u32 %v1083, 2147483648
        %v1210 = vxor.u32 %v1164, 2147483648
        %v1211 = vxor.u32 %v1166, 2147483648
        %v1212 = vxor.u32 %v921, 2147483648
        %v1213 = vxor.u32 %v923, 2147483648
        %v1214 = vxor.u32 %v1004, 2147483648
        %v1215 = vxor.u32 %v1006, 2147483648
        %v1216 = vxor.u32 %v1087, 2147483648
        %v1217 = vxor.u32 %v1089, 2147483648
        %v1218 = vxor.u32 %v1170, 2147483648
        %v1219 = vxor.u32 %v1172, 2147483648
        %v1220 = vxor.u32 %v927, 2147483648
        %v1221 = vxor.u32 %v929, 2147483648
        %v1222 = vxor.u32 %v1010, 2147483648
        %v1223 = vxor.u32 %v1012, 2147483648
        %v1224 = vxor.u32 %v1093, 2147483648
        %v1225 = vxor.u32 %v1095, 2147483648
        %v1226 = vxor.u32 %v1176, 2147483648
        %v1227 = vxor.u32 %v1178, 2147483648
        %v1228 = vmul.f32 %v1204, 1.442695
        %v1229 = vpow.pop %v1228
        %v1230 = vmul.f32 %v1205, 1.442695
        %v1231 = vpow.pop %v1230
        %v1232 = vmul.f32 %v1206, 1.442695
        %v1233 = vpow.pop %v1232
        %v1234 = vmul.f32 %v1207, 1.442695
        %v1235 = vpow.pop %v1234
        %v1236 = vmul.f32 %v1208, 1.442695
        %v1237 = vpow.pop %v1236
        %v1238 = vmul.f32 %v1209, 1.442695
        %v1239 = vpow.pop %v1238
        %v1240 = vmul.f32 %v1210, 1.442695
        %v1241 = vpow.pop %v1240
        %v1242 = vmul.f32 %v1211, 1.442695
        %v1243 = vpow.pop %v1242
        %v1244 = vmul.f32 %v1212, 1.442695
        %v1245 = vpow.pop %v1244
        %v1246 = vmul.f32 %v1213, 1.442695
        %v1247 = vpow.pop %v1246
        %v1248 = vmul.f32 %v1214, 1.442695
        %v1249 = vpow.pop %v1248
        %v1250 = vmul.f32 %v1215, 1.442695
        %v1251 = vpow.pop %v1250
        %v1252 = vmul.f32 %v1216, 1.442695
        %v1253 = vpow.pop %v1252
        %v1254 = vmul.f32 %v1217, 1.442695
        %v1255 = vpow.pop %v1254
        %v1256 = vmul.f32 %v1218, 1.442695
        %v1257 = vpow.pop %v1256
        %v1258 = vmul.f32 %v1219, 1.442695
        %v1259 = vpow.pop %v1258
        %v1260 = vmul.f32 %v1220, 1.442695
        %v1261 = vpow.pop %v1260
        %v1262 = vmul.f32 %v1221, 1.442695
        %v1263 = vpow.pop %v1262
        %v1264 = vmul.f32 %v1222, 1.442695
        %v1265 = vpow.pop %v1264
        %v1266 = vmul.f32 %v1223, 1.442695
        %v1267 = vpow.pop %v1266
        %v1268 = vmul.f32 %v1224, 1.442695
        %v1269 = vpow.pop %v1268
        %v1270 = vmul.f32 %v1225, 1.442695
        %v1271 = vpow.pop %v1270
        %v1272 = vmul.f32 %v1226, 1.442695
        %v1273 = vpow.pop %v1272
        %v1274 = vmul.f32 %v1227, 1.442695
        %v1275 = vpow.pop %v1274
        %v1276 = vadd.f32 %v1229, 1.0
        %v1277 = vadd.f32 %v1231, 1.0
        %v1278 = vadd.f32 %v1233, 1.0
        %v1279 = vadd.f32 %v1235, 1.0
        %v1280 = vadd.f32 %v1237, 1.0
        %v1281 = vadd.f32 %v1239, 1.0
        %v1282 = vadd.f32 %v1241, 1.0
        %v1283 = vadd.f32 %v1243, 1.0
        %v1284 = vadd.f32 %v1245, 1.0
        %v1285 = vadd.f32 %v1247, 1.0
        %v1286 = vadd.f32 %v1249, 1.0
        %v1287 = vadd.f32 %v1251, 1.0
        %v1288 = vadd.f32 %v1253, 1.0
        %v1289 = vadd.f32 %v1255, 1.0
        %v1290 = vadd.f32 %v1257, 1.0
        %v1291 = vadd.f32 %v1259, 1.0
        %v1292 = vadd.f32 %v1261, 1.0
        %v1293 = vadd.f32 %v1263, 1.0
        %v1294 = vadd.f32 %v1265, 1.0
        %v1295 = vadd.f32 %v1267, 1.0
        %v1296 = vadd.f32 %v1269, 1.0
        %v1297 = vadd.f32 %v1271, 1.0
        %v1298 = vadd.f32 %v1273, 1.0
        %v1299 = vadd.f32 %v1275, 1.0
        %v1300 = vrcp.pop %v1276
        %v1301 = vmul.f32 1.0, %v1300
        %v1302 = vrcp.pop %v1277
        %v1303 = vmul.f32 1.0, %v1302
        %v1304 = vrcp.pop %v1278
        %v1305 = vmul.f32 1.0, %v1304
        %v1306 = vrcp.pop %v1279
        %v1307 = vmul.f32 1.0, %v1306
        %v1308 = vrcp.pop %v1280
        %v1309 = vmul.f32 1.0, %v1308
        %v1310 = vrcp.pop %v1281
        %v1311 = vmul.f32 1.0, %v1310
        %v1312 = vrcp.pop %v1282
        %v1313 = vmul.f32 1.0, %v1312
        %v1314 = vrcp.pop %v1283
        %v1315 = vmul.f32 1.0, %v1314
        %v1316 = vrcp.pop %v1284
        %v1317 = vmul.f32 1.0, %v1316
        %v1318 = vrcp.pop %v1285
        %v1319 = vmul.f32 1.0, %v1318
        %v1320 = vrcp.pop %v1286
        %v1321 = vmul.f32 1.0, %v1320
        %v1322 = vrcp.pop %v1287
        %v1323 = vmul.f32 1.0, %v1322
        %v1324 = vrcp.pop %v1288
        %v1325 = vmul.f32 1.0, %v1324
        %v1326 = vrcp.pop %v1289
        %v1327 = vmul.f32 1.0, %v1326
        %v1328 = vrcp.pop %v1290
        %v1329 = vmul.f32 1.0, %v1328
        %v1330 = vrcp.pop %v1291
        %v1331 = vmul.f32 1.0, %v1330
        %v1332 = vrcp.pop %v1292
        %v1333 = vmul.f32 1.0, %v1332
        %v1334 = vrcp.pop %v1293
        %v1335 = vmul.f32 1.0, %v1334
        %v1336 = vrcp.pop %v1294
        %v1337 = vmul.f32 1.0, %v1336
        %v1338 = vrcp.pop %v1295
        %v1339 = vmul.f32 1.0, %v1338
        %v1340 = vrcp.pop %v1296
        %v1341 = vmul.f32 1.0, %v1340
        %v1342 = vrcp.pop %v1297
        %v1343 = vmul.f32 1.0, %v1342
        %v1344 = vrcp.pop %v1298
        %v1345 = vmul.f32 1.0, %v1344
        %v1346 = vrcp.pop %v1299
        %v1347 = vmul.f32 1.0, %v1346
        %v1348 = vmul.f32 %v1180, %v1301
        %v1349 = vmul.f32 %v1181, %v1303
        %v1350 = vmul.f32 %v1182, %v1305
        %v1351 = vmul.f32 %v1183, %v1307
        %v1352 = vmul.f32 %v1184, %v1309
        %v1353 = vmul.f32 %v1185, %v1311
        %v1354 = vmul.f32 %v1186, %v1313
        %v1355 = vmul.f32 %v1187, %v1315
        %v1356 = vmul.f32 %v1188, %v1317
        %v1357 = vmul.f32 %v1189, %v1319
        %v1358 = vmul.f32 %v1190, %v1321
        %v1359 = vmul.f32 %v1191, %v1323
        %v1360 = vmul.f32 %v1192, %v1325
        %v1361 = vmul.f32 %v1193, %v1327
        %v1362 = vmul.f32 %v1194, %v1329
        %v1363 = vmul.f32 %v1195, %v1331
        %v1364 = vmul.f32 %v1196, %v1333
        %v1365 = vmul.f32 %v1197, %v1335
        %v1366 = vmul.f32 %v1198, %v1337
        %v1367 = vmul.f32 %v1199, %v1339
        %v1368 = vmul.f32 %v1200, %v1341
        %v1369 = vmul.f32 %v1201, %v1343
        %v1370 = vmul.f32 %v1202, %v1345
        %v1371 = vmul.f32 %v1203, %v1347
        %v1372 = vadd.f32 %v1348, %v1180
        %v1373 = vadd.f32 %v1349, %v1181
        %v1374 = vadd.f32 %v1350, %v1182
        %v1375 = vadd.f32 %v1351, %v1183
        %v1376 = vadd.f32 %v1352, %v1184
        %v1377 = vadd.f32 %v1353, %v1185
        %v1378 = vadd.f32 %v1354, %v1186
        %v1379 = vadd.f32 %v1355, %v1187
        %v1380 = vadd.f32 %v1356, %v1188
        %v1381 = vadd.f32 %v1357, %v1189
        %v1382 = vadd.f32 %v1358, %v1190
        %v1383 = vadd.f32 %v1359, %v1191
        %v1384 = vadd.f32 %v1360, %v1192
        %v1385 = vadd.f32 %v1361, %v1193
        %v1386 = vadd.f32 %v1362, %v1194
        %v1387 = vadd.f32 %v1363, %v1195
        %v1388 = vadd.f32 %v1364, %v1196
        %v1389 = vadd.f32 %v1365, %v1197
        %v1390 = vadd.f32 %v1366, %v1198
        %v1391 = vadd.f32 %v1367, %v1199
        %v1392 = vadd.f32 %v1368, %v1200
        %v1393 = vadd.f32 %v1369, %v1201
        %v1394 = vadd.f32 %v1370, %v1202
        %v1395 = vadd.f32 %v1371, %v1203
        %1396 = vst [vmem:[%s413] sm:$0xff] %v1372
        %1397 = vst [vmem:[%s413 + $0x8] sm:$0xff] %v1373
        %1398 = vst [vmem:[%s413 + $0x10] sm:$0xff] %v1374
        %1399 = vst [vmem:[%s413 + $0x18] sm:$0xff] %v1375
        %1400 = vst [vmem:[%s413 + $0x20] sm:$0xff] %v1376
        %1401 = vst [vmem:[%s413 + $0x28] sm:$0xff] %v1377
        %1402 = vst [vmem:[%s413 + $0x30] sm:$0xff] %v1378
        %1403 = vst [vmem:[%s413 + $0x38] sm:$0xff] %v1379
        %1404 = vst [vmem:[%s413 + $0x40] sm:$0xff] %v1380
        %1405 = vst [vmem:[%s413 + $0x48] sm:$0xff] %v1381
        %1406 = vst [vmem:[%s413 + $0x50] sm:$0xff] %v1382
        %1407 = vst [vmem:[%s413 + $0x58] sm:$0xff] %v1383
        %1408 = vst [vmem:[%s413 + $0x60] sm:$0xff] %v1384
        %1409 = vst [vmem:[%s413 + $0x68] sm:$0xff] %v1385
        %1410 = vst [vmem:[%s413 + $0x70] sm:$0xff] %v1386
        %1411 = vst [vmem:[%s413 + $0x78] sm:$0xff] %v1387
        %1412 = vst [vmem:[%s413 + $0x80] sm:$0xff] %v1388
        %1413 = vst [vmem:[%s413 + $0x88] sm:$0xff] %v1389
        %1414 = vst [vmem:[%s413 + $0x90] sm:$0xff] %v1390
        %1415 = vst [vmem:[%s413 + $0x98] sm:$0xff] %v1391
        %1416 = vst [vmem:[%s413 + $0xa0] sm:$0xff] %v1392
        %1417 = vst [vmem:[%s413 + $0xa8] sm:$0xff] %v1393
        %1418 = vst [vmem:[%s413 + $0xb0] sm:$0xff] %v1394
        %1419 = vst [vmem:[%s413 + $0xb8] sm:$0xff] %v1395
        %s1420 = sand.u32 %s215, 1
        %s1421 = sand.u32 %s215, 1
        %s1422 = smul.addr %s1421, 192
        %s1423 = scalar_lea.vmem [#allocation3], %s1422
        // Predicated region
        $region76: #{fmdb_basic_fwd.34} parent=70 // pred_check
          %p1424 = pneg %p225
        $region77: #{fmdb_basic_fwd.34} parent=70 // pred_check_branch
          %1426 = sbr.rel (%p1424) target = $region79
        $region78: #{fmdb_basic_fwd.34} parent=70 // pred_region
          %s1427 = smul.u32 8, %s19
          %s1428 = smul.addr %s1427, 8
          %s1429 = scalar_lea.vmem %s8, %s1428
          // Predicated region
          $region80: #{fmdb_basic_fwd.34} parent=78 // pred_check
            _
          $region81: #{fmdb_basic_fwd.34} parent=78 // pred_check_branch
            %1431 = sbr.rel (0) target = $region83
          $region82: #{fmdb_basic_fwd.34} parent=78 // pred_region
            // Predicated region
            $region84: #{fmdb_basic_fwd.34} parent=82 // pred_check
              _
            $region85: #{fmdb_basic_fwd.34} parent=82 // pred_check_branch
              %1433 = sbr.rel (0) target = $region87
            $region86: #{fmdb_basic_fwd.34} parent=82 // pred_region
              loop: start=0, step=1, limit=1
              $region88: #{fmdb_basic_fwd.34} parent=86 // loop_pre_header
                _
              $region89: #{fmdb_basic_fwd.34} parent=86 // loop_header
                %s1435 = sphi 0, %s1439
                %p1436 = scmp.ge.s32.totalorder %s1435, 1
                %s1440 = sphi %s1423, %s1423
                %s1441 = sphi %s1429, %s1429
              $region90: #{fmdb_basic_fwd.34} parent=86 // loop_header_branch
                %1438 = sbr.rel (%p1436) target = $region94
              $region91: #{fmdb_basic_fwd.34} parent=86 // loop_body
                %v1442 = vld [vmem:[%s1440] sm:$0xff]
                %1443 = vst [vmem:[%s1441] sm:$0xff] %v1442
                %v1444 = vld [vmem:[%s1440 + $0x8] sm:$0xff]
                %1445 = vst [vmem:[%s1441 + $0x8] sm:$0xff] %v1444
                %v1446 = vld [vmem:[%s1440 + $0x10] sm:$0xff]
                %1447 = vst [vmem:[%s1441 + $0x10] sm:$0xff] %v1446
                %v1448 = vld [vmem:[%s1440 + $0x18] sm:$0xff]
                %1449 = vst [vmem:[%s1441 + $0x18] sm:$0xff] %v1448
                %v1450 = vld [vmem:[%s1440 + $0x20] sm:$0xff]
                %1451 = vst [vmem:[%s1441 + $0x20] sm:$0xff] %v1450
                %v1452 = vld [vmem:[%s1440 + $0x28] sm:$0xff]
                %1453 = vst [vmem:[%s1441 + $0x28] sm:$0xff] %v1452
                %v1454 = vld [vmem:[%s1440 + $0x30] sm:$0xff]
                %1455 = vst [vmem:[%s1441 + $0x30] sm:$0xff] %v1454
                %v1456 = vld [vmem:[%s1440 + $0x38] sm:$0xff]
                %1457 = vst [vmem:[%s1441 + $0x38] sm:$0xff] %v1456
                %v1458 = vld [vmem:[%s1440 + $0x40] sm:$0xff]
                %1459 = vst [vmem:[%s1441 + $0x80] sm:$0xff] %v1458
                %v1460 = vld [vmem:[%s1440 + $0x48] sm:$0xff]
                %1461 = vst [vmem:[%s1441 + $0x88] sm:$0xff] %v1460
                %v1462 = vld [vmem:[%s1440 + $0x50] sm:$0xff]
                %1463 = vst [vmem:[%s1441 + $0x90] sm:$0xff] %v1462
                %v1464 = vld [vmem:[%s1440 + $0x58] sm:$0xff]
                %1465 = vst [vmem:[%s1441 + $0x98] sm:$0xff] %v1464
                %v1466 = vld [vmem:[%s1440 + $0x60] sm:$0xff]
                %1467 = vst [vmem:[%s1441 + $0xa0] sm:$0xff] %v1466
                %v1468 = vld [vmem:[%s1440 + $0x68] sm:$0xff]
                %1469 = vst [vmem:[%s1441 + $0xa8] sm:$0xff] %v1468
                %v1470 = vld [vmem:[%s1440 + $0x70] sm:$0xff]
                %1471 = vst [vmem:[%s1441 + $0xb0] sm:$0xff] %v1470
                %v1472 = vld [vmem:[%s1440 + $0x78] sm:$0xff]
                %1473 = vst [vmem:[%s1441 + $0xb8] sm:$0xff] %v1472
                %v1474 = vld [vmem:[%s1440 + $0x80] sm:$0xff]
                %1475 = vst [vmem:[%s1441 + $0x100] sm:$0xff] %v1474
                %v1476 = vld [vmem:[%s1440 + $0x88] sm:$0xff]
                %1477 = vst [vmem:[%s1441 + $0x108] sm:$0xff] %v1476
                %v1478 = vld [vmem:[%s1440 + $0x90] sm:$0xff]
                %1479 = vst [vmem:[%s1441 + $0x110] sm:$0xff] %v1478
                %v1480 = vld [vmem:[%s1440 + $0x98] sm:$0xff]
                %1481 = vst [vmem:[%s1441 + $0x118] sm:$0xff] %v1480
                %v1482 = vld [vmem:[%s1440 + $0xa0] sm:$0xff]
                %1483 = vst [vmem:[%s1441 + $0x120] sm:$0xff] %v1482
                %v1484 = vld [vmem:[%s1440 + $0xa8] sm:$0xff]
                %1485 = vst [vmem:[%s1441 + $0x128] sm:$0xff] %v1484
                %v1486 = vld [vmem:[%s1440 + $0xb0] sm:$0xff]
                %1487 = vst [vmem:[%s1441 + $0x130] sm:$0xff] %v1486
                %v1488 = vld [vmem:[%s1440 + $0xb8] sm:$0xff]
                %1489 = vst [vmem:[%s1441 + $0x138] sm:$0xff] %v1488
              $region92: #{fmdb_basic_fwd.34} parent=86 // loop_footer
                %s1439 = sadd.s32 1, %s1435
              $region93: #{fmdb_basic_fwd.34} parent=86 // loop_footer_branch
                %1434 = sbr.rel target = $region89
              $region94: #{fmdb_basic_fwd.34} parent=86 // loop_exit
                _
            $region87: #{fmdb_basic_fwd.34} parent=82 // pred_fallthru
              _
            // Predicated region
            $region95: #{fmdb_basic_fwd.34} parent=82 // pred_check
              _
            $region96: #{fmdb_basic_fwd.34} parent=82 // pred_check_branch
              %1491 = sbr.rel target = $region98
            $region97: #{fmdb_basic_fwd.34} parent=82 // pred_region
              _
            $region98: #{fmdb_basic_fwd.34} parent=82 // pred_fallthru
              _
          $region83: #{fmdb_basic_fwd.34} parent=78 // pred_fallthru
            _
          %1492 = vnop
        $region79: #{fmdb_basic_fwd.34} parent=70 // pred_fallthru
          _
      $region71: #{fmdb_basic_fwd.34} parent=5 // pred_fallthru
        _
      %p1493 = scmp.le.s32.totalorder 2, %s14
      // Predicated region
      $region99: #{fmdb_basic_fwd.34} parent=5 // pred_check
        %p1494 = pneg %p1493
      $region100: #{fmdb_basic_fwd.34} parent=5 // pred_check_branch
        %1496 = sbr.rel (%p1494) target = $region102
      $region101: #{fmdb_basic_fwd.34} parent=5 // pred_region
        %s1497 = ssub.s32 %s14, 2
        // Predicated region
        $region103: #{fmdb_basic_fwd.34} parent=101 // pred_check
          %p1498 = pneg %p231
        $region104: #{fmdb_basic_fwd.34} parent=101 // pred_check_branch
          %1500 = sbr.rel (%p1498) target = $region106
        $region105: #{fmdb_basic_fwd.34} parent=101 // pred_region
          %s1501 = sand.u32 %s216, 1
          %s1502 = sand.u32 %s216, 1
          %s1503 = smul.addr %s1502, 192
          %s1504 = scalar_lea.vmem [#allocation3], %s1503
        $region106: #{fmdb_basic_fwd.34} parent=101 // pred_fallthru
          _
      $region102: #{fmdb_basic_fwd.34} parent=5 // pred_fallthru
        _
    $region6: #{fmdb_basic_fwd.34} parent=1 // loop_footer
      %s18 = sadd.s32 1, %s14
    $region7: #{fmdb_basic_fwd.34} parent=1 // loop_footer_branch
      %13 = sbr.rel target = $region3
    $region8: #{fmdb_basic_fwd.34} parent=1 // loop_exit
      _

// kernel: fmdb_basic_fwd.35
$region0: #{fmdb_basic_fwd.35}
  #allocation0 [shape = 'u32[]', space=smem, size = 0x4, offset = 0x4, fixed_abs, tag = 'smem constant byte address 0x4 - core index']
  #allocation1 [shape = 'u32[144,128]{1,0:T(1,128)}', space=vmem, size = 0x12000, scoped, tag = 'internal scratch']
  %s0 = inlined_call_operand.vmem [shape: f32[24,2048], index: 0, kind: input, shape index: {}]
  %s1 = inlined_call_operand.vmem [shape: f32[48,24], index: 1, kind: input, shape index: {}]
  %s2 = inlined_call_operand.vmem [shape: f32[48,1], index: 2, kind: input, shape index: {}]
  %s3 = inlined_call_operand.vmem [shape: f32[48,2048], index: 3, kind: output, shape index: {}]
  %s4 = sld [smem:[#allocation0]]
  $region87: #{fmdb_basic_fwd.35} parent=0
    _
  %s6 = ssub.s32 1, %s4
  %s7 = scalar_select 0, %s6, %s4
  $region1: #{fmdb_basic_fwd.35} parent=0
    #allocation2 [shape = 'u8[196608]{0}', space=vmem, size = 0x30000, scoped, tag = 'input window, operand 0']
    #allocation3 [shape = 'u8[393216]{0}', space=vmem, size = 0x60000, scoped, tag = 'output window, operand 0']
    loop: start=0, step=1, limit=4
    $region2: #{fmdb_basic_fwd.35} parent=1 // loop_pre_header
      _
    $region3: #{fmdb_basic_fwd.35} parent=1 // loop_header
      %s9 = sphi 0, %s13
      %p10 = scmp.ge.s32.totalorder %s9, 4
      %s19 = sphi 0, %s21
      %s22 = sphi 0, %s19
      %s23 = sphi 0, %s22
      %s39 = sphi 0, %s23
      %s43 = sphi 0, %s43
      %s45 = sphi 0, %s43
      %s46 = sphi 0, %s45
      %s60 = sphi 0, %s46
      %s64 = sphi 0, %s64
      %s66 = sphi 0, %s64
      %s67 = sphi 0, %s66
      %s81 = sphi 0, %s67
      %s87 = sphi 0, %s89
      %s90 = sphi 0, %s87
      %s91 = sphi 0, %s90
      %s107 = sphi 0, %s91
    $region4: #{fmdb_basic_fwd.35} parent=1 // loop_header_branch
      %12 = sbr.rel (%p10) target = $region8
    $region5: #{fmdb_basic_fwd.35} parent=1 // loop_body
      %s14 = ssub.s32 %s9, 1
      %s15 = ssub.s32 %s9, 2
      %s16 = sadd.s32 %s9, 1
      %s17 = ssub.s32 %s9, %s16
      %p18 = scmp.eq.s32.totalorder %s17, 0
      %s20 = sadd.s32 %s19, 1
      %s21 = scalar_select %p18, %s19, %s20
      %p24 = pneg %p18
      %p25 = scmp.eq.s32.totalorder %s9, 1
      %p26 = por %p24, %p25
      %p27 = scmp.ne.s32.totalorder %s19, %s22
      %p28 = scmp.eq.s32.totalorder %s9, 0
      %p29 = por %p27, %p28
      %p30 = scmp.ne.s32.totalorder %s19, %s22
      %p31 = scmp.eq.s32.totalorder %s14, 1
      %p32 = por %p30, %p31
      %p33 = scmp.ne.s32.totalorder %s22, %s23
      %p34 = scmp.eq.s32.totalorder %s14, 0
      %p35 = por %p33, %p34
      %p36 = scmp.ne.s32.totalorder %s22, %s23
      %p37 = scmp.eq.s32.totalorder %s15, 1
      %p38 = por %p36, %p37
      %p40 = scmp.ne.s32.totalorder %s23, %s39
      %p41 = scmp.eq.s32.totalorder %s15, 0
      %p42 = por %p40, %p41
      %s44 = sadd.s32 %s43, 1
      %p47 = scmp.eq.s32.totalorder %s9, 1
      %p48 = scmp.ne.s32.totalorder %s43, %s45
      %p49 = scmp.eq.s32.totalorder %s9, 0
      %p50 = por %p48, %p49
      %p51 = scmp.ne.s32.totalorder %s43, %s45
      %p52 = scmp.eq.s32.totalorder %s14, 1
      %p53 = por %p51, %p52
      %p54 = scmp.ne.s32.totalorder %s45, %s46
      %p55 = scmp.eq.s32.totalorder %s14, 0
      %p56 = por %p54, %p55
      %p57 = scmp.ne.s32.totalorder %s45, %s46
      %p58 = scmp.eq.s32.totalorder %s15, 1
      %p59 = por %p57, %p58
      %p61 = scmp.ne.s32.totalorder %s46, %s60
      %p62 = scmp.eq.s32.totalorder %s15, 0
      %p63 = por %p61, %p62
      %s65 = sadd.s32 %s64, 1
      %p68 = scmp.eq.s32.totalorder %s9, 1
      %p69 = scmp.ne.s32.totalorder %s64, %s66
      %p70 = scmp.eq.s32.totalorder %s9, 0
      %p71 = por %p69, %p70
      %p72 = scmp.ne.s32.totalorder %s64, %s66
      %p73 = scmp.eq.s32.totalorder %s14, 1
      %p74 = por %p72, %p73
      %p75 = scmp.ne.s32.totalorder %s66, %s67
      %p76 = scmp.eq.s32.totalorder %s14, 0
      %p77 = por %p75, %p76
      %p78 = scmp.ne.s32.totalorder %s66, %s67
      %p79 = scmp.eq.s32.totalorder %s15, 1
      %p80 = por %p78, %p79
      %p82 = scmp.ne.s32.totalorder %s67, %s81
      %p83 = scmp.eq.s32.totalorder %s15, 0
      %p84 = por %p82, %p83
      %s85 = ssub.s32 %s9, %s16
      %p86 = scmp.eq.s32.totalorder %s85, 0
      %s88 = sadd.s32 %s87, 1
      %s89 = scalar_select %p86, %s87, %s88
      %p92 = pneg %p86
      %p93 = scmp.eq.s32.totalorder %s9, 1
      %p94 = por %p92, %p93
      %p95 = scmp.ne.s32.totalorder %s87, %s90
      %p96 = scmp.eq.s32.totalorder %s9, 0
      %p97 = por %p95, %p96
      %p98 = scmp.ne.s32.totalorder %s87, %s90
      %p99 = scmp.eq.s32.totalorder %s14, 1
      %p100 = por %p98, %p99
      %p101 = scmp.ne.s32.totalorder %s90, %s91
      %p102 = scmp.eq.s32.totalorder %s14, 0
      %p103 = por %p101, %p102
      %p104 = scmp.ne.s32.totalorder %s90, %s91
      %p105 = scmp.eq.s32.totalorder %s15, 1
      %p106 = por %p104, %p105
      %p108 = scmp.ne.s32.totalorder %s91, %s107
      %p109 = scmp.eq.s32.totalorder %s15, 0
      %p110 = por %p108, %p109
      %p111 = scmp.le.s32.totalorder 1, %s9
      %p112 = scmp.lt.s32.totalorder %s9, 3
      %p113 = pnand %p111, %p112
      %p114 = pneg %p113
      // Predicated region
      $region9: #{fmdb_basic_fwd.35} parent=5 // pred_check
        _
      $region10: #{fmdb_basic_fwd.35} parent=5 // pred_check_branch
        %116 = sbr.rel (%p113) target = $region12
      $region11: #{fmdb_basic_fwd.35} parent=5 // pred_region
        %s117 = ssub.s32 %s9, 1
        // Predicated region
        $region13: #{fmdb_basic_fwd.35} parent=11 // pred_check
          %p118 = pneg %p56
        $region14: #{fmdb_basic_fwd.35} parent=11 // pred_check_branch
          %120 = sbr.rel (%p118) target = $region16
        $region15: #{fmdb_basic_fwd.35} parent=11 // pred_region
          _
        $region16: #{fmdb_basic_fwd.35} parent=11 // pred_fallthru
          _
        // Predicated region
        $region17: #{fmdb_basic_fwd.35} parent=11 // pred_check
          %p121 = pneg %p77
        $region18: #{fmdb_basic_fwd.35} parent=11 // pred_check_branch
          %123 = sbr.rel (%p121) target = $region20
        $region19: #{fmdb_basic_fwd.35} parent=11 // pred_region
          _
        $region20: #{fmdb_basic_fwd.35} parent=11 // pred_fallthru
          _
      $region12: #{fmdb_basic_fwd.35} parent=5 // pred_fallthru
        _
      %p124 = scmp.lt.s32.totalorder %s9, 2
      // Predicated region
      $region21: #{fmdb_basic_fwd.35} parent=5 // pred_check
        %p125 = pneg %p124
      $region22: #{fmdb_basic_fwd.35} parent=5 // pred_check_branch
        %127 = sbr.rel (%p125) target = $region24
      $region23: #{fmdb_basic_fwd.35} parent=5 // pred_region
        // Predicated region
        $region25: #{fmdb_basic_fwd.35} parent=23 // pred_check
          %p128 = pneg %p29
        $region26: #{fmdb_basic_fwd.35} parent=23 // pred_check_branch
          %130 = sbr.rel (%p128) target = $region28
        $region27: #{fmdb_basic_fwd.35} parent=23 // pred_region
          %s131 = sand.u32 %s19, 1
          %s132 = sand.u32 %s19, 1
          %s133 = smul.addr %s132, 192
          %s134 = scalar_lea.vmem [#allocation2], %s133
          %s135 = smul.u32 8, %s9
          %s136 = smul.addr %s135, 8
          %s137 = scalar_lea.vmem %s0, %s136
          // Predicated region
          $region29: #{fmdb_basic_fwd.35} parent=27 // pred_check
            _
          $region30: #{fmdb_basic_fwd.35} parent=27 // pred_check_branch
            %139 = sbr.rel (0) target = $region32
          $region31: #{fmdb_basic_fwd.35} parent=27 // pred_region
            // Predicated region
            $region33: #{fmdb_basic_fwd.35} parent=31 // pred_check
              _
            $region34: #{fmdb_basic_fwd.35} parent=31 // pred_check_branch
              %141 = sbr.rel (0) target = $region36
            $region35: #{fmdb_basic_fwd.35} parent=31 // pred_region
              loop: start=0, step=1, limit=1
              $region37: #{fmdb_basic_fwd.35} parent=35 // loop_pre_header
                _
              $region38: #{fmdb_basic_fwd.35} parent=35 // loop_header
                %s143 = sphi 0, %s147
                %p144 = scmp.ge.s32.totalorder %s143, 1
                %s148 = sphi %s137, %s137
                %s149 = sphi %s134, %s134
              $region39: #{fmdb_basic_fwd.35} parent=35 // loop_header_branch
                %146 = sbr.rel (%p144) target = $region43
              $region40: #{fmdb_basic_fwd.35} parent=35 // loop_body
                %v150 = vld [vmem:[%s148] sm:$0xff]
                %151 = vst [vmem:[%s149] sm:$0xff] %v150
                %v152 = vld [vmem:[%s148 + $0x8] sm:$0xff]
                %153 = vst [vmem:[%s149 + $0x8] sm:$0xff] %v152
                %v154 = vld [vmem:[%s148 + $0x10] sm:$0xff]
                %155 = vst [vmem:[%s149 + $0x10] sm:$0xff] %v154
                %v156 = vld [vmem:[%s148 + $0x18] sm:$0xff]
                %157 = vst [vmem:[%s149 + $0x18] sm:$0xff] %v156
                %v158 = vld [vmem:[%s148 + $0x20] sm:$0xff]
                %159 = vst [vmem:[%s149 + $0x20] sm:$0xff] %v158
                %v160 = vld [vmem:[%s148 + $0x28] sm:$0xff]
                %161 = vst [vmem:[%s149 + $0x28] sm:$0xff] %v160
                %v162 = vld [vmem:[%s148 + $0x30] sm:$0xff]
                %163 = vst [vmem:[%s149 + $0x30] sm:$0xff] %v162
                %v164 = vld [vmem:[%s148 + $0x38] sm:$0xff]
                %165 = vst [vmem:[%s149 + $0x38] sm:$0xff] %v164
                %v166 = vld [vmem:[%s148 + $0x80] sm:$0xff]
                %167 = vst [vmem:[%s149 + $0x40] sm:$0xff] %v166
                %v168 = vld [vmem:[%s148 + $0x88] sm:$0xff]
                %169 = vst [vmem:[%s149 + $0x48] sm:$0xff] %v168
                %v170 = vld [vmem:[%s148 + $0x90] sm:$0xff]
                %171 = vst [vmem:[%s149 + $0x50] sm:$0xff] %v170
                %v172 = vld [vmem:[%s148 + $0x98] sm:$0xff]
                %173 = vst [vmem:[%s149 + $0x58] sm:$0xff] %v172
                %v174 = vld [vmem:[%s148 + $0xa0] sm:$0xff]
                %175 = vst [vmem:[%s149 + $0x60] sm:$0xff] %v174
                %v176 = vld [vmem:[%s148 + $0xa8] sm:$0xff]
                %177 = vst [vmem:[%s149 + $0x68] sm:$0xff] %v176
                %v178 = vld [vmem:[%s148 + $0xb0] sm:$0xff]
                %179 = vst [vmem:[%s149 + $0x70] sm:$0xff] %v178
                %v180 = vld [vmem:[%s148 + $0xb8] sm:$0xff]
                %181 = vst [vmem:[%s149 + $0x78] sm:$0xff] %v180
                %v182 = vld [vmem:[%s148 + $0x100] sm:$0xff]
                %183 = vst [vmem:[%s149 + $0x80] sm:$0xff] %v182
                %v184 = vld [vmem:[%s148 + $0x108] sm:$0xff]
                %185 = vst [vmem:[%s149 + $0x88] sm:$0xff] %v184
                %v186 = vld [vmem:[%s148 + $0x110] sm:$0xff]
                %187 = vst [vmem:[%s149 + $0x90] sm:$0xff] %v186
                %v188 = vld [vmem:[%s148 + $0x118] sm:$0xff]
                %189 = vst [vmem:[%s149 + $0x98] sm:$0xff] %v188
                %v190 = vld [vmem:[%s148 + $0x120] sm:$0xff]
                %191 = vst [vmem:[%s149 + $0xa0] sm:$0xff] %v190
                %v192 = vld [vmem:[%s148 + $0x128] sm:$0xff]
                %193 = vst [vmem:[%s149 + $0xa8] sm:$0xff] %v192
                %v194 = vld [vmem:[%s148 + $0x130] sm:$0xff]
                %195 = vst [vmem:[%s149 + $0xb0] sm:$0xff] %v194
                %v196 = vld [vmem:[%s148 + $0x138] sm:$0xff]
                %197 = vst [vmem:[%s149 + $0xb8] sm:$0xff] %v196
              $region41: #{fmdb_basic_fwd.35} parent=35 // loop_footer
                %s147 = sadd.s32 1, %s143
              $region42: #{fmdb_basic_fwd.35} parent=35 // loop_footer_branch
                %142 = sbr.rel target = $region38
              $region43: #{fmdb_basic_fwd.35} parent=35 // loop_exit
                _
            $region36: #{fmdb_basic_fwd.35} parent=31 // pred_fallthru
              _
            // Predicated region
            $region44: #{fmdb_basic_fwd.35} parent=31 // pred_check
              _
            $region45: #{fmdb_basic_fwd.35} parent=31 // pred_check_branch
              %199 = sbr.rel target = $region47
            $region46: #{fmdb_basic_fwd.35} parent=31 // pred_region
              _
            $region47: #{fmdb_basic_fwd.35} parent=31 // pred_fallthru
              _
          $region32: #{fmdb_basic_fwd.35} parent=27 // pred_fallthru
            _
          %200 = vnop
        $region28: #{fmdb_basic_fwd.35} parent=23 // pred_fallthru
          _
      $region24: #{fmdb_basic_fwd.35} parent=5 // pred_fallthru
        _
      %p201 = scmp.le.s32.totalorder 1, %s9
      %p202 = scmp.lt.s32.totalorder %s9, 3
      %p203 = pnand %p201, %p202
      %p204 = pneg %p203
      // Predicated region
      $region48: #{fmdb_basic_fwd.35} parent=5 // pred_check
        _
      $region49: #{fmdb_basic_fwd.35} parent=5 // pred_check_branch
        %206 = sbr.rel (%p203) target = $region51
      $region50: #{fmdb_basic_fwd.35} parent=5 // pred_region
        %s207 = ssub.s32 %s9, 1
        %s208 = sand.u32 %s22, 1
        %s209 = sand.u32 %s22, 1
        %s210 = smul.addr %s209, 192
        %s211 = scalar_lea.vmem [#allocation2], %s210
        // Predicated region
        $region52: #{fmdb_basic_fwd.35} parent=50 // pred_check
          %p212 = pneg %p35
        $region53: #{fmdb_basic_fwd.35} parent=50 // pred_check_branch
          %214 = sbr.rel (%p212) target = $region55
        $region54: #{fmdb_basic_fwd.35} parent=50 // pred_region
          _
        $region55: #{fmdb_basic_fwd.35} parent=50 // pred_fallthru
          _
        %s215 = sand.u32 %s22, 1
        %s216 = sand.u32 %s22, 1
        %s217 = smul.addr %s216, 192
        %s218 = scalar_lea.vmem [#allocation2], %s217
        %p219 = pneg %p35
        %p220 = pneg %p32
        %p221 = pneg %p56
        %p222 = pneg %p53
        %p223 = pneg %p77
        %p224 = pneg %p74
        %p225 = pneg %p103
        %p226 = pneg %p100
        %s227 = sand.u32 %s90, 1
        %s228 = sand.u32 %s90, 1
        %s229 = smul.addr %s228, 384
        %s230 = scalar_lea.vmem [#allocation3], %s229
        %s231 = smul.u32 8, %s14
        %s232 = smul.u32 8, %s14
        %v233 = vld [vmem:[%s211] sm:$0xff]
        %v234 = vld [vmem:[%s211 + $0x8] sm:$0xff]
        %v235 = vld [vmem:[%s211 + $0x10] sm:$0xff]
        %v236 = vld [vmem:[%s211 + $0x18] sm:$0xff]
        %v237 = vld [vmem:[%s211 + $0x20] sm:$0xff]
        %v238 = vld [vmem:[%s211 + $0x28] sm:$0xff]
        %v239 = vld [vmem:[%s211 + $0x30] sm:$0xff]
        %v240 = vld [vmem:[%s211 + $0x38] sm:$0xff]
        %v241 = vld [vmem:[%s211 + $0x40] sm:$0xff]
        %v242 = vld [vmem:[%s211 + $0x48] sm:$0xff]
        %v243 = vld [vmem:[%s211 + $0x50] sm:$0xff]
        %v244 = vld [vmem:[%s211 + $0x58] sm:$0xff]
        %v245 = vld [vmem:[%s211 + $0x60] sm:$0xff]
        %v246 = vld [vmem:[%s211 + $0x68] sm:$0xff]
        %v247 = vld [vmem:[%s211 + $0x70] sm:$0xff]
        %v248 = vld [vmem:[%s211 + $0x78] sm:$0xff]
        %v249 = vld [vmem:[%s211 + $0x80] sm:$0xff]
        %v250 = vld [vmem:[%s211 + $0x88] sm:$0xff]
        %v251 = vld [vmem:[%s211 + $0x90] sm:$0xff]
        %v252 = vld [vmem:[%s211 + $0x98] sm:$0xff]
        %v253 = vld [vmem:[%s211 + $0xa0] sm:$0xff]
        %v254 = vld [vmem:[%s211 + $0xa8] sm:$0xff]
        %v255 = vld [vmem:[%s211 + $0xb0] sm:$0xff]
        %v256 = vld [vmem:[%s211 + $0xb8] sm:$0xff]
        %v257 = vmul.f32 %v233, %v233
        %v258 = vmul.f32 %v234, %v234
        %v259 = vmul.f32 %v235, %v235
        %v260 = vmul.f32 %v236, %v236
        %v261 = vmul.f32 %v237, %v237
        %v262 = vmul.f32 %v238, %v238
        %v263 = vmul.f32 %v239, %v239
        %v264 = vmul.f32 %v240, %v240
        %v265 = vmul.f32 %v241, %v241
        %v266 = vmul.f32 %v242, %v242
        %v267 = vmul.f32 %v243, %v243
        %v268 = vmul.f32 %v244, %v244
        %v269 = vmul.f32 %v245, %v245
        %v270 = vmul.f32 %v246, %v246
        %v271 = vmul.f32 %v247, %v247
        %v272 = vmul.f32 %v248, %v248
        %v273 = vmul.f32 %v249, %v249
        %v274 = vmul.f32 %v250, %v250
        %v275 = vmul.f32 %v251, %v251
        %v276 = vmul.f32 %v252, %v252
        %v277 = vmul.f32 %v253, %v253
        %v278 = vmul.f32 %v254, %v254
        %v279 = vmul.f32 %v255, %v255
        %v280 = vmul.f32 %v256, %v256
        %v281 = vadd.f32 %v257, %v265
        %v282 = vadd.f32 %v281, %v273
        %v283 = vrot.slane %v282, 4
        %v284 = vadd.f32 %v282, %v283
        %v285 = vrot.slane %v284, 2
        %v286 = vadd.f32 %v284, %v285
        %v287 = vrot.slane %v286, 1
        %v288 = vadd.f32 %v286, %v287
        %v289 = vadd.f32 %v258, %v266
        %v290 = vadd.f32 %v289, %v274
        %v291 = vrot.slane %v290, 4
        %v292 = vadd.f32 %v290, %v291
        %v293 = vrot.slane %v292, 2
        %v294 = vadd.f32 %v292, %v293
        %v295 = vrot.slane %v294, 1
        %v296 = vadd.f32 %v294, %v295
        %v297 = vadd.f32 %v259, %v267
        %v298 = vadd.f32 %v297, %v275
        %v299 = vrot.slane %v298, 4
        %v300 = vadd.f32 %v298, %v299
        %v301 = vrot.slane %v300, 2
        %v302 = vadd.f32 %v300, %v301
        %v303 = vrot.slane %v302, 1
        %v304 = vadd.f32 %v302, %v303
        %v305 = vadd.f32 %v260, %v268
        %v306 = vadd.f32 %v305, %v276
        %v307 = vrot.slane %v306, 4
        %v308 = vadd.f32 %v306, %v307
        %v309 = vrot.slane %v308, 2
        %v310 = vadd.f32 %v308, %v309
        %v311 = vrot.slane %v310, 1
        %v312 = vadd.f32 %v310, %v311
        %v313 = vadd.f32 %v261, %v269
        %v314 = vadd.f32 %v313, %v277
        %v315 = vrot.slane %v314, 4
        %v316 = vadd.f32 %v314, %v315
        %v317 = vrot.slane %v316, 2
        %v318 = vadd.f32 %v316, %v317
        %v319 = vrot.slane %v318, 1
        %v320 = vadd.f32 %v318, %v319
        %v321 = vadd.f32 %v262, %v270
        %v322 = vadd.f32 %v321, %v278
        %v323 = vrot.slane %v322, 4
        %v324 = vadd.f32 %v322, %v323
        %v325 = vrot.slane %v324, 2
        %v326 = vadd.f32 %v324, %v325
        %v327 = vrot.slane %v326, 1
        %v328 = vadd.f32 %v326, %v327
        %v329 = vadd.f32 %v263, %v271
        %v330 = vadd.f32 %v329, %v279
        %v331 = vrot.slane %v330, 4
        %v332 = vadd.f32 %v330, %v331
        %v333 = vrot.slane %v332, 2
        %v334 = vadd.f32 %v332, %v333
        %v335 = vrot.slane %v334, 1
        %v336 = vadd.f32 %v334, %v335
        %v337 = vadd.f32 %v264, %v272
        %v338 = vadd.f32 %v337, %v280
        %v339 = vrot.slane %v338, 4
        %v340 = vadd.f32 %v338, %v339
        %v341 = vrot.slane %v340, 2
        %v342 = vadd.f32 %v340, %v341
        %v343 = vrot.slane %v342, 1
        %v344 = vadd.f32 %v342, %v343
        %v345 = vrsqrt.pop %v288
        %v346 = vmul.f32 %v288, %v345
        %vm347 = vcmp.eq.f32.partialorder %v288, inf
        %v348 = vsel %vm347, %v288, %v346
        %vm349 = vcmp.eq.f32.partialorder %v288, 0.0
        %v350 = vand.u32 %v288, 2147483648
        %v351 = vsel %vm349, %v350, %v348
        %v352 = vrsqrt.pop %v296
        %v353 = vmul.f32 %v296, %v352
        %vm354 = vcmp.eq.f32.partialorder %v296, inf
        %v355 = vsel %vm354, %v296, %v353
        %vm356 = vcmp.eq.f32.partialorder %v296, 0.0
        %v357 = vand.u32 %v296, 2147483648
        %v358 = vsel %vm356, %v357, %v355
        %v359 = vrsqrt.pop %v304
        %v360 = vmul.f32 %v304, %v359
        %vm361 = vcmp.eq.f32.partialorder %v304, inf
        %v362 = vsel %vm361, %v304, %v360
        %vm363 = vcmp.eq.f32.partialorder %v304, 0.0
        %v364 = vand.u32 %v304, 2147483648
        %v365 = vsel %vm363, %v364, %v362
        %v366 = vrsqrt.pop %v312
        %v367 = vmul.f32 %v312, %v366
        %vm368 = vcmp.eq.f32.partialorder %v312, inf
        %v369 = vsel %vm368, %v312, %v367
        %vm370 = vcmp.eq.f32.partialorder %v312, 0.0
        %v371 = vand.u32 %v312, 2147483648
        %v372 = vsel %vm370, %v371, %v369
        %v373 = vrsqrt.pop %v320
        %v374 = vmul.f32 %v320, %v373
        %vm375 = vcmp.eq.f32.partialorder %v320, inf
        %v376 = vsel %vm375, %v320, %v374
        %vm377 = vcmp.eq.f32.partialorder %v320, 0.0
        %v378 = vand.u32 %v320, 2147483648
        %v379 = vsel %vm377, %v378, %v376
        %v380 = vrsqrt.pop %v328
        %v381 = vmul.f32 %v328, %v380
        %vm382 = vcmp.eq.f32.partialorder %v328, inf
        %v383 = vsel %vm382, %v328, %v381
        %vm384 = vcmp.eq.f32.partialorder %v328, 0.0
        %v385 = vand.u32 %v328, 2147483648
        %v386 = vsel %vm384, %v385, %v383
        %v387 = vrsqrt.pop %v336
        %v388 = vmul.f32 %v336, %v387
        %vm389 = vcmp.eq.f32.partialorder %v336, inf
        %v390 = vsel %vm389, %v336, %v388
        %vm391 = vcmp.eq.f32.partialorder %v336, 0.0
        %v392 = vand.u32 %v336, 2147483648
        %v393 = vsel %vm391, %v392, %v390
        %v394 = vrsqrt.pop %v344
        %v395 = vmul.f32 %v344, %v394
        %vm396 = vcmp.eq.f32.partialorder %v344, inf
        %v397 = vsel %vm396, %v344, %v395
        %vm398 = vcmp.eq.f32.partialorder %v344, 0.0
        %v399 = vand.u32 %v344, 2147483648
        %v400 = vsel %vm398, %v399, %v397
        %v401 = vmax.f32 %v351, 1e-12
        %v402 = vmax.f32 %v358, 1e-12
        %v403 = vmax.f32 %v365, 1e-12
        %v404 = vmax.f32 %v372, 1e-12
        %v405 = vmax.f32 %v379, 1e-12
        %v406 = vmax.f32 %v386, 1e-12
        %v407 = vmax.f32 %v393, 1e-12
        %v408 = vmax.f32 %v400, 1e-12
        %v409 = vrcp.pop %v401
        %v410 = vmul.f32 1.0, %v409
        %v411 = vrcp.pop %v402
        %v412 = vmul.f32 1.0, %v411
        %v413 = vrcp.pop %v403
        %v414 = vmul.f32 1.0, %v413
        %v415 = vrcp.pop %v404
        %v416 = vmul.f32 1.0, %v415
        %v417 = vrcp.pop %v405
        %v418 = vmul.f32 1.0, %v417
        %v419 = vrcp.pop %v406
        %v420 = vmul.f32 1.0, %v419
        %v421 = vrcp.pop %v407
        %v422 = vmul.f32 1.0, %v421
        %v423 = vrcp.pop %v408
        %v424 = vmul.f32 1.0, %v423
        %v425 = vmul.f32 %v233, %v410
        %v426 = vmul.f32 %v234, %v412
        %v427 = vmul.f32 %v235, %v414
        %v428 = vmul.f32 %v236, %v416
        %v429 = vmul.f32 %v237, %v418
        %v430 = vmul.f32 %v238, %v420
        %v431 = vmul.f32 %v239, %v422
        %v432 = vmul.f32 %v240, %v424
        %v433 = vmul.f32 %v241, %v410
        %v434 = vmul.f32 %v242, %v412
        %v435 = vmul.f32 %v243, %v414
        %v436 = vmul.f32 %v244, %v416
        %v437 = vmul.f32 %v245, %v418
        %v438 = vmul.f32 %v246, %v420
        %v439 = vmul.f32 %v247, %v422
        %v440 = vmul.f32 %v248, %v424
        %v441 = vmul.f32 %v249, %v410
        %v442 = vmul.f32 %v250, %v412
        %v443 = vmul.f32 %v251, %v414
        %v444 = vmul.f32 %v252, %v416
        %v445 = vmul.f32 %v253, %v418
        %v446 = vmul.f32 %v254, %v420
        %v447 = vmul.f32 %v255, %v422
        %v448 = vmul.f32 %v256, %v424
        %v449 = vld [vmem:[%s1] sm:$0xff]
        %v450 = vld [vmem:[%s1 + $0x8] sm:$0xff]
        %v451 = vld [vmem:[%s1 + $0x10] sm:$0xff]
        %v452 = vld [vmem:[%s1 + $0x18] sm:$0xff]
        %v453 = vld [vmem:[%s1 + $0x20] sm:$0xff]
        %v454 = vld [vmem:[%s1 + $0x28] sm:$0xff]
        %v455 = vld [vmem:[%s2] sm:$0xff]
        %v456 = vld [vmem:[%s2 + $0x8] sm:$0xff]
        %v457 = vld [vmem:[%s2 + $0x10] sm:$0xff]
        %v458 = vld [vmem:[%s2 + $0x18] sm:$0xff]
        %v459 = vld [vmem:[%s2 + $0x20] sm:$0xff]
        %v460 = vld [vmem:[%s2 + $0x28] sm:$0xff]
        %462 = vset.pattern.permute.xlu0 0
        %463 = vperm.xlu0 %462, %v455
        %v464 = vpop.permute.xlu0 %463
        %467 = vset.pattern.permute.xlu0 0
        %468 = vperm.xlu0 %467, %v456
        %v469 = vpop.permute.xlu0 %468
        %472 = vset.pattern.permute.xlu0 0
        %473 = vperm.xlu0 %472, %v457
        %v474 = vpop.permute.xlu0 %473
        %477 = vset.pattern.permute.xlu0 0
        %478 = vperm.xlu0 %477, %v458
        %v479 = vpop.permute.xlu0 %478
        %482 = vset.pattern.permute.xlu0 0
        %483 = vperm.xlu0 %482, %v459
        %v484 = vpop.permute.xlu0 %483
        %487 = vset.pattern.permute.xlu0 0
        %488 = vperm.xlu0 %487, %v460
        %v489 = vpop.permute.xlu0 %488
        %vm491 = vcmask 195584
        %v493 = vsel %vm491, %v449, 0
        %v496 = vsel %vm491, %v450, 0
        %v499 = vsel %vm491, %v451, 0
        %v502 = vsel %vm491, %v452, 0
        %v505 = vsel %vm491, %v453, 0
        %v508 = vsel %vm491, %v454, 0
        %510 = vmatprep.subr.mxu0 %v426
        %511 = vmatpush1.msra.mxu0 %v425
        %512 = vmatprep.subr.mxu0 %v434
        %513 = vmatpush1.msra.mxu0 %v433
        %514 = vmatprep.subr.mxu0 %v442
        %515 = vmatpush1.msra.mxu0 %v441
        %516 = vmatprep.subr.mxu0 0.0
        %517 = vmatpush1.msra.mxu0 0.0
        %518 = vmatprep.subr.mxu0 0.0
        %519 = vmatpush1.msra.mxu0 0.0
        %520 = vmatprep.subr.mxu0 0.0
        %521 = vmatpush1.msra.mxu0 0.0
        %522 = vmatprep.subr.mxu0 0.0
        %523 = vmatpush1.msra.mxu0 0.0
        %524 = vmatprep.subr.mxu0 0.0
        %525 = vmatpush1.msra.mxu0 0.0
        %526 = vmatprep.subr.mxu0 0.0
        %527 = vmatpush1.msra.mxu0 0.0
        %528 = vmatprep.subr.mxu0 0.0
        %529 = vmatpush1.msra.mxu0 0.0
        %530 = vmatprep.subr.mxu0 0.0
        %531 = vmatpush1.msra.mxu0 0.0
        %532 = vmatprep.subr.mxu0 0.0
        %533 = vmatpush1.msra.mxu0 0.0
        %534 = vmatprep.subr.mxu0 0.0
        %535 = vmatpush1.msra.mxu0 0.0
        %536 = vmatprep.subr.mxu0 0.0
        %537 = vmatpush1.msra.mxu0 0.0
        %538 = vmatprep.subr.mxu0 0.0
        %539 = vmatpush1.msra.mxu0 0.0
        %540 = vmatprep.subr.mxu0 0.0
        %541 = vmatpush1.msra.mxu0 0.0
        %542 = vmatprep.subr.mxu0 0.0
        %543 = vmatpush1.msra.mxu0 0.0
        %544 = vmatprep.subr.mxu0 0.0
        %545 = vmatpush1.msra.mxu0 0.0
        %546 = vmatprep.subr.mxu0 0.0
        %547 = vmatpush1.msra.mxu0 0.0
        %548 = vmatprep.subr.mxu0 0.0
        %549 = vmatpush1.msra.mxu0 0.0
        %550 = vmatprep.subr.mxu0 0.0
        %551 = vmatpush1.msra.mxu0 0.0
        %552 = vmatprep.subr.mxu0 0.0
        %553 = vmatpush1.msra.mxu0 0.0
        %554 = vmatprep.subr.mxu0 0.0
        %555 = vmatpush1.msra.mxu0 0.0
        %556 = vmatprep.subr.mxu0 0.0
        %557 = vmatpush1.msra.mxu0 0.0
        %558 = vmatprep.subr.mxu0 0.0
        %559 = vmatpush1.msra.mxu0 0.0
        %560 = vmatprep.subr.mxu0 0.0
        %561 = vmatpush1.msra.mxu0 0.0
        %562 = vmatprep.subr.mxu0 0.0
        %563 = vmatpush1.msra.mxu0 0.0
        %564 = vmatprep.subr.mxu0 0.0
        %565 = vmatpush1.msra.mxu0 0.0
        %566 = vmatprep.subr.mxu0 0.0
        %567 = vmatpush1.msra.mxu0 0.0
        %568 = vmatprep.subr.mxu0 0.0
        %569 = vmatpush1.msra.mxu0 0.0
        %570 = vmatprep.subr.mxu0 0.0
        %571 = vmatpush1.msra.mxu0 0.0
        %572 = vmatprep.subr.mxu0 0.0
        %573 = vmatpush1.msra.mxu0 0.0
        %574 = vmatprep.mubr.f32.mxu0 0.0
        %575 = vmatmul.mubr.f32.gmra.mrb[0].mxu0 %v493
        %v576 = vpop.f32.mrb[0].mxu0
        %v577 = vadd.f32 %v464, %v576
        %v578 = vpop.f32.mrb[0].mxu0
        %v579 = vadd.f32 %v464, %v578
        %580 = vmatprep.mubr.f32.mxu0 0.0
        %581 = vmatmul.mubr.f32.gmra.mrb[0].mxu0 %v496
        %v582 = vpop.f32.mrb[0].mxu0
        %v583 = vadd.f32 %v469, %v582
        %v584 = vpop.f32.mrb[0].mxu0
        %v585 = vadd.f32 %v469, %v584
        %586 = vmatprep.mubr.f32.mxu0 0.0
        %587 = vmatmul.mubr.f32.gmra.mrb[0].mxu0 %v499
        %v588 = vpop.f32.mrb[0].mxu0
        %v589 = vadd.f32 %v474, %v588
        %v590 = vpop.f32.mrb[0].mxu0
        %v591 = vadd.f32 %v474, %v590
        %592 = vmatprep.mubr.f32.mxu0 0.0
        %593 = vmatmul.mubr.f32.gmra.mrb[0].mxu0 %v502
        %v594 = vpop.f32.mrb[0].mxu0
        %v595 = vadd.f32 %v479, %v594
        %v596 = vpop.f32.mrb[0].mxu0
        %v597 = vadd.f32 %v479, %v596
        %598 = vmatprep.mubr.f32.mxu0 0.0
        %599 = vmatmul.mubr.f32.gmra.mrb[0].mxu0 %v505
        %v600 = vpop.f32.mrb[0].mxu0
        %v601 = vadd.f32 %v484, %v600
        %v602 = vpop.f32.mrb[0].mxu0
        %v603 = vadd.f32 %v484, %v602
        %604 = vmatprep.mubr.f32.mxu0 0.0
        %605 = vmatmul.mubr.f32.gmra.mrb[0].mxu0 %v508
        %v606 = vpop.f32.mrb[0].mxu0
        %v607 = vadd.f32 %v489, %v606
        %v608 = vpop.f32.mrb[0].mxu0
        %v609 = vadd.f32 %v489, %v608
        %610 = vdwg.mxu0
        %611 = vmatprep.subr.mxu0 %v428
        %612 = vmatpush1.msra.mxu0 %v427
        %613 = vmatprep.subr.mxu0 %v436
        %614 = vmatpush1.msra.mxu0 %v435
        %615 = vmatprep.subr.mxu0 %v444
        %616 = vmatpush1.msra.mxu0 %v443
        %617 = vmatprep.subr.mxu0 0.0
        %618 = vmatpush1.msra.mxu0 0.0
        %619 = vmatprep.subr.mxu0 0.0
        %620 = vmatpush1.msra.mxu0 0.0
        %621 = vmatprep.subr.mxu0 0.0
        %622 = vmatpush1.msra.mxu0 0.0
        %623 = vmatprep.subr.mxu0 0.0
        %624 = vmatpush1.msra.mxu0 0.0
        %625 = vmatprep.subr.mxu0 0.0
        %626 = vmatpush1.msra.mxu0 0.0
        %627 = vmatprep.subr.mxu0 0.0
        %628 = vmatpush1.msra.mxu0 0.0
        %629 = vmatprep.subr.mxu0 0.0
        %630 = vmatpush1.msra.mxu0 0.0
        %631 = vmatprep.subr.mxu0 0.0
        %632 = vmatpush1.msra.mxu0 0.0
        %633 = vmatprep.subr.mxu0 0.0
        %634 = vmatpush1.msra.mxu0 0.0
        %635 = vmatprep.subr.mxu0 0.0
        %636 = vmatpush1.msra.mxu0 0.0
        %637 = vmatprep.subr.mxu0 0.0
        %638 = vmatpush1.msra.mxu0 0.0
        %639 = vmatprep.subr.mxu0 0.0
        %640 = vmatpush1.msra.mxu0 0.0
        %641 = vmatprep.subr.mxu0 0.0
        %642 = vmatpush1.msra.mxu0 0.0
        %643 = vmatprep.subr.mxu0 0.0
        %644 = vmatpush1.msra.mxu0 0.0
        %645 = vmatprep.subr.mxu0 0.0
        %646 = vmatpush1.msra.mxu0 0.0
        %647 = vmatprep.subr.mxu0 0.0
        %648 = vmatpush1.msra.mxu0 0.0
        %649 = vmatprep.subr.mxu0 0.0
        %650 = vmatpush1.msra.mxu0 0.0
        %651 = vmatprep.subr.mxu0 0.0
        %652 = vmatpush1.msra.mxu0 0.0
        %653 = vmatprep.subr.mxu0 0.0
        %654 = vmatpush1.msra.mxu0 0.0
        %655 = vmatprep.subr.mxu0 0.0
        %656 = vmatpush1.msra.mxu0 0.0
        %657 = vmatprep.subr.mxu0 0.0
        %658 = vmatpush1.msra.mxu0 0.0
        %659 = vmatprep.subr.mxu0 0.0
        %660 = vmatpush1.msra.mxu0 0.0
        %661 = vmatprep.subr.mxu0 0.0
        %662 = vmatpush1.msra.mxu0 0.0
        %663 = vmatprep.subr.mxu0 0.0
        %664 = vmatpush1.msra.mxu0 0.0
        %665 = vmatprep.subr.mxu0 0.0
        %666 = vmatpush1.msra.mxu0 0.0
        %667 = vmatprep.subr.mxu0 0.0
        %668 = vmatpush1.msra.mxu0 0.0
        %669 = vmatprep.subr.mxu0 0.0
        %670 = vmatpush1.msra.mxu0 0.0
        %671 = vmatprep.subr.mxu0 0.0
        %672 = vmatpush1.msra.mxu0 0.0
        %673 = vmatprep.subr.mxu0 0.0
        %674 = vmatpush1.msra.mxu0 0.0
        %675 = vmatprep.mubr.f32.mxu0 0.0
        %676 = vmatmul.mubr.f32.gmra.mrb[0].mxu0 %v493
        %v677 = vpop.f32.mrb[0].mxu0
        %v678 = vadd.f32 %v464, %v677
        %v679 = vpop.f32.mrb[0].mxu0
        %v680 = vadd.f32 %v464, %v679
        %681 = vmatprep.mubr.f32.mxu0 0.0
        %682 = vmatmul.mubr.f32.gmra.mrb[0].mxu0 %v496
        %v683 = vpop.f32.mrb[0].mxu0
        %v684 = vadd.f32 %v469, %v683
        %v685 = vpop.f32.mrb[0].mxu0
        %v686 = vadd.f32 %v469, %v685
        %687 = vmatprep.mubr.f32.mxu0 0.0
        %688 = vmatmul.mubr.f32.gmra.mrb[0].mxu0 %v499
        %v689 = vpop.f32.mrb[0].mxu0
        %v690 = vadd.f32 %v474, %v689
        %v691 = vpop.f32.mrb[0].mxu0
        %v692 = vadd.f32 %v474, %v691
        %693 = vmatprep.mubr.f32.mxu0 0.0
        %694 = vmatmul.mubr.f32.gmra.mrb[0].mxu0 %v502
        %v695 = vpop.f32.mrb[0].mxu0
        %v696 = vadd.f32 %v479, %v695
        %v697 = vpop.f32.mrb[0].mxu0
        %v698 = vadd.f32 %v479, %v697
        %699 = vmatprep.mubr.f32.mxu0 0.0
        %700 = vmatmul.mubr.f32.gmra.mrb[0].mxu0 %v505
        %v701 = vpop.f32.mrb[0].mxu0
        %v702 = vadd.f32 %v484, %v701
        %v703 = vpop.f32.mrb[0].mxu0
        %v704 = vadd.f32 %v484, %v703
        %705 = vmatprep.mubr.f32.mxu0 0.0
        %706 = vmatmul.mubr.f32.gmra.mrb[0].mxu0 %v508
        %v707 = vpop.f32.mrb[0].mxu0
        %v708 = vadd.f32 %v489, %v707
        %v709 = vpop.f32.mrb[0].mxu0
        %v710 = vadd.f32 %v489, %v709
        %711 = vdwg.mxu0
        %712 = vmatprep.subr.mxu0 %v430
        %713 = vmatpush1.msra.mxu0 %v429
        %714 = vmatprep.subr.mxu0 %v438
        %715 = vmatpush1.msra.mxu0 %v437
        %716 = vmatprep.subr.mxu0 %v446
        %717 = vmatpush1.msra.mxu0 %v445
        %718 = vmatprep.subr.mxu0 0.0
        %719 = vmatpush1.msra.mxu0 0.0
        %720 = vmatprep.subr.mxu0 0.0
        %721 = vmatpush1.msra.mxu0 0.0
        %722 = vmatprep.subr.mxu0 0.0
        %723 = vmatpush1.msra.mxu0 0.0
        %724 = vmatprep.subr.mxu0 0.0
        %725 = vmatpush1.msra.mxu0 0.0
        %726 = vmatprep.subr.mxu0 0.0
        %727 = vmatpush1.msra.mxu0 0.0
        %728 = vmatprep.subr.mxu0 0.0
        %729 = vmatpush1.msra.mxu0 0.0
        %730 = vmatprep.subr.mxu0 0.0
        %731 = vmatpush1.msra.mxu0 0.0
        %732 = vmatprep.subr.mxu0 0.0
        %733 = vmatpush1.msra.mxu0 0.0
        %734 = vmatprep.subr.mxu0 0.0
        %735 = vmatpush1.msra.mxu0 0.0
        %736 = vmatprep.subr.mxu0 0.0
        %737 = vmatpush1.msra.mxu0 0.0
        %738 = vmatprep.subr.mxu0 0.0
        %739 = vmatpush1.msra.mxu0 0.0
        %740 = vmatprep.subr.mxu0 0.0
        %741 = vmatpush1.msra.mxu0 0.0
        %742 = vmatprep.subr.mxu0 0.0
        %743 = vmatpush1.msra.mxu0 0.0
        %744 = vmatprep.subr.mxu0 0.0
        %745 = vmatpush1.msra.mxu0 0.0
        %746 = vmatprep.subr.mxu0 0.0
        %747 = vmatpush1.msra.mxu0 0.0
        %748 = vmatprep.subr.mxu0 0.0
        %749 = vmatpush1.msra.mxu0 0.0
        %750 = vmatprep.subr.mxu0 0.0
        %751 = vmatpush1.msra.mxu0 0.0
        %752 = vmatprep.subr.mxu0 0.0
        %753 = vmatpush1.msra.mxu0 0.0
        %754 = vmatprep.subr.mxu0 0.0
        %755 = vmatpush1.msra.mxu0 0.0
        %756 = vmatprep.subr.mxu0 0.0
        %757 = vmatpush1.msra.mxu0 0.0
        %758 = vmatprep.subr.mxu0 0.0
        %759 = vmatpush1.msra.mxu0 0.0
        %760 = vmatprep.subr.mxu0 0.0
        %761 = vmatpush1.msra.mxu0 0.0
        %762 = vmatprep.subr.mxu0 0.0
        %763 = vmatpush1.msra.mxu0 0.0
        %764 = vmatprep.subr.mxu0 0.0
        %765 = vmatpush1.msra.mxu0 0.0
        %766 = vmatprep.subr.mxu0 0.0
        %767 = vmatpush1.msra.mxu0 0.0
        %768 = vmatprep.subr.mxu0 0.0
        %769 = vmatpush1.msra.mxu0 0.0
        %770 = vmatprep.subr.mxu0 0.0
        %771 = vmatpush1.msra.mxu0 0.0
        %772 = vmatprep.subr.mxu0 0.0
        %773 = vmatpush1.msra.mxu0 0.0
        %774 = vmatprep.subr.mxu0 0.0
        %775 = vmatpush1.msra.mxu0 0.0
        %776 = vmatprep.mubr.f32.mxu0 0.0
        %777 = vmatmul.mubr.f32.gmra.mrb[0].mxu0 %v493
        %v778 = vpop.f32.mrb[0].mxu0
        %v779 = vadd.f32 %v464, %v778
        %v780 = vpop.f32.mrb[0].mxu0
        %v781 = vadd.f32 %v464, %v780
        %782 = vmatprep.mubr.f32.mxu0 0.0
        %783 = vmatmul.mubr.f32.gmra.mrb[0].mxu0 %v496
        %v784 = vpop.f32.mrb[0].mxu0
        %v785 = vadd.f32 %v469, %v784
        %v786 = vpop.f32.mrb[0].mxu0
        %v787 = vadd.f32 %v469, %v786
        %788 = vmatprep.mubr.f32.mxu0 0.0
        %789 = vmatmul.mubr.f32.gmra.mrb[0].mxu0 %v499
        %v790 = vpop.f32.mrb[0].mxu0
        %v791 = vadd.f32 %v474, %v790
        %v792 = vpop.f32.mrb[0].mxu0
        %v793 = vadd.f32 %v474, %v792
        %794 = vmatprep.mubr.f32.mxu0 0.0
        %795 = vmatmul.mubr.f32.gmra.mrb[0].mxu0 %v502
        %v796 = vpop.f32.mrb[0].mxu0
        %v797 = vadd.f32 %v479, %v796
        %v798 = vpop.f32.mrb[0].mxu0
        %v799 = vadd.f32 %v479, %v798
        %800 = vmatprep.mubr.f32.mxu0 0.0
        %801 = vmatmul.mubr.f32.gmra.mrb[0].mxu0 %v505
        %v802 = vpop.f32.mrb[0].mxu0
        %v803 = vadd.f32 %v484, %v802
        %v804 = vpop.f32.mrb[0].mxu0
        %v805 = vadd.f32 %v484, %v804
        %806 = vmatprep.mubr.f32.mxu0 0.0
        %807 = vmatmul.mubr.f32.gmra.mrb[0].mxu0 %v508
        %v808 = vpop.f32.mrb[0].mxu0
        %v809 = vadd.f32 %v489, %v808
        %v810 = vpop.f32.mrb[0].mxu0
        %v811 = vadd.f32 %v489, %v810
        %812 = vdwg.mxu0
        %813 = vmatprep.subr.mxu0 %v432
        %814 = vmatpush1.msra.mxu0 %v431
        %815 = vmatprep.subr.mxu0 %v440
        %816 = vmatpush1.msra.mxu0 %v439
        %817 = vmatprep.subr.mxu0 %v448
        %818 = vmatpush1.msra.mxu0 %v447
        %819 = vmatprep.subr.mxu0 0.0
        %820 = vmatpush1.msra.mxu0 0.0
        %821 = vmatprep.subr.mxu0 0.0
        %822 = vmatpush1.msra.mxu0 0.0
        %823 = vmatprep.subr.mxu0 0.0
        %824 = vmatpush1.msra.mxu0 0.0
        %825 = vmatprep.subr.mxu0 0.0
        %826 = vmatpush1.msra.mxu0 0.0
        %827 = vmatprep.subr.mxu0 0.0
        %828 = vmatpush1.msra.mxu0 0.0
        %829 = vmatprep.subr.mxu0 0.0
        %830 = vmatpush1.msra.mxu0 0.0
        %831 = vmatprep.subr.mxu0 0.0
        %832 = vmatpush1.msra.mxu0 0.0
        %833 = vmatprep.subr.mxu0 0.0
        %834 = vmatpush1.msra.mxu0 0.0
        %835 = vmatprep.subr.mxu0 0.0
        %836 = vmatpush1.msra.mxu0 0.0
        %837 = vmatprep.subr.mxu0 0.0
        %838 = vmatpush1.msra.mxu0 0.0
        %839 = vmatprep.subr.mxu0 0.0
        %840 = vmatpush1.msra.mxu0 0.0
        %841 = vmatprep.subr.mxu0 0.0
        %842 = vmatpush1.msra.mxu0 0.0
        %843 = vmatprep.subr.mxu0 0.0
        %844 = vmatpush1.msra.mxu0 0.0
        %845 = vmatprep.subr.mxu0 0.0
        %846 = vmatpush1.msra.mxu0 0.0
        %847 = vmatprep.subr.mxu0 0.0
        %848 = vmatpush1.msra.mxu0 0.0
        %849 = vmatprep.subr.mxu0 0.0
        %850 = vmatpush1.msra.mxu0 0.0
        %851 = vmatprep.subr.mxu0 0.0
        %852 = vmatpush1.msra.mxu0 0.0
        %853 = vmatprep.subr.mxu0 0.0
        %854 = vmatpush1.msra.mxu0 0.0
        %855 = vmatprep.subr.mxu0 0.0
        %856 = vmatpush1.msra.mxu0 0.0
        %857 = vmatprep.subr.mxu0 0.0
        %858 = vmatpush1.msra.mxu0 0.0
        %859 = vmatprep.subr.mxu0 0.0
        %860 = vmatpush1.msra.mxu0 0.0
        %861 = vmatprep.subr.mxu0 0.0
        %862 = vmatpush1.msra.mxu0 0.0
        %863 = vmatprep.subr.mxu0 0.0
        %864 = vmatpush1.msra.mxu0 0.0
        %865 = vmatprep.subr.mxu0 0.0
        %866 = vmatpush1.msra.mxu0 0.0
        %867 = vmatprep.subr.mxu0 0.0
        %868 = vmatpush1.msra.mxu0 0.0
        %869 = vmatprep.subr.mxu0 0.0
        %870 = vmatpush1.msra.mxu0 0.0
        %871 = vmatprep.subr.mxu0 0.0
        %872 = vmatpush1.msra.mxu0 0.0
        %873 = vmatprep.subr.mxu0 0.0
        %874 = vmatpush1.msra.mxu0 0.0
        %875 = vmatprep.subr.mxu0 0.0
        %876 = vmatpush1.msra.mxu0 0.0
        %877 = vmatprep.mubr.f32.mxu0 0.0
        %878 = vmatmul.mubr.f32.gmra.mrb[0].mxu0 %v493
        %v879 = vpop.f32.mrb[0].mxu0
        %v880 = vadd.f32 %v464, %v879
        %v881 = vpop.f32.mrb[0].mxu0
        %v882 = vadd.f32 %v464, %v881
        %883 = vmatprep.mubr.f32.mxu0 0.0
        %884 = vmatmul.mubr.f32.gmra.mrb[0].mxu0 %v496
        %v885 = vpop.f32.mrb[0].mxu0
        %v886 = vadd.f32 %v469, %v885
        %v887 = vpop.f32.mrb[0].mxu0
        %v888 = vadd.f32 %v469, %v887
        %889 = vmatprep.mubr.f32.mxu0 0.0
        %890 = vmatmul.mubr.f32.gmra.mrb[0].mxu0 %v499
        %v891 = vpop.f32.mrb[0].mxu0
        %v892 = vadd.f32 %v474, %v891
        %v893 = vpop.f32.mrb[0].mxu0
        %v894 = vadd.f32 %v474, %v893
        %895 = vmatprep.mubr.f32.mxu0 0.0
        %896 = vmatmul.mubr.f32.gmra.mrb[0].mxu0 %v502
        %v897 = vpop.f32.mrb[0].mxu0
        %v898 = vadd.f32 %v479, %v897
        %v899 = vpop.f32.mrb[0].mxu0
        %v900 = vadd.f32 %v479, %v899
        %901 = vmatprep.mubr.f32.mxu0 0.0
        %902 = vmatmul.mubr.f32.gmra.mrb[0].mxu0 %v505
        %v903 = vpop.f32.mrb[0].mxu0
        %v904 = vadd.f32 %v484, %v903
        %v905 = vpop.f32.mrb[0].mxu0
        %v906 = vadd.f32 %v484, %v905
        %907 = vmatprep.mubr.f32.mxu0 0.0
        %908 = vmatmul.mubr.f32.gmra.mrb[0].mxu0 %v508
        %v909 = vpop.f32.mrb[0].mxu0
        %v910 = vadd.f32 %v489, %v909
        %v911 = vpop.f32.mrb[0].mxu0
        %v912 = vadd.f32 %v489, %v911
        %913 = vdwg.mxu0
        %914 = vst [vmem:[%s230] sm:$0xff] %v577
        %915 = vst [vmem:[%s230 + $0x8] sm:$0xff] %v579
        %916 = vst [vmem:[%s230 + $0x10] sm:$0xff] %v678
        %917 = vst [vmem:[%s230 + $0x18] sm:$0xff] %v680
        %918 = vst [vmem:[%s230 + $0x20] sm:$0xff] %v779
        %919 = vst [vmem:[%s230 + $0x28] sm:$0xff] %v781
        %920 = vst [vmem:[%s230 + $0x30] sm:$0xff] %v880
        %921 = vst [vmem:[%s230 + $0x38] sm:$0xff] %v882
        %922 = vst [vmem:[%s230 + $0x40] sm:$0xff] %v583
        %923 = vst [vmem:[%s230 + $0x48] sm:$0xff] %v585
        %924 = vst [vmem:[%s230 + $0x50] sm:$0xff] %v684
        %925 = vst [vmem:[%s230 + $0x58] sm:$0xff] %v686
        %926 = vst [vmem:[%s230 + $0x60] sm:$0xff] %v785
        %927 = vst [vmem:[%s230 + $0x68] sm:$0xff] %v787
        %928 = vst [vmem:[%s230 + $0x70] sm:$0xff] %v886
        %929 = vst [vmem:[%s230 + $0x78] sm:$0xff] %v888
        %930 = vst [vmem:[%s230 + $0x80] sm:$0xff] %v589
        %931 = vst [vmem:[%s230 + $0x88] sm:$0xff] %v591
        %932 = vst [vmem:[%s230 + $0x90] sm:$0xff] %v690
        %933 = vst [vmem:[%s230 + $0x98] sm:$0xff] %v692
        %934 = vst [vmem:[%s230 + $0xa0] sm:$0xff] %v791
        %935 = vst [vmem:[%s230 + $0xa8] sm:$0xff] %v793
        %936 = vst [vmem:[%s230 + $0xb0] sm:$0xff] %v892
        %937 = vst [vmem:[%s230 + $0xb8] sm:$0xff] %v894
        %938 = vst [vmem:[%s230 + $0xc0] sm:$0xff] %v595
        %939 = vst [vmem:[%s230 + $0xc8] sm:$0xff] %v597
        %940 = vst [vmem:[%s230 + $0xd0] sm:$0xff] %v696
        %941 = vst [vmem:[%s230 + $0xd8] sm:$0xff] %v698
        %942 = vst [vmem:[%s230 + $0xe0] sm:$0xff] %v797
        %943 = vst [vmem:[%s230 + $0xe8] sm:$0xff] %v799
        %944 = vst [vmem:[%s230 + $0xf0] sm:$0xff] %v898
        %945 = vst [vmem:[%s230 + $0xf8] sm:$0xff] %v900
        %946 = vst [vmem:[%s230 + $0x100] sm:$0xff] %v601
        %947 = vst [vmem:[%s230 + $0x108] sm:$0xff] %v603
        %948 = vst [vmem:[%s230 + $0x110] sm:$0xff] %v702
        %949 = vst [vmem:[%s230 + $0x118] sm:$0xff] %v704
        %950 = vst [vmem:[%s230 + $0x120] sm:$0xff] %v803
        %951 = vst [vmem:[%s230 + $0x128] sm:$0xff] %v805
        %952 = vst [vmem:[%s230 + $0x130] sm:$0xff] %v904
        %953 = vst [vmem:[%s230 + $0x138] sm:$0xff] %v906
        %954 = vst [vmem:[%s230 + $0x140] sm:$0xff] %v607
        %955 = vst [vmem:[%s230 + $0x148] sm:$0xff] %v609
        %956 = vst [vmem:[%s230 + $0x150] sm:$0xff] %v708
        %957 = vst [vmem:[%s230 + $0x158] sm:$0xff] %v710
        %958 = vst [vmem:[%s230 + $0x160] sm:$0xff] %v809
        %959 = vst [vmem:[%s230 + $0x168] sm:$0xff] %v811
        %960 = vst [vmem:[%s230 + $0x170] sm:$0xff] %v910
        %961 = vst [vmem:[%s230 + $0x178] sm:$0xff] %v912
        %s962 = sand.u32 %s90, 1
        %s963 = sand.u32 %s90, 1
        %s964 = smul.addr %s963, 384
        %s965 = scalar_lea.vmem [#allocation3], %s964
        // Predicated region
        $region56: #{fmdb_basic_fwd.35} parent=50 // pred_check
          %p966 = pneg %p100
        $region57: #{fmdb_basic_fwd.35} parent=50 // pred_check_branch
          %968 = sbr.rel (%p966) target = $region59
        $region58: #{fmdb_basic_fwd.35} parent=50 // pred_region
          %s969 = smul.u32 8, %s14
          %s970 = smul.addr %s969, 8
          %s971 = scalar_lea.vmem %s3, %s970
          // Predicated region
          $region60: #{fmdb_basic_fwd.35} parent=58 // pred_check
            _
          $region61: #{fmdb_basic_fwd.35} parent=58 // pred_check_branch
            %973 = sbr.rel (0) target = $region63
          $region62: #{fmdb_basic_fwd.35} parent=58 // pred_region
            // Predicated region
            $region64: #{fmdb_basic_fwd.35} parent=62 // pred_check
              _
            $region65: #{fmdb_basic_fwd.35} parent=62 // pred_check_branch
              %975 = sbr.rel (0) target = $region67
            $region66: #{fmdb_basic_fwd.35} parent=62 // pred_region
              loop: start=0, step=1, limit=1
              $region68: #{fmdb_basic_fwd.35} parent=66 // loop_pre_header
                _
              $region69: #{fmdb_basic_fwd.35} parent=66 // loop_header
                %s977 = sphi 0, %s981
                %p978 = scmp.ge.s32.totalorder %s977, 1
                %s982 = sphi %s965, %s965
                %s983 = sphi %s971, %s971
              $region70: #{fmdb_basic_fwd.35} parent=66 // loop_header_branch
                %980 = sbr.rel (%p978) target = $region74
              $region71: #{fmdb_basic_fwd.35} parent=66 // loop_body
                %v984 = vld [vmem:[%s982] sm:$0xff]
                %985 = vst [vmem:[%s983] sm:$0xff] %v984
                %v986 = vld [vmem:[%s982 + $0x8] sm:$0xff]
                %987 = vst [vmem:[%s983 + $0x8] sm:$0xff] %v986
                %v988 = vld [vmem:[%s982 + $0x10] sm:$0xff]
                %989 = vst [vmem:[%s983 + $0x10] sm:$0xff] %v988
                %v990 = vld [vmem:[%s982 + $0x18] sm:$0xff]
                %991 = vst [vmem:[%s983 + $0x18] sm:$0xff] %v990
                %v992 = vld [vmem:[%s982 + $0x20] sm:$0xff]
                %993 = vst [vmem:[%s983 + $0x20] sm:$0xff] %v992
                %v994 = vld [vmem:[%s982 + $0x28] sm:$0xff]
                %995 = vst [vmem:[%s983 + $0x28] sm:$0xff] %v994
                %v996 = vld [vmem:[%s982 + $0x30] sm:$0xff]
                %997 = vst [vmem:[%s983 + $0x30] sm:$0xff] %v996
                %v998 = vld [vmem:[%s982 + $0x38] sm:$0xff]
                %999 = vst [vmem:[%s983 + $0x38] sm:$0xff] %v998
                %v1000 = vld [vmem:[%s982 + $0x40] sm:$0xff]
                %1001 = vst [vmem:[%s983 + $0x80] sm:$0xff] %v1000
                %v1002 = vld [vmem:[%s982 + $0x48] sm:$0xff]
                %1003 = vst [vmem:[%s983 + $0x88] sm:$0xff] %v1002
                %v1004 = vld [vmem:[%s982 + $0x50] sm:$0xff]
                %1005 = vst [vmem:[%s983 + $0x90] sm:$0xff] %v1004
                %v1006 = vld [vmem:[%s982 + $0x58] sm:$0xff]
                %1007 = vst [vmem:[%s983 + $0x98] sm:$0xff] %v1006
                %v1008 = vld [vmem:[%s982 + $0x60] sm:$0xff]
                %1009 = vst [vmem:[%s983 + $0xa0] sm:$0xff] %v1008
                %v1010 = vld [vmem:[%s982 + $0x68] sm:$0xff]
                %1011 = vst [vmem:[%s983 + $0xa8] sm:$0xff] %v1010
                %v1012 = vld [vmem:[%s982 + $0x70] sm:$0xff]
                %1013 = vst [vmem:[%s983 + $0xb0] sm:$0xff] %v1012
                %v1014 = vld [vmem:[%s982 + $0x78] sm:$0xff]
                %1015 = vst [vmem:[%s983 + $0xb8] sm:$0xff] %v1014
                %v1016 = vld [vmem:[%s982 + $0x80] sm:$0xff]
                %1017 = vst [vmem:[%s983 + $0x100] sm:$0xff] %v1016
                %v1018 = vld [vmem:[%s982 + $0x88] sm:$0xff]
                %1019 = vst [vmem:[%s983 + $0x108] sm:$0xff] %v1018
                %v1020 = vld [vmem:[%s982 + $0x90] sm:$0xff]
                %1021 = vst [vmem:[%s983 + $0x110] sm:$0xff] %v1020
                %v1022 = vld [vmem:[%s982 + $0x98] sm:$0xff]
                %1023 = vst [vmem:[%s983 + $0x118] sm:$0xff] %v1022
                %v1024 = vld [vmem:[%s982 + $0xa0] sm:$0xff]
                %1025 = vst [vmem:[%s983 + $0x120] sm:$0xff] %v1024
                %v1026 = vld [vmem:[%s982 + $0xa8] sm:$0xff]
                %1027 = vst [vmem:[%s983 + $0x128] sm:$0xff] %v1026
                %v1028 = vld [vmem:[%s982 + $0xb0] sm:$0xff]
                %1029 = vst [vmem:[%s983 + $0x130] sm:$0xff] %v1028
                %v1030 = vld [vmem:[%s982 + $0xb8] sm:$0xff]
                %1031 = vst [vmem:[%s983 + $0x138] sm:$0xff] %v1030
                %v1032 = vld [vmem:[%s982 + $0xc0] sm:$0xff]
                %1033 = vst [vmem:[%s983 + $0x180] sm:$0xff] %v1032
                %v1034 = vld [vmem:[%s982 + $0xc8] sm:$0xff]
                %1035 = vst [vmem:[%s983 + $0x188] sm:$0xff] %v1034
                %v1036 = vld [vmem:[%s982 + $0xd0] sm:$0xff]
                %1037 = vst [vmem:[%s983 + $0x190] sm:$0xff] %v1036
                %v1038 = vld [vmem:[%s982 + $0xd8] sm:$0xff]
                %1039 = vst [vmem:[%s983 + $0x198] sm:$0xff] %v1038
                %v1040 = vld [vmem:[%s982 + $0xe0] sm:$0xff]
                %1041 = vst [vmem:[%s983 + $0x1a0] sm:$0xff] %v1040
                %v1042 = vld [vmem:[%s982 + $0xe8] sm:$0xff]
                %1043 = vst [vmem:[%s983 + $0x1a8] sm:$0xff] %v1042
                %v1044 = vld [vmem:[%s982 + $0xf0] sm:$0xff]
                %1045 = vst [vmem:[%s983 + $0x1b0] sm:$0xff] %v1044
                %v1046 = vld [vmem:[%s982 + $0xf8] sm:$0xff]
                %1047 = vst [vmem:[%s983 + $0x1b8] sm:$0xff] %v1046
                %v1048 = vld [vmem:[%s982 + $0x100] sm:$0xff]
                %1049 = vst [vmem:[%s983 + $0x200] sm:$0xff] %v1048
                %v1050 = vld [vmem:[%s982 + $0x108] sm:$0xff]
                %1051 = vst [vmem:[%s983 + $0x208] sm:$0xff] %v1050
                %v1052 = vld [vmem:[%s982 + $0x110] sm:$0xff]
                %1053 = vst [vmem:[%s983 + $0x210] sm:$0xff] %v1052
                %v1054 = vld [vmem:[%s982 + $0x118] sm:$0xff]
                %1055 = vst [vmem:[%s983 + $0x218] sm:$0xff] %v1054
                %v1056 = vld [vmem:[%s982 + $0x120] sm:$0xff]
                %1057 = vst [vmem:[%s983 + $0x220] sm:$0xff] %v1056
                %v1058 = vld [vmem:[%s982 + $0x128] sm:$0xff]
                %1059 = vst [vmem:[%s983 + $0x228] sm:$0xff] %v1058
                %v1060 = vld [vmem:[%s982 + $0x130] sm:$0xff]
                %1061 = vst [vmem:[%s983 + $0x230] sm:$0xff] %v1060
                %v1062 = vld [vmem:[%s982 + $0x138] sm:$0xff]
                %1063 = vst [vmem:[%s983 + $0x238] sm:$0xff] %v1062
                %v1064 = vld [vmem:[%s982 + $0x140] sm:$0xff]
                %1065 = vst [vmem:[%s983 + $0x280] sm:$0xff] %v1064
                %v1066 = vld [vmem:[%s982 + $0x148] sm:$0xff]
                %1067 = vst [vmem:[%s983 + $0x288] sm:$0xff] %v1066
                %v1068 = vld [vmem:[%s982 + $0x150] sm:$0xff]
                %1069 = vst [vmem:[%s983 + $0x290] sm:$0xff] %v1068
                %v1070 = vld [vmem:[%s982 + $0x158] sm:$0xff]
                %1071 = vst [vmem:[%s983 + $0x298] sm:$0xff] %v1070
                %v1072 = vld [vmem:[%s982 + $0x160] sm:$0xff]
                %1073 = vst [vmem:[%s983 + $0x2a0] sm:$0xff] %v1072
                %v1074 = vld [vmem:[%s982 + $0x168] sm:$0xff]
                %1075 = vst [vmem:[%s983 + $0x2a8] sm:$0xff] %v1074
                %v1076 = vld [vmem:[%s982 + $0x170] sm:$0xff]
                %1077 = vst [vmem:[%s983 + $0x2b0] sm:$0xff] %v1076
                %v1078 = vld [vmem:[%s982 + $0x178] sm:$0xff]
                %1079 = vst [vmem:[%s983 + $0x2b8] sm:$0xff] %v1078
              $region72: #{fmdb_basic_fwd.35} parent=66 // loop_footer
                %s981 = sadd.s32 1, %s977
              $region73: #{fmdb_basic_fwd.35} parent=66 // loop_footer_branch
                %976 = sbr.rel target = $region69
              $region74: #{fmdb_basic_fwd.35} parent=66 // loop_exit
                _
            $region67: #{fmdb_basic_fwd.35} parent=62 // pred_fallthru
              _
            // Predicated region
            $region75: #{fmdb_basic_fwd.35} parent=62 // pred_check
              _
            $region76: #{fmdb_basic_fwd.35} parent=62 // pred_check_branch
              %1081 = sbr.rel target = $region78
            $region77: #{fmdb_basic_fwd.35} parent=62 // pred_region
              _
            $region78: #{fmdb_basic_fwd.35} parent=62 // pred_fallthru
              _
          $region63: #{fmdb_basic_fwd.35} parent=58 // pred_fallthru
            _
          %1082 = vnop
        $region59: #{fmdb_basic_fwd.35} parent=50 // pred_fallthru
          _
      $region51: #{fmdb_basic_fwd.35} parent=5 // pred_fallthru
        _
      %p1083 = scmp.le.s32.totalorder 2, %s9
      // Predicated region
      $region79: #{fmdb_basic_fwd.35} parent=5 // pred_check
        %p1084 = pneg %p1083
      $region80: #{fmdb_basic_fwd.35} parent=5 // pred_check_branch
        %1086 = sbr.rel (%p1084) target = $region82
      $region81: #{fmdb_basic_fwd.35} parent=5 // pred_region
        %s1087 = ssub.s32 %s9, 2
        // Predicated region
        $region83: #{fmdb_basic_fwd.35} parent=81 // pred_check
          %p1088 = pneg %p106
        $region84: #{fmdb_basic_fwd.35} parent=81 // pred_check_branch
          %1090 = sbr.rel (%p1088) target = $region86
        $region85: #{fmdb_basic_fwd.35} parent=81 // pred_region
          %s1091 = sand.u32 %s91, 1
          %s1092 = sand.u32 %s91, 1
          %s1093 = smul.addr %s1092, 384
          %s1094 = scalar_lea.vmem [#allocation3], %s1093
        $region86: #{fmdb_basic_fwd.35} parent=81 // pred_fallthru
          _
      $region82: #{fmdb_basic_fwd.35} parent=5 // pred_fallthru
        _
    $region6: #{fmdb_basic_fwd.35} parent=1 // loop_footer
      %s13 = sadd.s32 1, %s9
    $region7: #{fmdb_basic_fwd.35} parent=1 // loop_footer_branch
      %8 = sbr.rel target = $region3
    $region8: #{fmdb_basic_fwd.35} parent=1 // loop_exit
      _

// kernel: fmdb_basic_fwd.36
$region0: #{fmdb_basic_fwd.36}
  #allocation0 [shape = 'u32[]', space=smem, size = 0x4, offset = 0x4, fixed_abs, tag = 'smem constant byte address 0x4 - core index']
  #allocation1 [shape = 'u32[144,128]{1,0:T(1,128)}', space=vmem, size = 0x12000, scoped, tag = 'internal scratch']
  %s0 = inlined_call_operand.vmem [shape: f32[24,32], index: 0, kind: input, shape index: {}]
  %s1 = inlined_call_operand.vmem [shape: f32[24,24], index: 1, kind: input, shape index: {}]
  %s2 = inlined_call_operand.vmem [shape: f32[24,1], index: 2, kind: input, shape index: {}]
  %s3 = inlined_call_operand.vmem [shape: f32[24,32], index: 3, kind: output, shape index: {}]
  %s4 = sld [smem:[#allocation0]]
  $region22: #{fmdb_basic_fwd.36} parent=0
    _
  %s6 = ssub.s32 1, %s4
  %s7 = scalar_select 0, %s6, %s4
  // Predicated region
  $region2: #{fmdb_basic_fwd.36} parent=0 // pred_check
    _
  $region3: #{fmdb_basic_fwd.36} parent=0 // pred_check_branch
    %9 = sbr.rel (0) target = $region5
  $region4: #{fmdb_basic_fwd.36} parent=0 // pred_region
    _
  $region5: #{fmdb_basic_fwd.36} parent=0 // pred_fallthru
    _
  // Predicated region
  $region6: #{fmdb_basic_fwd.36} parent=0 // pred_check
    _
  $region7: #{fmdb_basic_fwd.36} parent=0 // pred_check_branch
    %11 = sbr.rel (0) target = $region9
  $region8: #{fmdb_basic_fwd.36} parent=0 // pred_region
    _
  $region9: #{fmdb_basic_fwd.36} parent=0 // pred_fallthru
    _
  // Predicated region
  $region10: #{fmdb_basic_fwd.36} parent=0 // pred_check
    _
  $region11: #{fmdb_basic_fwd.36} parent=0 // pred_check_branch
    %13 = sbr.rel (0) target = $region13
  $region12: #{fmdb_basic_fwd.36} parent=0 // pred_region
    _
  $region13: #{fmdb_basic_fwd.36} parent=0 // pred_fallthru
    _
  %v14 = vld [vmem:[%s1] sm:$0xff]
  %v15 = vld [vmem:[%s1 + $0x8] sm:$0xff]
  %v16 = vld [vmem:[%s1 + $0x10] sm:$0xff]
  %v17 = vld [vmem:[%s0] sm:$0xff]
  %v18 = vld [vmem:[%s0 + $0x8] sm:$0xff]
  %v19 = vld [vmem:[%s0 + $0x10] sm:$0xff]
  %v20 = vld [vmem:[%s2] sm:$0xff]
  %v21 = vld [vmem:[%s2 + $0x8] sm:$0xff]
  %v22 = vld [vmem:[%s2 + $0x10] sm:$0xff]
  %24 = vset.pattern.permute.xlu0 0
  %25 = vperm.xlu0 %24, %v20
  %v26 = vpop.permute.xlu0 %25
  %29 = vset.pattern.permute.xlu0 0
  %30 = vperm.xlu0 %29, %v21
  %v31 = vpop.permute.xlu0 %30
  %34 = vset.pattern.permute.xlu0 0
  %35 = vperm.xlu0 %34, %v22
  %v36 = vpop.permute.xlu0 %35
  %vm38 = vcmask 195584
  %v40 = vsel %vm38, %v14, 0
  %v43 = vsel %vm38, %v15, 0
  %v46 = vsel %vm38, %v16, 0
  %48 = vmatprep.subr.mxu0 0.0
  %49 = vmatpush1.msra.mxu0 %v17
  %50 = vmatprep.subr.mxu0 0.0
  %51 = vmatpush1.msra.mxu0 %v18
  %52 = vmatprep.subr.mxu0 0.0
  %53 = vmatpush1.msra.mxu0 %v19
  %54 = vmatprep.subr.mxu0 0.0
  %55 = vmatpush1.msra.mxu0 0.0
  %56 = vmatprep.subr.mxu0 0.0
  %57 = vmatpush1.msra.mxu0 0.0
  %58 = vmatprep.subr.mxu0 0.0
  %59 = vmatpush1.msra.mxu0 0.0
  %60 = vmatprep.subr.mxu0 0.0
  %61 = vmatpush1.msra.mxu0 0.0
  %62 = vmatprep.subr.mxu0 0.0
  %63 = vmatpush1.msra.mxu0 0.0
  %64 = vmatprep.subr.mxu0 0.0
  %65 = vmatpush1.msra.mxu0 0.0
  %66 = vmatprep.subr.mxu0 0.0
  %67 = vmatpush1.msra.mxu0 0.0
  %68 = vmatprep.subr.mxu0 0.0
  %69 = vmatpush1.msra.mxu0 0.0
  %70 = vmatprep.subr.mxu0 0.0
  %71 = vmatpush1.msra.mxu0 0.0
  %72 = vmatprep.subr.mxu0 0.0
  %73 = vmatpush1.msra.mxu0 0.0
  %74 = vmatprep.subr.mxu0 0.0
  %75 = vmatpush1.msra.mxu0 0.0
  %76 = vmatprep.subr.mxu0 0.0
  %77 = vmatpush1.msra.mxu0 0.0
  %78 = vmatprep.subr.mxu0 0.0
  %79 = vmatpush1.msra.mxu0 0.0
  %80 = vmatprep.subr.mxu0 0.0
  %81 = vmatpush1.msra.mxu0 0.0
  %82 = vmatprep.subr.mxu0 0.0
  %83 = vmatpush1.msra.mxu0 0.0
  %84 = vmatprep.subr.mxu0 0.0
  %85 = vmatpush1.msra.mxu0 0.0
  %86 = vmatprep.subr.mxu0 0.0
  %87 = vmatpush1.msra.mxu0 0.0
  %88 = vmatprep.subr.mxu0 0.0
  %89 = vmatpush1.msra.mxu0 0.0
  %90 = vmatprep.subr.mxu0 0.0
  %91 = vmatpush1.msra.mxu0 0.0
  %92 = vmatprep.subr.mxu0 0.0
  %93 = vmatpush1.msra.mxu0 0.0
  %94 = vmatprep.subr.mxu0 0.0
  %95 = vmatpush1.msra.mxu0 0.0
  %96 = vmatprep.subr.mxu0 0.0
  %97 = vmatpush1.msra.mxu0 0.0
  %98 = vmatprep.subr.mxu0 0.0
  %99 = vmatpush1.msra.mxu0 0.0
  %100 = vmatprep.subr.mxu0 0.0
  %101 = vmatpush1.msra.mxu0 0.0
  %102 = vmatprep.subr.mxu0 0.0
  %103 = vmatpush1.msra.mxu0 0.0
  %104 = vmatprep.subr.mxu0 0.0
  %105 = vmatpush1.msra.mxu0 0.0
  %106 = vmatprep.subr.mxu0 0.0
  %107 = vmatpush1.msra.mxu0 0.0
  %108 = vmatprep.subr.mxu0 0.0
  %109 = vmatpush1.msra.mxu0 0.0
  %110 = vmatprep.subr.mxu0 0.0
  %111 = vmatpush1.msra.mxu0 0.0
  %112 = vmatprep.mubr.f32.mxu0 0.0
  %113 = vmatmul.mubr.f32.gmra.mrb[0].mxu0 %v40
  %v114 = vpop.f32.mrb[0].mxu0
  %v115 = vadd.f32 %v26, %v114
  %v116 = vpop.f32.mrb[0].mxu0
  %117 = vmatprep.mubr.f32.mxu0 0.0
  %118 = vmatmul.mubr.f32.gmra.mrb[0].mxu0 %v43
  %v119 = vpop.f32.mrb[0].mxu0
  %v120 = vadd.f32 %v31, %v119
  %v121 = vpop.f32.mrb[0].mxu0
  %122 = vmatprep.mubr.f32.mxu0 0.0
  %123 = vmatmul.mubr.f32.gmra.mrb[0].mxu0 %v46
  %v124 = vpop.f32.mrb[0].mxu0
  %v125 = vadd.f32 %v36, %v124
  %v126 = vpop.f32.mrb[0].mxu0
  %127 = vdwg.mxu0
  %vm128 = vcmask 261120
  %129 = vst.msk [vmem:[%s3] sm:$0xff] %vm128, %v115
  %130 = vst.msk [vmem:[%s3 + $0x8] sm:$0xff] %vm128, %v120
  %131 = vst.msk [vmem:[%s3 + $0x10] sm:$0xff] %vm128, %v125
  // Predicated region
  $region14: #{fmdb_basic_fwd.36} parent=0 // pred_check
    _
  $region15: #{fmdb_basic_fwd.36} parent=0 // pred_check_branch
    %133 = sbr.rel (0) target = $region17
  $region16: #{fmdb_basic_fwd.36} parent=0 // pred_region
    _
  $region17: #{fmdb_basic_fwd.36} parent=0 // pred_fallthru
    _
  // Predicated region
  $region18: #{fmdb_basic_fwd.36} parent=0 // pred_check
    _
  $region19: #{fmdb_basic_fwd.36} parent=0 // pred_check_branch
    %135 = sbr.rel (0) target = $region21
  $region20: #{fmdb_basic_fwd.36} parent=0 // pred_region
    _
  $region21: #{fmdb_basic_fwd.36} parent=0 // pred_fallthru
    _

// kernel: fmdb_basic_fwd.37
$region0: #{fmdb_basic_fwd.37}
  #allocation0 [shape = 'u32[]', space=smem, size = 0x4, offset = 0x4, fixed_abs, tag = 'smem constant byte address 0x4 - core index']
  #allocation1 [shape = 'u32[144,128]{1,0:T(1,128)}', space=vmem, size = 0x12000, scoped, tag = 'internal scratch']
  %s0 = inlined_call_operand.vmem [shape: f32[24,2048], index: 0, kind: input, shape index: {}]
  %s1 = inlined_call_operand.vmem [shape: f32[24,2048], index: 1, kind: input, shape index: {}]
  %s2 = inlined_call_operand.vmem [shape: f32[24,2048], index: 2, kind: input, shape index: {}]
  %s3 = inlined_call_operand.vmem [shape: f32[24,24], index: 3, kind: input, shape index: {}]
  %s4 = inlined_call_operand.vmem [shape: f32[24,1], index: 4, kind: input, shape index: {}]
  %s5 = inlined_call_operand.vmem [shape: f32[24,2048], index: 5, kind: output, shape index: {}]
  %s6 = sld [smem:[#allocation0]]
  $region141: #{fmdb_basic_fwd.37} parent=0
    _
  %s8 = ssub.s32 1, %s6
  %s9 = scalar_select 0, %s8, %s6
  $region1: #{fmdb_basic_fwd.37} parent=0
    #allocation2 [shape = 'u8[196608]{0}', space=vmem, size = 0x30000, scoped, tag = 'input window, operand 0']
    #allocation3 [shape = 'u8[196608]{0}', space=vmem, size = 0x30000, scoped, tag = 'input window, operand 1']
    #allocation4 [shape = 'u8[196608]{0}', space=vmem, size = 0x30000, scoped, tag = 'input window, operand 2']
    #allocation5 [shape = 'u8[196608]{0}', space=vmem, size = 0x30000, scoped, tag = 'output window, operand 0']
    loop: start=0, step=1, limit=4
    $region2: #{fmdb_basic_fwd.37} parent=1 // loop_pre_header
      _
    $region3: #{fmdb_basic_fwd.37} parent=1 // loop_header
      %s11 = sphi 0, %s15
      %p12 = scmp.ge.s32.totalorder %s11, 4
      %s21 = sphi 0, %s23
      %s24 = sphi 0, %s21
      %s25 = sphi 0, %s24
      %s41 = sphi 0, %s25
      %s47 = sphi 0, %s49
      %s50 = sphi 0, %s47
      %s51 = sphi 0, %s50
      %s67 = sphi 0, %s51
      %s73 = sphi 0, %s75
      %s76 = sphi 0, %s73
      %s77 = sphi 0, %s76
      %s93 = sphi 0, %s77
      %s97 = sphi 0, %s97
      %s99 = sphi 0, %s97
      %s100 = sphi 0, %s99
      %s114 = sphi 0, %s100
      %s118 = sphi 0, %s118
      %s120 = sphi 0, %s118
      %s121 = sphi 0, %s120
      %s135 = sphi 0, %s121
      %s141 = sphi 0, %s143
      %s144 = sphi 0, %s141
      %s145 = sphi 0, %s144
      %s161 = sphi 0, %s145
    $region4: #{fmdb_basic_fwd.37} parent=1 // loop_header_branch
      %14 = sbr.rel (%p12) target = $region8
    $region5: #{fmdb_basic_fwd.37} parent=1 // loop_body
      %s16 = ssub.s32 %s11, 1
      %s17 = ssub.s32 %s11, 2
      %s18 = sadd.s32 %s11, 1
      %s19 = ssub.s32 %s11, %s18
      %p20 = scmp.eq.s32.totalorder %s19, 0
      %s22 = sadd.s32 %s21, 1
      %s23 = scalar_select %p20, %s21, %s22
      %p26 = pneg %p20
      %p27 = scmp.eq.s32.totalorder %s11, 1
      %p28 = por %p26, %p27
      %p29 = scmp.ne.s32.totalorder %s21, %s24
      %p30 = scmp.eq.s32.totalorder %s11, 0
      %p31 = por %p29, %p30
      %p32 = scmp.ne.s32.totalorder %s21, %s24
      %p33 = scmp.eq.s32.totalorder %s16, 1
      %p34 = por %p32, %p33
      %p35 = scmp.ne.s32.totalorder %s24, %s25
      %p36 = scmp.eq.s32.totalorder %s16, 0
      %p37 = por %p35, %p36
      %p38 = scmp.ne.s32.totalorder %s24, %s25
      %p39 = scmp.eq.s32.totalorder %s17, 1
      %p40 = por %p38, %p39
      %p42 = scmp.ne.s32.totalorder %s25, %s41
      %p43 = scmp.eq.s32.totalorder %s17, 0
      %p44 = por %p42, %p43
      %s45 = ssub.s32 %s11, %s18
      %p46 = scmp.eq.s32.totalorder %s45, 0
      %s48 = sadd.s32 %s47, 1
      %s49 = scalar_select %p46, %s47, %s48
      %p52 = pneg %p46
      %p53 = scmp.eq.s32.totalorder %s11, 1
      %p54 = por %p52, %p53
      %p55 = scmp.ne.s32.totalorder %s47, %s50
      %p56 = scmp.eq.s32.totalorder %s11, 0
      %p57 = por %p55, %p56
      %p58 = scmp.ne.s32.totalorder %s47, %s50
      %p59 = scmp.eq.s32.totalorder %s16, 1
      %p60 = por %p58, %p59
      %p61 = scmp.ne.s32.totalorder %s50, %s51
      %p62 = scmp.eq.s32.totalorder %s16, 0
      %p63 = por %p61, %p62
      %p64 = scmp.ne.s32.totalorder %s50, %s51
      %p65 = scmp.eq.s32.totalorder %s17, 1
      %p66 = por %p64, %p65
      %p68 = scmp.ne.s32.totalorder %s51, %s67
      %p69 = scmp.eq.s32.totalorder %s17, 0
      %p70 = por %p68, %p69
      %s71 = ssub.s32 %s11, %s18
      %p72 = scmp.eq.s32.totalorder %s71, 0
      %s74 = sadd.s32 %s73, 1
      %s75 = scalar_select %p72, %s73, %s74
      %p78 = pneg %p72
      %p79 = scmp.eq.s32.totalorder %s11, 1
      %p80 = por %p78, %p79
      %p81 = scmp.ne.s32.totalorder %s73, %s76
      %p82 = scmp.eq.s32.totalorder %s11, 0
      %p83 = por %p81, %p82
      %p84 = scmp.ne.s32.totalorder %s73, %s76
      %p85 = scmp.eq.s32.totalorder %s16, 1
      %p86 = por %p84, %p85
      %p87 = scmp.ne.s32.totalorder %s76, %s77
      %p88 = scmp.eq.s32.totalorder %s16, 0
      %p89 = por %p87, %p88
      %p90 = scmp.ne.s32.totalorder %s76, %s77
      %p91 = scmp.eq.s32.totalorder %s17, 1
      %p92 = por %p90, %p91
      %p94 = scmp.ne.s32.totalorder %s77, %s93
      %p95 = scmp.eq.s32.totalorder %s17, 0
      %p96 = por %p94, %p95
      %s98 = sadd.s32 %s97, 1
      %p101 = scmp.eq.s32.totalorder %s11, 1
      %p102 = scmp.ne.s32.totalorder %s97, %s99
      %p103 = scmp.eq.s32.totalorder %s11, 0
      %p104 = por %p102, %p103
      %p105 = scmp.ne.s32.totalorder %s97, %s99
      %p106 = scmp.eq.s32.totalorder %s16, 1
      %p107 = por %p105, %p106
      %p108 = scmp.ne.s32.totalorder %s99, %s100
      %p109 = scmp.eq.s32.totalorder %s16, 0
      %p110 = por %p108, %p109
      %p111 = scmp.ne.s32.totalorder %s99, %s100
      %p112 = scmp.eq.s32.totalorder %s17, 1
      %p113 = por %p111, %p112
      %p115 = scmp.ne.s32.totalorder %s100, %s114
      %p116 = scmp.eq.s32.totalorder %s17, 0
      %p117 = por %p115, %p116
      %s119 = sadd.s32 %s118, 1
      %p122 = scmp.eq.s32.totalorder %s11, 1
      %p123 = scmp.ne.s32.totalorder %s118, %s120
      %p124 = scmp.eq.s32.totalorder %s11, 0
      %p125 = por %p123, %p124
      %p126 = scmp.ne.s32.totalorder %s118, %s120
      %p127 = scmp.eq.s32.totalorder %s16, 1
      %p128 = por %p126, %p127
      %p129 = scmp.ne.s32.totalorder %s120, %s121
      %p130 = scmp.eq.s32.totalorder %s16, 0
      %p131 = por %p129, %p130
      %p132 = scmp.ne.s32.totalorder %s120, %s121
      %p133 = scmp.eq.s32.totalorder %s17, 1
      %p134 = por %p132, %p133
      %p136 = scmp.ne.s32.totalorder %s121, %s135
      %p137 = scmp.eq.s32.totalorder %s17, 0
      %p138 = por %p136, %p137
      %s139 = ssub.s32 %s11, %s18
      %p140 = scmp.eq.s32.totalorder %s139, 0
      %s142 = sadd.s32 %s141, 1
      %s143 = scalar_select %p140, %s141, %s142
      %p146 = pneg %p140
      %p147 = scmp.eq.s32.totalorder %s11, 1
      %p148 = por %p146, %p147
      %p149 = scmp.ne.s32.totalorder %s141, %s144
      %p150 = scmp.eq.s32.totalorder %s11, 0
      %p151 = por %p149, %p150
      %p152 = scmp.ne.s32.totalorder %s141, %s144
      %p153 = scmp.eq.s32.totalorder %s16, 1
      %p154 = por %p152, %p153
      %p155 = scmp.ne.s32.totalorder %s144, %s145
      %p156 = scmp.eq.s32.totalorder %s16, 0
      %p157 = por %p155, %p156
      %p158 = scmp.ne.s32.totalorder %s144, %s145
      %p159 = scmp.eq.s32.totalorder %s17, 1
      %p160 = por %p158, %p159
      %p162 = scmp.ne.s32.totalorder %s145, %s161
      %p163 = scmp.eq.s32.totalorder %s17, 0
      %p164 = por %p162, %p163
      %p165 = scmp.le.s32.totalorder 1, %s11
      %p166 = scmp.lt.s32.totalorder %s11, 3
      %p167 = pnand %p165, %p166
      %p168 = pneg %p167
      // Predicated region
      $region9: #{fmdb_basic_fwd.37} parent=5 // pred_check
        _
      $region10: #{fmdb_basic_fwd.37} parent=5 // pred_check_branch
        %170 = sbr.rel (%p167) target = $region12
      $region11: #{fmdb_basic_fwd.37} parent=5 // pred_region
        %s171 = ssub.s32 %s11, 1
        // Predicated region
        $region13: #{fmdb_basic_fwd.37} parent=11 // pred_check
          %p172 = pneg %p110
        $region14: #{fmdb_basic_fwd.37} parent=11 // pred_check_branch
          %174 = sbr.rel (%p172) target = $region16
        $region15: #{fmdb_basic_fwd.37} parent=11 // pred_region
          _
        $region16: #{fmdb_basic_fwd.37} parent=11 // pred_fallthru
          _
        // Predicated region
        $region17: #{fmdb_basic_fwd.37} parent=11 // pred_check
          %p175 = pneg %p131
        $region18: #{fmdb_basic_fwd.37} parent=11 // pred_check_branch
          %177 = sbr.rel (%p175) target = $region20
        $region19: #{fmdb_basic_fwd.37} parent=11 // pred_region
          _
        $region20: #{fmdb_basic_fwd.37} parent=11 // pred_fallthru
          _
      $region12: #{fmdb_basic_fwd.37} parent=5 // pred_fallthru
        _
      %p178 = scmp.lt.s32.totalorder %s11, 2
      // Predicated region
      $region21: #{fmdb_basic_fwd.37} parent=5 // pred_check
        %p179 = pneg %p178
      $region22: #{fmdb_basic_fwd.37} parent=5 // pred_check_branch
        %181 = sbr.rel (%p179) target = $region24
      $region23: #{fmdb_basic_fwd.37} parent=5 // pred_region
        // Predicated region
        $region25: #{fmdb_basic_fwd.37} parent=23 // pred_check
          %p182 = pneg %p31
        $region26: #{fmdb_basic_fwd.37} parent=23 // pred_check_branch
          %184 = sbr.rel (%p182) target = $region28
        $region27: #{fmdb_basic_fwd.37} parent=23 // pred_region
          %s185 = sand.u32 %s21, 1
          %s186 = sand.u32 %s21, 1
          %s187 = smul.addr %s186, 192
          %s188 = scalar_lea.vmem [#allocation2], %s187
          %s189 = smul.u32 8, %s11
          %s190 = smul.addr %s189, 8
          %s191 = scalar_lea.vmem %s0, %s190
          // Predicated region
          $region29: #{fmdb_basic_fwd.37} parent=27 // pred_check
            _
          $region30: #{fmdb_basic_fwd.37} parent=27 // pred_check_branch
            %193 = sbr.rel (0) target = $region32
          $region31: #{fmdb_basic_fwd.37} parent=27 // pred_region
            // Predicated region
            $region33: #{fmdb_basic_fwd.37} parent=31 // pred_check
              _
            $region34: #{fmdb_basic_fwd.37} parent=31 // pred_check_branch
              %195 = sbr.rel (0) target = $region36
            $region35: #{fmdb_basic_fwd.37} parent=31 // pred_region
              loop: start=0, step=1, limit=1
              $region37: #{fmdb_basic_fwd.37} parent=35 // loop_pre_header
                _
              $region38: #{fmdb_basic_fwd.37} parent=35 // loop_header
                %s197 = sphi 0, %s201
                %p198 = scmp.ge.s32.totalorder %s197, 1
                %s202 = sphi %s191, %s191
                %s203 = sphi %s188, %s188
              $region39: #{fmdb_basic_fwd.37} parent=35 // loop_header_branch
                %200 = sbr.rel (%p198) target = $region43
              $region40: #{fmdb_basic_fwd.37} parent=35 // loop_body
                %v204 = vld [vmem:[%s202] sm:$0xff]
                %205 = vst [vmem:[%s203] sm:$0xff] %v204
                %v206 = vld [vmem:[%s202 + $0x8] sm:$0xff]
                %207 = vst [vmem:[%s203 + $0x8] sm:$0xff] %v206
                %v208 = vld [vmem:[%s202 + $0x10] sm:$0xff]
                %209 = vst [vmem:[%s203 + $0x10] sm:$0xff] %v208
                %v210 = vld [vmem:[%s202 + $0x18] sm:$0xff]
                %211 = vst [vmem:[%s203 + $0x18] sm:$0xff] %v210
                %v212 = vld [vmem:[%s202 + $0x20] sm:$0xff]
                %213 = vst [vmem:[%s203 + $0x20] sm:$0xff] %v212
                %v214 = vld [vmem:[%s202 + $0x28] sm:$0xff]
                %215 = vst [vmem:[%s203 + $0x28] sm:$0xff] %v214
                %v216 = vld [vmem:[%s202 + $0x30] sm:$0xff]
                %217 = vst [vmem:[%s203 + $0x30] sm:$0xff] %v216
                %v218 = vld [vmem:[%s202 + $0x38] sm:$0xff]
                %219 = vst [vmem:[%s203 + $0x38] sm:$0xff] %v218
                %v220 = vld [vmem:[%s202 + $0x80] sm:$0xff]
                %221 = vst [vmem:[%s203 + $0x40] sm:$0xff] %v220
                %v222 = vld [vmem:[%s202 + $0x88] sm:$0xff]
                %223 = vst [vmem:[%s203 + $0x48] sm:$0xff] %v222
                %v224 = vld [vmem:[%s202 + $0x90] sm:$0xff]
                %225 = vst [vmem:[%s203 + $0x50] sm:$0xff] %v224
                %v226 = vld [vmem:[%s202 + $0x98] sm:$0xff]
                %227 = vst [vmem:[%s203 + $0x58] sm:$0xff] %v226
                %v228 = vld [vmem:[%s202 + $0xa0] sm:$0xff]
                %229 = vst [vmem:[%s203 + $0x60] sm:$0xff] %v228
                %v230 = vld [vmem:[%s202 + $0xa8] sm:$0xff]
                %231 = vst [vmem:[%s203 + $0x68] sm:$0xff] %v230
                %v232 = vld [vmem:[%s202 + $0xb0] sm:$0xff]
                %233 = vst [vmem:[%s203 + $0x70] sm:$0xff] %v232
                %v234 = vld [vmem:[%s202 + $0xb8] sm:$0xff]
                %235 = vst [vmem:[%s203 + $0x78] sm:$0xff] %v234
                %v236 = vld [vmem:[%s202 + $0x100] sm:$0xff]
                %237 = vst [vmem:[%s203 + $0x80] sm:$0xff] %v236
                %v238 = vld [vmem:[%s202 + $0x108] sm:$0xff]
                %239 = vst [vmem:[%s203 + $0x88] sm:$0xff] %v238
                %v240 = vld [vmem:[%s202 + $0x110] sm:$0xff]
                %241 = vst [vmem:[%s203 + $0x90] sm:$0xff] %v240
                %v242 = vld [vmem:[%s202 + $0x118] sm:$0xff]
                %243 = vst [vmem:[%s203 + $0x98] sm:$0xff] %v242
                %v244 = vld [vmem:[%s202 + $0x120] sm:$0xff]
                %245 = vst [vmem:[%s203 + $0xa0] sm:$0xff] %v244
                %v246 = vld [vmem:[%s202 + $0x128] sm:$0xff]
                %247 = vst [vmem:[%s203 + $0xa8] sm:$0xff] %v246
                %v248 = vld [vmem:[%s202 + $0x130] sm:$0xff]
                %249 = vst [vmem:[%s203 + $0xb0] sm:$0xff] %v248
                %v250 = vld [vmem:[%s202 + $0x138] sm:$0xff]
                %251 = vst [vmem:[%s203 + $0xb8] sm:$0xff] %v250
              $region41: #{fmdb_basic_fwd.37} parent=35 // loop_footer
                %s201 = sadd.s32 1, %s197
              $region42: #{fmdb_basic_fwd.37} parent=35 // loop_footer_branch
                %196 = sbr.rel target = $region38
              $region43: #{fmdb_basic_fwd.37} parent=35 // loop_exit
                _
            $region36: #{fmdb_basic_fwd.37} parent=31 // pred_fallthru
              _
            // Predicated region
            $region44: #{fmdb_basic_fwd.37} parent=31 // pred_check
              _
            $region45: #{fmdb_basic_fwd.37} parent=31 // pred_check_branch
              %253 = sbr.rel target = $region47
            $region46: #{fmdb_basic_fwd.37} parent=31 // pred_region
              _
            $region47: #{fmdb_basic_fwd.37} parent=31 // pred_fallthru
              _
          $region32: #{fmdb_basic_fwd.37} parent=27 // pred_fallthru
            _
          %254 = vnop
        $region28: #{fmdb_basic_fwd.37} parent=23 // pred_fallthru
          _
        // Predicated region
        $region48: #{fmdb_basic_fwd.37} parent=23 // pred_check
          %p255 = pneg %p57
        $region49: #{fmdb_basic_fwd.37} parent=23 // pred_check_branch
          %257 = sbr.rel (%p255) target = $region51
        $region50: #{fmdb_basic_fwd.37} parent=23 // pred_region
          %s258 = sand.u32 %s47, 1
          %s259 = sand.u32 %s47, 1
          %s260 = smul.addr %s259, 192
          %s261 = scalar_lea.vmem [#allocation3], %s260
          %s262 = smul.u32 8, %s11
          %s263 = smul.addr %s262, 8
          %s264 = scalar_lea.vmem %s1, %s263
          // Predicated region
          $region52: #{fmdb_basic_fwd.37} parent=50 // pred_check
            _
          $region53: #{fmdb_basic_fwd.37} parent=50 // pred_check_branch
            %266 = sbr.rel (0) target = $region55
          $region54: #{fmdb_basic_fwd.37} parent=50 // pred_region
            // Predicated region
            $region56: #{fmdb_basic_fwd.37} parent=54 // pred_check
              _
            $region57: #{fmdb_basic_fwd.37} parent=54 // pred_check_branch
              %268 = sbr.rel (0) target = $region59
            $region58: #{fmdb_basic_fwd.37} parent=54 // pred_region
              loop: start=0, step=1, limit=1
              $region60: #{fmdb_basic_fwd.37} parent=58 // loop_pre_header
                _
              $region61: #{fmdb_basic_fwd.37} parent=58 // loop_header
                %s270 = sphi 0, %s274
                %p271 = scmp.ge.s32.totalorder %s270, 1
                %s275 = sphi %s264, %s264
                %s276 = sphi %s261, %s261
              $region62: #{fmdb_basic_fwd.37} parent=58 // loop_header_branch
                %273 = sbr.rel (%p271) target = $region66
              $region63: #{fmdb_basic_fwd.37} parent=58 // loop_body
                %v277 = vld [vmem:[%s275] sm:$0xff]
                %278 = vst [vmem:[%s276] sm:$0xff] %v277
                %v279 = vld [vmem:[%s275 + $0x8] sm:$0xff]
                %280 = vst [vmem:[%s276 + $0x8] sm:$0xff] %v279
                %v281 = vld [vmem:[%s275 + $0x10] sm:$0xff]
                %282 = vst [vmem:[%s276 + $0x10] sm:$0xff] %v281
                %v283 = vld [vmem:[%s275 + $0x18] sm:$0xff]
                %284 = vst [vmem:[%s276 + $0x18] sm:$0xff] %v283
                %v285 = vld [vmem:[%s275 + $0x20] sm:$0xff]
                %286 = vst [vmem:[%s276 + $0x20] sm:$0xff] %v285
                %v287 = vld [vmem:[%s275 + $0x28] sm:$0xff]
                %288 = vst [vmem:[%s276 + $0x28] sm:$0xff] %v287
                %v289 = vld [vmem:[%s275 + $0x30] sm:$0xff]
                %290 = vst [vmem:[%s276 + $0x30] sm:$0xff] %v289
                %v291 = vld [vmem:[%s275 + $0x38] sm:$0xff]
                %292 = vst [vmem:[%s276 + $0x38] sm:$0xff] %v291
                %v293 = vld [vmem:[%s275 + $0x80] sm:$0xff]
                %294 = vst [vmem:[%s276 + $0x40] sm:$0xff] %v293
                %v295 = vld [vmem:[%s275 + $0x88] sm:$0xff]
                %296 = vst [vmem:[%s276 + $0x48] sm:$0xff] %v295
                %v297 = vld [vmem:[%s275 + $0x90] sm:$0xff]
                %298 = vst [vmem:[%s276 + $0x50] sm:$0xff] %v297
                %v299 = vld [vmem:[%s275 + $0x98] sm:$0xff]
                %300 = vst [vmem:[%s276 + $0x58] sm:$0xff] %v299
                %v301 = vld [vmem:[%s275 + $0xa0] sm:$0xff]
                %302 = vst [vmem:[%s276 + $0x60] sm:$0xff] %v301
                %v303 = vld [vmem:[%s275 + $0xa8] sm:$0xff]
                %304 = vst [vmem:[%s276 + $0x68] sm:$0xff] %v303
                %v305 = vld [vmem:[%s275 + $0xb0] sm:$0xff]
                %306 = vst [vmem:[%s276 + $0x70] sm:$0xff] %v305
                %v307 = vld [vmem:[%s275 + $0xb8] sm:$0xff]
                %308 = vst [vmem:[%s276 + $0x78] sm:$0xff] %v307
                %v309 = vld [vmem:[%s275 + $0x100] sm:$0xff]
                %310 = vst [vmem:[%s276 + $0x80] sm:$0xff] %v309
                %v311 = vld [vmem:[%s275 + $0x108] sm:$0xff]
                %312 = vst [vmem:[%s276 + $0x88] sm:$0xff] %v311
                %v313 = vld [vmem:[%s275 + $0x110] sm:$0xff]
                %314 = vst [vmem:[%s276 + $0x90] sm:$0xff] %v313
                %v315 = vld [vmem:[%s275 + $0x118] sm:$0xff]
                %316 = vst [vmem:[%s276 + $0x98] sm:$0xff] %v315
                %v317 = vld [vmem:[%s275 + $0x120] sm:$0xff]
                %318 = vst [vmem:[%s276 + $0xa0] sm:$0xff] %v317
                %v319 = vld [vmem:[%s275 + $0x128] sm:$0xff]
                %320 = vst [vmem:[%s276 + $0xa8] sm:$0xff] %v319
                %v321 = vld [vmem:[%s275 + $0x130] sm:$0xff]
                %322 = vst [vmem:[%s276 + $0xb0] sm:$0xff] %v321
                %v323 = vld [vmem:[%s275 + $0x138] sm:$0xff]
                %324 = vst [vmem:[%s276 + $0xb8] sm:$0xff] %v323
              $region64: #{fmdb_basic_fwd.37} parent=58 // loop_footer
                %s274 = sadd.s32 1, %s270
              $region65: #{fmdb_basic_fwd.37} parent=58 // loop_footer_branch
                %269 = sbr.rel target = $region61
              $region66: #{fmdb_basic_fwd.37} parent=58 // loop_exit
                _
            $region59: #{fmdb_basic_fwd.37} parent=54 // pred_fallthru
              _
            // Predicated region
            $region67: #{fmdb_basic_fwd.37} parent=54 // pred_check
              _
            $region68: #{fmdb_basic_fwd.37} parent=54 // pred_check_branch
              %326 = sbr.rel target = $region70
            $region69: #{fmdb_basic_fwd.37} parent=54 // pred_region
              _
            $region70: #{fmdb_basic_fwd.37} parent=54 // pred_fallthru
              _
          $region55: #{fmdb_basic_fwd.37} parent=50 // pred_fallthru
            _
          %327 = vnop
        $region51: #{fmdb_basic_fwd.37} parent=23 // pred_fallthru
          _
        // Predicated region
        $region71: #{fmdb_basic_fwd.37} parent=23 // pred_check
          %p328 = pneg %p83
        $region72: #{fmdb_basic_fwd.37} parent=23 // pred_check_branch
          %330 = sbr.rel (%p328) target = $region74
        $region73: #{fmdb_basic_fwd.37} parent=23 // pred_region
          %s331 = sand.u32 %s73, 1
          %s332 = sand.u32 %s73, 1
          %s333 = smul.addr %s332, 192
          %s334 = scalar_lea.vmem [#allocation4], %s333
          %s335 = smul.u32 8, %s11
          %s336 = smul.addr %s335, 8
          %s337 = scalar_lea.vmem %s2, %s336
          // Predicated region
          $region75: #{fmdb_basic_fwd.37} parent=73 // pred_check
            _
          $region76: #{fmdb_basic_fwd.37} parent=73 // pred_check_branch
            %339 = sbr.rel (0) target = $region78
          $region77: #{fmdb_basic_fwd.37} parent=73 // pred_region
            // Predicated region
            $region79: #{fmdb_basic_fwd.37} parent=77 // pred_check
              _
            $region80: #{fmdb_basic_fwd.37} parent=77 // pred_check_branch
              %341 = sbr.rel (0) target = $region82
            $region81: #{fmdb_basic_fwd.37} parent=77 // pred_region
              loop: start=0, step=1, limit=1
              $region83: #{fmdb_basic_fwd.37} parent=81 // loop_pre_header
                _
              $region84: #{fmdb_basic_fwd.37} parent=81 // loop_header
                %s343 = sphi 0, %s347
                %p344 = scmp.ge.s32.totalorder %s343, 1
                %s348 = sphi %s337, %s337
                %s349 = sphi %s334, %s334
              $region85: #{fmdb_basic_fwd.37} parent=81 // loop_header_branch
                %346 = sbr.rel (%p344) target = $region89
              $region86: #{fmdb_basic_fwd.37} parent=81 // loop_body
                %v350 = vld [vmem:[%s348] sm:$0xff]
                %351 = vst [vmem:[%s349] sm:$0xff] %v350
                %v352 = vld [vmem:[%s348 + $0x8] sm:$0xff]
                %353 = vst [vmem:[%s349 + $0x8] sm:$0xff] %v352
                %v354 = vld [vmem:[%s348 + $0x10] sm:$0xff]
                %355 = vst [vmem:[%s349 + $0x10] sm:$0xff] %v354
                %v356 = vld [vmem:[%s348 + $0x18] sm:$0xff]
                %357 = vst [vmem:[%s349 + $0x18] sm:$0xff] %v356
                %v358 = vld [vmem:[%s348 + $0x20] sm:$0xff]
                %359 = vst [vmem:[%s349 + $0x20] sm:$0xff] %v358
                %v360 = vld [vmem:[%s348 + $0x28] sm:$0xff]
                %361 = vst [vmem:[%s349 + $0x28] sm:$0xff] %v360
                %v362 = vld [vmem:[%s348 + $0x30] sm:$0xff]
                %363 = vst [vmem:[%s349 + $0x30] sm:$0xff] %v362
                %v364 = vld [vmem:[%s348 + $0x38] sm:$0xff]
                %365 = vst [vmem:[%s349 + $0x38] sm:$0xff] %v364
                %v366 = vld [vmem:[%s348 + $0x80] sm:$0xff]
                %367 = vst [vmem:[%s349 + $0x40] sm:$0xff] %v366
                %v368 = vld [vmem:[%s348 + $0x88] sm:$0xff]
                %369 = vst [vmem:[%s349 + $0x48] sm:$0xff] %v368
                %v370 = vld [vmem:[%s348 + $0x90] sm:$0xff]
                %371 = vst [vmem:[%s349 + $0x50] sm:$0xff] %v370
                %v372 = vld [vmem:[%s348 + $0x98] sm:$0xff]
                %373 = vst [vmem:[%s349 + $0x58] sm:$0xff] %v372
                %v374 = vld [vmem:[%s348 + $0xa0] sm:$0xff]
                %375 = vst [vmem:[%s349 + $0x60] sm:$0xff] %v374
                %v376 = vld [vmem:[%s348 + $0xa8] sm:$0xff]
                %377 = vst [vmem:[%s349 + $0x68] sm:$0xff] %v376
                %v378 = vld [vmem:[%s348 + $0xb0] sm:$0xff]
                %379 = vst [vmem:[%s349 + $0x70] sm:$0xff] %v378
                %v380 = vld [vmem:[%s348 + $0xb8] sm:$0xff]
                %381 = vst [vmem:[%s349 + $0x78] sm:$0xff] %v380
                %v382 = vld [vmem:[%s348 + $0x100] sm:$0xff]
                %383 = vst [vmem:[%s349 + $0x80] sm:$0xff] %v382
                %v384 = vld [vmem:[%s348 + $0x108] sm:$0xff]
                %385 = vst [vmem:[%s349 + $0x88] sm:$0xff] %v384
                %v386 = vld [vmem:[%s348 + $0x110] sm:$0xff]
                %387 = vst [vmem:[%s349 + $0x90] sm:$0xff] %v386
                %v388 = vld [vmem:[%s348 + $0x118] sm:$0xff]
                %389 = vst [vmem:[%s349 + $0x98] sm:$0xff] %v388
                %v390 = vld [vmem:[%s348 + $0x120] sm:$0xff]
                %391 = vst [vmem:[%s349 + $0xa0] sm:$0xff] %v390
                %v392 = vld [vmem:[%s348 + $0x128] sm:$0xff]
                %393 = vst [vmem:[%s349 + $0xa8] sm:$0xff] %v392
                %v394 = vld [vmem:[%s348 + $0x130] sm:$0xff]
                %395 = vst [vmem:[%s349 + $0xb0] sm:$0xff] %v394
                %v396 = vld [vmem:[%s348 + $0x138] sm:$0xff]
                %397 = vst [vmem:[%s349 + $0xb8] sm:$0xff] %v396
              $region87: #{fmdb_basic_fwd.37} parent=81 // loop_footer
                %s347 = sadd.s32 1, %s343
              $region88: #{fmdb_basic_fwd.37} parent=81 // loop_footer_branch
                %342 = sbr.rel target = $region84
              $region89: #{fmdb_basic_fwd.37} parent=81 // loop_exit
                _
            $region82: #{fmdb_basic_fwd.37} parent=77 // pred_fallthru
              _
            // Predicated region
            $region90: #{fmdb_basic_fwd.37} parent=77 // pred_check
              _
            $region91: #{fmdb_basic_fwd.37} parent=77 // pred_check_branch
              %399 = sbr.rel target = $region93
            $region92: #{fmdb_basic_fwd.37} parent=77 // pred_region
              _
            $region93: #{fmdb_basic_fwd.37} parent=77 // pred_fallthru
              _
          $region78: #{fmdb_basic_fwd.37} parent=73 // pred_fallthru
            _
          %400 = vnop
        $region74: #{fmdb_basic_fwd.37} parent=23 // pred_fallthru
          _
      $region24: #{fmdb_basic_fwd.37} parent=5 // pred_fallthru
        _
      %p401 = scmp.le.s32.totalorder 1, %s11
      %p402 = scmp.lt.s32.totalorder %s11, 3
      %p403 = pnand %p401, %p402
      %p404 = pneg %p403
      // Predicated region
      $region94: #{fmdb_basic_fwd.37} parent=5 // pred_check
        _
      $region95: #{fmdb_basic_fwd.37} parent=5 // pred_check_branch
        %406 = sbr.rel (%p403) target = $region97
      $region96: #{fmdb_basic_fwd.37} parent=5 // pred_region
        %s407 = ssub.s32 %s11, 1
        %s408 = sand.u32 %s24, 1
        %s409 = sand.u32 %s24, 1
        %s410 = smul.addr %s409, 192
        %s411 = scalar_lea.vmem [#allocation2], %s410
        // Predicated region
        $region98: #{fmdb_basic_fwd.37} parent=96 // pred_check
          %p412 = pneg %p37
        $region99: #{fmdb_basic_fwd.37} parent=96 // pred_check_branch
          %414 = sbr.rel (%p412) target = $region101
        $region100: #{fmdb_basic_fwd.37} parent=96 // pred_region
          _
        $region101: #{fmdb_basic_fwd.37} parent=96 // pred_fallthru
          _
        %s415 = sand.u32 %s50, 1
        %s416 = sand.u32 %s50, 1
        %s417 = smul.addr %s416, 192
        %s418 = scalar_lea.vmem [#allocation3], %s417
        // Predicated region
        $region102: #{fmdb_basic_fwd.37} parent=96 // pred_check
          %p419 = pneg %p63
        $region103: #{fmdb_basic_fwd.37} parent=96 // pred_check_branch
          %421 = sbr.rel (%p419) target = $region105
        $region104: #{fmdb_basic_fwd.37} parent=96 // pred_region
          _
        $region105: #{fmdb_basic_fwd.37} parent=96 // pred_fallthru
          _
        %s422 = sand.u32 %s76, 1
        %s423 = sand.u32 %s76, 1
        %s424 = smul.addr %s423, 192
        %s425 = scalar_lea.vmem [#allocation4], %s424
        // Predicated region
        $region106: #{fmdb_basic_fwd.37} parent=96 // pred_check
          %p426 = pneg %p89
        $region107: #{fmdb_basic_fwd.37} parent=96 // pred_check_branch
          %428 = sbr.rel (%p426) target = $region109
        $region108: #{fmdb_basic_fwd.37} parent=96 // pred_region
          _
        $region109: #{fmdb_basic_fwd.37} parent=96 // pred_fallthru
          _
        %s429 = sand.u32 %s24, 1
        %s430 = sand.u32 %s24, 1
        %s431 = smul.addr %s430, 192
        %s432 = scalar_lea.vmem [#allocation2], %s431
        %p433 = pneg %p37
        %p434 = pneg %p34
        %s435 = sand.u32 %s50, 1
        %s436 = sand.u32 %s50, 1
        %s437 = smul.addr %s436, 192
        %s438 = scalar_lea.vmem [#allocation3], %s437
        %p439 = pneg %p63
        %p440 = pneg %p60
        %s441 = sand.u32 %s76, 1
        %s442 = sand.u32 %s76, 1
        %s443 = smul.addr %s442, 192
        %s444 = scalar_lea.vmem [#allocation4], %s443
        %p445 = pneg %p89
        %p446 = pneg %p86
        %p447 = pneg %p110
        %p448 = pneg %p107
        %p449 = pneg %p131
        %p450 = pneg %p128
        %p451 = pneg %p157
        %p452 = pneg %p154
        %s453 = sand.u32 %s144, 1
        %s454 = sand.u32 %s144, 1
        %s455 = smul.addr %s454, 192
        %s456 = scalar_lea.vmem [#allocation5], %s455
        %s457 = smul.u32 8, %s16
        %s458 = smul.u32 8, %s16
        %s459 = smul.u32 8, %s16
        %s460 = smul.u32 8, %s16
        %v461 = vld [vmem:[%s411] sm:$0xff]
        %v462 = vld [vmem:[%s411 + $0x8] sm:$0xff]
        %v463 = vld [vmem:[%s411 + $0x10] sm:$0xff]
        %v464 = vld [vmem:[%s411 + $0x18] sm:$0xff]
        %v465 = vld [vmem:[%s411 + $0x20] sm:$0xff]
        %v466 = vld [vmem:[%s411 + $0x28] sm:$0xff]
        %v467 = vld [vmem:[%s411 + $0x30] sm:$0xff]
        %v468 = vld [vmem:[%s411 + $0x38] sm:$0xff]
        %v469 = vld [vmem:[%s411 + $0x40] sm:$0xff]
        %v470 = vld [vmem:[%s411 + $0x48] sm:$0xff]
        %v471 = vld [vmem:[%s411 + $0x50] sm:$0xff]
        %v472 = vld [vmem:[%s411 + $0x58] sm:$0xff]
        %v473 = vld [vmem:[%s411 + $0x60] sm:$0xff]
        %v474 = vld [vmem:[%s411 + $0x68] sm:$0xff]
        %v475 = vld [vmem:[%s411 + $0x70] sm:$0xff]
        %v476 = vld [vmem:[%s411 + $0x78] sm:$0xff]
        %v477 = vld [vmem:[%s411 + $0x80] sm:$0xff]
        %v478 = vld [vmem:[%s411 + $0x88] sm:$0xff]
        %v479 = vld [vmem:[%s411 + $0x90] sm:$0xff]
        %v480 = vld [vmem:[%s411 + $0x98] sm:$0xff]
        %v481 = vld [vmem:[%s411 + $0xa0] sm:$0xff]
        %v482 = vld [vmem:[%s411 + $0xa8] sm:$0xff]
        %v483 = vld [vmem:[%s411 + $0xb0] sm:$0xff]
        %v484 = vld [vmem:[%s411 + $0xb8] sm:$0xff]
        %v485 = vld [vmem:[%s418] sm:$0xff]
        %v486 = vld [vmem:[%s418 + $0x8] sm:$0xff]
        %v487 = vld [vmem:[%s418 + $0x10] sm:$0xff]
        %v488 = vld [vmem:[%s418 + $0x18] sm:$0xff]
        %v489 = vld [vmem:[%s418 + $0x20] sm:$0xff]
        %v490 = vld [vmem:[%s418 + $0x28] sm:$0xff]
        %v491 = vld [vmem:[%s418 + $0x30] sm:$0xff]
        %v492 = vld [vmem:[%s418 + $0x38] sm:$0xff]
        %v493 = vld [vmem:[%s418 + $0x40] sm:$0xff]
        %v494 = vld [vmem:[%s418 + $0x48] sm:$0xff]
        %v495 = vld [vmem:[%s418 + $0x50] sm:$0xff]
        %v496 = vld [vmem:[%s418 + $0x58] sm:$0xff]
        %v497 = vld [vmem:[%s418 + $0x60] sm:$0xff]
        %v498 = vld [vmem:[%s418 + $0x68] sm:$0xff]
        %v499 = vld [vmem:[%s418 + $0x70] sm:$0xff]
        %v500 = vld [vmem:[%s418 + $0x78] sm:$0xff]
        %v501 = vld [vmem:[%s418 + $0x80] sm:$0xff]
        %v502 = vld [vmem:[%s418 + $0x88] sm:$0xff]
        %v503 = vld [vmem:[%s418 + $0x90] sm:$0xff]
        %v504 = vld [vmem:[%s418 + $0x98] sm:$0xff]
        %v505 = vld [vmem:[%s418 + $0xa0] sm:$0xff]
        %v506 = vld [vmem:[%s418 + $0xa8] sm:$0xff]
        %v507 = vld [vmem:[%s418 + $0xb0] sm:$0xff]
        %v508 = vld [vmem:[%s418 + $0xb8] sm:$0xff]
        %v509 = vadd.f32 %v461, %v485
        %v510 = vadd.f32 %v462, %v486
        %v511 = vadd.f32 %v463, %v487
        %v512 = vadd.f32 %v464, %v488
        %v513 = vadd.f32 %v465, %v489
        %v514 = vadd.f32 %v466, %v490
        %v515 = vadd.f32 %v467, %v491
        %v516 = vadd.f32 %v468, %v492
        %v517 = vadd.f32 %v469, %v493
        %v518 = vadd.f32 %v470, %v494
        %v519 = vadd.f32 %v471, %v495
        %v520 = vadd.f32 %v472, %v496
        %v521 = vadd.f32 %v473, %v497
        %v522 = vadd.f32 %v474, %v498
        %v523 = vadd.f32 %v475, %v499
        %v524 = vadd.f32 %v476, %v500
        %v525 = vadd.f32 %v477, %v501
        %v526 = vadd.f32 %v478, %v502
        %v527 = vadd.f32 %v479, %v503
        %v528 = vadd.f32 %v480, %v504
        %v529 = vadd.f32 %v481, %v505
        %v530 = vadd.f32 %v482, %v506
        %v531 = vadd.f32 %v483, %v507
        %v532 = vadd.f32 %v484, %v508
        %v533 = vld [vmem:[%s3] sm:$0xff]
        %v534 = vld [vmem:[%s3 + $0x8] sm:$0xff]
        %v535 = vld [vmem:[%s3 + $0x10] sm:$0xff]
        %v536 = vld [vmem:[%s4] sm:$0xff]
        %v537 = vld [vmem:[%s4 + $0x8] sm:$0xff]
        %v538 = vld [vmem:[%s4 + $0x10] sm:$0xff]
        %540 = vset.pattern.permute.xlu0 0
        %541 = vperm.xlu0 %540, %v536
        %v542 = vpop.permute.xlu0 %541
        %545 = vset.pattern.permute.xlu0 0
        %546 = vperm.xlu0 %545, %v537
        %v547 = vpop.permute.xlu0 %546
        %550 = vset.pattern.permute.xlu0 0
        %551 = vperm.xlu0 %550, %v538
        %v552 = vpop.permute.xlu0 %551
        %vm554 = vcmask 195584
        %v556 = vsel %vm554, %v533, 0
        %v559 = vsel %vm554, %v534, 0
        %v562 = vsel %vm554, %v535, 0
        %564 = vmatprep.subr.mxu0 %v510
        %565 = vmatpush1.msra.mxu0 %v509
        %566 = vmatprep.subr.mxu0 %v518
        %567 = vmatpush1.msra.mxu0 %v517
        %568 = vmatprep.subr.mxu0 %v526
        %569 = vmatpush1.msra.mxu0 %v525
        %570 = vmatprep.subr.mxu0 0.0
        %571 = vmatpush1.msra.mxu0 0.0
        %572 = vmatprep.subr.mxu0 0.0
        %573 = vmatpush1.msra.mxu0 0.0
        %574 = vmatprep.subr.mxu0 0.0
        %575 = vmatpush1.msra.mxu0 0.0
        %576 = vmatprep.subr.mxu0 0.0
        %577 = vmatpush1.msra.mxu0 0.0
        %578 = vmatprep.subr.mxu0 0.0
        %579 = vmatpush1.msra.mxu0 0.0
        %580 = vmatprep.subr.mxu0 0.0
        %581 = vmatpush1.msra.mxu0 0.0
        %582 = vmatprep.subr.mxu0 0.0
        %583 = vmatpush1.msra.mxu0 0.0
        %584 = vmatprep.subr.mxu0 0.0
        %585 = vmatpush1.msra.mxu0 0.0
        %586 = vmatprep.subr.mxu0 0.0
        %587 = vmatpush1.msra.mxu0 0.0
        %588 = vmatprep.subr.mxu0 0.0
        %589 = vmatpush1.msra.mxu0 0.0
        %590 = vmatprep.subr.mxu0 0.0
        %591 = vmatpush1.msra.mxu0 0.0
        %592 = vmatprep.subr.mxu0 0.0
        %593 = vmatpush1.msra.mxu0 0.0
        %594 = vmatprep.subr.mxu0 0.0
        %595 = vmatpush1.msra.mxu0 0.0
        %596 = vmatprep.subr.mxu0 0.0
        %597 = vmatpush1.msra.mxu0 0.0
        %598 = vmatprep.subr.mxu0 0.0
        %599 = vmatpush1.msra.mxu0 0.0
        %600 = vmatprep.subr.mxu0 0.0
        %601 = vmatpush1.msra.mxu0 0.0
        %602 = vmatprep.subr.mxu0 0.0
        %603 = vmatpush1.msra.mxu0 0.0
        %604 = vmatprep.subr.mxu0 0.0
        %605 = vmatpush1.msra.mxu0 0.0
        %606 = vmatprep.subr.mxu0 0.0
        %607 = vmatpush1.msra.mxu0 0.0
        %608 = vmatprep.subr.mxu0 0.0
        %609 = vmatpush1.msra.mxu0 0.0
        %610 = vmatprep.subr.mxu0 0.0
        %611 = vmatpush1.msra.mxu0 0.0
        %612 = vmatprep.subr.mxu0 0.0
        %613 = vmatpush1.msra.mxu0 0.0
        %614 = vmatprep.subr.mxu0 0.0
        %615 = vmatpush1.msra.mxu0 0.0
        %616 = vmatprep.subr.mxu0 0.0
        %617 = vmatpush1.msra.mxu0 0.0
        %618 = vmatprep.subr.mxu0 0.0
        %619 = vmatpush1.msra.mxu0 0.0
        %620 = vmatprep.subr.mxu0 0.0
        %621 = vmatpush1.msra.mxu0 0.0
        %622 = vmatprep.subr.mxu0 0.0
        %623 = vmatpush1.msra.mxu0 0.0
        %624 = vmatprep.subr.mxu0 0.0
        %625 = vmatpush1.msra.mxu0 0.0
        %626 = vmatprep.subr.mxu0 0.0
        %627 = vmatpush1.msra.mxu0 0.0
        %628 = vmatprep.mubr.f32.mxu0 0.0
        %629 = vmatmul.mubr.f32.gmra.mrb[0].mxu0 %v556
        %v630 = vpop.f32.mrb[0].mxu0
        %v631 = vadd.f32 %v542, %v630
        %v632 = vpop.f32.mrb[0].mxu0
        %v633 = vadd.f32 %v542, %v632
        %634 = vmatprep.mubr.f32.mxu0 0.0
        %635 = vmatmul.mubr.f32.gmra.mrb[0].mxu0 %v559
        %v636 = vpop.f32.mrb[0].mxu0
        %v637 = vadd.f32 %v547, %v636
        %v638 = vpop.f32.mrb[0].mxu0
        %v639 = vadd.f32 %v547, %v638
        %640 = vmatprep.mubr.f32.mxu0 0.0
        %641 = vmatmul.mubr.f32.gmra.mrb[0].mxu0 %v562
        %v642 = vpop.f32.mrb[0].mxu0
        %v643 = vadd.f32 %v552, %v642
        %v644 = vpop.f32.mrb[0].mxu0
        %v645 = vadd.f32 %v552, %v644
        %646 = vdwg.mxu0
        %647 = vmatprep.subr.mxu0 %v512
        %648 = vmatpush1.msra.mxu0 %v511
        %649 = vmatprep.subr.mxu0 %v520
        %650 = vmatpush1.msra.mxu0 %v519
        %651 = vmatprep.subr.mxu0 %v528
        %652 = vmatpush1.msra.mxu0 %v527
        %653 = vmatprep.subr.mxu0 0.0
        %654 = vmatpush1.msra.mxu0 0.0
        %655 = vmatprep.subr.mxu0 0.0
        %656 = vmatpush1.msra.mxu0 0.0
        %657 = vmatprep.subr.mxu0 0.0
        %658 = vmatpush1.msra.mxu0 0.0
        %659 = vmatprep.subr.mxu0 0.0
        %660 = vmatpush1.msra.mxu0 0.0
        %661 = vmatprep.subr.mxu0 0.0
        %662 = vmatpush1.msra.mxu0 0.0
        %663 = vmatprep.subr.mxu0 0.0
        %664 = vmatpush1.msra.mxu0 0.0
        %665 = vmatprep.subr.mxu0 0.0
        %666 = vmatpush1.msra.mxu0 0.0
        %667 = vmatprep.subr.mxu0 0.0
        %668 = vmatpush1.msra.mxu0 0.0
        %669 = vmatprep.subr.mxu0 0.0
        %670 = vmatpush1.msra.mxu0 0.0
        %671 = vmatprep.subr.mxu0 0.0
        %672 = vmatpush1.msra.mxu0 0.0
        %673 = vmatprep.subr.mxu0 0.0
        %674 = vmatpush1.msra.mxu0 0.0
        %675 = vmatprep.subr.mxu0 0.0
        %676 = vmatpush1.msra.mxu0 0.0
        %677 = vmatprep.subr.mxu0 0.0
        %678 = vmatpush1.msra.mxu0 0.0
        %679 = vmatprep.subr.mxu0 0.0
        %680 = vmatpush1.msra.mxu0 0.0
        %681 = vmatprep.subr.mxu0 0.0
        %682 = vmatpush1.msra.mxu0 0.0
        %683 = vmatprep.subr.mxu0 0.0
        %684 = vmatpush1.msra.mxu0 0.0
        %685 = vmatprep.subr.mxu0 0.0
        %686 = vmatpush1.msra.mxu0 0.0
        %687 = vmatprep.subr.mxu0 0.0
        %688 = vmatpush1.msra.mxu0 0.0
        %689 = vmatprep.subr.mxu0 0.0
        %690 = vmatpush1.msra.mxu0 0.0
        %691 = vmatprep.subr.mxu0 0.0
        %692 = vmatpush1.msra.mxu0 0.0
        %693 = vmatprep.subr.mxu0 0.0
        %694 = vmatpush1.msra.mxu0 0.0
        %695 = vmatprep.subr.mxu0 0.0
        %696 = vmatpush1.msra.mxu0 0.0
        %697 = vmatprep.subr.mxu0 0.0
        %698 = vmatpush1.msra.mxu0 0.0
        %699 = vmatprep.subr.mxu0 0.0
        %700 = vmatpush1.msra.mxu0 0.0
        %701 = vmatprep.subr.mxu0 0.0
        %702 = vmatpush1.msra.mxu0 0.0
        %703 = vmatprep.subr.mxu0 0.0
        %704 = vmatpush1.msra.mxu0 0.0
        %705 = vmatprep.subr.mxu0 0.0
        %706 = vmatpush1.msra.mxu0 0.0
        %707 = vmatprep.subr.mxu0 0.0
        %708 = vmatpush1.msra.mxu0 0.0
        %709 = vmatprep.subr.mxu0 0.0
        %710 = vmatpush1.msra.mxu0 0.0
        %711 = vmatprep.mubr.f32.mxu0 0.0
        %712 = vmatmul.mubr.f32.gmra.mrb[0].mxu0 %v556
        %v713 = vpop.f32.mrb[0].mxu0
        %v714 = vadd.f32 %v542, %v713
        %v715 = vpop.f32.mrb[0].mxu0
        %v716 = vadd.f32 %v542, %v715
        %717 = vmatprep.mubr.f32.mxu0 0.0
        %718 = vmatmul.mubr.f32.gmra.mrb[0].mxu0 %v559
        %v719 = vpop.f32.mrb[0].mxu0
        %v720 = vadd.f32 %v547, %v719
        %v721 = vpop.f32.mrb[0].mxu0
        %v722 = vadd.f32 %v547, %v721
        %723 = vmatprep.mubr.f32.mxu0 0.0
        %724 = vmatmul.mubr.f32.gmra.mrb[0].mxu0 %v562
        %v725 = vpop.f32.mrb[0].mxu0
        %v726 = vadd.f32 %v552, %v725
        %v727 = vpop.f32.mrb[0].mxu0
        %v728 = vadd.f32 %v552, %v727
        %729 = vdwg.mxu0
        %730 = vmatprep.subr.mxu0 %v514
        %731 = vmatpush1.msra.mxu0 %v513
        %732 = vmatprep.subr.mxu0 %v522
        %733 = vmatpush1.msra.mxu0 %v521
        %734 = vmatprep.subr.mxu0 %v530
        %735 = vmatpush1.msra.mxu0 %v529
        %736 = vmatprep.subr.mxu0 0.0
        %737 = vmatpush1.msra.mxu0 0.0
        %738 = vmatprep.subr.mxu0 0.0
        %739 = vmatpush1.msra.mxu0 0.0
        %740 = vmatprep.subr.mxu0 0.0
        %741 = vmatpush1.msra.mxu0 0.0
        %742 = vmatprep.subr.mxu0 0.0
        %743 = vmatpush1.msra.mxu0 0.0
        %744 = vmatprep.subr.mxu0 0.0
        %745 = vmatpush1.msra.mxu0 0.0
        %746 = vmatprep.subr.mxu0 0.0
        %747 = vmatpush1.msra.mxu0 0.0
        %748 = vmatprep.subr.mxu0 0.0
        %749 = vmatpush1.msra.mxu0 0.0
        %750 = vmatprep.subr.mxu0 0.0
        %751 = vmatpush1.msra.mxu0 0.0
        %752 = vmatprep.subr.mxu0 0.0
        %753 = vmatpush1.msra.mxu0 0.0
        %754 = vmatprep.subr.mxu0 0.0
        %755 = vmatpush1.msra.mxu0 0.0
        %756 = vmatprep.subr.mxu0 0.0
        %757 = vmatpush1.msra.mxu0 0.0
        %758 = vmatprep.subr.mxu0 0.0
        %759 = vmatpush1.msra.mxu0 0.0
        %760 = vmatprep.subr.mxu0 0.0
        %761 = vmatpush1.msra.mxu0 0.0
        %762 = vmatprep.subr.mxu0 0.0
        %763 = vmatpush1.msra.mxu0 0.0
        %764 = vmatprep.subr.mxu0 0.0
        %765 = vmatpush1.msra.mxu0 0.0
        %766 = vmatprep.subr.mxu0 0.0
        %767 = vmatpush1.msra.mxu0 0.0
        %768 = vmatprep.subr.mxu0 0.0
        %769 = vmatpush1.msra.mxu0 0.0
        %770 = vmatprep.subr.mxu0 0.0
        %771 = vmatpush1.msra.mxu0 0.0
        %772 = vmatprep.subr.mxu0 0.0
        %773 = vmatpush1.msra.mxu0 0.0
        %774 = vmatprep.subr.mxu0 0.0
        %775 = vmatpush1.msra.mxu0 0.0
        %776 = vmatprep.subr.mxu0 0.0
        %777 = vmatpush1.msra.mxu0 0.0
        %778 = vmatprep.subr.mxu0 0.0
        %779 = vmatpush1.msra.mxu0 0.0
        %780 = vmatprep.subr.mxu0 0.0
        %781 = vmatpush1.msra.mxu0 0.0
        %782 = vmatprep.subr.mxu0 0.0
        %783 = vmatpush1.msra.mxu0 0.0
        %784 = vmatprep.subr.mxu0 0.0
        %785 = vmatpush1.msra.mxu0 0.0
        %786 = vmatprep.subr.mxu0 0.0
        %787 = vmatpush1.msra.mxu0 0.0
        %788 = vmatprep.subr.mxu0 0.0
        %789 = vmatpush1.msra.mxu0 0.0
        %790 = vmatprep.subr.mxu0 0.0
        %791 = vmatpush1.msra.mxu0 0.0
        %792 = vmatprep.subr.mxu0 0.0
        %793 = vmatpush1.msra.mxu0 0.0
        %794 = vmatprep.mubr.f32.mxu0 0.0
        %795 = vmatmul.mubr.f32.gmra.mrb[0].mxu0 %v556
        %v796 = vpop.f32.mrb[0].mxu0
        %v797 = vadd.f32 %v542, %v796
        %v798 = vpop.f32.mrb[0].mxu0
        %v799 = vadd.f32 %v542, %v798
        %800 = vmatprep.mubr.f32.mxu0 0.0
        %801 = vmatmul.mubr.f32.gmra.mrb[0].mxu0 %v559
        %v802 = vpop.f32.mrb[0].mxu0
        %v803 = vadd.f32 %v547, %v802
        %v804 = vpop.f32.mrb[0].mxu0
        %v805 = vadd.f32 %v547, %v804
        %806 = vmatprep.mubr.f32.mxu0 0.0
        %807 = vmatmul.mubr.f32.gmra.mrb[0].mxu0 %v562
        %v808 = vpop.f32.mrb[0].mxu0
        %v809 = vadd.f32 %v552, %v808
        %v810 = vpop.f32.mrb[0].mxu0
        %v811 = vadd.f32 %v552, %v810
        %812 = vdwg.mxu0
        %813 = vmatprep.subr.mxu0 %v516
        %814 = vmatpush1.msra.mxu0 %v515
        %815 = vmatprep.subr.mxu0 %v524
        %816 = vmatpush1.msra.mxu0 %v523
        %817 = vmatprep.subr.mxu0 %v532
        %818 = vmatpush1.msra.mxu0 %v531
        %819 = vmatprep.subr.mxu0 0.0
        %820 = vmatpush1.msra.mxu0 0.0
        %821 = vmatprep.subr.mxu0 0.0
        %822 = vmatpush1.msra.mxu0 0.0
        %823 = vmatprep.subr.mxu0 0.0
        %824 = vmatpush1.msra.mxu0 0.0
        %825 = vmatprep.subr.mxu0 0.0
        %826 = vmatpush1.msra.mxu0 0.0
        %827 = vmatprep.subr.mxu0 0.0
        %828 = vmatpush1.msra.mxu0 0.0
        %829 = vmatprep.subr.mxu0 0.0
        %830 = vmatpush1.msra.mxu0 0.0
        %831 = vmatprep.subr.mxu0 0.0
        %832 = vmatpush1.msra.mxu0 0.0
        %833 = vmatprep.subr.mxu0 0.0
        %834 = vmatpush1.msra.mxu0 0.0
        %835 = vmatprep.subr.mxu0 0.0
        %836 = vmatpush1.msra.mxu0 0.0
        %837 = vmatprep.subr.mxu0 0.0
        %838 = vmatpush1.msra.mxu0 0.0
        %839 = vmatprep.subr.mxu0 0.0
        %840 = vmatpush1.msra.mxu0 0.0
        %841 = vmatprep.subr.mxu0 0.0
        %842 = vmatpush1.msra.mxu0 0.0
        %843 = vmatprep.subr.mxu0 0.0
        %844 = vmatpush1.msra.mxu0 0.0
        %845 = vmatprep.subr.mxu0 0.0
        %846 = vmatpush1.msra.mxu0 0.0
        %847 = vmatprep.subr.mxu0 0.0
        %848 = vmatpush1.msra.mxu0 0.0
        %849 = vmatprep.subr.mxu0 0.0
        %850 = vmatpush1.msra.mxu0 0.0
        %851 = vmatprep.subr.mxu0 0.0
        %852 = vmatpush1.msra.mxu0 0.0
        %853 = vmatprep.subr.mxu0 0.0
        %854 = vmatpush1.msra.mxu0 0.0
        %855 = vmatprep.subr.mxu0 0.0
        %856 = vmatpush1.msra.mxu0 0.0
        %857 = vmatprep.subr.mxu0 0.0
        %858 = vmatpush1.msra.mxu0 0.0
        %859 = vmatprep.subr.mxu0 0.0
        %860 = vmatpush1.msra.mxu0 0.0
        %861 = vmatprep.subr.mxu0 0.0
        %862 = vmatpush1.msra.mxu0 0.0
        %863 = vmatprep.subr.mxu0 0.0
        %864 = vmatpush1.msra.mxu0 0.0
        %865 = vmatprep.subr.mxu0 0.0
        %866 = vmatpush1.msra.mxu0 0.0
        %867 = vmatprep.subr.mxu0 0.0
        %868 = vmatpush1.msra.mxu0 0.0
        %869 = vmatprep.subr.mxu0 0.0
        %870 = vmatpush1.msra.mxu0 0.0
        %871 = vmatprep.subr.mxu0 0.0
        %872 = vmatpush1.msra.mxu0 0.0
        %873 = vmatprep.subr.mxu0 0.0
        %874 = vmatpush1.msra.mxu0 0.0
        %875 = vmatprep.subr.mxu0 0.0
        %876 = vmatpush1.msra.mxu0 0.0
        %877 = vmatprep.mubr.f32.mxu0 0.0
        %878 = vmatmul.mubr.f32.gmra.mrb[0].mxu0 %v556
        %v879 = vpop.f32.mrb[0].mxu0
        %v880 = vadd.f32 %v542, %v879
        %v881 = vpop.f32.mrb[0].mxu0
        %v882 = vadd.f32 %v542, %v881
        %883 = vmatprep.mubr.f32.mxu0 0.0
        %884 = vmatmul.mubr.f32.gmra.mrb[0].mxu0 %v559
        %v885 = vpop.f32.mrb[0].mxu0
        %v886 = vadd.f32 %v547, %v885
        %v887 = vpop.f32.mrb[0].mxu0
        %v888 = vadd.f32 %v547, %v887
        %889 = vmatprep.mubr.f32.mxu0 0.0
        %890 = vmatmul.mubr.f32.gmra.mrb[0].mxu0 %v562
        %v891 = vpop.f32.mrb[0].mxu0
        %v892 = vadd.f32 %v552, %v891
        %v893 = vpop.f32.mrb[0].mxu0
        %v894 = vadd.f32 %v552, %v893
        %895 = vdwg.mxu0
        %v896 = vld [vmem:[%s425] sm:$0xff]
        %v897 = vld [vmem:[%s425 + $0x8] sm:$0xff]
        %v898 = vld [vmem:[%s425 + $0x10] sm:$0xff]
        %v899 = vld [vmem:[%s425 + $0x18] sm:$0xff]
        %v900 = vld [vmem:[%s425 + $0x20] sm:$0xff]
        %v901 = vld [vmem:[%s425 + $0x28] sm:$0xff]
        %v902 = vld [vmem:[%s425 + $0x30] sm:$0xff]
        %v903 = vld [vmem:[%s425 + $0x38] sm:$0xff]
        %v904 = vld [vmem:[%s425 + $0x40] sm:$0xff]
        %v905 = vld [vmem:[%s425 + $0x48] sm:$0xff]
        %v906 = vld [vmem:[%s425 + $0x50] sm:$0xff]
        %v907 = vld [vmem:[%s425 + $0x58] sm:$0xff]
        %v908 = vld [vmem:[%s425 + $0x60] sm:$0xff]
        %v909 = vld [vmem:[%s425 + $0x68] sm:$0xff]
        %v910 = vld [vmem:[%s425 + $0x70] sm:$0xff]
        %v911 = vld [vmem:[%s425 + $0x78] sm:$0xff]
        %v912 = vld [vmem:[%s425 + $0x80] sm:$0xff]
        %v913 = vld [vmem:[%s425 + $0x88] sm:$0xff]
        %v914 = vld [vmem:[%s425 + $0x90] sm:$0xff]
        %v915 = vld [vmem:[%s425 + $0x98] sm:$0xff]
        %v916 = vld [vmem:[%s425 + $0xa0] sm:$0xff]
        %v917 = vld [vmem:[%s425 + $0xa8] sm:$0xff]
        %v918 = vld [vmem:[%s425 + $0xb0] sm:$0xff]
        %v919 = vld [vmem:[%s425 + $0xb8] sm:$0xff]
        %v920 = vadd.f32 %v631, %v896
        %v921 = vadd.f32 %v633, %v897
        %v922 = vadd.f32 %v714, %v898
        %v923 = vadd.f32 %v716, %v899
        %v924 = vadd.f32 %v797, %v900
        %v925 = vadd.f32 %v799, %v901
        %v926 = vadd.f32 %v880, %v902
        %v927 = vadd.f32 %v882, %v903
        %v928 = vadd.f32 %v637, %v904
        %v929 = vadd.f32 %v639, %v905
        %v930 = vadd.f32 %v720, %v906
        %v931 = vadd.f32 %v722, %v907
        %v932 = vadd.f32 %v803, %v908
        %v933 = vadd.f32 %v805, %v909
        %v934 = vadd.f32 %v886, %v910
        %v935 = vadd.f32 %v888, %v911
        %v936 = vadd.f32 %v643, %v912
        %v937 = vadd.f32 %v645, %v913
        %v938 = vadd.f32 %v726, %v914
        %v939 = vadd.f32 %v728, %v915
        %v940 = vadd.f32 %v809, %v916
        %v941 = vadd.f32 %v811, %v917
        %v942 = vadd.f32 %v892, %v918
        %v943 = vadd.f32 %v894, %v919
        %944 = vst [vmem:[%s456] sm:$0xff] %v920
        %945 = vst [vmem:[%s456 + $0x8] sm:$0xff] %v921
        %946 = vst [vmem:[%s456 + $0x10] sm:$0xff] %v922
        %947 = vst [vmem:[%s456 + $0x18] sm:$0xff] %v923
        %948 = vst [vmem:[%s456 + $0x20] sm:$0xff] %v924
        %949 = vst [vmem:[%s456 + $0x28] sm:$0xff] %v925
        %950 = vst [vmem:[%s456 + $0x30] sm:$0xff] %v926
        %951 = vst [vmem:[%s456 + $0x38] sm:$0xff] %v927
        %952 = vst [vmem:[%s456 + $0x40] sm:$0xff] %v928
        %953 = vst [vmem:[%s456 + $0x48] sm:$0xff] %v929
        %954 = vst [vmem:[%s456 + $0x50] sm:$0xff] %v930
        %955 = vst [vmem:[%s456 + $0x58] sm:$0xff] %v931
        %956 = vst [vmem:[%s456 + $0x60] sm:$0xff] %v932
        %957 = vst [vmem:[%s456 + $0x68] sm:$0xff] %v933
        %958 = vst [vmem:[%s456 + $0x70] sm:$0xff] %v934
        %959 = vst [vmem:[%s456 + $0x78] sm:$0xff] %v935
        %960 = vst [vmem:[%s456 + $0x80] sm:$0xff] %v936
        %961 = vst [vmem:[%s456 + $0x88] sm:$0xff] %v937
        %962 = vst [vmem:[%s456 + $0x90] sm:$0xff] %v938
        %963 = vst [vmem:[%s456 + $0x98] sm:$0xff] %v939
        %964 = vst [vmem:[%s456 + $0xa0] sm:$0xff] %v940
        %965 = vst [vmem:[%s456 + $0xa8] sm:$0xff] %v941
        %966 = vst [vmem:[%s456 + $0xb0] sm:$0xff] %v942
        %967 = vst [vmem:[%s456 + $0xb8] sm:$0xff] %v943
        %s968 = sand.u32 %s144, 1
        %s969 = sand.u32 %s144, 1
        %s970 = smul.addr %s969, 192
        %s971 = scalar_lea.vmem [#allocation5], %s970
        // Predicated region
        $region110: #{fmdb_basic_fwd.37} parent=96 // pred_check
          %p972 = pneg %p154
        $region111: #{fmdb_basic_fwd.37} parent=96 // pred_check_branch
          %974 = sbr.rel (%p972) target = $region113
        $region112: #{fmdb_basic_fwd.37} parent=96 // pred_region
          %s975 = smul.u32 8, %s16
          %s976 = smul.addr %s975, 8
          %s977 = scalar_lea.vmem %s5, %s976
          // Predicated region
          $region114: #{fmdb_basic_fwd.37} parent=112 // pred_check
            _
          $region115: #{fmdb_basic_fwd.37} parent=112 // pred_check_branch
            %979 = sbr.rel (0) target = $region117
          $region116: #{fmdb_basic_fwd.37} parent=112 // pred_region
            // Predicated region
            $region118: #{fmdb_basic_fwd.37} parent=116 // pred_check
              _
            $region119: #{fmdb_basic_fwd.37} parent=116 // pred_check_branch
              %981 = sbr.rel (0) target = $region121
            $region120: #{fmdb_basic_fwd.37} parent=116 // pred_region
              loop: start=0, step=1, limit=1
              $region122: #{fmdb_basic_fwd.37} parent=120 // loop_pre_header
                _
              $region123: #{fmdb_basic_fwd.37} parent=120 // loop_header
                %s983 = sphi 0, %s987
                %p984 = scmp.ge.s32.totalorder %s983, 1
                %s988 = sphi %s971, %s971
                %s989 = sphi %s977, %s977
              $region124: #{fmdb_basic_fwd.37} parent=120 // loop_header_branch
                %986 = sbr.rel (%p984) target = $region128
              $region125: #{fmdb_basic_fwd.37} parent=120 // loop_body
                %v990 = vld [vmem:[%s988] sm:$0xff]
                %991 = vst [vmem:[%s989] sm:$0xff] %v990
                %v992 = vld [vmem:[%s988 + $0x8] sm:$0xff]
                %993 = vst [vmem:[%s989 + $0x8] sm:$0xff] %v992
                %v994 = vld [vmem:[%s988 + $0x10] sm:$0xff]
                %995 = vst [vmem:[%s989 + $0x10] sm:$0xff] %v994
                %v996 = vld [vmem:[%s988 + $0x18] sm:$0xff]
                %997 = vst [vmem:[%s989 + $0x18] sm:$0xff] %v996
                %v998 = vld [vmem:[%s988 + $0x20] sm:$0xff]
                %999 = vst [vmem:[%s989 + $0x20] sm:$0xff] %v998
                %v1000 = vld [vmem:[%s988 + $0x28] sm:$0xff]
                %1001 = vst [vmem:[%s989 + $0x28] sm:$0xff] %v1000
                %v1002 = vld [vmem:[%s988 + $0x30] sm:$0xff]
                %1003 = vst [vmem:[%s989 + $0x30] sm:$0xff] %v1002
                %v1004 = vld [vmem:[%s988 + $0x38] sm:$0xff]
                %1005 = vst [vmem:[%s989 + $0x38] sm:$0xff] %v1004
                %v1006 = vld [vmem:[%s988 + $0x40] sm:$0xff]
                %1007 = vst [vmem:[%s989 + $0x80] sm:$0xff] %v1006
                %v1008 = vld [vmem:[%s988 + $0x48] sm:$0xff]
                %1009 = vst [vmem:[%s989 + $0x88] sm:$0xff] %v1008
                %v1010 = vld [vmem:[%s988 + $0x50] sm:$0xff]
                %1011 = vst [vmem:[%s989 + $0x90] sm:$0xff] %v1010
                %v1012 = vld [vmem:[%s988 + $0x58] sm:$0xff]
                %1013 = vst [vmem:[%s989 + $0x98] sm:$0xff] %v1012
                %v1014 = vld [vmem:[%s988 + $0x60] sm:$0xff]
                %1015 = vst [vmem:[%s989 + $0xa0] sm:$0xff] %v1014
                %v1016 = vld [vmem:[%s988 + $0x68] sm:$0xff]
                %1017 = vst [vmem:[%s989 + $0xa8] sm:$0xff] %v1016
                %v1018 = vld [vmem:[%s988 + $0x70] sm:$0xff]
                %1019 = vst [vmem:[%s989 + $0xb0] sm:$0xff] %v1018
                %v1020 = vld [vmem:[%s988 + $0x78] sm:$0xff]
                %1021 = vst [vmem:[%s989 + $0xb8] sm:$0xff] %v1020
                %v1022 = vld [vmem:[%s988 + $0x80] sm:$0xff]
                %1023 = vst [vmem:[%s989 + $0x100] sm:$0xff] %v1022
                %v1024 = vld [vmem:[%s988 + $0x88] sm:$0xff]
                %1025 = vst [vmem:[%s989 + $0x108] sm:$0xff] %v1024
                %v1026 = vld [vmem:[%s988 + $0x90] sm:$0xff]
                %1027 = vst [vmem:[%s989 + $0x110] sm:$0xff] %v1026
                %v1028 = vld [vmem:[%s988 + $0x98] sm:$0xff]
                %1029 = vst [vmem:[%s989 + $0x118] sm:$0xff] %v1028
                %v1030 = vld [vmem:[%s988 + $0xa0] sm:$0xff]
                %1031 = vst [vmem:[%s989 + $0x120] sm:$0xff] %v1030
                %v1032 = vld [vmem:[%s988 + $0xa8] sm:$0xff]
                %1033 = vst [vmem:[%s989 + $0x128] sm:$0xff] %v1032
                %v1034 = vld [vmem:[%s988 + $0xb0] sm:$0xff]
                %1035 = vst [vmem:[%s989 + $0x130] sm:$0xff] %v1034
                %v1036 = vld [vmem:[%s988 + $0xb8] sm:$0xff]
                %1037 = vst [vmem:[%s989 + $0x138] sm:$0xff] %v1036
              $region126: #{fmdb_basic_fwd.37} parent=120 // loop_footer
                %s987 = sadd.s32 1, %s983
              $region127: #{fmdb_basic_fwd.37} parent=120 // loop_footer_branch
                %982 = sbr.rel target = $region123
              $region128: #{fmdb_basic_fwd.37} parent=120 // loop_exit
                _
            $region121: #{fmdb_basic_fwd.37} parent=116 // pred_fallthru
              _
            // Predicated region
            $region129: #{fmdb_basic_fwd.37} parent=116 // pred_check
              _
            $region130: #{fmdb_basic_fwd.37} parent=116 // pred_check_branch
              %1039 = sbr.rel target = $region132
            $region131: #{fmdb_basic_fwd.37} parent=116 // pred_region
              _
            $region132: #{fmdb_basic_fwd.37} parent=116 // pred_fallthru
              _
          $region117: #{fmdb_basic_fwd.37} parent=112 // pred_fallthru
            _
          %1040 = vnop
        $region113: #{fmdb_basic_fwd.37} parent=96 // pred_fallthru
          _
      $region97: #{fmdb_basic_fwd.37} parent=5 // pred_fallthru
        _
      %p1041 = scmp.le.s32.totalorder 2, %s11
      // Predicated region
      $region133: #{fmdb_basic_fwd.37} parent=5 // pred_check
        %p1042 = pneg %p1041
      $region134: #{fmdb_basic_fwd.37} parent=5 // pred_check_branch
        %1044 = sbr.rel (%p1042) target = $region136
      $region135: #{fmdb_basic_fwd.37} parent=5 // pred_region
        %s1045 = ssub.s32 %s11, 2
        // Predicated region
        $region137: #{fmdb_basic_fwd.37} parent=135 // pred_check
          %p1046 = pneg %p160
        $region138: #{fmdb_basic_fwd.37} parent=135 // pred_check_branch
          %1048 = sbr.rel (%p1046) target = $region140
        $region139: #{fmdb_basic_fwd.37} parent=135 // pred_region
          %s1049 = sand.u32 %s145, 1
          %s1050 = sand.u32 %s145, 1
          %s1051 = smul.addr %s1050, 192
          %s1052 = scalar_lea.vmem [#allocation5], %s1051
        $region140: #{fmdb_basic_fwd.37} parent=135 // pred_fallthru
          _
      $region136: #{fmdb_basic_fwd.37} parent=5 // pred_fallthru
        _
    $region6: #{fmdb_basic_fwd.37} parent=1 // loop_footer
      %s15 = sadd.s32 1, %s11
    $region7: #{fmdb_basic_fwd.37} parent=1 // loop_footer_branch
      %10 = sbr.rel target = $region3
    $region8: #{fmdb_basic_fwd.37} parent=1 // loop_exit
      _

// kernel: fmdb_basic_fwd.38
$region0: #{fmdb_basic_fwd.38}
  #allocation0 [shape = 'u32[]', space=smem, size = 0x4, offset = 0x4, fixed_abs, tag = 'smem constant byte address 0x4 - core index']
  #allocation1 [shape = 'u32[144,128]{1,0:T(1,128)}', space=vmem, size = 0x12000, scoped, tag = 'internal scratch']
  %s0 = inlined_call_operand.vmem [shape: f32[24,2048], index: 0, kind: input, shape index: {}]
  %s1 = inlined_call_operand.vmem [shape: f32[24,1], index: 1, kind: input, shape index: {}]
  %s2 = inlined_call_operand.vmem [shape: f32[24,1], index: 2, kind: input, shape index: {}]
  %s3 = inlined_call_operand.vmem [shape: f32[96,24], index: 3, kind: input, shape index: {}]
  %s4 = inlined_call_operand.vmem [shape: f32[96,2048], index: 4, kind: output, shape index: {}]
  %s5 = sld [smem:[#allocation0]]
  $region91: #{fmdb_basic_fwd.38} parent=0
    _
  %s7 = ssub.s32 1, %s5
  %s8 = scalar_select 0, %s7, %s5
  $region1: #{fmdb_basic_fwd.38} parent=0
    #allocation2 [shape = 'u8[196608]{0}', space=vmem, size = 0x30000, scoped, tag = 'input window, operand 0']
    #allocation3 [shape = 'u8[786432]{0}', space=vmem, size = 0xc0000, scoped, tag = 'output window, operand 0']
    loop: start=0, step=1, limit=4
    $region2: #{fmdb_basic_fwd.38} parent=1 // loop_pre_header
      _
    $region3: #{fmdb_basic_fwd.38} parent=1 // loop_header
      %s10 = sphi 0, %s14
      %p11 = scmp.ge.s32.totalorder %s10, 4
      %s20 = sphi 0, %s22
      %s23 = sphi 0, %s20
      %s24 = sphi 0, %s23
      %s40 = sphi 0, %s24
      %s44 = sphi 0, %s44
      %s46 = sphi 0, %s44
      %s47 = sphi 0, %s46
      %s61 = sphi 0, %s47
      %s65 = sphi 0, %s65
      %s67 = sphi 0, %s65
      %s68 = sphi 0, %s67
      %s82 = sphi 0, %s68
      %s86 = sphi 0, %s86
      %s88 = sphi 0, %s86
      %s89 = sphi 0, %s88
      %s103 = sphi 0, %s89
      %s109 = sphi 0, %s111
      %s112 = sphi 0, %s109
      %s113 = sphi 0, %s112
      %s129 = sphi 0, %s113
    $region4: #{fmdb_basic_fwd.38} parent=1 // loop_header_branch
      %13 = sbr.rel (%p11) target = $region8
    $region5: #{fmdb_basic_fwd.38} parent=1 // loop_body
      %s15 = ssub.s32 %s10, 1
      %s16 = ssub.s32 %s10, 2
      %s17 = sadd.s32 %s10, 1
      %s18 = ssub.s32 %s10, %s17
      %p19 = scmp.eq.s32.totalorder %s18, 0
      %s21 = sadd.s32 %s20, 1
      %s22 = scalar_select %p19, %s20, %s21
      %p25 = pneg %p19
      %p26 = scmp.eq.s32.totalorder %s10, 1
      %p27 = por %p25, %p26
      %p28 = scmp.ne.s32.totalorder %s20, %s23
      %p29 = scmp.eq.s32.totalorder %s10, 0
      %p30 = por %p28, %p29
      %p31 = scmp.ne.s32.totalorder %s20, %s23
      %p32 = scmp.eq.s32.totalorder %s15, 1
      %p33 = por %p31, %p32
      %p34 = scmp.ne.s32.totalorder %s23, %s24
      %p35 = scmp.eq.s32.totalorder %s15, 0
      %p36 = por %p34, %p35
      %p37 = scmp.ne.s32.totalorder %s23, %s24
      %p38 = scmp.eq.s32.totalorder %s16, 1
      %p39 = por %p37, %p38
      %p41 = scmp.ne.s32.totalorder %s24, %s40
      %p42 = scmp.eq.s32.totalorder %s16, 0
      %p43 = por %p41, %p42
      %s45 = sadd.s32 %s44, 1
      %p48 = scmp.eq.s32.totalorder %s10, 1
      %p49 = scmp.ne.s32.totalorder %s44, %s46
      %p50 = scmp.eq.s32.totalorder %s10, 0
      %p51 = por %p49, %p50
      %p52 = scmp.ne.s32.totalorder %s44, %s46
      %p53 = scmp.eq.s32.totalorder %s15, 1
      %p54 = por %p52, %p53
      %p55 = scmp.ne.s32.totalorder %s46, %s47
      %p56 = scmp.eq.s32.totalorder %s15, 0
      %p57 = por %p55, %p56
      %p58 = scmp.ne.s32.totalorder %s46, %s47
      %p59 = scmp.eq.s32.totalorder %s16, 1
      %p60 = por %p58, %p59
      %p62 = scmp.ne.s32.totalorder %s47, %s61
      %p63 = scmp.eq.s32.totalorder %s16, 0
      %p64 = por %p62, %p63
      %s66 = sadd.s32 %s65, 1
      %p69 = scmp.eq.s32.totalorder %s10, 1
      %p70 = scmp.ne.s32.totalorder %s65, %s67
      %p71 = scmp.eq.s32.totalorder %s10, 0
      %p72 = por %p70, %p71
      %p73 = scmp.ne.s32.totalorder %s65, %s67
      %p74 = scmp.eq.s32.totalorder %s15, 1
      %p75 = por %p73, %p74
      %p76 = scmp.ne.s32.totalorder %s67, %s68
      %p77 = scmp.eq.s32.totalorder %s15, 0
      %p78 = por %p76, %p77
      %p79 = scmp.ne.s32.totalorder %s67, %s68
      %p80 = scmp.eq.s32.totalorder %s16, 1
      %p81 = por %p79, %p80
      %p83 = scmp.ne.s32.totalorder %s68, %s82
      %p84 = scmp.eq.s32.totalorder %s16, 0
      %p85 = por %p83, %p84
      %s87 = sadd.s32 %s86, 1
      %p90 = scmp.eq.s32.totalorder %s10, 1
      %p91 = scmp.ne.s32.totalorder %s86, %s88
      %p92 = scmp.eq.s32.totalorder %s10, 0
      %p93 = por %p91, %p92
      %p94 = scmp.ne.s32.totalorder %s86, %s88
      %p95 = scmp.eq.s32.totalorder %s15, 1
      %p96 = por %p94, %p95
      %p97 = scmp.ne.s32.totalorder %s88, %s89
      %p98 = scmp.eq.s32.totalorder %s15, 0
      %p99 = por %p97, %p98
      %p100 = scmp.ne.s32.totalorder %s88, %s89
      %p101 = scmp.eq.s32.totalorder %s16, 1
      %p102 = por %p100, %p101
      %p104 = scmp.ne.s32.totalorder %s89, %s103
      %p105 = scmp.eq.s32.totalorder %s16, 0
      %p106 = por %p104, %p105
      %s107 = ssub.s32 %s10, %s17
      %p108 = scmp.eq.s32.totalorder %s107, 0
      %s110 = sadd.s32 %s109, 1
      %s111 = scalar_select %p108, %s109, %s110
      %p114 = pneg %p108
      %p115 = scmp.eq.s32.totalorder %s10, 1
      %p116 = por %p114, %p115
      %p117 = scmp.ne.s32.totalorder %s109, %s112
      %p118 = scmp.eq.s32.totalorder %s10, 0
      %p119 = por %p117, %p118
      %p120 = scmp.ne.s32.totalorder %s109, %s112
      %p121 = scmp.eq.s32.totalorder %s15, 1
      %p122 = por %p120, %p121
      %p123 = scmp.ne.s32.totalorder %s112, %s113
      %p124 = scmp.eq.s32.totalorder %s15, 0
      %p125 = por %p123, %p124
      %p126 = scmp.ne.s32.totalorder %s112, %s113
      %p127 = scmp.eq.s32.totalorder %s16, 1
      %p128 = por %p126, %p127
      %p130 = scmp.ne.s32.totalorder %s113, %s129
      %p131 = scmp.eq.s32.totalorder %s16, 0
      %p132 = por %p130, %p131
      %p133 = scmp.le.s32.totalorder 1, %s10
      %p134 = scmp.lt.s32.totalorder %s10, 3
      %p135 = pnand %p133, %p134
      %p136 = pneg %p135
      // Predicated region
      $region9: #{fmdb_basic_fwd.38} parent=5 // pred_check
        _
      $region10: #{fmdb_basic_fwd.38} parent=5 // pred_check_branch
        %138 = sbr.rel (%p135) target = $region12
      $region11: #{fmdb_basic_fwd.38} parent=5 // pred_region
        %s139 = ssub.s32 %s10, 1
        // Predicated region
        $region13: #{fmdb_basic_fwd.38} parent=11 // pred_check
          %p140 = pneg %p57
        $region14: #{fmdb_basic_fwd.38} parent=11 // pred_check_branch
          %142 = sbr.rel (%p140) target = $region16
        $region15: #{fmdb_basic_fwd.38} parent=11 // pred_region
          _
        $region16: #{fmdb_basic_fwd.38} parent=11 // pred_fallthru
          _
        // Predicated region
        $region17: #{fmdb_basic_fwd.38} parent=11 // pred_check
          %p143 = pneg %p78
        $region18: #{fmdb_basic_fwd.38} parent=11 // pred_check_branch
          %145 = sbr.rel (%p143) target = $region20
        $region19: #{fmdb_basic_fwd.38} parent=11 // pred_region
          _
        $region20: #{fmdb_basic_fwd.38} parent=11 // pred_fallthru
          _
        // Predicated region
        $region21: #{fmdb_basic_fwd.38} parent=11 // pred_check
          %p146 = pneg %p99
        $region22: #{fmdb_basic_fwd.38} parent=11 // pred_check_branch
          %148 = sbr.rel (%p146) target = $region24
        $region23: #{fmdb_basic_fwd.38} parent=11 // pred_region
          _
        $region24: #{fmdb_basic_fwd.38} parent=11 // pred_fallthru
          _
      $region12: #{fmdb_basic_fwd.38} parent=5 // pred_fallthru
        _
      %p149 = scmp.lt.s32.totalorder %s10, 2
      // Predicated region
      $region25: #{fmdb_basic_fwd.38} parent=5 // pred_check
        %p150 = pneg %p149
      $region26: #{fmdb_basic_fwd.38} parent=5 // pred_check_branch
        %152 = sbr.rel (%p150) target = $region28
      $region27: #{fmdb_basic_fwd.38} parent=5 // pred_region
        // Predicated region
        $region29: #{fmdb_basic_fwd.38} parent=27 // pred_check
          %p153 = pneg %p30
        $region30: #{fmdb_basic_fwd.38} parent=27 // pred_check_branch
          %155 = sbr.rel (%p153) target = $region32
        $region31: #{fmdb_basic_fwd.38} parent=27 // pred_region
          %s156 = sand.u32 %s20, 1
          %s157 = sand.u32 %s20, 1
          %s158 = smul.addr %s157, 192
          %s159 = scalar_lea.vmem [#allocation2], %s158
          %s160 = smul.u32 8, %s10
          %s161 = smul.addr %s160, 8
          %s162 = scalar_lea.vmem %s0, %s161
          // Predicated region
          $region33: #{fmdb_basic_fwd.38} parent=31 // pred_check
            _
          $region34: #{fmdb_basic_fwd.38} parent=31 // pred_check_branch
            %164 = sbr.rel (0) target = $region36
          $region35: #{fmdb_basic_fwd.38} parent=31 // pred_region
            // Predicated region
            $region37: #{fmdb_basic_fwd.38} parent=35 // pred_check
              _
            $region38: #{fmdb_basic_fwd.38} parent=35 // pred_check_branch
              %166 = sbr.rel (0) target = $region40
            $region39: #{fmdb_basic_fwd.38} parent=35 // pred_region
              loop: start=0, step=1, limit=1
              $region41: #{fmdb_basic_fwd.38} parent=39 // loop_pre_header
                _
              $region42: #{fmdb_basic_fwd.38} parent=39 // loop_header
                %s168 = sphi 0, %s172
                %p169 = scmp.ge.s32.totalorder %s168, 1
                %s173 = sphi %s162, %s162
                %s174 = sphi %s159, %s159
              $region43: #{fmdb_basic_fwd.38} parent=39 // loop_header_branch
                %171 = sbr.rel (%p169) target = $region47
              $region44: #{fmdb_basic_fwd.38} parent=39 // loop_body
                %v175 = vld [vmem:[%s173] sm:$0xff]
                %176 = vst [vmem:[%s174] sm:$0xff] %v175
                %v177 = vld [vmem:[%s173 + $0x8] sm:$0xff]
                %178 = vst [vmem:[%s174 + $0x8] sm:$0xff] %v177
                %v179 = vld [vmem:[%s173 + $0x10] sm:$0xff]
                %180 = vst [vmem:[%s174 + $0x10] sm:$0xff] %v179
                %v181 = vld [vmem:[%s173 + $0x18] sm:$0xff]
                %182 = vst [vmem:[%s174 + $0x18] sm:$0xff] %v181
                %v183 = vld [vmem:[%s173 + $0x20] sm:$0xff]
                %184 = vst [vmem:[%s174 + $0x20] sm:$0xff] %v183
                %v185 = vld [vmem:[%s173 + $0x28] sm:$0xff]
                %186 = vst [vmem:[%s174 + $0x28] sm:$0xff] %v185
                %v187 = vld [vmem:[%s173 + $0x30] sm:$0xff]
                %188 = vst [vmem:[%s174 + $0x30] sm:$0xff] %v187
                %v189 = vld [vmem:[%s173 + $0x38] sm:$0xff]
                %190 = vst [vmem:[%s174 + $0x38] sm:$0xff] %v189
                %v191 = vld [vmem:[%s173 + $0x80] sm:$0xff]
                %192 = vst [vmem:[%s174 + $0x40] sm:$0xff] %v191
                %v193 = vld [vmem:[%s173 + $0x88] sm:$0xff]
                %194 = vst [vmem:[%s174 + $0x48] sm:$0xff] %v193
                %v195 = vld [vmem:[%s173 + $0x90] sm:$0xff]
                %196 = vst [vmem:[%s174 + $0x50] sm:$0xff] %v195
                %v197 = vld [vmem:[%s173 + $0x98] sm:$0xff]
                %198 = vst [vmem:[%s174 + $0x58] sm:$0xff] %v197
                %v199 = vld [vmem:[%s173 + $0xa0] sm:$0xff]
                %200 = vst [vmem:[%s174 + $0x60] sm:$0xff] %v199
                %v201 = vld [vmem:[%s173 + $0xa8] sm:$0xff]
                %202 = vst [vmem:[%s174 + $0x68] sm:$0xff] %v201
                %v203 = vld [vmem:[%s173 + $0xb0] sm:$0xff]
                %204 = vst [vmem:[%s174 + $0x70] sm:$0xff] %v203
                %v205 = vld [vmem:[%s173 + $0xb8] sm:$0xff]
                %206 = vst [vmem:[%s174 + $0x78] sm:$0xff] %v205
                %v207 = vld [vmem:[%s173 + $0x100] sm:$0xff]
                %208 = vst [vmem:[%s174 + $0x80] sm:$0xff] %v207
                %v209 = vld [vmem:[%s173 + $0x108] sm:$0xff]
                %210 = vst [vmem:[%s174 + $0x88] sm:$0xff] %v209
                %v211 = vld [vmem:[%s173 + $0x110] sm:$0xff]
                %212 = vst [vmem:[%s174 + $0x90] sm:$0xff] %v211
                %v213 = vld [vmem:[%s173 + $0x118] sm:$0xff]
                %214 = vst [vmem:[%s174 + $0x98] sm:$0xff] %v213
                %v215 = vld [vmem:[%s173 + $0x120] sm:$0xff]
                %216 = vst [vmem:[%s174 + $0xa0] sm:$0xff] %v215
                %v217 = vld [vmem:[%s173 + $0x128] sm:$0xff]
                %218 = vst [vmem:[%s174 + $0xa8] sm:$0xff] %v217
                %v219 = vld [vmem:[%s173 + $0x130] sm:$0xff]
                %220 = vst [vmem:[%s174 + $0xb0] sm:$0xff] %v219
                %v221 = vld [vmem:[%s173 + $0x138] sm:$0xff]
                %222 = vst [vmem:[%s174 + $0xb8] sm:$0xff] %v221
              $region45: #{fmdb_basic_fwd.38} parent=39 // loop_footer
                %s172 = sadd.s32 1, %s168
              $region46: #{fmdb_basic_fwd.38} parent=39 // loop_footer_branch
                %167 = sbr.rel target = $region42
              $region47: #{fmdb_basic_fwd.38} parent=39 // loop_exit
                _
            $region40: #{fmdb_basic_fwd.38} parent=35 // pred_fallthru
              _
            // Predicated region
            $region48: #{fmdb_basic_fwd.38} parent=35 // pred_check
              _
            $region49: #{fmdb_basic_fwd.38} parent=35 // pred_check_branch
              %224 = sbr.rel target = $region51
            $region50: #{fmdb_basic_fwd.38} parent=35 // pred_region
              _
            $region51: #{fmdb_basic_fwd.38} parent=35 // pred_fallthru
              _
          $region36: #{fmdb_basic_fwd.38} parent=31 // pred_fallthru
            _
          %225 = vnop
        $region32: #{fmdb_basic_fwd.38} parent=27 // pred_fallthru
          _
      $region28: #{fmdb_basic_fwd.38} parent=5 // pred_fallthru
        _
      %p226 = scmp.le.s32.totalorder 1, %s10
      %p227 = scmp.lt.s32.totalorder %s10, 3
      %p228 = pnand %p226, %p227
      %p229 = pneg %p228
      // Predicated region
      $region52: #{fmdb_basic_fwd.38} parent=5 // pred_check
        _
      $region53: #{fmdb_basic_fwd.38} parent=5 // pred_check_branch
        %231 = sbr.rel (%p228) target = $region55
      $region54: #{fmdb_basic_fwd.38} parent=5 // pred_region
        %s232 = ssub.s32 %s10, 1
        %s233 = sand.u32 %s23, 1
        %s234 = sand.u32 %s23, 1
        %s235 = smul.addr %s234, 192
        %s236 = scalar_lea.vmem [#allocation2], %s235
        // Predicated region
        $region56: #{fmdb_basic_fwd.38} parent=54 // pred_check
          %p237 = pneg %p36
        $region57: #{fmdb_basic_fwd.38} parent=54 // pred_check_branch
          %239 = sbr.rel (%p237) target = $region59
        $region58: #{fmdb_basic_fwd.38} parent=54 // pred_region
          _
        $region59: #{fmdb_basic_fwd.38} parent=54 // pred_fallthru
          _
        %s240 = sand.u32 %s23, 1
        %s241 = sand.u32 %s23, 1
        %s242 = smul.addr %s241, 192
        %s243 = scalar_lea.vmem [#allocation2], %s242
        %p244 = pneg %p36
        %p245 = pneg %p33
        %p246 = pneg %p57
        %p247 = pneg %p54
        %p248 = pneg %p78
        %p249 = pneg %p75
        %p250 = pneg %p99
        %p251 = pneg %p96
        %p252 = pneg %p125
        %p253 = pneg %p122
        %s254 = sand.u32 %s112, 1
        %s255 = sand.u32 %s112, 1
        %s256 = smul.addr %s255, 768
        %s257 = scalar_lea.vmem [#allocation3], %s256
        %s258 = smul.u32 8, %s15
        %s259 = smul.u32 8, %s15
        %v260 = vld [vmem:[%s236] sm:$0xff]
        %v261 = vld [vmem:[%s236 + $0x8] sm:$0xff]
        %v262 = vld [vmem:[%s236 + $0x10] sm:$0xff]
        %v263 = vld [vmem:[%s236 + $0x18] sm:$0xff]
        %v264 = vld [vmem:[%s236 + $0x20] sm:$0xff]
        %v265 = vld [vmem:[%s236 + $0x28] sm:$0xff]
        %v266 = vld [vmem:[%s236 + $0x30] sm:$0xff]
        %v267 = vld [vmem:[%s236 + $0x38] sm:$0xff]
        %v268 = vld [vmem:[%s236 + $0x40] sm:$0xff]
        %v269 = vld [vmem:[%s236 + $0x48] sm:$0xff]
        %v270 = vld [vmem:[%s236 + $0x50] sm:$0xff]
        %v271 = vld [vmem:[%s236 + $0x58] sm:$0xff]
        %v272 = vld [vmem:[%s236 + $0x60] sm:$0xff]
        %v273 = vld [vmem:[%s236 + $0x68] sm:$0xff]
        %v274 = vld [vmem:[%s236 + $0x70] sm:$0xff]
        %v275 = vld [vmem:[%s236 + $0x78] sm:$0xff]
        %v276 = vld [vmem:[%s236 + $0x80] sm:$0xff]
        %v277 = vld [vmem:[%s236 + $0x88] sm:$0xff]
        %v278 = vld [vmem:[%s236 + $0x90] sm:$0xff]
        %v279 = vld [vmem:[%s236 + $0x98] sm:$0xff]
        %v280 = vld [vmem:[%s236 + $0xa0] sm:$0xff]
        %v281 = vld [vmem:[%s236 + $0xa8] sm:$0xff]
        %v282 = vld [vmem:[%s236 + $0xb0] sm:$0xff]
        %v283 = vld [vmem:[%s236 + $0xb8] sm:$0xff]
        %v284 = vadd.f32 %v260, %v268
        %v285 = vadd.f32 %v284, %v276
        %v286 = vrot.slane %v285, 4
        %v287 = vadd.f32 %v285, %v286
        %v288 = vrot.slane %v287, 2
        %v289 = vadd.f32 %v287, %v288
        %v290 = vrot.slane %v289, 1
        %v291 = vadd.f32 %v289, %v290
        %v292 = vadd.f32 %v261, %v269
        %v293 = vadd.f32 %v292, %v277
        %v294 = vrot.slane %v293, 4
        %v295 = vadd.f32 %v293, %v294
        %v296 = vrot.slane %v295, 2
        %v297 = vadd.f32 %v295, %v296
        %v298 = vrot.slane %v297, 1
        %v299 = vadd.f32 %v297, %v298
        %v300 = vadd.f32 %v262, %v270
        %v301 = vadd.f32 %v300, %v278
        %v302 = vrot.slane %v301, 4
        %v303 = vadd.f32 %v301, %v302
        %v304 = vrot.slane %v303, 2
        %v305 = vadd.f32 %v303, %v304
        %v306 = vrot.slane %v305, 1
        %v307 = vadd.f32 %v305, %v306
        %v308 = vadd.f32 %v263, %v271
        %v309 = vadd.f32 %v308, %v279
        %v310 = vrot.slane %v309, 4
        %v311 = vadd.f32 %v309, %v310
        %v312 = vrot.slane %v311, 2
        %v313 = vadd.f32 %v311, %v312
        %v314 = vrot.slane %v313, 1
        %v315 = vadd.f32 %v313, %v314
        %v316 = vadd.f32 %v264, %v272
        %v317 = vadd.f32 %v316, %v280
        %v318 = vrot.slane %v317, 4
        %v319 = vadd.f32 %v317, %v318
        %v320 = vrot.slane %v319, 2
        %v321 = vadd.f32 %v319, %v320
        %v322 = vrot.slane %v321, 1
        %v323 = vadd.f32 %v321, %v322
        %v324 = vadd.f32 %v265, %v273
        %v325 = vadd.f32 %v324, %v281
        %v326 = vrot.slane %v325, 4
        %v327 = vadd.f32 %v325, %v326
        %v328 = vrot.slane %v327, 2
        %v329 = vadd.f32 %v327, %v328
        %v330 = vrot.slane %v329, 1
        %v331 = vadd.f32 %v329, %v330
        %v332 = vadd.f32 %v266, %v274
        %v333 = vadd.f32 %v332, %v282
        %v334 = vrot.slane %v333, 4
        %v335 = vadd.f32 %v333, %v334
        %v336 = vrot.slane %v335, 2
        %v337 = vadd.f32 %v335, %v336
        %v338 = vrot.slane %v337, 1
        %v339 = vadd.f32 %v337, %v338
        %v340 = vadd.f32 %v267, %v275
        %v341 = vadd.f32 %v340, %v283
        %v342 = vrot.slane %v341, 4
        %v343 = vadd.f32 %v341, %v342
        %v344 = vrot.slane %v343, 2
        %v345 = vadd.f32 %v343, %v344
        %v346 = vrot.slane %v345, 1
        %v347 = vadd.f32 %v345, %v346
        %v348 = vrcp.pop 24.0
        %v349 = vmul.f32 %v291, %v348
        %v350 = vmul.f32 %v299, %v348
        %v351 = vmul.f32 %v307, %v348
        %v352 = vmul.f32 %v315, %v348
        %v353 = vmul.f32 %v323, %v348
        %v354 = vmul.f32 %v331, %v348
        %v355 = vmul.f32 %v339, %v348
        %v356 = vmul.f32 %v347, %v348
        %v357 = vsub.f32 %v260, %v349
        %v358 = vsub.f32 %v261, %v350
        %v359 = vsub.f32 %v262, %v351
        %v360 = vsub.f32 %v263, %v352
        %v361 = vsub.f32 %v264, %v353
        %v362 = vsub.f32 %v265, %v354
        %v363 = vsub.f32 %v266, %v355
        %v364 = vsub.f32 %v267, %v356
        %v365 = vsub.f32 %v268, %v349
        %v366 = vsub.f32 %v269, %v350
        %v367 = vsub.f32 %v270, %v351
        %v368 = vsub.f32 %v271, %v352
        %v369 = vsub.f32 %v272, %v353
        %v370 = vsub.f32 %v273, %v354
        %v371 = vsub.f32 %v274, %v355
        %v372 = vsub.f32 %v275, %v356
        %v373 = vsub.f32 %v276, %v349
        %v374 = vsub.f32 %v277, %v350
        %v375 = vsub.f32 %v278, %v351
        %v376 = vsub.f32 %v279, %v352
        %v377 = vsub.f32 %v280, %v353
        %v378 = vsub.f32 %v281, %v354
        %v379 = vsub.f32 %v282, %v355
        %v380 = vsub.f32 %v283, %v356
        %v381 = vmul.f32 %v357, %v357
        %v382 = vmul.f32 %v358, %v358
        %v383 = vmul.f32 %v359, %v359
        %v384 = vmul.f32 %v360, %v360
        %v385 = vmul.f32 %v361, %v361
        %v386 = vmul.f32 %v362, %v362
        %v387 = vmul.f32 %v363, %v363
        %v388 = vmul.f32 %v364, %v364
        %v389 = vmul.f32 %v365, %v365
        %v390 = vmul.f32 %v366, %v366
        %v391 = vmul.f32 %v367, %v367
        %v392 = vmul.f32 %v368, %v368
        %v393 = vmul.f32 %v369, %v369
        %v394 = vmul.f32 %v370, %v370
        %v395 = vmul.f32 %v371, %v371
        %v396 = vmul.f32 %v372, %v372
        %v397 = vmul.f32 %v373, %v373
        %v398 = vmul.f32 %v374, %v374
        %v399 = vmul.f32 %v375, %v375
        %v400 = vmul.f32 %v376, %v376
        %v401 = vmul.f32 %v377, %v377
        %v402 = vmul.f32 %v378, %v378
        %v403 = vmul.f32 %v379, %v379
        %v404 = vmul.f32 %v380, %v380
        %v405 = vadd.f32 %v381, %v389
        %v406 = vadd.f32 %v405, %v397
        %v407 = vrot.slane %v406, 4
        %v408 = vadd.f32 %v406, %v407
        %v409 = vrot.slane %v408, 2
        %v410 = vadd.f32 %v408, %v409
        %v411 = vrot.slane %v410, 1
        %v412 = vadd.f32 %v410, %v411
        %v413 = vadd.f32 %v382, %v390
        %v414 = vadd.f32 %v413, %v398
        %v415 = vrot.slane %v414, 4
        %v416 = vadd.f32 %v414, %v415
        %v417 = vrot.slane %v416, 2
        %v418 = vadd.f32 %v416, %v417
        %v419 = vrot.slane %v418, 1
        %v420 = vadd.f32 %v418, %v419
        %v421 = vadd.f32 %v383, %v391
        %v422 = vadd.f32 %v421, %v399
        %v423 = vrot.slane %v422, 4
        %v424 = vadd.f32 %v422, %v423
        %v425 = vrot.slane %v424, 2
        %v426 = vadd.f32 %v424, %v425
        %v427 = vrot.slane %v426, 1
        %v428 = vadd.f32 %v426, %v427
        %v429 = vadd.f32 %v384, %v392
        %v430 = vadd.f32 %v429, %v400
        %v431 = vrot.slane %v430, 4
        %v432 = vadd.f32 %v430, %v431
        %v433 = vrot.slane %v432, 2
        %v434 = vadd.f32 %v432, %v433
        %v435 = vrot.slane %v434, 1
        %v436 = vadd.f32 %v434, %v435
        %v437 = vadd.f32 %v385, %v393
        %v438 = vadd.f32 %v437, %v401
        %v439 = vrot.slane %v438, 4
        %v440 = vadd.f32 %v438, %v439
        %v441 = vrot.slane %v440, 2
        %v442 = vadd.f32 %v440, %v441
        %v443 = vrot.slane %v442, 1
        %v444 = vadd.f32 %v442, %v443
        %v445 = vadd.f32 %v386, %v394
        %v446 = vadd.f32 %v445, %v402
        %v447 = vrot.slane %v446, 4
        %v448 = vadd.f32 %v446, %v447
        %v449 = vrot.slane %v448, 2
        %v450 = vadd.f32 %v448, %v449
        %v451 = vrot.slane %v450, 1
        %v452 = vadd.f32 %v450, %v451
        %v453 = vadd.f32 %v387, %v395
        %v454 = vadd.f32 %v453, %v403
        %v455 = vrot.slane %v454, 4
        %v456 = vadd.f32 %v454, %v455
        %v457 = vrot.slane %v456, 2
        %v458 = vadd.f32 %v456, %v457
        %v459 = vrot.slane %v458, 1
        %v460 = vadd.f32 %v458, %v459
        %v461 = vadd.f32 %v388, %v396
        %v462 = vadd.f32 %v461, %v404
        %v463 = vrot.slane %v462, 4
        %v464 = vadd.f32 %v462, %v463
        %v465 = vrot.slane %v464, 2
        %v466 = vadd.f32 %v464, %v465
        %v467 = vrot.slane %v466, 1
        %v468 = vadd.f32 %v466, %v467
        %v469 = vmul.f32 %v412, %v348
        %v470 = vmul.f32 %v420, %v348
        %v471 = vmul.f32 %v428, %v348
        %v472 = vmul.f32 %v436, %v348
        %v473 = vmul.f32 %v444, %v348
        %v474 = vmul.f32 %v452, %v348
        %v475 = vmul.f32 %v460, %v348
        %v476 = vmul.f32 %v468, %v348
        %v477 = vadd.f32 %v469, 1e-05
        %v478 = vadd.f32 %v470, 1e-05
        %v479 = vadd.f32 %v471, 1e-05
        %v480 = vadd.f32 %v472, 1e-05
        %v481 = vadd.f32 %v473, 1e-05
        %v482 = vadd.f32 %v474, 1e-05
        %v483 = vadd.f32 %v475, 1e-05
        %v484 = vadd.f32 %v476, 1e-05
        %v485 = vrsqrt.pop %v477
        %v486 = vrsqrt.pop %v478
        %v487 = vrsqrt.pop %v479
        %v488 = vrsqrt.pop %v480
        %v489 = vrsqrt.pop %v481
        %v490 = vrsqrt.pop %v482
        %v491 = vrsqrt.pop %v483
        %v492 = vrsqrt.pop %v484
        %v493 = vmul.f32 %v357, %v485
        %v494 = vmul.f32 %v358, %v486
        %v495 = vmul.f32 %v359, %v487
        %v496 = vmul.f32 %v360, %v488
        %v497 = vmul.f32 %v361, %v489
        %v498 = vmul.f32 %v362, %v490
        %v499 = vmul.f32 %v363, %v491
        %v500 = vmul.f32 %v364, %v492
        %v501 = vmul.f32 %v365, %v485
        %v502 = vmul.f32 %v366, %v486
        %v503 = vmul.f32 %v367, %v487
        %v504 = vmul.f32 %v368, %v488
        %v505 = vmul.f32 %v369, %v489
        %v506 = vmul.f32 %v370, %v490
        %v507 = vmul.f32 %v371, %v491
        %v508 = vmul.f32 %v372, %v492
        %v509 = vmul.f32 %v373, %v485
        %v510 = vmul.f32 %v374, %v486
        %v511 = vmul.f32 %v375, %v487
        %v512 = vmul.f32 %v376, %v488
        %v513 = vmul.f32 %v377, %v489
        %v514 = vmul.f32 %v378, %v490
        %v515 = vmul.f32 %v379, %v491
        %v516 = vmul.f32 %v380, %v492
        %v517 = vld [vmem:[%s1] sm:$0xff]
        %v518 = vld [vmem:[%s1 + $0x8] sm:$0xff]
        %v519 = vld [vmem:[%s1 + $0x10] sm:$0xff]
        %521 = vset.pattern.permute.xlu0 0
        %522 = vperm.xlu0 %521, %v517
        %v523 = vpop.permute.xlu0 %522
        %526 = vset.pattern.permute.xlu0 0
        %527 = vperm.xlu0 %526, %v518
        %v528 = vpop.permute.xlu0 %527
        %531 = vset.pattern.permute.xlu0 0
        %532 = vperm.xlu0 %531, %v519
        %v533 = vpop.permute.xlu0 %532
        %v535 = vmul.f32 %v493, %v523
        %v536 = vmul.f32 %v494, %v523
        %v537 = vmul.f32 %v495, %v523
        %v538 = vmul.f32 %v496, %v523
        %v539 = vmul.f32 %v497, %v523
        %v540 = vmul.f32 %v498, %v523
        %v541 = vmul.f32 %v499, %v523
        %v542 = vmul.f32 %v500, %v523
        %v543 = vmul.f32 %v501, %v528
        %v544 = vmul.f32 %v502, %v528
        %v545 = vmul.f32 %v503, %v528
        %v546 = vmul.f32 %v504, %v528
        %v547 = vmul.f32 %v505, %v528
        %v548 = vmul.f32 %v506, %v528
        %v549 = vmul.f32 %v507, %v528
        %v550 = vmul.f32 %v508, %v528
        %v551 = vmul.f32 %v509, %v533
        %v552 = vmul.f32 %v510, %v533
        %v553 = vmul.f32 %v511, %v533
        %v554 = vmul.f32 %v512, %v533
        %v555 = vmul.f32 %v513, %v533
        %v556 = vmul.f32 %v514, %v533
        %v557 = vmul.f32 %v515, %v533
        %v558 = vmul.f32 %v516, %v533
        %v559 = vld [vmem:[%s2] sm:$0xff]
        %v560 = vld [vmem:[%s2 + $0x8] sm:$0xff]
        %v561 = vld [vmem:[%s2 + $0x10] sm:$0xff]
        %563 = vset.pattern.permute.xlu0 0
        %564 = vperm.xlu0 %563, %v559
        %v565 = vpop.permute.xlu0 %564
        %568 = vset.pattern.permute.xlu0 0
        %569 = vperm.xlu0 %568, %v560
        %v570 = vpop.permute.xlu0 %569
        %573 = vset.pattern.permute.xlu0 0
        %574 = vperm.xlu0 %573, %v561
        %v575 = vpop.permute.xlu0 %574
        %v577 = vadd.f32 %v535, %v565
        %v578 = vadd.f32 %v536, %v565
        %v579 = vadd.f32 %v537, %v565
        %v580 = vadd.f32 %v538, %v565
        %v581 = vadd.f32 %v539, %v565
        %v582 = vadd.f32 %v540, %v565
        %v583 = vadd.f32 %v541, %v565
        %v584 = vadd.f32 %v542, %v565
        %v585 = vadd.f32 %v543, %v570
        %v586 = vadd.f32 %v544, %v570
        %v587 = vadd.f32 %v545, %v570
        %v588 = vadd.f32 %v546, %v570
        %v589 = vadd.f32 %v547, %v570
        %v590 = vadd.f32 %v548, %v570
        %v591 = vadd.f32 %v549, %v570
        %v592 = vadd.f32 %v550, %v570
        %v593 = vadd.f32 %v551, %v575
        %v594 = vadd.f32 %v552, %v575
        %v595 = vadd.f32 %v553, %v575
        %v596 = vadd.f32 %v554, %v575
        %v597 = vadd.f32 %v555, %v575
        %v598 = vadd.f32 %v556, %v575
        %v599 = vadd.f32 %v557, %v575
        %v600 = vadd.f32 %v558, %v575
        %v601 = vld [vmem:[%s3] sm:$0xff]
        %v602 = vld [vmem:[%s3 + $0x8] sm:$0xff]
        %v603 = vld [vmem:[%s3 + $0x10] sm:$0xff]
        %v604 = vld [vmem:[%s3 + $0x18] sm:$0xff]
        %v605 = vld [vmem:[%s3 + $0x20] sm:$0xff]
        %v606 = vld [vmem:[%s3 + $0x28] sm:$0xff]
        %v607 = vld [vmem:[%s3 + $0x30] sm:$0xff]
        %v608 = vld [vmem:[%s3 + $0x38] sm:$0xff]
        %v609 = vld [vmem:[%s3 + $0x40] sm:$0xff]
        %v610 = vld [vmem:[%s3 + $0x48] sm:$0xff]
        %v611 = vld [vmem:[%s3 + $0x50] sm:$0xff]
        %v612 = vld [vmem:[%s3 + $0x58] sm:$0xff]
        %vm613 = vcmask 195584
        %v615 = vsel %vm613, %v601, 0
        %v618 = vsel %vm613, %v602, 0
        %v621 = vsel %vm613, %v603, 0
        %v624 = vsel %vm613, %v604, 0
        %v627 = vsel %vm613, %v605, 0
        %v630 = vsel %vm613, %v606, 0
        %v633 = vsel %vm613, %v607, 0
        %v636 = vsel %vm613, %v608, 0
        %v639 = vsel %vm613, %v609, 0
        %v642 = vsel %vm613, %v610, 0
        %v645 = vsel %vm613, %v611, 0
        %v648 = vsel %vm613, %v612, 0
        %650 = vmatprep.subr.mxu0 %v578
        %651 = vmatpush1.msra.mxu0 %v577
        %652 = vmatprep.subr.mxu0 %v586
        %653 = vmatpush1.msra.mxu0 %v585
        %654 = vmatprep.subr.mxu0 %v594
        %655 = vmatpush1.msra.mxu0 %v593
        %656 = vmatprep.subr.mxu0 0.0
        %657 = vmatpush1.msra.mxu0 0.0
        %658 = vmatprep.subr.mxu0 0.0
        %659 = vmatpush1.msra.mxu0 0.0
        %660 = vmatprep.subr.mxu0 0.0
        %661 = vmatpush1.msra.mxu0 0.0
        %662 = vmatprep.subr.mxu0 0.0
        %663 = vmatpush1.msra.mxu0 0.0
        %664 = vmatprep.subr.mxu0 0.0
        %665 = vmatpush1.msra.mxu0 0.0
        %666 = vmatprep.subr.mxu0 0.0
        %667 = vmatpush1.msra.mxu0 0.0
        %668 = vmatprep.subr.mxu0 0.0
        %669 = vmatpush1.msra.mxu0 0.0
        %670 = vmatprep.subr.mxu0 0.0
        %671 = vmatpush1.msra.mxu0 0.0
        %672 = vmatprep.subr.mxu0 0.0
        %673 = vmatpush1.msra.mxu0 0.0
        %674 = vmatprep.subr.mxu0 0.0
        %675 = vmatpush1.msra.mxu0 0.0
        %676 = vmatprep.subr.mxu0 0.0
        %677 = vmatpush1.msra.mxu0 0.0
        %678 = vmatprep.subr.mxu0 0.0
        %679 = vmatpush1.msra.mxu0 0.0
        %680 = vmatprep.subr.mxu0 0.0
        %681 = vmatpush1.msra.mxu0 0.0
        %682 = vmatprep.subr.mxu0 0.0
        %683 = vmatpush1.msra.mxu0 0.0
        %684 = vmatprep.subr.mxu0 0.0
        %685 = vmatpush1.msra.mxu0 0.0
        %686 = vmatprep.subr.mxu0 0.0
        %687 = vmatpush1.msra.mxu0 0.0
        %688 = vmatprep.subr.mxu0 0.0
        %689 = vmatpush1.msra.mxu0 0.0
        %690 = vmatprep.subr.mxu0 0.0
        %691 = vmatpush1.msra.mxu0 0.0
        %692 = vmatprep.subr.mxu0 0.0
        %693 = vmatpush1.msra.mxu0 0.0
        %694 = vmatprep.subr.mxu0 0.0
        %695 = vmatpush1.msra.mxu0 0.0
        %696 = vmatprep.subr.mxu0 0.0
        %697 = vmatpush1.msra.mxu0 0.0
        %698 = vmatprep.subr.mxu0 0.0
        %699 = vmatpush1.msra.mxu0 0.0
        %700 = vmatprep.subr.mxu0 0.0
        %701 = vmatpush1.msra.mxu0 0.0
        %702 = vmatprep.subr.mxu0 0.0
        %703 = vmatpush1.msra.mxu0 0.0
        %704 = vmatprep.subr.mxu0 0.0
        %705 = vmatpush1.msra.mxu0 0.0
        %706 = vmatprep.subr.mxu0 0.0
        %707 = vmatpush1.msra.mxu0 0.0
        %708 = vmatprep.subr.mxu0 0.0
        %709 = vmatpush1.msra.mxu0 0.0
        %710 = vmatprep.subr.mxu0 0.0
        %711 = vmatpush1.msra.mxu0 0.0
        %712 = vmatprep.subr.mxu0 0.0
        %713 = vmatpush1.msra.mxu0 0.0
        %714 = vmatprep.mubr.f32.mxu0 0.0
        %715 = vmatmul.mubr.f32.gmra.mrb[0].mxu0 %v615
        %v716 = vpop.f32.mrb[0].mxu0
        %v717 = vadd.f32 0.0, %v716
        %v718 = vpop.f32.mrb[0].mxu0
        %v719 = vadd.f32 0.0, %v718
        %720 = vmatprep.mubr.f32.mxu0 0.0
        %721 = vmatmul.mubr.f32.gmra.mrb[0].mxu0 %v618
        %v722 = vpop.f32.mrb[0].mxu0
        %v723 = vadd.f32 0.0, %v722
        %v724 = vpop.f32.mrb[0].mxu0
        %v725 = vadd.f32 0.0, %v724
        %726 = vmatprep.mubr.f32.mxu0 0.0
        %727 = vmatmul.mubr.f32.gmra.mrb[0].mxu0 %v621
        %v728 = vpop.f32.mrb[0].mxu0
        %v729 = vadd.f32 0.0, %v728
        %v730 = vpop.f32.mrb[0].mxu0
        %v731 = vadd.f32 0.0, %v730
        %732 = vmatprep.mubr.f32.mxu0 0.0
        %733 = vmatmul.mubr.f32.gmra.mrb[0].mxu0 %v624
        %v734 = vpop.f32.mrb[0].mxu0
        %v735 = vadd.f32 0.0, %v734
        %v736 = vpop.f32.mrb[0].mxu0
        %v737 = vadd.f32 0.0, %v736
        %738 = vmatprep.mubr.f32.mxu0 0.0
        %739 = vmatmul.mubr.f32.gmra.mrb[0].mxu0 %v627
        %v740 = vpop.f32.mrb[0].mxu0
        %v741 = vadd.f32 0.0, %v740
        %v742 = vpop.f32.mrb[0].mxu0
        %v743 = vadd.f32 0.0, %v742
        %744 = vmatprep.mubr.f32.mxu0 0.0
        %745 = vmatmul.mubr.f32.gmra.mrb[0].mxu0 %v630
        %v746 = vpop.f32.mrb[0].mxu0
        %v747 = vadd.f32 0.0, %v746
        %v748 = vpop.f32.mrb[0].mxu0
        %v749 = vadd.f32 0.0, %v748
        %750 = vmatprep.mubr.f32.mxu0 0.0
        %751 = vmatmul.mubr.f32.gmra.mrb[0].mxu0 %v633
        %v752 = vpop.f32.mrb[0].mxu0
        %v753 = vadd.f32 0.0, %v752
        %v754 = vpop.f32.mrb[0].mxu0
        %v755 = vadd.f32 0.0, %v754
        %756 = vmatprep.mubr.f32.mxu0 0.0
        %757 = vmatmul.mubr.f32.gmra.mrb[0].mxu0 %v636
        %v758 = vpop.f32.mrb[0].mxu0
        %v759 = vadd.f32 0.0, %v758
        %v760 = vpop.f32.mrb[0].mxu0
        %v761 = vadd.f32 0.0, %v760
        %762 = vmatprep.mubr.f32.mxu0 0.0
        %763 = vmatmul.mubr.f32.gmra.mrb[0].mxu0 %v639
        %v764 = vpop.f32.mrb[0].mxu0
        %v765 = vadd.f32 0.0, %v764
        %v766 = vpop.f32.mrb[0].mxu0
        %v767 = vadd.f32 0.0, %v766
        %768 = vmatprep.mubr.f32.mxu0 0.0
        %769 = vmatmul.mubr.f32.gmra.mrb[0].mxu0 %v642
        %v770 = vpop.f32.mrb[0].mxu0
        %v771 = vadd.f32 0.0, %v770
        %v772 = vpop.f32.mrb[0].mxu0
        %v773 = vadd.f32 0.0, %v772
        %774 = vmatprep.mubr.f32.mxu0 0.0
        %775 = vmatmul.mubr.f32.gmra.mrb[0].mxu0 %v645
        %v776 = vpop.f32.mrb[0].mxu0
        %v777 = vadd.f32 0.0, %v776
        %v778 = vpop.f32.mrb[0].mxu0
        %v779 = vadd.f32 0.0, %v778
        %780 = vmatprep.mubr.f32.mxu0 0.0
        %781 = vmatmul.mubr.f32.gmra.mrb[0].mxu0 %v648
        %v782 = vpop.f32.mrb[0].mxu0
        %v783 = vadd.f32 0.0, %v782
        %v784 = vpop.f32.mrb[0].mxu0
        %v785 = vadd.f32 0.0, %v784
        %786 = vdwg.mxu0
        %787 = vmatprep.subr.mxu0 %v580
        %788 = vmatpush1.msra.mxu0 %v579
        %789 = vmatprep.subr.mxu0 %v588
        %790 = vmatpush1.msra.mxu0 %v587
        %791 = vmatprep.subr.mxu0 %v596
        %792 = vmatpush1.msra.mxu0 %v595
        %793 = vmatprep.subr.mxu0 0.0
        %794 = vmatpush1.msra.mxu0 0.0
        %795 = vmatprep.subr.mxu0 0.0
        %796 = vmatpush1.msra.mxu0 0.0
        %797 = vmatprep.subr.mxu0 0.0
        %798 = vmatpush1.msra.mxu0 0.0
        %799 = vmatprep.subr.mxu0 0.0
        %800 = vmatpush1.msra.mxu0 0.0
        %801 = vmatprep.subr.mxu0 0.0
        %802 = vmatpush1.msra.mxu0 0.0
        %803 = vmatprep.subr.mxu0 0.0
        %804 = vmatpush1.msra.mxu0 0.0
        %805 = vmatprep.subr.mxu0 0.0
        %806 = vmatpush1.msra.mxu0 0.0
        %807 = vmatprep.subr.mxu0 0.0
        %808 = vmatpush1.msra.mxu0 0.0
        %809 = vmatprep.subr.mxu0 0.0
        %810 = vmatpush1.msra.mxu0 0.0
        %811 = vmatprep.subr.mxu0 0.0
        %812 = vmatpush1.msra.mxu0 0.0
        %813 = vmatprep.subr.mxu0 0.0
        %814 = vmatpush1.msra.mxu0 0.0
        %815 = vmatprep.subr.mxu0 0.0
        %816 = vmatpush1.msra.mxu0 0.0
        %817 = vmatprep.subr.mxu0 0.0
        %818 = vmatpush1.msra.mxu0 0.0
        %819 = vmatprep.subr.mxu0 0.0
        %820 = vmatpush1.msra.mxu0 0.0
        %821 = vmatprep.subr.mxu0 0.0
        %822 = vmatpush1.msra.mxu0 0.0
        %823 = vmatprep.subr.mxu0 0.0
        %824 = vmatpush1.msra.mxu0 0.0
        %825 = vmatprep.subr.mxu0 0.0
        %826 = vmatpush1.msra.mxu0 0.0
        %827 = vmatprep.subr.mxu0 0.0
        %828 = vmatpush1.msra.mxu0 0.0
        %829 = vmatprep.subr.mxu0 0.0
        %830 = vmatpush1.msra.mxu0 0.0
        %831 = vmatprep.subr.mxu0 0.0
        %832 = vmatpush1.msra.mxu0 0.0
        %833 = vmatprep.subr.mxu0 0.0
        %834 = vmatpush1.msra.mxu0 0.0
        %835 = vmatprep.subr.mxu0 0.0
        %836 = vmatpush1.msra.mxu0 0.0
        %837 = vmatprep.subr.mxu0 0.0
        %838 = vmatpush1.msra.mxu0 0.0
        %839 = vmatprep.subr.mxu0 0.0
        %840 = vmatpush1.msra.mxu0 0.0
        %841 = vmatprep.subr.mxu0 0.0
        %842 = vmatpush1.msra.mxu0 0.0
        %843 = vmatprep.subr.mxu0 0.0
        %844 = vmatpush1.msra.mxu0 0.0
        %845 = vmatprep.subr.mxu0 0.0
        %846 = vmatpush1.msra.mxu0 0.0
        %847 = vmatprep.subr.mxu0 0.0
        %848 = vmatpush1.msra.mxu0 0.0
        %849 = vmatprep.subr.mxu0 0.0
        %850 = vmatpush1.msra.mxu0 0.0
        %851 = vmatprep.mubr.f32.mxu0 0.0
        %852 = vmatmul.mubr.f32.gmra.mrb[0].mxu0 %v615
        %v853 = vpop.f32.mrb[0].mxu0
        %v854 = vadd.f32 0.0, %v853
        %v855 = vpop.f32.mrb[0].mxu0
        %v856 = vadd.f32 0.0, %v855
        %857 = vmatprep.mubr.f32.mxu0 0.0
        %858 = vmatmul.mubr.f32.gmra.mrb[0].mxu0 %v618
        %v859 = vpop.f32.mrb[0].mxu0
        %v860 = vadd.f32 0.0, %v859
        %v861 = vpop.f32.mrb[0].mxu0
        %v862 = vadd.f32 0.0, %v861
        %863 = vmatprep.mubr.f32.mxu0 0.0
        %864 = vmatmul.mubr.f32.gmra.mrb[0].mxu0 %v621
        %v865 = vpop.f32.mrb[0].mxu0
        %v866 = vadd.f32 0.0, %v865
        %v867 = vpop.f32.mrb[0].mxu0
        %v868 = vadd.f32 0.0, %v867
        %869 = vmatprep.mubr.f32.mxu0 0.0
        %870 = vmatmul.mubr.f32.gmra.mrb[0].mxu0 %v624
        %v871 = vpop.f32.mrb[0].mxu0
        %v872 = vadd.f32 0.0, %v871
        %v873 = vpop.f32.mrb[0].mxu0
        %v874 = vadd.f32 0.0, %v873
        %875 = vmatprep.mubr.f32.mxu0 0.0
        %876 = vmatmul.mubr.f32.gmra.mrb[0].mxu0 %v627
        %v877 = vpop.f32.mrb[0].mxu0
        %v878 = vadd.f32 0.0, %v877
        %v879 = vpop.f32.mrb[0].mxu0
        %v880 = vadd.f32 0.0, %v879
        %881 = vmatprep.mubr.f32.mxu0 0.0
        %882 = vmatmul.mubr.f32.gmra.mrb[0].mxu0 %v630
        %v883 = vpop.f32.mrb[0].mxu0
        %v884 = vadd.f32 0.0, %v883
        %v885 = vpop.f32.mrb[0].mxu0
        %v886 = vadd.f32 0.0, %v885
        %887 = vmatprep.mubr.f32.mxu0 0.0
        %888 = vmatmul.mubr.f32.gmra.mrb[0].mxu0 %v633
        %v889 = vpop.f32.mrb[0].mxu0
        %v890 = vadd.f32 0.0, %v889
        %v891 = vpop.f32.mrb[0].mxu0
        %v892 = vadd.f32 0.0, %v891
        %893 = vmatprep.mubr.f32.mxu0 0.0
        %894 = vmatmul.mubr.f32.gmra.mrb[0].mxu0 %v636
        %v895 = vpop.f32.mrb[0].mxu0
        %v896 = vadd.f32 0.0, %v895
        %v897 = vpop.f32.mrb[0].mxu0
        %v898 = vadd.f32 0.0, %v897
        %899 = vmatprep.mubr.f32.mxu0 0.0
        %900 = vmatmul.mubr.f32.gmra.mrb[0].mxu0 %v639
        %v901 = vpop.f32.mrb[0].mxu0
        %v902 = vadd.f32 0.0, %v901
        %v903 = vpop.f32.mrb[0].mxu0
        %v904 = vadd.f32 0.0, %v903
        %905 = vmatprep.mubr.f32.mxu0 0.0
        %906 = vmatmul.mubr.f32.gmra.mrb[0].mxu0 %v642
        %v907 = vpop.f32.mrb[0].mxu0
        %v908 = vadd.f32 0.0, %v907
        %v909 = vpop.f32.mrb[0].mxu0
        %v910 = vadd.f32 0.0, %v909
        %911 = vmatprep.mubr.f32.mxu0 0.0
        %912 = vmatmul.mubr.f32.gmra.mrb[0].mxu0 %v645
        %v913 = vpop.f32.mrb[0].mxu0
        %v914 = vadd.f32 0.0, %v913
        %v915 = vpop.f32.mrb[0].mxu0
        %v916 = vadd.f32 0.0, %v915
        %917 = vmatprep.mubr.f32.mxu0 0.0
        %918 = vmatmul.mubr.f32.gmra.mrb[0].mxu0 %v648
        %v919 = vpop.f32.mrb[0].mxu0
        %v920 = vadd.f32 0.0, %v919
        %v921 = vpop.f32.mrb[0].mxu0
        %v922 = vadd.f32 0.0, %v921
        %923 = vdwg.mxu0
        %924 = vmatprep.subr.mxu0 %v582
        %925 = vmatpush1.msra.mxu0 %v581
        %926 = vmatprep.subr.mxu0 %v590
        %927 = vmatpush1.msra.mxu0 %v589
        %928 = vmatprep.subr.mxu0 %v598
        %929 = vmatpush1.msra.mxu0 %v597
        %930 = vmatprep.subr.mxu0 0.0
        %931 = vmatpush1.msra.mxu0 0.0
        %932 = vmatprep.subr.mxu0 0.0
        %933 = vmatpush1.msra.mxu0 0.0
        %934 = vmatprep.subr.mxu0 0.0
        %935 = vmatpush1.msra.mxu0 0.0
        %936 = vmatprep.subr.mxu0 0.0
        %937 = vmatpush1.msra.mxu0 0.0
        %938 = vmatprep.subr.mxu0 0.0
        %939 = vmatpush1.msra.mxu0 0.0
        %940 = vmatprep.subr.mxu0 0.0
        %941 = vmatpush1.msra.mxu0 0.0
        %942 = vmatprep.subr.mxu0 0.0
        %943 = vmatpush1.msra.mxu0 0.0
        %944 = vmatprep.subr.mxu0 0.0
        %945 = vmatpush1.msra.mxu0 0.0
        %946 = vmatprep.subr.mxu0 0.0
        %947 = vmatpush1.msra.mxu0 0.0
        %948 = vmatprep.subr.mxu0 0.0
        %949 = vmatpush1.msra.mxu0 0.0
        %950 = vmatprep.subr.mxu0 0.0
        %951 = vmatpush1.msra.mxu0 0.0
        %952 = vmatprep.subr.mxu0 0.0
        %953 = vmatpush1.msra.mxu0 0.0
        %954 = vmatprep.subr.mxu0 0.0
        %955 = vmatpush1.msra.mxu0 0.0
        %956 = vmatprep.subr.mxu0 0.0
        %957 = vmatpush1.msra.mxu0 0.0
        %958 = vmatprep.subr.mxu0 0.0
        %959 = vmatpush1.msra.mxu0 0.0
        %960 = vmatprep.subr.mxu0 0.0
        %961 = vmatpush1.msra.mxu0 0.0
        %962 = vmatprep.subr.mxu0 0.0
        %963 = vmatpush1.msra.mxu0 0.0
        %964 = vmatprep.subr.mxu0 0.0
        %965 = vmatpush1.msra.mxu0 0.0
        %966 = vmatprep.subr.mxu0 0.0
        %967 = vmatpush1.msra.mxu0 0.0
        %968 = vmatprep.subr.mxu0 0.0
        %969 = vmatpush1.msra.mxu0 0.0
        %970 = vmatprep.subr.mxu0 0.0
        %971 = vmatpush1.msra.mxu0 0.0
        %972 = vmatprep.subr.mxu0 0.0
        %973 = vmatpush1.msra.mxu0 0.0
        %974 = vmatprep.subr.mxu0 0.0
        %975 = vmatpush1.msra.mxu0 0.0
        %976 = vmatprep.subr.mxu0 0.0
        %977 = vmatpush1.msra.mxu0 0.0
        %978 = vmatprep.subr.mxu0 0.0
        %979 = vmatpush1.msra.mxu0 0.0
        %980 = vmatprep.subr.mxu0 0.0
        %981 = vmatpush1.msra.mxu0 0.0
        %982 = vmatprep.subr.mxu0 0.0
        %983 = vmatpush1.msra.mxu0 0.0
        %984 = vmatprep.subr.mxu0 0.0
        %985 = vmatpush1.msra.mxu0 0.0
        %986 = vmatprep.subr.mxu0 0.0
        %987 = vmatpush1.msra.mxu0 0.0
        %988 = vmatprep.mubr.f32.mxu0 0.0
        %989 = vmatmul.mubr.f32.gmra.mrb[0].mxu0 %v615
        %v990 = vpop.f32.mrb[0].mxu0
        %v991 = vadd.f32 0.0, %v990
        %v992 = vpop.f32.mrb[0].mxu0
        %v993 = vadd.f32 0.0, %v992
        %994 = vmatprep.mubr.f32.mxu0 0.0
        %995 = vmatmul.mubr.f32.gmra.mrb[0].mxu0 %v618
        %v996 = vpop.f32.mrb[0].mxu0
        %v997 = vadd.f32 0.0, %v996
        %v998 = vpop.f32.mrb[0].mxu0
        %v999 = vadd.f32 0.0, %v998
        %1000 = vmatprep.mubr.f32.mxu0 0.0
        %1001 = vmatmul.mubr.f32.gmra.mrb[0].mxu0 %v621
        %v1002 = vpop.f32.mrb[0].mxu0
        %v1003 = vadd.f32 0.0, %v1002
        %v1004 = vpop.f32.mrb[0].mxu0
        %v1005 = vadd.f32 0.0, %v1004
        %1006 = vmatprep.mubr.f32.mxu0 0.0
        %1007 = vmatmul.mubr.f32.gmra.mrb[0].mxu0 %v624
        %v1008 = vpop.f32.mrb[0].mxu0
        %v1009 = vadd.f32 0.0, %v1008
        %v1010 = vpop.f32.mrb[0].mxu0
        %v1011 = vadd.f32 0.0, %v1010
        %1012 = vmatprep.mubr.f32.mxu0 0.0
        %1013 = vmatmul.mubr.f32.gmra.mrb[0].mxu0 %v627
        %v1014 = vpop.f32.mrb[0].mxu0
        %v1015 = vadd.f32 0.0, %v1014
        %v1016 = vpop.f32.mrb[0].mxu0
        %v1017 = vadd.f32 0.0, %v1016
        %1018 = vmatprep.mubr.f32.mxu0 0.0
        %1019 = vmatmul.mubr.f32.gmra.mrb[0].mxu0 %v630
        %v1020 = vpop.f32.mrb[0].mxu0
        %v1021 = vadd.f32 0.0, %v1020
        %v1022 = vpop.f32.mrb[0].mxu0
        %v1023 = vadd.f32 0.0, %v1022
        %1024 = vmatprep.mubr.f32.mxu0 0.0
        %1025 = vmatmul.mubr.f32.gmra.mrb[0].mxu0 %v633
        %v1026 = vpop.f32.mrb[0].mxu0
        %v1027 = vadd.f32 0.0, %v1026
        %v1028 = vpop.f32.mrb[0].mxu0
        %v1029 = vadd.f32 0.0, %v1028
        %1030 = vmatprep.mubr.f32.mxu0 0.0
        %1031 = vmatmul.mubr.f32.gmra.mrb[0].mxu0 %v636
        %v1032 = vpop.f32.mrb[0].mxu0
        %v1033 = vadd.f32 0.0, %v1032
        %v1034 = vpop.f32.mrb[0].mxu0
        %v1035 = vadd.f32 0.0, %v1034
        %1036 = vmatprep.mubr.f32.mxu0 0.0
        %1037 = vmatmul.mubr.f32.gmra.mrb[0].mxu0 %v639
        %v1038 = vpop.f32.mrb[0].mxu0
        %v1039 = vadd.f32 0.0, %v1038
        %v1040 = vpop.f32.mrb[0].mxu0
        %v1041 = vadd.f32 0.0, %v1040
        %1042 = vmatprep.mubr.f32.mxu0 0.0
        %1043 = vmatmul.mubr.f32.gmra.mrb[0].mxu0 %v642
        %v1044 = vpop.f32.mrb[0].mxu0
        %v1045 = vadd.f32 0.0, %v1044
        %v1046 = vpop.f32.mrb[0].mxu0
        %v1047 = vadd.f32 0.0, %v1046
        %1048 = vmatprep.mubr.f32.mxu0 0.0
        %1049 = vmatmul.mubr.f32.gmra.mrb[0].mxu0 %v645
        %v1050 = vpop.f32.mrb[0].mxu0
        %v1051 = vadd.f32 0.0, %v1050
        %v1052 = vpop.f32.mrb[0].mxu0
        %v1053 = vadd.f32 0.0, %v1052
        %1054 = vmatprep.mubr.f32.mxu0 0.0
        %1055 = vmatmul.mubr.f32.gmra.mrb[0].mxu0 %v648
        %v1056 = vpop.f32.mrb[0].mxu0
        %v1057 = vadd.f32 0.0, %v1056
        %v1058 = vpop.f32.mrb[0].mxu0
        %v1059 = vadd.f32 0.0, %v1058
        %1060 = vdwg.mxu0
        %1061 = vmatprep.subr.mxu0 %v584
        %1062 = vmatpush1.msra.mxu0 %v583
        %1063 = vmatprep.subr.mxu0 %v592
        %1064 = vmatpush1.msra.mxu0 %v591
        %1065 = vmatprep.subr.mxu0 %v600
        %1066 = vmatpush1.msra.mxu0 %v599
        %1067 = vmatprep.subr.mxu0 0.0
        %1068 = vmatpush1.msra.mxu0 0.0
        %1069 = vmatprep.subr.mxu0 0.0
        %1070 = vmatpush1.msra.mxu0 0.0
        %1071 = vmatprep.subr.mxu0 0.0
        %1072 = vmatpush1.msra.mxu0 0.0
        %1073 = vmatprep.subr.mxu0 0.0
        %1074 = vmatpush1.msra.mxu0 0.0
        %1075 = vmatprep.subr.mxu0 0.0
        %1076 = vmatpush1.msra.mxu0 0.0
        %1077 = vmatprep.subr.mxu0 0.0
        %1078 = vmatpush1.msra.mxu0 0.0
        %1079 = vmatprep.subr.mxu0 0.0
        %1080 = vmatpush1.msra.mxu0 0.0
        %1081 = vmatprep.subr.mxu0 0.0
        %1082 = vmatpush1.msra.mxu0 0.0
        %1083 = vmatprep.subr.mxu0 0.0
        %1084 = vmatpush1.msra.mxu0 0.0
        %1085 = vmatprep.subr.mxu0 0.0
        %1086 = vmatpush1.msra.mxu0 0.0
        %1087 = vmatprep.subr.mxu0 0.0
        %1088 = vmatpush1.msra.mxu0 0.0
        %1089 = vmatprep.subr.mxu0 0.0
        %1090 = vmatpush1.msra.mxu0 0.0
        %1091 = vmatprep.subr.mxu0 0.0
        %1092 = vmatpush1.msra.mxu0 0.0
        %1093 = vmatprep.subr.mxu0 0.0
        %1094 = vmatpush1.msra.mxu0 0.0
        %1095 = vmatprep.subr.mxu0 0.0
        %1096 = vmatpush1.msra.mxu0 0.0
        %1097 = vmatprep.subr.mxu0 0.0
        %1098 = vmatpush1.msra.mxu0 0.0
        %1099 = vmatprep.subr.mxu0 0.0
        %1100 = vmatpush1.msra.mxu0 0.0
        %1101 = vmatprep.subr.mxu0 0.0
        %1102 = vmatpush1.msra.mxu0 0.0
        %1103 = vmatprep.subr.mxu0 0.0
        %1104 = vmatpush1.msra.mxu0 0.0
        %1105 = vmatprep.subr.mxu0 0.0
        %1106 = vmatpush1.msra.mxu0 0.0
        %1107 = vmatprep.subr.mxu0 0.0
        %1108 = vmatpush1.msra.mxu0 0.0
        %1109 = vmatprep.subr.mxu0 0.0
        %1110 = vmatpush1.msra.mxu0 0.0
        %1111 = vmatprep.subr.mxu0 0.0
        %1112 = vmatpush1.msra.mxu0 0.0
        %1113 = vmatprep.subr.mxu0 0.0
        %1114 = vmatpush1.msra.mxu0 0.0
        %1115 = vmatprep.subr.mxu0 0.0
        %1116 = vmatpush1.msra.mxu0 0.0
        %1117 = vmatprep.subr.mxu0 0.0
        %1118 = vmatpush1.msra.mxu0 0.0
        %1119 = vmatprep.subr.mxu0 0.0
        %1120 = vmatpush1.msra.mxu0 0.0
        %1121 = vmatprep.subr.mxu0 0.0
        %1122 = vmatpush1.msra.mxu0 0.0
        %1123 = vmatprep.subr.mxu0 0.0
        %1124 = vmatpush1.msra.mxu0 0.0
        %1125 = vmatprep.mubr.f32.mxu0 0.0
        %1126 = vmatmul.mubr.f32.gmra.mrb[0].mxu0 %v615
        %v1127 = vpop.f32.mrb[0].mxu0
        %v1128 = vadd.f32 0.0, %v1127
        %v1129 = vpop.f32.mrb[0].mxu0
        %v1130 = vadd.f32 0.0, %v1129
        %1131 = vmatprep.mubr.f32.mxu0 0.0
        %1132 = vmatmul.mubr.f32.gmra.mrb[0].mxu0 %v618
        %v1133 = vpop.f32.mrb[0].mxu0
        %v1134 = vadd.f32 0.0, %v1133
        %v1135 = vpop.f32.mrb[0].mxu0
        %v1136 = vadd.f32 0.0, %v1135
        %1137 = vmatprep.mubr.f32.mxu0 0.0
        %1138 = vmatmul.mubr.f32.gmra.mrb[0].mxu0 %v621
        %v1139 = vpop.f32.mrb[0].mxu0
        %v1140 = vadd.f32 0.0, %v1139
        %v1141 = vpop.f32.mrb[0].mxu0
        %v1142 = vadd.f32 0.0, %v1141
        %1143 = vmatprep.mubr.f32.mxu0 0.0
        %1144 = vmatmul.mubr.f32.gmra.mrb[0].mxu0 %v624
        %v1145 = vpop.f32.mrb[0].mxu0
        %v1146 = vadd.f32 0.0, %v1145
        %v1147 = vpop.f32.mrb[0].mxu0
        %v1148 = vadd.f32 0.0, %v1147
        %1149 = vmatprep.mubr.f32.mxu0 0.0
        %1150 = vmatmul.mubr.f32.gmra.mrb[0].mxu0 %v627
        %v1151 = vpop.f32.mrb[0].mxu0
        %v1152 = vadd.f32 0.0, %v1151
        %v1153 = vpop.f32.mrb[0].mxu0
        %v1154 = vadd.f32 0.0, %v1153
        %1155 = vmatprep.mubr.f32.mxu0 0.0
        %1156 = vmatmul.mubr.f32.gmra.mrb[0].mxu0 %v630
        %v1157 = vpop.f32.mrb[0].mxu0
        %v1158 = vadd.f32 0.0, %v1157
        %v1159 = vpop.f32.mrb[0].mxu0
        %v1160 = vadd.f32 0.0, %v1159
        %1161 = vmatprep.mubr.f32.mxu0 0.0
        %1162 = vmatmul.mubr.f32.gmra.mrb[0].mxu0 %v633
        %v1163 = vpop.f32.mrb[0].mxu0
        %v1164 = vadd.f32 0.0, %v1163
        %v1165 = vpop.f32.mrb[0].mxu0
        %v1166 = vadd.f32 0.0, %v1165
        %1167 = vmatprep.mubr.f32.mxu0 0.0
        %1168 = vmatmul.mubr.f32.gmra.mrb[0].mxu0 %v636
        %v1169 = vpop.f32.mrb[0].mxu0
        %v1170 = vadd.f32 0.0, %v1169
        %v1171 = vpop.f32.mrb[0].mxu0
        %v1172 = vadd.f32 0.0, %v1171
        %1173 = vmatprep.mubr.f32.mxu0 0.0
        %1174 = vmatmul.mubr.f32.gmra.mrb[0].mxu0 %v639
        %v1175 = vpop.f32.mrb[0].mxu0
        %v1176 = vadd.f32 0.0, %v1175
        %v1177 = vpop.f32.mrb[0].mxu0
        %v1178 = vadd.f32 0.0, %v1177
        %1179 = vmatprep.mubr.f32.mxu0 0.0
        %1180 = vmatmul.mubr.f32.gmra.mrb[0].mxu0 %v642
        %v1181 = vpop.f32.mrb[0].mxu0
        %v1182 = vadd.f32 0.0, %v1181
        %v1183 = vpop.f32.mrb[0].mxu0
        %v1184 = vadd.f32 0.0, %v1183
        %1185 = vmatprep.mubr.f32.mxu0 0.0
        %1186 = vmatmul.mubr.f32.gmra.mrb[0].mxu0 %v645
        %v1187 = vpop.f32.mrb[0].mxu0
        %v1188 = vadd.f32 0.0, %v1187
        %v1189 = vpop.f32.mrb[0].mxu0
        %v1190 = vadd.f32 0.0, %v1189
        %1191 = vmatprep.mubr.f32.mxu0 0.0
        %1192 = vmatmul.mubr.f32.gmra.mrb[0].mxu0 %v648
        %v1193 = vpop.f32.mrb[0].mxu0
        %v1194 = vadd.f32 0.0, %v1193
        %v1195 = vpop.f32.mrb[0].mxu0
        %v1196 = vadd.f32 0.0, %v1195
        %1197 = vdwg.mxu0
        %1198 = vst [vmem:[%s257] sm:$0xff] %v717
        %1199 = vst [vmem:[%s257 + $0x8] sm:$0xff] %v719
        %1200 = vst [vmem:[%s257 + $0x10] sm:$0xff] %v854
        %1201 = vst [vmem:[%s257 + $0x18] sm:$0xff] %v856
        %1202 = vst [vmem:[%s257 + $0x20] sm:$0xff] %v991
        %1203 = vst [vmem:[%s257 + $0x28] sm:$0xff] %v993
        %1204 = vst [vmem:[%s257 + $0x30] sm:$0xff] %v1128
        %1205 = vst [vmem:[%s257 + $0x38] sm:$0xff] %v1130
        %1206 = vst [vmem:[%s257 + $0x40] sm:$0xff] %v723
        %1207 = vst [vmem:[%s257 + $0x48] sm:$0xff] %v725
        %1208 = vst [vmem:[%s257 + $0x50] sm:$0xff] %v860
        %1209 = vst [vmem:[%s257 + $0x58] sm:$0xff] %v862
        %1210 = vst [vmem:[%s257 + $0x60] sm:$0xff] %v997
        %1211 = vst [vmem:[%s257 + $0x68] sm:$0xff] %v999
        %1212 = vst [vmem:[%s257 + $0x70] sm:$0xff] %v1134
        %1213 = vst [vmem:[%s257 + $0x78] sm:$0xff] %v1136
        %1214 = vst [vmem:[%s257 + $0x80] sm:$0xff] %v729
        %1215 = vst [vmem:[%s257 + $0x88] sm:$0xff] %v731
        %1216 = vst [vmem:[%s257 + $0x90] sm:$0xff] %v866
        %1217 = vst [vmem:[%s257 + $0x98] sm:$0xff] %v868
        %1218 = vst [vmem:[%s257 + $0xa0] sm:$0xff] %v1003
        %1219 = vst [vmem:[%s257 + $0xa8] sm:$0xff] %v1005
        %1220 = vst [vmem:[%s257 + $0xb0] sm:$0xff] %v1140
        %1221 = vst [vmem:[%s257 + $0xb8] sm:$0xff] %v1142
        %1222 = vst [vmem:[%s257 + $0xc0] sm:$0xff] %v735
        %1223 = vst [vmem:[%s257 + $0xc8] sm:$0xff] %v737
        %1224 = vst [vmem:[%s257 + $0xd0] sm:$0xff] %v872
        %1225 = vst [vmem:[%s257 + $0xd8] sm:$0xff] %v874
        %1226 = vst [vmem:[%s257 + $0xe0] sm:$0xff] %v1009
        %1227 = vst [vmem:[%s257 + $0xe8] sm:$0xff] %v1011
        %1228 = vst [vmem:[%s257 + $0xf0] sm:$0xff] %v1146
        %1229 = vst [vmem:[%s257 + $0xf8] sm:$0xff] %v1148
        %1230 = vst [vmem:[%s257 + $0x100] sm:$0xff] %v741
        %1231 = vst [vmem:[%s257 + $0x108] sm:$0xff] %v743
        %1232 = vst [vmem:[%s257 + $0x110] sm:$0xff] %v878
        %1233 = vst [vmem:[%s257 + $0x118] sm:$0xff] %v880
        %1234 = vst [vmem:[%s257 + $0x120] sm:$0xff] %v1015
        %1235 = vst [vmem:[%s257 + $0x128] sm:$0xff] %v1017
        %1236 = vst [vmem:[%s257 + $0x130] sm:$0xff] %v1152
        %1237 = vst [vmem:[%s257 + $0x138] sm:$0xff] %v1154
        %1238 = vst [vmem:[%s257 + $0x140] sm:$0xff] %v747
        %1239 = vst [vmem:[%s257 + $0x148] sm:$0xff] %v749
        %1240 = vst [vmem:[%s257 + $0x150] sm:$0xff] %v884
        %1241 = vst [vmem:[%s257 + $0x158] sm:$0xff] %v886
        %1242 = vst [vmem:[%s257 + $0x160] sm:$0xff] %v1021
        %1243 = vst [vmem:[%s257 + $0x168] sm:$0xff] %v1023
        %1244 = vst [vmem:[%s257 + $0x170] sm:$0xff] %v1158
        %1245 = vst [vmem:[%s257 + $0x178] sm:$0xff] %v1160
        %1246 = vst [vmem:[%s257 + $0x180] sm:$0xff] %v753
        %1247 = vst [vmem:[%s257 + $0x188] sm:$0xff] %v755
        %1248 = vst [vmem:[%s257 + $0x190] sm:$0xff] %v890
        %1249 = vst [vmem:[%s257 + $0x198] sm:$0xff] %v892
        %1250 = vst [vmem:[%s257 + $0x1a0] sm:$0xff] %v1027
        %1251 = vst [vmem:[%s257 + $0x1a8] sm:$0xff] %v1029
        %1252 = vst [vmem:[%s257 + $0x1b0] sm:$0xff] %v1164
        %1253 = vst [vmem:[%s257 + $0x1b8] sm:$0xff] %v1166
        %1254 = vst [vmem:[%s257 + $0x1c0] sm:$0xff] %v759
        %1255 = vst [vmem:[%s257 + $0x1c8] sm:$0xff] %v761
        %1256 = vst [vmem:[%s257 + $0x1d0] sm:$0xff] %v896
        %1257 = vst [vmem:[%s257 + $0x1d8] sm:$0xff] %v898
        %1258 = vst [vmem:[%s257 + $0x1e0] sm:$0xff] %v1033
        %1259 = vst [vmem:[%s257 + $0x1e8] sm:$0xff] %v1035
        %1260 = vst [vmem:[%s257 + $0x1f0] sm:$0xff] %v1170
        %1261 = vst [vmem:[%s257 + $0x1f8] sm:$0xff] %v1172
        %1262 = vst [vmem:[%s257 + $0x200] sm:$0xff] %v765
        %1263 = vst [vmem:[%s257 + $0x208] sm:$0xff] %v767
        %1264 = vst [vmem:[%s257 + $0x210] sm:$0xff] %v902
        %1265 = vst [vmem:[%s257 + $0x218] sm:$0xff] %v904
        %1266 = vst [vmem:[%s257 + $0x220] sm:$0xff] %v1039
        %1267 = vst [vmem:[%s257 + $0x228] sm:$0xff] %v1041
        %1268 = vst [vmem:[%s257 + $0x230] sm:$0xff] %v1176
        %1269 = vst [vmem:[%s257 + $0x238] sm:$0xff] %v1178
        %1270 = vst [vmem:[%s257 + $0x240] sm:$0xff] %v771
        %1271 = vst [vmem:[%s257 + $0x248] sm:$0xff] %v773
        %1272 = vst [vmem:[%s257 + $0x250] sm:$0xff] %v908
        %1273 = vst [vmem:[%s257 + $0x258] sm:$0xff] %v910
        %1274 = vst [vmem:[%s257 + $0x260] sm:$0xff] %v1045
        %1275 = vst [vmem:[%s257 + $0x268] sm:$0xff] %v1047
        %1276 = vst [vmem:[%s257 + $0x270] sm:$0xff] %v1182
        %1277 = vst [vmem:[%s257 + $0x278] sm:$0xff] %v1184
        %1278 = vst [vmem:[%s257 + $0x280] sm:$0xff] %v777
        %1279 = vst [vmem:[%s257 + $0x288] sm:$0xff] %v779
        %1280 = vst [vmem:[%s257 + $0x290] sm:$0xff] %v914
        %1281 = vst [vmem:[%s257 + $0x298] sm:$0xff] %v916
        %1282 = vst [vmem:[%s257 + $0x2a0] sm:$0xff] %v1051
        %1283 = vst [vmem:[%s257 + $0x2a8] sm:$0xff] %v1053
        %1284 = vst [vmem:[%s257 + $0x2b0] sm:$0xff] %v1188
        %1285 = vst [vmem:[%s257 + $0x2b8] sm:$0xff] %v1190
        %1286 = vst [vmem:[%s257 + $0x2c0] sm:$0xff] %v783
        %1287 = vst [vmem:[%s257 + $0x2c8] sm:$0xff] %v785
        %1288 = vst [vmem:[%s257 + $0x2d0] sm:$0xff] %v920
        %1289 = vst [vmem:[%s257 + $0x2d8] sm:$0xff] %v922
        %1290 = vst [vmem:[%s257 + $0x2e0] sm:$0xff] %v1057
        %1291 = vst [vmem:[%s257 + $0x2e8] sm:$0xff] %v1059
        %1292 = vst [vmem:[%s257 + $0x2f0] sm:$0xff] %v1194
        %1293 = vst [vmem:[%s257 + $0x2f8] sm:$0xff] %v1196
        %s1294 = sand.u32 %s112, 1
        %s1295 = sand.u32 %s112, 1
        %s1296 = smul.addr %s1295, 768
        %s1297 = scalar_lea.vmem [#allocation3], %s1296
        // Predicated region
        $region60: #{fmdb_basic_fwd.38} parent=54 // pred_check
          %p1298 = pneg %p122
        $region61: #{fmdb_basic_fwd.38} parent=54 // pred_check_branch
          %1300 = sbr.rel (%p1298) target = $region63
        $region62: #{fmdb_basic_fwd.38} parent=54 // pred_region
          %s1301 = smul.u32 8, %s15
          %s1302 = smul.addr %s1301, 8
          %s1303 = scalar_lea.vmem %s4, %s1302
          // Predicated region
          $region64: #{fmdb_basic_fwd.38} parent=62 // pred_check
            _
          $region65: #{fmdb_basic_fwd.38} parent=62 // pred_check_branch
            %1305 = sbr.rel (0) target = $region67
          $region66: #{fmdb_basic_fwd.38} parent=62 // pred_region
            // Predicated region
            $region68: #{fmdb_basic_fwd.38} parent=66 // pred_check
              _
            $region69: #{fmdb_basic_fwd.38} parent=66 // pred_check_branch
              %1307 = sbr.rel (0) target = $region71
            $region70: #{fmdb_basic_fwd.38} parent=66 // pred_region
              loop: start=0, step=1, limit=1
              $region72: #{fmdb_basic_fwd.38} parent=70 // loop_pre_header
                _
              $region73: #{fmdb_basic_fwd.38} parent=70 // loop_header
                %s1309 = sphi 0, %s1313
                %p1310 = scmp.ge.s32.totalorder %s1309, 1
                %s1314 = sphi %s1297, %s1297
                %s1315 = sphi %s1303, %s1303
              $region74: #{fmdb_basic_fwd.38} parent=70 // loop_header_branch
                %1312 = sbr.rel (%p1310) target = $region78
              $region75: #{fmdb_basic_fwd.38} parent=70 // loop_body
                %v1316 = vld [vmem:[%s1314] sm:$0xff]
                %1317 = vst [vmem:[%s1315] sm:$0xff] %v1316
                %v1318 = vld [vmem:[%s1314 + $0x8] sm:$0xff]
                %1319 = vst [vmem:[%s1315 + $0x8] sm:$0xff] %v1318
                %v1320 = vld [vmem:[%s1314 + $0x10] sm:$0xff]
                %1321 = vst [vmem:[%s1315 + $0x10] sm:$0xff] %v1320
                %v1322 = vld [vmem:[%s1314 + $0x18] sm:$0xff]
                %1323 = vst [vmem:[%s1315 + $0x18] sm:$0xff] %v1322
                %v1324 = vld [vmem:[%s1314 + $0x20] sm:$0xff]
                %1325 = vst [vmem:[%s1315 + $0x20] sm:$0xff] %v1324
                %v1326 = vld [vmem:[%s1314 + $0x28] sm:$0xff]
                %1327 = vst [vmem:[%s1315 + $0x28] sm:$0xff] %v1326
                %v1328 = vld [vmem:[%s1314 + $0x30] sm:$0xff]
                %1329 = vst [vmem:[%s1315 + $0x30] sm:$0xff] %v1328
                %v1330 = vld [vmem:[%s1314 + $0x38] sm:$0xff]
                %1331 = vst [vmem:[%s1315 + $0x38] sm:$0xff] %v1330
                %v1332 = vld [vmem:[%s1314 + $0x40] sm:$0xff]
                %1333 = vst [vmem:[%s1315 + $0x80] sm:$0xff] %v1332
                %v1334 = vld [vmem:[%s1314 + $0x48] sm:$0xff]
                %1335 = vst [vmem:[%s1315 + $0x88] sm:$0xff] %v1334
                %v1336 = vld [vmem:[%s1314 + $0x50] sm:$0xff]
                %1337 = vst [vmem:[%s1315 + $0x90] sm:$0xff] %v1336
                %v1338 = vld [vmem:[%s1314 + $0x58] sm:$0xff]
                %1339 = vst [vmem:[%s1315 + $0x98] sm:$0xff] %v1338
                %v1340 = vld [vmem:[%s1314 + $0x60] sm:$0xff]
                %1341 = vst [vmem:[%s1315 + $0xa0] sm:$0xff] %v1340
                %v1342 = vld [vmem:[%s1314 + $0x68] sm:$0xff]
                %1343 = vst [vmem:[%s1315 + $0xa8] sm:$0xff] %v1342
                %v1344 = vld [vmem:[%s1314 + $0x70] sm:$0xff]
                %1345 = vst [vmem:[%s1315 + $0xb0] sm:$0xff] %v1344
                %v1346 = vld [vmem:[%s1314 + $0x78] sm:$0xff]
                %1347 = vst [vmem:[%s1315 + $0xb8] sm:$0xff] %v1346
                %v1348 = vld [vmem:[%s1314 + $0x80] sm:$0xff]
                %1349 = vst [vmem:[%s1315 + $0x100] sm:$0xff] %v1348
                %v1350 = vld [vmem:[%s1314 + $0x88] sm:$0xff]
                %1351 = vst [vmem:[%s1315 + $0x108] sm:$0xff] %v1350
                %v1352 = vld [vmem:[%s1314 + $0x90] sm:$0xff]
                %1353 = vst [vmem:[%s1315 + $0x110] sm:$0xff] %v1352
                %v1354 = vld [vmem:[%s1314 + $0x98] sm:$0xff]
                %1355 = vst [vmem:[%s1315 + $0x118] sm:$0xff] %v1354
                %v1356 = vld [vmem:[%s1314 + $0xa0] sm:$0xff]
                %1357 = vst [vmem:[%s1315 + $0x120] sm:$0xff] %v1356
                %v1358 = vld [vmem:[%s1314 + $0xa8] sm:$0xff]
                %1359 = vst [vmem:[%s1315 + $0x128] sm:$0xff] %v1358
                %v1360 = vld [vmem:[%s1314 + $0xb0] sm:$0xff]
                %1361 = vst [vmem:[%s1315 + $0x130] sm:$0xff] %v1360
                %v1362 = vld [vmem:[%s1314 + $0xb8] sm:$0xff]
                %1363 = vst [vmem:[%s1315 + $0x138] sm:$0xff] %v1362
                %v1364 = vld [vmem:[%s1314 + $0xc0] sm:$0xff]
                %1365 = vst [vmem:[%s1315 + $0x180] sm:$0xff] %v1364
                %v1366 = vld [vmem:[%s1314 + $0xc8] sm:$0xff]
                %1367 = vst [vmem:[%s1315 + $0x188] sm:$0xff] %v1366
                %v1368 = vld [vmem:[%s1314 + $0xd0] sm:$0xff]
                %1369 = vst [vmem:[%s1315 + $0x190] sm:$0xff] %v1368
                %v1370 = vld [vmem:[%s1314 + $0xd8] sm:$0xff]
                %1371 = vst [vmem:[%s1315 + $0x198] sm:$0xff] %v1370
                %v1372 = vld [vmem:[%s1314 + $0xe0] sm:$0xff]
                %1373 = vst [vmem:[%s1315 + $0x1a0] sm:$0xff] %v1372
                %v1374 = vld [vmem:[%s1314 + $0xe8] sm:$0xff]
                %1375 = vst [vmem:[%s1315 + $0x1a8] sm:$0xff] %v1374
                %v1376 = vld [vmem:[%s1314 + $0xf0] sm:$0xff]
                %1377 = vst [vmem:[%s1315 + $0x1b0] sm:$0xff] %v1376
                %v1378 = vld [vmem:[%s1314 + $0xf8] sm:$0xff]
                %1379 = vst [vmem:[%s1315 + $0x1b8] sm:$0xff] %v1378
                %v1380 = vld [vmem:[%s1314 + $0x100] sm:$0xff]
                %1381 = vst [vmem:[%s1315 + $0x200] sm:$0xff] %v1380
                %v1382 = vld [vmem:[%s1314 + $0x108] sm:$0xff]
                %1383 = vst [vmem:[%s1315 + $0x208] sm:$0xff] %v1382
                %v1384 = vld [vmem:[%s1314 + $0x110] sm:$0xff]
                %1385 = vst [vmem:[%s1315 + $0x210] sm:$0xff] %v1384
                %v1386 = vld [vmem:[%s1314 + $0x118] sm:$0xff]
                %1387 = vst [vmem:[%s1315 + $0x218] sm:$0xff] %v1386
                %v1388 = vld [vmem:[%s1314 + $0x120] sm:$0xff]
                %1389 = vst [vmem:[%s1315 + $0x220] sm:$0xff] %v1388
                %v1390 = vld [vmem:[%s1314 + $0x128] sm:$0xff]
                %1391 = vst [vmem:[%s1315 + $0x228] sm:$0xff] %v1390
                %v1392 = vld [vmem:[%s1314 + $0x130] sm:$0xff]
                %1393 = vst [vmem:[%s1315 + $0x230] sm:$0xff] %v1392
                %v1394 = vld [vmem:[%s1314 + $0x138] sm:$0xff]
                %1395 = vst [vmem:[%s1315 + $0x238] sm:$0xff] %v1394
                %v1396 = vld [vmem:[%s1314 + $0x140] sm:$0xff]
                %1397 = vst [vmem:[%s1315 + $0x280] sm:$0xff] %v1396
                %v1398 = vld [vmem:[%s1314 + $0x148] sm:$0xff]
                %1399 = vst [vmem:[%s1315 + $0x288] sm:$0xff] %v1398
                %v1400 = vld [vmem:[%s1314 + $0x150] sm:$0xff]
                %1401 = vst [vmem:[%s1315 + $0x290] sm:$0xff] %v1400
                %v1402 = vld [vmem:[%s1314 + $0x158] sm:$0xff]
                %1403 = vst [vmem:[%s1315 + $0x298] sm:$0xff] %v1402
                %v1404 = vld [vmem:[%s1314 + $0x160] sm:$0xff]
                %1405 = vst [vmem:[%s1315 + $0x2a0] sm:$0xff] %v1404
                %v1406 = vld [vmem:[%s1314 + $0x168] sm:$0xff]
                %1407 = vst [vmem:[%s1315 + $0x2a8] sm:$0xff] %v1406
                %v1408 = vld [vmem:[%s1314 + $0x170] sm:$0xff]
                %1409 = vst [vmem:[%s1315 + $0x2b0] sm:$0xff] %v1408
                %v1410 = vld [vmem:[%s1314 + $0x178] sm:$0xff]
                %1411 = vst [vmem:[%s1315 + $0x2b8] sm:$0xff] %v1410
                %v1412 = vld [vmem:[%s1314 + $0x180] sm:$0xff]
                %1413 = vst [vmem:[%s1315 + $0x300] sm:$0xff] %v1412
                %v1414 = vld [vmem:[%s1314 + $0x188] sm:$0xff]
                %1415 = vst [vmem:[%s1315 + $0x308] sm:$0xff] %v1414
                %v1416 = vld [vmem:[%s1314 + $0x190] sm:$0xff]
                %1417 = vst [vmem:[%s1315 + $0x310] sm:$0xff] %v1416
                %v1418 = vld [vmem:[%s1314 + $0x198] sm:$0xff]
                %1419 = vst [vmem:[%s1315 + $0x318] sm:$0xff] %v1418
                %v1420 = vld [vmem:[%s1314 + $0x1a0] sm:$0xff]
                %1421 = vst [vmem:[%s1315 + $0x320] sm:$0xff] %v1420
                %v1422 = vld [vmem:[%s1314 + $0x1a8] sm:$0xff]
                %1423 = vst [vmem:[%s1315 + $0x328] sm:$0xff] %v1422
                %v1424 = vld [vmem:[%s1314 + $0x1b0] sm:$0xff]
                %1425 = vst [vmem:[%s1315 + $0x330] sm:$0xff] %v1424
                %v1426 = vld [vmem:[%s1314 + $0x1b8] sm:$0xff]
                %1427 = vst [vmem:[%s1315 + $0x338] sm:$0xff] %v1426
                %v1428 = vld [vmem:[%s1314 + $0x1c0] sm:$0xff]
                %1429 = vst [vmem:[%s1315 + $0x380] sm:$0xff] %v1428
                %v1430 = vld [vmem:[%s1314 + $0x1c8] sm:$0xff]
                %1431 = vst [vmem:[%s1315 + $0x388] sm:$0xff] %v1430
                %v1432 = vld [vmem:[%s1314 + $0x1d0] sm:$0xff]
                %1433 = vst [vmem:[%s1315 + $0x390] sm:$0xff] %v1432
                %v1434 = vld [vmem:[%s1314 + $0x1d8] sm:$0xff]
                %1435 = vst [vmem:[%s1315 + $0x398] sm:$0xff] %v1434
                %v1436 = vld [vmem:[%s1314 + $0x1e0] sm:$0xff]
                %1437 = vst [vmem:[%s1315 + $0x3a0] sm:$0xff] %v1436
                %v1438 = vld [vmem:[%s1314 + $0x1e8] sm:$0xff]
                %1439 = vst [vmem:[%s1315 + $0x3a8] sm:$0xff] %v1438
                %v1440 = vld [vmem:[%s1314 + $0x1f0] sm:$0xff]
                %1441 = vst [vmem:[%s1315 + $0x3b0] sm:$0xff] %v1440
                %v1442 = vld [vmem:[%s1314 + $0x1f8] sm:$0xff]
                %1443 = vst [vmem:[%s1315 + $0x3b8] sm:$0xff] %v1442
                %v1444 = vld [vmem:[%s1314 + $0x200] sm:$0xff]
                %1445 = vst [vmem:[%s1315 + $0x400] sm:$0xff] %v1444
                %v1446 = vld [vmem:[%s1314 + $0x208] sm:$0xff]
                %1447 = vst [vmem:[%s1315 + $0x408] sm:$0xff] %v1446
                %v1448 = vld [vmem:[%s1314 + $0x210] sm:$0xff]
                %1449 = vst [vmem:[%s1315 + $0x410] sm:$0xff] %v1448
                %v1450 = vld [vmem:[%s1314 + $0x218] sm:$0xff]
                %1451 = vst [vmem:[%s1315 + $0x418] sm:$0xff] %v1450
                %v1452 = vld [vmem:[%s1314 + $0x220] sm:$0xff]
                %1453 = vst [vmem:[%s1315 + $0x420] sm:$0xff] %v1452
                %v1454 = vld [vmem:[%s1314 + $0x228] sm:$0xff]
                %1455 = vst [vmem:[%s1315 + $0x428] sm:$0xff] %v1454
                %v1456 = vld [vmem:[%s1314 + $0x230] sm:$0xff]
                %1457 = vst [vmem:[%s1315 + $0x430] sm:$0xff] %v1456
                %v1458 = vld [vmem:[%s1314 + $0x238] sm:$0xff]
                %1459 = vst [vmem:[%s1315 + $0x438] sm:$0xff] %v1458
                %v1460 = vld [vmem:[%s1314 + $0x240] sm:$0xff]
                %1461 = vst [vmem:[%s1315 + $0x480] sm:$0xff] %v1460
                %v1462 = vld [vmem:[%s1314 + $0x248] sm:$0xff]
                %1463 = vst [vmem:[%s1315 + $0x488] sm:$0xff] %v1462
                %v1464 = vld [vmem:[%s1314 + $0x250] sm:$0xff]
                %1465 = vst [vmem:[%s1315 + $0x490] sm:$0xff] %v1464
                %v1466 = vld [vmem:[%s1314 + $0x258] sm:$0xff]
                %1467 = vst [vmem:[%s1315 + $0x498] sm:$0xff] %v1466
                %v1468 = vld [vmem:[%s1314 + $0x260] sm:$0xff]
                %1469 = vst [vmem:[%s1315 + $0x4a0] sm:$0xff] %v1468
                %v1470 = vld [vmem:[%s1314 + $0x268] sm:$0xff]
                %1471 = vst [vmem:[%s1315 + $0x4a8] sm:$0xff] %v1470
                %v1472 = vld [vmem:[%s1314 + $0x270] sm:$0xff]
                %1473 = vst [vmem:[%s1315 + $0x4b0] sm:$0xff] %v1472
                %v1474 = vld [vmem:[%s1314 + $0x278] sm:$0xff]
                %1475 = vst [vmem:[%s1315 + $0x4b8] sm:$0xff] %v1474
                %v1476 = vld [vmem:[%s1314 + $0x280] sm:$0xff]
                %1477 = vst [vmem:[%s1315 + $0x500] sm:$0xff] %v1476
                %v1478 = vld [vmem:[%s1314 + $0x288] sm:$0xff]
                %1479 = vst [vmem:[%s1315 + $0x508] sm:$0xff] %v1478
                %v1480 = vld [vmem:[%s1314 + $0x290] sm:$0xff]
                %1481 = vst [vmem:[%s1315 + $0x510] sm:$0xff] %v1480
                %v1482 = vld [vmem:[%s1314 + $0x298] sm:$0xff]
                %1483 = vst [vmem:[%s1315 + $0x518] sm:$0xff] %v1482
                %v1484 = vld [vmem:[%s1314 + $0x2a0] sm:$0xff]
                %1485 = vst [vmem:[%s1315 + $0x520] sm:$0xff] %v1484
                %v1486 = vld [vmem:[%s1314 + $0x2a8] sm:$0xff]
                %1487 = vst [vmem:[%s1315 + $0x528] sm:$0xff] %v1486
                %v1488 = vld [vmem:[%s1314 + $0x2b0] sm:$0xff]
                %1489 = vst [vmem:[%s1315 + $0x530] sm:$0xff] %v1488
                %v1490 = vld [vmem:[%s1314 + $0x2b8] sm:$0xff]
                %1491 = vst [vmem:[%s1315 + $0x538] sm:$0xff] %v1490
                %v1492 = vld [vmem:[%s1314 + $0x2c0] sm:$0xff]
                %1493 = vst [vmem:[%s1315 + $0x580] sm:$0xff] %v1492
                %v1494 = vld [vmem:[%s1314 + $0x2c8] sm:$0xff]
                %1495 = vst [vmem:[%s1315 + $0x588] sm:$0xff] %v1494
                %v1496 = vld [vmem:[%s1314 + $0x2d0] sm:$0xff]
                %1497 = vst [vmem:[%s1315 + $0x590] sm:$0xff] %v1496
                %v1498 = vld [vmem:[%s1314 + $0x2d8] sm:$0xff]
                %1499 = vst [vmem:[%s1315 + $0x598] sm:$0xff] %v1498
                %v1500 = vld [vmem:[%s1314 + $0x2e0] sm:$0xff]
                %1501 = vst [vmem:[%s1315 + $0x5a0] sm:$0xff] %v1500
                %v1502 = vld [vmem:[%s1314 + $0x2e8] sm:$0xff]
                %1503 = vst [vmem:[%s1315 + $0x5a8] sm:$0xff] %v1502
                %v1504 = vld [vmem:[%s1314 + $0x2f0] sm:$0xff]
                %1505 = vst [vmem:[%s1315 + $0x5b0] sm:$0xff] %v1504
                %v1506 = vld [vmem:[%s1314 + $0x2f8] sm:$0xff]
                %1507 = vst [vmem:[%s1315 + $0x5b8] sm:$0xff] %v1506
              $region76: #{fmdb_basic_fwd.38} parent=70 // loop_footer
                %s1313 = sadd.s32 1, %s1309
              $region77: #{fmdb_basic_fwd.38} parent=70 // loop_footer_branch
                %1308 = sbr.rel target = $region73
              $region78: #{fmdb_basic_fwd.38} parent=70 // loop_exit
                _
            $region71: #{fmdb_basic_fwd.38} parent=66 // pred_fallthru
              _
            // Predicated region
            $region79: #{fmdb_basic_fwd.38} parent=66 // pred_check
              _
            $region80: #{fmdb_basic_fwd.38} parent=66 // pred_check_branch
              %1509 = sbr.rel target = $region82
            $region81: #{fmdb_basic_fwd.38} parent=66 // pred_region
              _
            $region82: #{fmdb_basic_fwd.38} parent=66 // pred_fallthru
              _
          $region67: #{fmdb_basic_fwd.38} parent=62 // pred_fallthru
            _
          %1510 = vnop
        $region63: #{fmdb_basic_fwd.38} parent=54 // pred_fallthru
          _
      $region55: #{fmdb_basic_fwd.38} parent=5 // pred_fallthru
        _
      %p1511 = scmp.le.s32.totalorder 2, %s10
      // Predicated region
      $region83: #{fmdb_basic_fwd.38} parent=5 // pred_check
        %p1512 = pneg %p1511
      $region84: #{fmdb_basic_fwd.38} parent=5 // pred_check_branch
        %1514 = sbr.rel (%p1512) target = $region86
      $region85: #{fmdb_basic_fwd.38} parent=5 // pred_region
        %s1515 = ssub.s32 %s10, 2
        // Predicated region
        $region87: #{fmdb_basic_fwd.38} parent=85 // pred_check
          %p1516 = pneg %p128
        $region88: #{fmdb_basic_fwd.38} parent=85 // pred_check_branch
          %1518 = sbr.rel (%p1516) target = $region90
        $region89: #{fmdb_basic_fwd.38} parent=85 // pred_region
          %s1519 = sand.u32 %s113, 1
          %s1520 = sand.u32 %s113, 1
          %s1521 = smul.addr %s1520, 768
          %s1522 = scalar_lea.vmem [#allocation3], %s1521
        $region90: #{fmdb_basic_fwd.38} parent=85 // pred_fallthru
          _
      $region86: #{fmdb_basic_fwd.38} parent=5 // pred_fallthru
        _
    $region6: #{fmdb_basic_fwd.38} parent=1 // loop_footer
      %s14 = sadd.s32 1, %s10
    $region7: #{fmdb_basic_fwd.38} parent=1 // loop_footer_branch
      %9 = sbr.rel target = $region3
    $region8: #{fmdb_basic_fwd.38} parent=1 // loop_exit
      _

</llo_original>
